<compile_context>
chip_gen: v6e
topology: v6e:2x2x1
jax: 0.10.0
libtpu: 0.0.40
codegen_flags: <defaults>
</compile_context>

<pallas_src>
import functools
import math

import jax
import jax.numpy as jnp
from jax.experimental import pallas as pl
from jax.experimental.pallas import tpu as pltpu

# ----------------------------- model dims -----------------------------------
D_MODEL = 32
D_INNER = 64
N_HEAD = 2
D_K = 16
D_V = 16
BATCH = 2
SEQ = 8
LN_EPS = 1e-5


# ----------------------------- fused Pallas kernel ---------------------------
def _node_decoder_rk4_kernel(
        ts_ref,                                    # (n_ts,) f32 in SMEM
        dec_ref, enc_ref, npm_ref, slf_bias_ref, de_bias_ref,
        slf_wqkv_ref, slf_bqkv_ref, slf_wfc_ref, slf_bfc_ref,
        enc_wqkv_ref, enc_bqkv_ref, enc_wfc_ref, enc_bfc_ref,
        w1_ref, b1_ref, w2_ref, b2_ref,
        gamma_ref, beta_ref,
        out_ref,
        *, n_head, d_k, d_v, n_ts, n_substeps):
    """Whole RK4 integration of NodeDecoderLayerFunc for one batch element."""
    nk = n_head * d_k

    # ---- per-batch inputs, resident for the whole integration -------------
    enc = enc_ref[0]                    # (L, D)
    npm = npm_ref[0]                    # (L, 1)  non-pad mask
    slf_bias = slf_bias_ref[0]          # (L, L)  additive (-1e30 on masked)
    de_bias = de_bias_ref[0]            # (L, L)

    # ---- weights, loaded from VMEM once ------------------------------------
    slf_wqkv = slf_wqkv_ref[...]        # (D, 2*nk + n_head*d_v)
    slf_bqkv = slf_bqkv_ref[...]
    slf_wfc = slf_wfc_ref[...]          # (n_head*d_v, D)
    slf_bfc = slf_bfc_ref[...]          # (1, D)
    enc_wqkv = enc_wqkv_ref[...]
    enc_bqkv = enc_bqkv_ref[...]
    enc_wfc = enc_wfc_ref[...]
    enc_bfc = enc_bfc_ref[...]
    w1 = w1_ref[...]; b1 = b1_ref[...]
    w2 = w2_ref[...]; b2 = b2_ref[...]
    gamma = gamma_ref[...]; beta = beta_ref[...]

    inv_temp = 1.0 / math.sqrt(d_k)

    # encoder K/V do not depend on t or y: project once, reuse for all f-evals
    enc_kv = jnp.dot(enc, enc_wqkv[:, nk:],
                     preferred_element_type=jnp.float32) + enc_bqkv[:, nk:]
    enc_K = enc_kv[:, :nk]
    enc_V = enc_kv[:, nk:]
    enc_wq = enc_wqkv[:, :nk]
    enc_bq = enc_bqkv[:, :nk]

    def attend(Q, K, V, bias, wfc, bfc):
        """Scaled dot-product attention, per-head accumulate of fc output."""
        out = None
        for h in range(n_head):                     # static, n_head small
            Qh = Q[:, h * d_k:(h + 1) * d_k]
            Kh = K[:, h * d_k:(h + 1) * d_k]
            Vh = V[:, h * d_v:(h + 1) * d_v]
            s = jnp.dot(Qh, Kh.T,
                        preferred_element_type=jnp.float32) * inv_temp + bias
            m = jnp.max(s, axis=-1, keepdims=True)
            e = jnp.exp(s - m)
            p = e * pl.reciprocal(jnp.sum(e, axis=-1, keepdims=True),
                                  approx=True)
            head = jnp.dot(p, Vh, preferred_element_type=jnp.float32)
            term = jnp.dot(head, wfc[h * d_v:(h + 1) * d_v, :],
                           preferred_element_type=jnp.float32)
            out = term if out is None else out + term
        return out + bfc                             # fc bias added once

    def layer_norm_mask(x):
        mean = jnp.mean(x, axis=-1, keepdims=True)
        var = jnp.mean((x - mean) ** 2, axis=-1, keepdims=True)
        y = (x - mean) * jax.lax.rsqrt(var + LN_EPS)
        return (y * gamma + beta) * npm

    def f(t, y):
        """NodeDecoderLayerFunc forward (ODE right-hand side)."""
        x = y + t                                    # add_time (in-kernel)
        # self-attention: fused QKV projection (one matmul)
        qkv = jnp.dot(x, slf_wqkv,
                      preferred_element_type=jnp.float32) + slf_bqkv
        o = attend(qkv[:, :nk], qkv[:, nk:2 * nk], qkv[:, 2 * nk:],
                   slf_bias, slf_wfc, slf_bfc)
        o = layer_norm_mask(o)
        # encoder/decoder attention: only Q depends on o
        Q = jnp.dot(o, enc_wq, preferred_element_type=jnp.float32) + enc_bq
        o = attend(Q, enc_K, enc_V, de_bias, enc_wfc, enc_bfc)
        o = layer_norm_mask(o)
        # position-wise FFN (1x1 convs as matmuls)
        h = jnp.maximum(jnp.dot(o, w1,
                                preferred_element_type=jnp.float32) + b1, 0.0)
        o = jnp.dot(h, w2, preferred_element_type=jnp.float32) + b2
        return layer_norm_mask(o)

    # ---- fixed-step RK4 integration over ts --------------------------------
    y = dec_ref[0].astype(jnp.float32)
    inv_sub = 1.0 / float(n_substeps)
    for i in range(n_ts - 1):                        # static: n_ts compile-time
        t0 = ts_ref[i]
        dt = (ts_ref[i + 1] - t0) * inv_sub
        half = dt * 0.5
        sixth = dt * (1.0 / 6.0)

        def substep(s, y_, t0=t0, dt=dt, half=half, sixth=sixth):
            tc = t0 + dt * s.astype(jnp.float32)
            k1 = f(tc, y_)
            k2 = f(tc + half, y_ + half * k1)
            k3 = f(tc + half, y_ + half * k2)
            k4 = f(tc + dt, y_ + dt * k3)
            return y_ + sixth * (k1 + 2.0 * k2 + 2.0 * k3 + k4)

        y = jax.lax.fori_loop(0, n_substeps, substep, y)

    out_ref[0] = y.astype(out_ref.dtype)


# ----------------------------- wrapper ---------------------------------------
def node_decoder_layer(dec_input, enc_output, ts, non_pad_mask,
                       slf_attn_mask, dec_enc_attn_mask, params, n_substeps=2):
    """odeint(node_func, dec_input, ts)[-1] with fixed-step RK4 — one kernel."""
    B, L, D = dec_input.shape
    n_ts = int(ts.shape[0])

    # additive attention-mask bias (>0 means masked -> -1e30; avoids -inf NaN)
    slf_bias = jnp.where(slf_attn_mask > 0, jnp.float32(-1e30),
                         jnp.float32(0.0))
    de_bias = jnp.where(dec_enc_attn_mask > 0, jnp.float32(-1e30),
                        jnp.float32(0.0))

    slf, enc, ffn = params["slf"], params["enc"], params["ffn"]
    slf_wqkv = jnp.concatenate([slf["wq"], slf["wk"], slf["wv"]], axis=1)
    slf_bqkv = jnp.concatenate([slf["bq"], slf["bk"], slf["bv"]], axis=1)
    enc_wqkv = jnp.concatenate([enc["wq"], enc["wk"], enc["wv"]], axis=1)
    enc_bqkv = jnp.concatenate([enc["bq"], enc["bk"], enc["bv"]], axis=1)

    kernel = functools.partial(_node_decoder_rk4_kernel,
                               n_head=N_HEAD, d_k=D_K, d_v=D_V,
                               n_ts=n_ts, n_substeps=n_substeps)

    def batch_spec(shape):
        n = len(shape) - 1
        return pl.BlockSpec((1,) + tuple(shape[1:]),
                            lambda b, _n=n: (b,) + (0,) * _n)

    def full_spec(shape):
        n = len(shape)
        return pl.BlockSpec(tuple(shape), lambda b, _n=n: (0,) * _n)

    return pl.pallas_call(
        kernel,
        out_shape=jax.ShapeDtypeStruct((B, L, D), dec_input.dtype),
        grid=(B,),
        in_specs=[
            pl.BlockSpec(memory_space=pltpu.MemorySpace.SMEM),       # ts
            batch_spec(dec_input.shape),
            batch_spec(enc_output.shape),
            batch_spec(non_pad_mask.shape),
            batch_spec(slf_bias.shape),
            batch_spec(de_bias.shape),
            full_spec(slf_wqkv.shape), full_spec(slf_bqkv.shape),
            full_spec(slf["wfc"].shape), full_spec(slf["bfc"].shape),
            full_spec(enc_wqkv.shape), full_spec(enc_bqkv.shape),
            full_spec(enc["wfc"].shape), full_spec(enc["bfc"].shape),
            full_spec(ffn["w1"].shape), full_spec(ffn["b1"].shape),
            full_spec(ffn["w2"].shape), full_spec(ffn["b2"].shape),
            full_spec(params["ln_gamma"].shape),
            full_spec(params["ln_beta"].shape),
        ],
        out_specs=batch_spec((B, L, D)),
        compiler_params=pltpu.CompilerParams(
            dimension_semantics=("parallel",)),        # batch -> v7x 2 TCs
    )(ts.astype(jnp.float32), dec_input, enc_output,
      non_pad_mask.astype(jnp.float32), slf_bias, de_bias,
      slf_wqkv, slf_bqkv, slf["wfc"], slf["bfc"],
      enc_wqkv, enc_bqkv, enc["wfc"], enc["bfc"],
      ffn["w1"], ffn["b1"], ffn["w2"], ffn["b2"],
      params["ln_gamma"], params["ln_beta"])


# ----------------------------- parameter init --------------------------------
def init_attn_params(key, d_model, n_head, d_k, d_v):
    ks = jax.random.split(key, 8)
    std_qk = math.sqrt(2.0 / (d_model + d_k))
    std_v = math.sqrt(2.0 / (d_model + d_v))
    std_fc = math.sqrt(2.0 / (n_head * d_v + d_model))   # xavier_normal
    b_bound = 1.0 / math.sqrt(d_model)
    return {
        "wq": std_qk * jax.random.normal(ks[0], (d_model, n_head * d_k), jnp.float32),
        "bq": jax.random.uniform(ks[1], (1, n_head * d_k), jnp.float32, -b_bound, b_bound),
        "wk": std_qk * jax.random.normal(ks[2], (d_model, n_head * d_k), jnp.float32),
        "bk": jax.random.uniform(ks[3], (1, n_head * d_k), jnp.float32, -b_bound, b_bound),
        "wv": std_v * jax.random.normal(ks[4], (d_model, n_head * d_v), jnp.float32),
        "bv": jax.random.uniform(ks[5], (1, n_head * d_v), jnp.float32, -b_bound, b_bound),
        "wfc": std_fc * jax.random.normal(ks[6], (n_head * d_v, d_model), jnp.float32),
        "bfc": jax.random.uniform(ks[7], (1, d_model), jnp.float32, -b_bound, b_bound),
    }


def init_ffn_params(key, d_in, d_hid):
    ks = jax.random.split(key, 4)
    b1 = 1.0 / math.sqrt(d_in)
    b2 = 1.0 / math.sqrt(d_hid)
    return {
        "w1": jax.random.uniform(ks[0], (d_in, d_hid), jnp.float32, -b1, b1),
        "b1": jax.random.uniform(ks[1], (1, d_hid), jnp.float32, -b1, b1),
        "w2": jax.random.uniform(ks[2], (d_hid, d_in), jnp.float32, -b2, b2),
        "b2": jax.random.uniform(ks[3], (1, d_in), jnp.float32, -b2, b2),
    }


def init_params(key):
    k1, k2, k3 = jax.random.split(key, 3)
    return {
        "slf": init_attn_params(k1, D_MODEL, N_HEAD, D_K, D_V),
        "enc": init_attn_params(k2, D_MODEL, N_HEAD, D_K, D_V),
        "ffn": init_ffn_params(k3, D_MODEL, D_INNER),
        "ln_gamma": jnp.ones((1, D_MODEL), jnp.float32),
        "ln_beta": jnp.zeros((1, D_MODEL), jnp.float32),
    }


# ----------------------------------- main -------------------------------------
if __name__ == "__main__":
    key = jax.random.PRNGKey(0)
    k_param, k_dec, k_enc = jax.random.split(key, 3)

    params = init_params(k_param)

    dec_input = jax.random.normal(k_dec, (BATCH, SEQ, D_MODEL), jnp.float32)
    enc_output = jax.random.normal(k_enc, (BATCH, SEQ, D_MODEL), jnp.float32)
    ts = jnp.array([0.0, 1.0], jnp.float32)

    # non_pad_mask: 1 for valid tokens, 0 for the last (padding) position.
    non_pad_mask = jnp.ones((BATCH, SEQ, 1), jnp.float32).at[:, -1, :].set(0.0)
    # attention masks: >0 means masked (matches masked_fill(mask, -inf)).
    slf_attn_mask = jnp.zeros((BATCH, SEQ, SEQ), jnp.float32).at[:, :, -1].set(1.0)
    dec_enc_attn_mask = jnp.zeros((BATCH, SEQ, SEQ), jnp.float32).at[:, :, -1].set(1.0)

    fwd = jax.jit(functools.partial(node_decoder_layer, n_substeps=2))
    out = fwd(dec_input, enc_output, ts, non_pad_mask,
              slf_attn_mask, dec_enc_attn_mask, params)
    out = jax.block_until_ready(out)

    assert out.shape == (BATCH, SEQ, D_MODEL), out.shape
    assert bool(jnp.all(jnp.isfinite(out)))
    print("KERNEL_OK")
</pallas_src>

<mosaic_0001>
module attributes {stable_mosaic.version = 11 : i64} {
  func.func @_node_decoder_rk4_kernel(%arg0: i32, %arg1: memref<2xf32, #tpu.memory_space<smem>>, %arg2: memref<1x8x32xf32, #tpu.memory_space<vmem>>, %arg3: memref<1x8x32xf32, #tpu.memory_space<vmem>>, %arg4: memref<1x8x1xf32, #tpu.memory_space<vmem>>, %arg5: memref<1x8x8xf32, #tpu.memory_space<vmem>>, %arg6: memref<1x8x8xf32, #tpu.memory_space<vmem>>, %arg7: memref<32x96xf32, #tpu.memory_space<vmem>>, %arg8: memref<1x96xf32, #tpu.memory_space<vmem>>, %arg9: memref<32x32xf32, #tpu.memory_space<vmem>>, %arg10: memref<1x32xf32, #tpu.memory_space<vmem>>, %arg11: memref<32x96xf32, #tpu.memory_space<vmem>>, %arg12: memref<1x96xf32, #tpu.memory_space<vmem>>, %arg13: memref<32x32xf32, #tpu.memory_space<vmem>>, %arg14: memref<1x32xf32, #tpu.memory_space<vmem>>, %arg15: memref<32x64xf32, #tpu.memory_space<vmem>>, %arg16: memref<1x64xf32, #tpu.memory_space<vmem>>, %arg17: memref<64x32xf32, #tpu.memory_space<vmem>>, %arg18: memref<1x32xf32, #tpu.memory_space<vmem>>, %arg19: memref<1x32xf32, #tpu.memory_space<vmem>>, %arg20: memref<1x32xf32, #tpu.memory_space<vmem>>, %arg21: memref<1x8x32xf32, #tpu.memory_space<vmem>>) attributes {dimension_semantics = [#tpu.dimension_semantics<parallel>], iteration_bounds = array<i64: 2>, scalar_prefetch = 0 : i64, scratch_operands = 0 : i64, tpu.core_type = #tpu.core_type<tc>, window_params = [{transform_indices = @transform_0, window_bounds = array<i64: 2>}, {transform_indices = @transform_1, window_bounds = array<i64: 1, 8, 32>}, {transform_indices = @transform_2, window_bounds = array<i64: 1, 8, 32>}, {transform_indices = @transform_3, window_bounds = array<i64: 1, 8, 1>}, {transform_indices = @transform_4, window_bounds = array<i64: 1, 8, 8>}, {transform_indices = @transform_5, window_bounds = array<i64: 1, 8, 8>}, {pipeline_mode = #tpu.pipeline_mode<synchronous>, transform_indices = @transform_6, window_bounds = array<i64: 32, 96>}, {pipeline_mode = #tpu.pipeline_mode<synchronous>, transform_indices = @transform_7, window_bounds = array<i64: 1, 96>}, {pipeline_mode = #tpu.pipeline_mode<synchronous>, transform_indices = @transform_8, window_bounds = array<i64: 32, 32>}, {pipeline_mode = #tpu.pipeline_mode<synchronous>, transform_indices = @transform_9, window_bounds = array<i64: 1, 32>}, {pipeline_mode = #tpu.pipeline_mode<synchronous>, transform_indices = @transform_10, window_bounds = array<i64: 32, 96>}, {pipeline_mode = #tpu.pipeline_mode<synchronous>, transform_indices = @transform_11, window_bounds = array<i64: 1, 96>}, {pipeline_mode = #tpu.pipeline_mode<synchronous>, transform_indices = @transform_12, window_bounds = array<i64: 32, 32>}, {pipeline_mode = #tpu.pipeline_mode<synchronous>, transform_indices = @transform_13, window_bounds = array<i64: 1, 32>}, {pipeline_mode = #tpu.pipeline_mode<synchronous>, transform_indices = @transform_14, window_bounds = array<i64: 32, 64>}, {pipeline_mode = #tpu.pipeline_mode<synchronous>, transform_indices = @transform_15, window_bounds = array<i64: 1, 64>}, {pipeline_mode = #tpu.pipeline_mode<synchronous>, transform_indices = @transform_16, window_bounds = array<i64: 64, 32>}, {pipeline_mode = #tpu.pipeline_mode<synchronous>, transform_indices = @transform_17, window_bounds = array<i64: 1, 32>}, {pipeline_mode = #tpu.pipeline_mode<synchronous>, transform_indices = @transform_18, window_bounds = array<i64: 1, 32>}, {pipeline_mode = #tpu.pipeline_mode<synchronous>, transform_indices = @transform_19, window_bounds = array<i64: 1, 32>}, {transform_indices = @transform_20, window_bounds = array<i64: 1, 8, 32>}]} {
    %c0 = arith.constant 0 : index
    %c0_0 = arith.constant 0 : index
    %c0_1 = arith.constant 0 : index
    %0 = vector.load %arg3[%c0, %c0_0, %c0_1] : memref<1x8x32xf32, #tpu.memory_space<vmem>>, vector<1x8x32xf32>
    %1 = vector.shape_cast %0 : vector<1x8x32xf32> to vector<8x32xf32>
    %c0_2 = arith.constant 0 : index
    %c0_3 = arith.constant 0 : index
    %c0_4 = arith.constant 0 : index
    %2 = vector.load %arg4[%c0_2, %c0_3, %c0_4] : memref<1x8x1xf32, #tpu.memory_space<vmem>>, vector<1x8x1xf32>
    %3 = vector.shape_cast %2 : vector<1x8x1xf32> to vector<8x1xf32>
    %c0_5 = arith.constant 0 : index
    %c0_6 = arith.constant 0 : index
    %c0_7 = arith.constant 0 : index
    %4 = vector.load %arg5[%c0_5, %c0_6, %c0_7] : memref<1x8x8xf32, #tpu.memory_space<vmem>>, vector<1x8x8xf32>
    %5 = vector.shape_cast %4 : vector<1x8x8xf32> to vector<8x8xf32>
    %c0_8 = arith.constant 0 : index
    %c0_9 = arith.constant 0 : index
    %c0_10 = arith.constant 0 : index
    %6 = vector.load %arg6[%c0_8, %c0_9, %c0_10] : memref<1x8x8xf32, #tpu.memory_space<vmem>>, vector<1x8x8xf32>
    %7 = vector.shape_cast %6 : vector<1x8x8xf32> to vector<8x8xf32>
    %c0_11 = arith.constant 0 : index
    %c0_12 = arith.constant 0 : index
    %8 = vector.load %arg7[%c0_11, %c0_12] : memref<32x96xf32, #tpu.memory_space<vmem>>, vector<32x96xf32>
    %c0_13 = arith.constant 0 : index
    %c0_14 = arith.constant 0 : index
    %9 = vector.load %arg8[%c0_13, %c0_14] : memref<1x96xf32, #tpu.memory_space<vmem>>, vector<1x96xf32>
    %c0_15 = arith.constant 0 : index
    %c0_16 = arith.constant 0 : index
    %10 = vector.load %arg9[%c0_15, %c0_16] : memref<32x32xf32, #tpu.memory_space<vmem>>, vector<32x32xf32>
    %c0_17 = arith.constant 0 : index
    %c0_18 = arith.constant 0 : index
    %11 = vector.load %arg10[%c0_17, %c0_18] : memref<1x32xf32, #tpu.memory_space<vmem>>, vector<1x32xf32>
    %c0_19 = arith.constant 0 : index
    %c0_20 = arith.constant 0 : index
    %12 = vector.load %arg11[%c0_19, %c0_20] : memref<32x96xf32, #tpu.memory_space<vmem>>, vector<32x96xf32>
    %c0_21 = arith.constant 0 : index
    %c0_22 = arith.constant 0 : index
    %13 = vector.load %arg12[%c0_21, %c0_22] : memref<1x96xf32, #tpu.memory_space<vmem>>, vector<1x96xf32>
    %c0_23 = arith.constant 0 : index
    %c0_24 = arith.constant 0 : index
    %14 = vector.load %arg13[%c0_23, %c0_24] : memref<32x32xf32, #tpu.memory_space<vmem>>, vector<32x32xf32>
    %c0_25 = arith.constant 0 : index
    %c0_26 = arith.constant 0 : index
    %15 = vector.load %arg14[%c0_25, %c0_26] : memref<1x32xf32, #tpu.memory_space<vmem>>, vector<1x32xf32>
    %c0_27 = arith.constant 0 : index
    %c0_28 = arith.constant 0 : index
    %16 = vector.load %arg15[%c0_27, %c0_28] : memref<32x64xf32, #tpu.memory_space<vmem>>, vector<32x64xf32>
    %c0_29 = arith.constant 0 : index
    %c0_30 = arith.constant 0 : index
    %17 = vector.load %arg16[%c0_29, %c0_30] : memref<1x64xf32, #tpu.memory_space<vmem>>, vector<1x64xf32>
    %c0_31 = arith.constant 0 : index
    %c0_32 = arith.constant 0 : index
    %18 = vector.load %arg17[%c0_31, %c0_32] : memref<64x32xf32, #tpu.memory_space<vmem>>, vector<64x32xf32>
    %c0_33 = arith.constant 0 : index
    %c0_34 = arith.constant 0 : index
    %19 = vector.load %arg18[%c0_33, %c0_34] : memref<1x32xf32, #tpu.memory_space<vmem>>, vector<1x32xf32>
    %c0_35 = arith.constant 0 : index
    %c0_36 = arith.constant 0 : index
    %20 = vector.load %arg19[%c0_35, %c0_36] : memref<1x32xf32, #tpu.memory_space<vmem>>, vector<1x32xf32>
    %c0_37 = arith.constant 0 : index
    %c0_38 = arith.constant 0 : index
    %21 = vector.load %arg20[%c0_37, %c0_38] : memref<1x32xf32, #tpu.memory_space<vmem>>, vector<1x32xf32>
    %22 = vector.extract_strided_slice %12 {offsets = [0, 32], sizes = [32, 64], strides = [1, 1]} : vector<32x96xf32> to vector<32x64xf32>
    %cst = arith.constant dense<0.000000e+00> : vector<8x64xf32>
    %23 = tpu.matmul %1, %22, %cst {dimension_numbers = #tpu.dot_dimension_numbers<[1], [0], [0], [1], [0, 0, 1, 1], [], []>} : vector<8x32xf32>, vector<32x64xf32>, vector<8x64xf32> -> vector<8x64xf32>
    %24 = vector.extract_strided_slice %13 {offsets = [0, 32], sizes = [1, 64], strides = [1, 1]} : vector<1x96xf32> to vector<1x64xf32>
    %25 = vector.broadcast %24 : vector<1x64xf32> to vector<8x64xf32>
    %26 = arith.addf %23, %25 : vector<8x64xf32>
    %27 = vector.extract_strided_slice %26 {offsets = [0, 0], sizes = [8, 32], strides = [1, 1]} : vector<8x64xf32> to vector<8x32xf32>
    %28 = vector.extract_strided_slice %26 {offsets = [0, 32], sizes = [8, 32], strides = [1, 1]} : vector<8x64xf32> to vector<8x32xf32>
    %29 = vector.extract_strided_slice %12 {offsets = [0, 0], sizes = [32, 32], strides = [1, 1]} : vector<32x96xf32> to vector<32x32xf32>
    %30 = vector.extract_strided_slice %13 {offsets = [0, 0], sizes = [1, 32], strides = [1, 1]} : vector<1x96xf32> to vector<1x32xf32>
    %c0_39 = arith.constant 0 : index
    %c0_40 = arith.constant 0 : index
    %c0_41 = arith.constant 0 : index
    %31 = vector.load %arg2[%c0_39, %c0_40, %c0_41] : memref<1x8x32xf32, #tpu.memory_space<vmem>>, vector<1x8x32xf32>
    %32 = vector.shape_cast %31 : vector<1x8x32xf32> to vector<8x32xf32>
    %c0_42 = arith.constant 0 : index
    %33 = memref.load %arg1[%c0_42] : memref<2xf32, #tpu.memory_space<smem>>
    %c1 = arith.constant 1 : index
    %34 = memref.load %arg1[%c1] : memref<2xf32, #tpu.memory_space<smem>>
    %35 = arith.subf %34, %33 : f32
    %cst_43 = arith.constant 5.000000e-01 : f32
    %36 = arith.mulf %35, %cst_43 : f32
    %cst_44 = arith.constant 5.000000e-01 : f32
    %37 = arith.mulf %36, %cst_44 : f32
    %cst_45 = arith.constant 0.166666672 : f32
    %38 = arith.mulf %36, %cst_45 : f32
    %c0_i32 = arith.constant 0 : i32
    %c2_i32 = arith.constant 2 : i32
    %39 = arith.addi %c0_i32, %c2_i32 : i32
    %c1_i32 = arith.constant 1 : i32
    %40 = scf.for %arg22 = %c0_i32 to %39 step %c1_i32 iter_args(%arg23 = %32) -> (vector<8x32xf32>)  : i32 {
      %44 = arith.sitofp %arg22 : i32 to f32
      %45 = arith.mulf %36, %44 : f32
      %46 = arith.addf %33, %45 : f32
      %47 = vector.broadcast %46 : f32 to vector<8x32xf32>
      %48 = arith.addf %arg23, %47 : vector<8x32xf32>
      %cst_50 = arith.constant dense<0.000000e+00> : vector<8x96xf32>
      %49 = tpu.matmul %48, %8, %cst_50 {dimension_numbers = #tpu.dot_dimension_numbers<[1], [0], [0], [1], [0, 0, 1, 1], [], []>} : vector<8x32xf32>, vector<32x96xf32>, vector<8x96xf32> -> vector<8x96xf32>
      %50 = vector.broadcast %9 : vector<1x96xf32> to vector<8x96xf32>
      %51 = arith.addf %49, %50 : vector<8x96xf32>
      %52 = vector.extract_strided_slice %51 {offsets = [0, 0], sizes = [8, 32], strides = [1, 1]} : vector<8x96xf32> to vector<8x32xf32>
      %53 = vector.extract_strided_slice %51 {offsets = [0, 32], sizes = [8, 32], strides = [1, 1]} : vector<8x96xf32> to vector<8x32xf32>
      %54 = vector.extract_strided_slice %51 {offsets = [0, 64], sizes = [8, 32], strides = [1, 1]} : vector<8x96xf32> to vector<8x32xf32>
      %55 = vector.extract_strided_slice %52 {offsets = [0, 0], sizes = [8, 16], strides = [1, 1]} : vector<8x32xf32> to vector<8x16xf32>
      %56 = vector.extract_strided_slice %53 {offsets = [0, 0], sizes = [8, 16], strides = [1, 1]} : vector<8x32xf32> to vector<8x16xf32>
      %57 = vector.extract_strided_slice %54 {offsets = [0, 0], sizes = [8, 16], strides = [1, 1]} : vector<8x32xf32> to vector<8x16xf32>
      %58 = tpu.transpose %56, [1, 0] : vector<8x16xf32> -> vector<16x8xf32>
      %cst_51 = arith.constant dense<0.000000e+00> : vector<8x8xf32>
      %59 = tpu.matmul %55, %58, %cst_51 {dimension_numbers = #tpu.dot_dimension_numbers<[1], [0], [0], [1], [0, 0, 1, 1], [], []>} : vector<8x16xf32>, vector<16x8xf32>, vector<8x8xf32> -> vector<8x8xf32>
      %cst_52 = arith.constant 2.500000e-01 : f32
      %60 = vector.broadcast %cst_52 : f32 to vector<8x8xf32>
      %61 = arith.mulf %59, %60 : vector<8x8xf32>
      %62 = arith.addf %61, %5 : vector<8x8xf32>
      %cst_53 = arith.constant dense<0xFF800000> : vector<8xf32>
      %63 = vector.multi_reduction <maximumf>, %62, %cst_53 [1] : vector<8x8xf32> to vector<8xf32>
      %64 = vector.shape_cast %63 : vector<8xf32> to vector<8x1xf32>
      %65 = vector.broadcast %64 : vector<8x1xf32> to vector<8x8xf32>
      %66 = arith.subf %62, %65 : vector<8x8xf32>
      %67 = math.exp %66 : vector<8x8xf32>
      %cst_54 = arith.constant dense<0.000000e+00> : vector<8xf32>
      %68 = vector.multi_reduction <add>, %67, %cst_54 [1] : vector<8x8xf32> to vector<8xf32>
      %69 = vector.shape_cast %68 : vector<8xf32> to vector<8x1xf32>
      %70 = tpu.reciprocal %69 {approx = true} : vector<8x1xf32> -> vector<8x1xf32>
      %71 = vector.broadcast %70 : vector<8x1xf32> to vector<8x8xf32>
      %72 = arith.mulf %67, %71 : vector<8x8xf32>
      %cst_55 = arith.constant dense<0.000000e+00> : vector<8x16xf32>
      %73 = tpu.matmul %72, %57, %cst_55 {dimension_numbers = #tpu.dot_dimension_numbers<[1], [0], [0], [1], [0, 0, 1, 1], [], []>} : vector<8x8xf32>, vector<8x16xf32>, vector<8x16xf32> -> vector<8x16xf32>
      %74 = vector.extract_strided_slice %10 {offsets = [0, 0], sizes = [16, 32], strides = [1, 1]} : vector<32x32xf32> to vector<16x32xf32>
      %cst_56 = arith.constant dense<0.000000e+00> : vector<8x32xf32>
      %75 = tpu.matmul %73, %74, %cst_56 {dimension_numbers = #tpu.dot_dimension_numbers<[1], [0], [0], [1], [0, 0, 1, 1], [], []>} : vector<8x16xf32>, vector<16x32xf32>, vector<8x32xf32> -> vector<8x32xf32>
      %76 = vector.extract_strided_slice %52 {offsets = [0, 16], sizes = [8, 16], strides = [1, 1]} : vector<8x32xf32> to vector<8x16xf32>
      %77 = vector.extract_strided_slice %53 {offsets = [0, 16], sizes = [8, 16], strides = [1, 1]} : vector<8x32xf32> to vector<8x16xf32>
      %78 = vector.extract_strided_slice %54 {offsets = [0, 16], sizes = [8, 16], strides = [1, 1]} : vector<8x32xf32> to vector<8x16xf32>
      %79 = tpu.transpose %77, [1, 0] : vector<8x16xf32> -> vector<16x8xf32>
      %cst_57 = arith.constant dense<0.000000e+00> : vector<8x8xf32>
      %80 = tpu.matmul %76, %79, %cst_57 {dimension_numbers = #tpu.dot_dimension_numbers<[1], [0], [0], [1], [0, 0, 1, 1], [], []>} : vector<8x16xf32>, vector<16x8xf32>, vector<8x8xf32> -> vector<8x8xf32>
      %cst_58 = arith.constant 2.500000e-01 : f32
      %81 = vector.broadcast %cst_58 : f32 to vector<8x8xf32>
      %82 = arith.mulf %80, %81 : vector<8x8xf32>
      %83 = arith.addf %82, %5 : vector<8x8xf32>
      %cst_59 = arith.constant dense<0xFF800000> : vector<8xf32>
      %84 = vector.multi_reduction <maximumf>, %83, %cst_59 [1] : vector<8x8xf32> to vector<8xf32>
      %85 = vector.shape_cast %84 : vector<8xf32> to vector<8x1xf32>
      %86 = vector.broadcast %85 : vector<8x1xf32> to vector<8x8xf32>
      %87 = arith.subf %83, %86 : vector<8x8xf32>
      %88 = math.exp %87 : vector<8x8xf32>
      %cst_60 = arith.constant dense<0.000000e+00> : vector<8xf32>
      %89 = vector.multi_reduction <add>, %88, %cst_60 [1] : vector<8x8xf32> to vector<8xf32>
      %90 = vector.shape_cast %89 : vector<8xf32> to vector<8x1xf32>
      %91 = tpu.reciprocal %90 {approx = true} : vector<8x1xf32> -> vector<8x1xf32>
      %92 = vector.broadcast %91 : vector<8x1xf32> to vector<8x8xf32>
      %93 = arith.mulf %88, %92 : vector<8x8xf32>
      %cst_61 = arith.constant dense<0.000000e+00> : vector<8x16xf32>
      %94 = tpu.matmul %93, %78, %cst_61 {dimension_numbers = #tpu.dot_dimension_numbers<[1], [0], [0], [1], [0, 0, 1, 1], [], []>} : vector<8x8xf32>, vector<8x16xf32>, vector<8x16xf32> -> vector<8x16xf32>
      %95 = vector.extract_strided_slice %10 {offsets = [16, 0], sizes = [16, 32], strides = [1, 1]} : vector<32x32xf32> to vector<16x32xf32>
      %cst_62 = arith.constant dense<0.000000e+00> : vector<8x32xf32>
      %96 = tpu.matmul %94, %95, %cst_62 {dimension_numbers = #tpu.dot_dimension_numbers<[1], [0], [0], [1], [0, 0, 1, 1], [], []>} : vector<8x16xf32>, vector<16x32xf32>, vector<8x32xf32> -> vector<8x32xf32>
      %97 = arith.addf %75, %96 : vector<8x32xf32>
      %98 = vector.broadcast %11 : vector<1x32xf32> to vector<8x32xf32>
      %99 = arith.addf %97, %98 : vector<8x32xf32>
      %cst_63 = arith.constant dense<0.000000e+00> : vector<8xf32>
      %100 = vector.multi_reduction <add>, %99, %cst_63 [1] : vector<8x32xf32> to vector<8xf32>
      %101 = vector.shape_cast %100 : vector<8xf32> to vector<8x1xf32>
      %cst_64 = arith.constant 3.200000e+01 : f32
      %102 = vector.broadcast %cst_64 : f32 to vector<8x1xf32>
      %103 = arith.divf %101, %102 : vector<8x1xf32>
      %104 = vector.broadcast %103 : vector<8x1xf32> to vector<8x32xf32>
      %105 = arith.subf %99, %104 : vector<8x32xf32>
      %106 = arith.mulf %105, %105 : vector<8x32xf32>
      %cst_65 = arith.constant dense<0.000000e+00> : vector<8xf32>
      %107 = vector.multi_reduction <add>, %106, %cst_65 [1] : vector<8x32xf32> to vector<8xf32>
      %108 = vector.shape_cast %107 : vector<8xf32> to vector<8x1xf32>
      %cst_66 = arith.constant 3.200000e+01 : f32
      %109 = vector.broadcast %cst_66 : f32 to vector<8x1xf32>
      %110 = arith.divf %108, %109 : vector<8x1xf32>
      %111 = vector.broadcast %103 : vector<8x1xf32> to vector<8x32xf32>
      %112 = arith.subf %99, %111 : vector<8x32xf32>
      %cst_67 = arith.constant 9.99999974E-6 : f32
      %113 = vector.broadcast %cst_67 : f32 to vector<8x1xf32>
      %114 = arith.addf %110, %113 : vector<8x1xf32>
      %115 = math.rsqrt %114 : vector<8x1xf32>
      %116 = vector.broadcast %115 : vector<8x1xf32> to vector<8x32xf32>
      %117 = arith.mulf %112, %116 : vector<8x32xf32>
      %118 = vector.broadcast %20 : vector<1x32xf32> to vector<8x32xf32>
      %119 = arith.mulf %117, %118 : vector<8x32xf32>
      %120 = vector.broadcast %21 : vector<1x32xf32> to vector<8x32xf32>
      %121 = arith.addf %119, %120 : vector<8x32xf32>
      %122 = vector.broadcast %3 : vector<8x1xf32> to vector<8x32xf32>
      %123 = arith.mulf %121, %122 : vector<8x32xf32>
      %cst_68 = arith.constant dense<0.000000e+00> : vector<8x32xf32>
      %124 = tpu.matmul %123, %29, %cst_68 {dimension_numbers = #tpu.dot_dimension_numbers<[1], [0], [0], [1], [0, 0, 1, 1], [], []>} : vector<8x32xf32>, vector<32x32xf32>, vector<8x32xf32> -> vector<8x32xf32>
      %125 = vector.broadcast %30 : vector<1x32xf32> to vector<8x32xf32>
      %126 = arith.addf %124, %125 : vector<8x32xf32>
      %127 = vector.extract_strided_slice %126 {offsets = [0, 0], sizes = [8, 16], strides = [1, 1]} : vector<8x32xf32> to vector<8x16xf32>
      %128 = vector.extract_strided_slice %27 {offsets = [0, 0], sizes = [8, 16], strides = [1, 1]} : vector<8x32xf32> to vector<8x16xf32>
      %129 = vector.extract_strided_slice %28 {offsets = [0, 0], sizes = [8, 16], strides = [1, 1]} : vector<8x32xf32> to vector<8x16xf32>
      %130 = tpu.transpose %128, [1, 0] : vector<8x16xf32> -> vector<16x8xf32>
      %cst_69 = arith.constant dense<0.000000e+00> : vector<8x8xf32>
      %131 = tpu.matmul %127, %130, %cst_69 {dimension_numbers = #tpu.dot_dimension_numbers<[1], [0], [0], [1], [0, 0, 1, 1], [], []>} : vector<8x16xf32>, vector<16x8xf32>, vector<8x8xf32> -> vector<8x8xf32>
      %cst_70 = arith.constant 2.500000e-01 : f32
      %132 = vector.broadcast %cst_70 : f32 to vector<8x8xf32>
      %133 = arith.mulf %131, %132 : vector<8x8xf32>
      %134 = arith.addf %133, %7 : vector<8x8xf32>
      %cst_71 = arith.constant dense<0xFF800000> : vector<8xf32>
      %135 = vector.multi_reduction <maximumf>, %134, %cst_71 [1] : vector<8x8xf32> to vector<8xf32>
      %136 = vector.shape_cast %135 : vector<8xf32> to vector<8x1xf32>
      %137 = vector.broadcast %136 : vector<8x1xf32> to vector<8x8xf32>
      %138 = arith.subf %134, %137 : vector<8x8xf32>
      %139 = math.exp %138 : vector<8x8xf32>
      %cst_72 = arith.constant dense<0.000000e+00> : vector<8xf32>
      %140 = vector.multi_reduction <add>, %139, %cst_72 [1] : vector<8x8xf32> to vector<8xf32>
      %141 = vector.shape_cast %140 : vector<8xf32> to vector<8x1xf32>
      %142 = tpu.reciprocal %141 {approx = true} : vector<8x1xf32> -> vector<8x1xf32>
      %143 = vector.broadcast %142 : vector<8x1xf32> to vector<8x8xf32>
      %144 = arith.mulf %139, %143 : vector<8x8xf32>
      %cst_73 = arith.constant dense<0.000000e+00> : vector<8x16xf32>
      %145 = tpu.matmul %144, %129, %cst_73 {dimension_numbers = #tpu.dot_dimension_numbers<[1], [0], [0], [1], [0, 0, 1, 1], [], []>} : vector<8x8xf32>, vector<8x16xf32>, vector<8x16xf32> -> vector<8x16xf32>
      %146 = vector.extract_strided_slice %14 {offsets = [0, 0], sizes = [16, 32], strides = [1, 1]} : vector<32x32xf32> to vector<16x32xf32>
      %cst_74 = arith.constant dense<0.000000e+00> : vector<8x32xf32>
      %147 = tpu.matmul %145, %146, %cst_74 {dimension_numbers = #tpu.dot_dimension_numbers<[1], [0], [0], [1], [0, 0, 1, 1], [], []>} : vector<8x16xf32>, vector<16x32xf32>, vector<8x32xf32> -> vector<8x32xf32>
      %148 = vector.extract_strided_slice %126 {offsets = [0, 16], sizes = [8, 16], strides = [1, 1]} : vector<8x32xf32> to vector<8x16xf32>
      %149 = vector.extract_strided_slice %27 {offsets = [0, 16], sizes = [8, 16], strides = [1, 1]} : vector<8x32xf32> to vector<8x16xf32>
      %150 = vector.extract_strided_slice %28 {offsets = [0, 16], sizes = [8, 16], strides = [1, 1]} : vector<8x32xf32> to vector<8x16xf32>
      %151 = tpu.transpose %149, [1, 0] : vector<8x16xf32> -> vector<16x8xf32>
      %cst_75 = arith.constant dense<0.000000e+00> : vector<8x8xf32>
      %152 = tpu.matmul %148, %151, %cst_75 {dimension_numbers = #tpu.dot_dimension_numbers<[1], [0], [0], [1], [0, 0, 1, 1], [], []>} : vector<8x16xf32>, vector<16x8xf32>, vector<8x8xf32> -> vector<8x8xf32>
      %cst_76 = arith.constant 2.500000e-01 : f32
      %153 = vector.broadcast %cst_76 : f32 to vector<8x8xf32>
      %154 = arith.mulf %152, %153 : vector<8x8xf32>
      %155 = arith.addf %154, %7 : vector<8x8xf32>
      %cst_77 = arith.constant dense<0xFF800000> : vector<8xf32>
      %156 = vector.multi_reduction <maximumf>, %155, %cst_77 [1] : vector<8x8xf32> to vector<8xf32>
      %157 = vector.shape_cast %156 : vector<8xf32> to vector<8x1xf32>
      %158 = vector.broadcast %157 : vector<8x1xf32> to vector<8x8xf32>
      %159 = arith.subf %155, %158 : vector<8x8xf32>
      %160 = math.exp %159 : vector<8x8xf32>
      %cst_78 = arith.constant dense<0.000000e+00> : vector<8xf32>
      %161 = vector.multi_reduction <add>, %160, %cst_78 [1] : vector<8x8xf32> to vector<8xf32>
      %162 = vector.shape_cast %161 : vector<8xf32> to vector<8x1xf32>
      %163 = tpu.reciprocal %162 {approx = true} : vector<8x1xf32> -> vector<8x1xf32>
      %164 = vector.broadcast %163 : vector<8x1xf32> to vector<8x8xf32>
      %165 = arith.mulf %160, %164 : vector<8x8xf32>
      %cst_79 = arith.constant dense<0.000000e+00> : vector<8x16xf32>
      %166 = tpu.matmul %165, %150, %cst_79 {dimension_numbers = #tpu.dot_dimension_numbers<[1], [0], [0], [1], [0, 0, 1, 1], [], []>} : vector<8x8xf32>, vector<8x16xf32>, vector<8x16xf32> -> vector<8x16xf32>
      %167 = vector.extract_strided_slice %14 {offsets = [16, 0], sizes = [16, 32], strides = [1, 1]} : vector<32x32xf32> to vector<16x32xf32>
      %cst_80 = arith.constant dense<0.000000e+00> : vector<8x32xf32>
      %168 = tpu.matmul %166, %167, %cst_80 {dimension_numbers = #tpu.dot_dimension_numbers<[1], [0], [0], [1], [0, 0, 1, 1], [], []>} : vector<8x16xf32>, vector<16x32xf32>, vector<8x32xf32> -> vector<8x32xf32>
      %169 = arith.addf %147, %168 : vector<8x32xf32>
      %170 = vector.broadcast %15 : vector<1x32xf32> to vector<8x32xf32>
      %171 = arith.addf %169, %170 : vector<8x32xf32>
      %cst_81 = arith.constant dense<0.000000e+00> : vector<8xf32>
      %172 = vector.multi_reduction <add>, %171, %cst_81 [1] : vector<8x32xf32> to vector<8xf32>
      %173 = vector.shape_cast %172 : vector<8xf32> to vector<8x1xf32>
      %cst_82 = arith.constant 3.200000e+01 : f32
      %174 = vector.broadcast %cst_82 : f32 to vector<8x1xf32>
      %175 = arith.divf %173, %174 : vector<8x1xf32>
      %176 = vector.broadcast %175 : vector<8x1xf32> to vector<8x32xf32>
      %177 = arith.subf %171, %176 : vector<8x32xf32>
      %178 = arith.mulf %177, %177 : vector<8x32xf32>
      %cst_83 = arith.constant dense<0.000000e+00> : vector<8xf32>
      %179 = vector.multi_reduction <add>, %178, %cst_83 [1] : vector<8x32xf32> to vector<8xf32>
      %180 = vector.shape_cast %179 : vector<8xf32> to vector<8x1xf32>
      %cst_84 = arith.constant 3.200000e+01 : f32
      %181 = vector.broadcast %cst_84 : f32 to vector<8x1xf32>
      %182 = arith.divf %180, %181 : vector<8x1xf32>
      %183 = vector.broadcast %175 : vector<8x1xf32> to vector<8x32xf32>
      %184 = arith.subf %171, %183 : vector<8x32xf32>
      %cst_85 = arith.constant 9.99999974E-6 : f32
      %185 = vector.broadcast %cst_85 : f32 to vector<8x1xf32>
      %186 = arith.addf %182, %185 : vector<8x1xf32>
      %187 = math.rsqrt %186 : vector<8x1xf32>
      %188 = vector.broadcast %187 : vector<8x1xf32> to vector<8x32xf32>
      %189 = arith.mulf %184, %188 : vector<8x32xf32>
      %190 = vector.broadcast %20 : vector<1x32xf32> to vector<8x32xf32>
      %191 = arith.mulf %189, %190 : vector<8x32xf32>
      %192 = vector.broadcast %21 : vector<1x32xf32> to vector<8x32xf32>
      %193 = arith.addf %191, %192 : vector<8x32xf32>
      %194 = vector.broadcast %3 : vector<8x1xf32> to vector<8x32xf32>
      %195 = arith.mulf %193, %194 : vector<8x32xf32>
      %cst_86 = arith.constant dense<0.000000e+00> : vector<8x64xf32>
      %196 = tpu.matmul %195, %16, %cst_86 {dimension_numbers = #tpu.dot_dimension_numbers<[1], [0], [0], [1], [0, 0, 1, 1], [], []>} : vector<8x32xf32>, vector<32x64xf32>, vector<8x64xf32> -> vector<8x64xf32>
      %197 = vector.broadcast %17 : vector<1x64xf32> to vector<8x64xf32>
      %198 = arith.addf %196, %197 : vector<8x64xf32>
      %cst_87 = arith.constant 0.000000e+00 : f32
      %199 = vector.broadcast %cst_87 : f32 to vector<8x64xf32>
      %200 = arith.maximumf %198, %199 : vector<8x64xf32>
      %cst_88 = arith.constant dense<0.000000e+00> : vector<8x32xf32>
      %201 = tpu.matmul %200, %18, %cst_88 {dimension_numbers = #tpu.dot_dimension_numbers<[1], [0], [0], [1], [0, 0, 1, 1], [], []>} : vector<8x64xf32>, vector<64x32xf32>, vector<8x32xf32> -> vector<8x32xf32>
      %202 = vector.broadcast %19 : vector<1x32xf32> to vector<8x32xf32>
      %203 = arith.addf %201, %202 : vector<8x32xf32>
      %cst_89 = arith.constant dense<0.000000e+00> : vector<8xf32>
      %204 = vector.multi_reduction <add>, %203, %cst_89 [1] : vector<8x32xf32> to vector<8xf32>
      %205 = vector.shape_cast %204 : vector<8xf32> to vector<8x1xf32>
      %cst_90 = arith.constant 3.200000e+01 : f32
      %206 = vector.broadcast %cst_90 : f32 to vector<8x1xf32>
      %207 = arith.divf %205, %206 : vector<8x1xf32>
      %208 = vector.broadcast %207 : vector<8x1xf32> to vector<8x32xf32>
      %209 = arith.subf %203, %208 : vector<8x32xf32>
      %210 = arith.mulf %209, %209 : vector<8x32xf32>
      %cst_91 = arith.constant dense<0.000000e+00> : vector<8xf32>
      %211 = vector.multi_reduction <add>, %210, %cst_91 [1] : vector<8x32xf32> to vector<8xf32>
      %212 = vector.shape_cast %211 : vector<8xf32> to vector<8x1xf32>
      %cst_92 = arith.constant 3.200000e+01 : f32
      %213 = vector.broadcast %cst_92 : f32 to vector<8x1xf32>
      %214 = arith.divf %212, %213 : vector<8x1xf32>
      %215 = vector.broadcast %207 : vector<8x1xf32> to vector<8x32xf32>
      %216 = arith.subf %203, %215 : vector<8x32xf32>
      %cst_93 = arith.constant 9.99999974E-6 : f32
      %217 = vector.broadcast %cst_93 : f32 to vector<8x1xf32>
      %218 = arith.addf %214, %217 : vector<8x1xf32>
      %219 = math.rsqrt %218 : vector<8x1xf32>
      %220 = vector.broadcast %219 : vector<8x1xf32> to vector<8x32xf32>
      %221 = arith.mulf %216, %220 : vector<8x32xf32>
      %222 = vector.broadcast %20 : vector<1x32xf32> to vector<8x32xf32>
      %223 = arith.mulf %221, %222 : vector<8x32xf32>
      %224 = vector.broadcast %21 : vector<1x32xf32> to vector<8x32xf32>
      %225 = arith.addf %223, %224 : vector<8x32xf32>
      %226 = vector.broadcast %3 : vector<8x1xf32> to vector<8x32xf32>
      %227 = arith.mulf %225, %226 : vector<8x32xf32>
      %228 = arith.addf %46, %37 : f32
      %229 = vector.broadcast %37 : f32 to vector<8x32xf32>
      %230 = arith.mulf %229, %227 : vector<8x32xf32>
      %231 = arith.addf %arg23, %230 : vector<8x32xf32>
      %232 = vector.broadcast %228 : f32 to vector<8x32xf32>
      %233 = arith.addf %231, %232 : vector<8x32xf32>
      %cst_94 = arith.constant dense<0.000000e+00> : vector<8x96xf32>
      %234 = tpu.matmul %233, %8, %cst_94 {dimension_numbers = #tpu.dot_dimension_numbers<[1], [0], [0], [1], [0, 0, 1, 1], [], []>} : vector<8x32xf32>, vector<32x96xf32>, vector<8x96xf32> -> vector<8x96xf32>
      %235 = vector.broadcast %9 : vector<1x96xf32> to vector<8x96xf32>
      %236 = arith.addf %234, %235 : vector<8x96xf32>
      %237 = vector.extract_strided_slice %236 {offsets = [0, 0], sizes = [8, 32], strides = [1, 1]} : vector<8x96xf32> to vector<8x32xf32>
      %238 = vector.extract_strided_slice %236 {offsets = [0, 32], sizes = [8, 32], strides = [1, 1]} : vector<8x96xf32> to vector<8x32xf32>
      %239 = vector.extract_strided_slice %236 {offsets = [0, 64], sizes = [8, 32], strides = [1, 1]} : vector<8x96xf32> to vector<8x32xf32>
      %240 = vector.extract_strided_slice %237 {offsets = [0, 0], sizes = [8, 16], strides = [1, 1]} : vector<8x32xf32> to vector<8x16xf32>
      %241 = vector.extract_strided_slice %238 {offsets = [0, 0], sizes = [8, 16], strides = [1, 1]} : vector<8x32xf32> to vector<8x16xf32>
      %242 = vector.extract_strided_slice %239 {offsets = [0, 0], sizes = [8, 16], strides = [1, 1]} : vector<8x32xf32> to vector<8x16xf32>
      %243 = tpu.transpose %241, [1, 0] : vector<8x16xf32> -> vector<16x8xf32>
      %cst_95 = arith.constant dense<0.000000e+00> : vector<8x8xf32>
      %244 = tpu.matmul %240, %243, %cst_95 {dimension_numbers = #tpu.dot_dimension_numbers<[1], [0], [0], [1], [0, 0, 1, 1], [], []>} : vector<8x16xf32>, vector<16x8xf32>, vector<8x8xf32> -> vector<8x8xf32>
      %cst_96 = arith.constant 2.500000e-01 : f32
      %245 = vector.broadcast %cst_96 : f32 to vector<8x8xf32>
      %246 = arith.mulf %244, %245 : vector<8x8xf32>
      %247 = arith.addf %246, %5 : vector<8x8xf32>
      %cst_97 = arith.constant dense<0xFF800000> : vector<8xf32>
      %248 = vector.multi_reduction <maximumf>, %247, %cst_97 [1] : vector<8x8xf32> to vector<8xf32>
      %249 = vector.shape_cast %248 : vector<8xf32> to vector<8x1xf32>
      %250 = vector.broadcast %249 : vector<8x1xf32> to vector<8x8xf32>
      %251 = arith.subf %247, %250 : vector<8x8xf32>
      %252 = math.exp %251 : vector<8x8xf32>
      %cst_98 = arith.constant dense<0.000000e+00> : vector<8xf32>
      %253 = vector.multi_reduction <add>, %252, %cst_98 [1] : vector<8x8xf32> to vector<8xf32>
      %254 = vector.shape_cast %253 : vector<8xf32> to vector<8x1xf32>
      %255 = tpu.reciprocal %254 {approx = true} : vector<8x1xf32> -> vector<8x1xf32>
      %256 = vector.broadcast %255 : vector<8x1xf32> to vector<8x8xf32>
      %257 = arith.mulf %252, %256 : vector<8x8xf32>
      %cst_99 = arith.constant dense<0.000000e+00> : vector<8x16xf32>
      %258 = tpu.matmul %257, %242, %cst_99 {dimension_numbers = #tpu.dot_dimension_numbers<[1], [0], [0], [1], [0, 0, 1, 1], [], []>} : vector<8x8xf32>, vector<8x16xf32>, vector<8x16xf32> -> vector<8x16xf32>
      %259 = vector.extract_strided_slice %10 {offsets = [0, 0], sizes = [16, 32], strides = [1, 1]} : vector<32x32xf32> to vector<16x32xf32>
      %cst_100 = arith.constant dense<0.000000e+00> : vector<8x32xf32>
      %260 = tpu.matmul %258, %259, %cst_100 {dimension_numbers = #tpu.dot_dimension_numbers<[1], [0], [0], [1], [0, 0, 1, 1], [], []>} : vector<8x16xf32>, vector<16x32xf32>, vector<8x32xf32> -> vector<8x32xf32>
      %261 = vector.extract_strided_slice %237 {offsets = [0, 16], sizes = [8, 16], strides = [1, 1]} : vector<8x32xf32> to vector<8x16xf32>
      %262 = vector.extract_strided_slice %238 {offsets = [0, 16], sizes = [8, 16], strides = [1, 1]} : vector<8x32xf32> to vector<8x16xf32>
      %263 = vector.extract_strided_slice %239 {offsets = [0, 16], sizes = [8, 16], strides = [1, 1]} : vector<8x32xf32> to vector<8x16xf32>
      %264 = tpu.transpose %262, [1, 0] : vector<8x16xf32> -> vector<16x8xf32>
      %cst_101 = arith.constant dense<0.000000e+00> : vector<8x8xf32>
      %265 = tpu.matmul %261, %264, %cst_101 {dimension_numbers = #tpu.dot_dimension_numbers<[1], [0], [0], [1], [0, 0, 1, 1], [], []>} : vector<8x16xf32>, vector<16x8xf32>, vector<8x8xf32> -> vector<8x8xf32>
      %cst_102 = arith.constant 2.500000e-01 : f32
      %266 = vector.broadcast %cst_102 : f32 to vector<8x8xf32>
      %267 = arith.mulf %265, %266 : vector<8x8xf32>
      %268 = arith.addf %267, %5 : vector<8x8xf32>
      %cst_103 = arith.constant dense<0xFF800000> : vector<8xf32>
      %269 = vector.multi_reduction <maximumf>, %268, %cst_103 [1] : vector<8x8xf32> to vector<8xf32>
      %270 = vector.shape_cast %269 : vector<8xf32> to vector<8x1xf32>
      %271 = vector.broadcast %270 : vector<8x1xf32> to vector<8x8xf32>
      %272 = arith.subf %268, %271 : vector<8x8xf32>
      %273 = math.exp %272 : vector<8x8xf32>
      %cst_104 = arith.constant dense<0.000000e+00> : vector<8xf32>
      %274 = vector.multi_reduction <add>, %273, %cst_104 [1] : vector<8x8xf32> to vector<8xf32>
      %275 = vector.shape_cast %274 : vector<8xf32> to vector<8x1xf32>
      %276 = tpu.reciprocal %275 {approx = true} : vector<8x1xf32> -> vector<8x1xf32>
      %277 = vector.broadcast %276 : vector<8x1xf32> to vector<8x8xf32>
      %278 = arith.mulf %273, %277 : vector<8x8xf32>
      %cst_105 = arith.constant dense<0.000000e+00> : vector<8x16xf32>
      %279 = tpu.matmul %278, %263, %cst_105 {dimension_numbers = #tpu.dot_dimension_numbers<[1], [0], [0], [1], [0, 0, 1, 1], [], []>} : vector<8x8xf32>, vector<8x16xf32>, vector<8x16xf32> -> vector<8x16xf32>
      %280 = vector.extract_strided_slice %10 {offsets = [16, 0], sizes = [16, 32], strides = [1, 1]} : vector<32x32xf32> to vector<16x32xf32>
      %cst_106 = arith.constant dense<0.000000e+00> : vector<8x32xf32>
      %281 = tpu.matmul %279, %280, %cst_106 {dimension_numbers = #tpu.dot_dimension_numbers<[1], [0], [0], [1], [0, 0, 1, 1], [], []>} : vector<8x16xf32>, vector<16x32xf32>, vector<8x32xf32> -> vector<8x32xf32>
      %282 = arith.addf %260, %281 : vector<8x32xf32>
      %283 = vector.broadcast %11 : vector<1x32xf32> to vector<8x32xf32>
      %284 = arith.addf %282, %283 : vector<8x32xf32>
      %cst_107 = arith.constant dense<0.000000e+00> : vector<8xf32>
      %285 = vector.multi_reduction <add>, %284, %cst_107 [1] : vector<8x32xf32> to vector<8xf32>
      %286 = vector.shape_cast %285 : vector<8xf32> to vector<8x1xf32>
      %cst_108 = arith.constant 3.200000e+01 : f32
      %287 = vector.broadcast %cst_108 : f32 to vector<8x1xf32>
      %288 = arith.divf %286, %287 : vector<8x1xf32>
      %289 = vector.broadcast %288 : vector<8x1xf32> to vector<8x32xf32>
      %290 = arith.subf %284, %289 : vector<8x32xf32>
      %291 = arith.mulf %290, %290 : vector<8x32xf32>
      %cst_109 = arith.constant dense<0.000000e+00> : vector<8xf32>
      %292 = vector.multi_reduction <add>, %291, %cst_109 [1] : vector<8x32xf32> to vector<8xf32>
      %293 = vector.shape_cast %292 : vector<8xf32> to vector<8x1xf32>
      %cst_110 = arith.constant 3.200000e+01 : f32
      %294 = vector.broadcast %cst_110 : f32 to vector<8x1xf32>
      %295 = arith.divf %293, %294 : vector<8x1xf32>
      %296 = vector.broadcast %288 : vector<8x1xf32> to vector<8x32xf32>
      %297 = arith.subf %284, %296 : vector<8x32xf32>
      %cst_111 = arith.constant 9.99999974E-6 : f32
      %298 = vector.broadcast %cst_111 : f32 to vector<8x1xf32>
      %299 = arith.addf %295, %298 : vector<8x1xf32>
      %300 = math.rsqrt %299 : vector<8x1xf32>
      %301 = vector.broadcast %300 : vector<8x1xf32> to vector<8x32xf32>
      %302 = arith.mulf %297, %301 : vector<8x32xf32>
      %303 = vector.broadcast %20 : vector<1x32xf32> to vector<8x32xf32>
      %304 = arith.mulf %302, %303 : vector<8x32xf32>
      %305 = vector.broadcast %21 : vector<1x32xf32> to vector<8x32xf32>
      %306 = arith.addf %304, %305 : vector<8x32xf32>
      %307 = vector.broadcast %3 : vector<8x1xf32> to vector<8x32xf32>
      %308 = arith.mulf %306, %307 : vector<8x32xf32>
      %cst_112 = arith.constant dense<0.000000e+00> : vector<8x32xf32>
      %309 = tpu.matmul %308, %29, %cst_112 {dimension_numbers = #tpu.dot_dimension_numbers<[1], [0], [0], [1], [0, 0, 1, 1], [], []>} : vector<8x32xf32>, vector<32x32xf32>, vector<8x32xf32> -> vector<8x32xf32>
      %310 = vector.broadcast %30 : vector<1x32xf32> to vector<8x32xf32>
      %311 = arith.addf %309, %310 : vector<8x32xf32>
      %312 = vector.extract_strided_slice %311 {offsets = [0, 0], sizes = [8, 16], strides = [1, 1]} : vector<8x32xf32> to vector<8x16xf32>
      %313 = vector.extract_strided_slice %27 {offsets = [0, 0], sizes = [8, 16], strides = [1, 1]} : vector<8x32xf32> to vector<8x16xf32>
      %314 = vector.extract_strided_slice %28 {offsets = [0, 0], sizes = [8, 16], strides = [1, 1]} : vector<8x32xf32> to vector<8x16xf32>
      %315 = tpu.transpose %313, [1, 0] : vector<8x16xf32> -> vector<16x8xf32>
      %cst_113 = arith.constant dense<0.000000e+00> : vector<8x8xf32>
      %316 = tpu.matmul %312, %315, %cst_113 {dimension_numbers = #tpu.dot_dimension_numbers<[1], [0], [0], [1], [0, 0, 1, 1], [], []>} : vector<8x16xf32>, vector<16x8xf32>, vector<8x8xf32> -> vector<8x8xf32>
      %cst_114 = arith.constant 2.500000e-01 : f32
      %317 = vector.broadcast %cst_114 : f32 to vector<8x8xf32>
      %318 = arith.mulf %316, %317 : vector<8x8xf32>
      %319 = arith.addf %318, %7 : vector<8x8xf32>
      %cst_115 = arith.constant dense<0xFF800000> : vector<8xf32>
      %320 = vector.multi_reduction <maximumf>, %319, %cst_115 [1] : vector<8x8xf32> to vector<8xf32>
      %321 = vector.shape_cast %320 : vector<8xf32> to vector<8x1xf32>
      %322 = vector.broadcast %321 : vector<8x1xf32> to vector<8x8xf32>
      %323 = arith.subf %319, %322 : vector<8x8xf32>
      %324 = math.exp %323 : vector<8x8xf32>
      %cst_116 = arith.constant dense<0.000000e+00> : vector<8xf32>
      %325 = vector.multi_reduction <add>, %324, %cst_116 [1] : vector<8x8xf32> to vector<8xf32>
      %326 = vector.shape_cast %325 : vector<8xf32> to vector<8x1xf32>
      %327 = tpu.reciprocal %326 {approx = true} : vector<8x1xf32> -> vector<8x1xf32>
      %328 = vector.broadcast %327 : vector<8x1xf32> to vector<8x8xf32>
      %329 = arith.mulf %324, %328 : vector<8x8xf32>
      %cst_117 = arith.constant dense<0.000000e+00> : vector<8x16xf32>
      %330 = tpu.matmul %329, %314, %cst_117 {dimension_numbers = #tpu.dot_dimension_numbers<[1], [0], [0], [1], [0, 0, 1, 1], [], []>} : vector<8x8xf32>, vector<8x16xf32>, vector<8x16xf32> -> vector<8x16xf32>
      %331 = vector.extract_strided_slice %14 {offsets = [0, 0], sizes = [16, 32], strides = [1, 1]} : vector<32x32xf32> to vector<16x32xf32>
      %cst_118 = arith.constant dense<0.000000e+00> : vector<8x32xf32>
      %332 = tpu.matmul %330, %331, %cst_118 {dimension_numbers = #tpu.dot_dimension_numbers<[1], [0], [0], [1], [0, 0, 1, 1], [], []>} : vector<8x16xf32>, vector<16x32xf32>, vector<8x32xf32> -> vector<8x32xf32>
      %333 = vector.extract_strided_slice %311 {offsets = [0, 16], sizes = [8, 16], strides = [1, 1]} : vector<8x32xf32> to vector<8x16xf32>
      %334 = vector.extract_strided_slice %27 {offsets = [0, 16], sizes = [8, 16], strides = [1, 1]} : vector<8x32xf32> to vector<8x16xf32>
      %335 = vector.extract_strided_slice %28 {offsets = [0, 16], sizes = [8, 16], strides = [1, 1]} : vector<8x32xf32> to vector<8x16xf32>
      %336 = tpu.transpose %334, [1, 0] : vector<8x16xf32> -> vector<16x8xf32>
      %cst_119 = arith.constant dense<0.000000e+00> : vector<8x8xf32>
      %337 = tpu.matmul %333, %336, %cst_119 {dimension_numbers = #tpu.dot_dimension_numbers<[1], [0], [0], [1], [0, 0, 1, 1], [], []>} : vector<8x16xf32>, vector<16x8xf32>, vector<8x8xf32> -> vector<8x8xf32>
      %cst_120 = arith.constant 2.500000e-01 : f32
      %338 = vector.broadcast %cst_120 : f32 to vector<8x8xf32>
      %339 = arith.mulf %337, %338 : vector<8x8xf32>
      %340 = arith.addf %339, %7 : vector<8x8xf32>
      %cst_121 = arith.constant dense<0xFF800000> : vector<8xf32>
      %341 = vector.multi_reduction <maximumf>, %340, %cst_121 [1] : vector<8x8xf32> to vector<8xf32>
      %342 = vector.shape_cast %341 : vector<8xf32> to vector<8x1xf32>
      %343 = vector.broadcast %342 : vector<8x1xf32> to vector<8x8xf32>
      %344 = arith.subf %340, %343 : vector<8x8xf32>
      %345 = math.exp %344 : vector<8x8xf32>
      %cst_122 = arith.constant dense<0.000000e+00> : vector<8xf32>
      %346 = vector.multi_reduction <add>, %345, %cst_122 [1] : vector<8x8xf32> to vector<8xf32>
      %347 = vector.shape_cast %346 : vector<8xf32> to vector<8x1xf32>
      %348 = tpu.reciprocal %347 {approx = true} : vector<8x1xf32> -> vector<8x1xf32>
      %349 = vector.broadcast %348 : vector<8x1xf32> to vector<8x8xf32>
      %350 = arith.mulf %345, %349 : vector<8x8xf32>
      %cst_123 = arith.constant dense<0.000000e+00> : vector<8x16xf32>
      %351 = tpu.matmul %350, %335, %cst_123 {dimension_numbers = #tpu.dot_dimension_numbers<[1], [0], [0], [1], [0, 0, 1, 1], [], []>} : vector<8x8xf32>, vector<8x16xf32>, vector<8x16xf32> -> vector<8x16xf32>
      %352 = vector.extract_strided_slice %14 {offsets = [16, 0], sizes = [16, 32], strides = [1, 1]} : vector<32x32xf32> to vector<16x32xf32>
      %cst_124 = arith.constant dense<0.000000e+00> : vector<8x32xf32>
      %353 = tpu.matmul %351, %352, %cst_124 {dimension_numbers = #tpu.dot_dimension_numbers<[1], [0], [0], [1], [0, 0, 1, 1], [], []>} : vector<8x16xf32>, vector<16x32xf32>, vector<8x32xf32> -> vector<8x32xf32>
      %354 = arith.addf %332, %353 : vector<8x32xf32>
      %355 = vector.broadcast %15 : vector<1x32xf32> to vector<8x32xf32>
      %356 = arith.addf %354, %355 : vector<8x32xf32>
      %cst_125 = arith.constant dense<0.000000e+00> : vector<8xf32>
      %357 = vector.multi_reduction <add>, %356, %cst_125 [1] : vector<8x32xf32> to vector<8xf32>
      %358 = vector.shape_cast %357 : vector<8xf32> to vector<8x1xf32>
      %cst_126 = arith.constant 3.200000e+01 : f32
      %359 = vector.broadcast %cst_126 : f32 to vector<8x1xf32>
      %360 = arith.divf %358, %359 : vector<8x1xf32>
      %361 = vector.broadcast %360 : vector<8x1xf32> to vector<8x32xf32>
      %362 = arith.subf %356, %361 : vector<8x32xf32>
      %363 = arith.mulf %362, %362 : vector<8x32xf32>
      %cst_127 = arith.constant dense<0.000000e+00> : vector<8xf32>
      %364 = vector.multi_reduction <add>, %363, %cst_127 [1] : vector<8x32xf32> to vector<8xf32>
      %365 = vector.shape_cast %364 : vector<8xf32> to vector<8x1xf32>
      %cst_128 = arith.constant 3.200000e+01 : f32
      %366 = vector.broadcast %cst_128 : f32 to vector<8x1xf32>
      %367 = arith.divf %365, %366 : vector<8x1xf32>
      %368 = vector.broadcast %360 : vector<8x1xf32> to vector<8x32xf32>
      %369 = arith.subf %356, %368 : vector<8x32xf32>
      %cst_129 = arith.constant 9.99999974E-6 : f32
      %370 = vector.broadcast %cst_129 : f32 to vector<8x1xf32>
      %371 = arith.addf %367, %370 : vector<8x1xf32>
      %372 = math.rsqrt %371 : vector<8x1xf32>
      %373 = vector.broadcast %372 : vector<8x1xf32> to vector<8x32xf32>
      %374 = arith.mulf %369, %373 : vector<8x32xf32>
      %375 = vector.broadcast %20 : vector<1x32xf32> to vector<8x32xf32>
      %376 = arith.mulf %374, %375 : vector<8x32xf32>
      %377 = vector.broadcast %21 : vector<1x32xf32> to vector<8x32xf32>
      %378 = arith.addf %376, %377 : vector<8x32xf32>
      %379 = vector.broadcast %3 : vector<8x1xf32> to vector<8x32xf32>
      %380 = arith.mulf %378, %379 : vector<8x32xf32>
      %cst_130 = arith.constant dense<0.000000e+00> : vector<8x64xf32>
      %381 = tpu.matmul %380, %16, %cst_130 {dimension_numbers = #tpu.dot_dimension_numbers<[1], [0], [0], [1], [0, 0, 1, 1], [], []>} : vector<8x32xf32>, vector<32x64xf32>, vector<8x64xf32> -> vector<8x64xf32>
      %382 = vector.broadcast %17 : vector<1x64xf32> to vector<8x64xf32>
      %383 = arith.addf %381, %382 : vector<8x64xf32>
      %cst_131 = arith.constant 0.000000e+00 : f32
      %384 = vector.broadcast %cst_131 : f32 to vector<8x64xf32>
      %385 = arith.maximumf %383, %384 : vector<8x64xf32>
      %cst_132 = arith.constant dense<0.000000e+00> : vector<8x32xf32>
      %386 = tpu.matmul %385, %18, %cst_132 {dimension_numbers = #tpu.dot_dimension_numbers<[1], [0], [0], [1], [0, 0, 1, 1], [], []>} : vector<8x64xf32>, vector<64x32xf32>, vector<8x32xf32> -> vector<8x32xf32>
      %387 = vector.broadcast %19 : vector<1x32xf32> to vector<8x32xf32>
      %388 = arith.addf %386, %387 : vector<8x32xf32>
      %cst_133 = arith.constant dense<0.000000e+00> : vector<8xf32>
      %389 = vector.multi_reduction <add>, %388, %cst_133 [1] : vector<8x32xf32> to vector<8xf32>
      %390 = vector.shape_cast %389 : vector<8xf32> to vector<8x1xf32>
      %cst_134 = arith.constant 3.200000e+01 : f32
      %391 = vector.broadcast %cst_134 : f32 to vector<8x1xf32>
      %392 = arith.divf %390, %391 : vector<8x1xf32>
      %393 = vector.broadcast %392 : vector<8x1xf32> to vector<8x32xf32>
      %394 = arith.subf %388, %393 : vector<8x32xf32>
      %395 = arith.mulf %394, %394 : vector<8x32xf32>
      %cst_135 = arith.constant dense<0.000000e+00> : vector<8xf32>
      %396 = vector.multi_reduction <add>, %395, %cst_135 [1] : vector<8x32xf32> to vector<8xf32>
      %397 = vector.shape_cast %396 : vector<8xf32> to vector<8x1xf32>
      %cst_136 = arith.constant 3.200000e+01 : f32
      %398 = vector.broadcast %cst_136 : f32 to vector<8x1xf32>
      %399 = arith.divf %397, %398 : vector<8x1xf32>
      %400 = vector.broadcast %392 : vector<8x1xf32> to vector<8x32xf32>
      %401 = arith.subf %388, %400 : vector<8x32xf32>
      %cst_137 = arith.constant 9.99999974E-6 : f32
      %402 = vector.broadcast %cst_137 : f32 to vector<8x1xf32>
      %403 = arith.addf %399, %402 : vector<8x1xf32>
      %404 = math.rsqrt %403 : vector<8x1xf32>
      %405 = vector.broadcast %404 : vector<8x1xf32> to vector<8x32xf32>
      %406 = arith.mulf %401, %405 : vector<8x32xf32>
      %407 = vector.broadcast %20 : vector<1x32xf32> to vector<8x32xf32>
      %408 = arith.mulf %406, %407 : vector<8x32xf32>
      %409 = vector.broadcast %21 : vector<1x32xf32> to vector<8x32xf32>
      %410 = arith.addf %408, %409 : vector<8x32xf32>
      %411 = vector.broadcast %3 : vector<8x1xf32> to vector<8x32xf32>
      %412 = arith.mulf %410, %411 : vector<8x32xf32>
      %413 = arith.addf %46, %37 : f32
      %414 = vector.broadcast %37 : f32 to vector<8x32xf32>
      %415 = arith.mulf %414, %412 : vector<8x32xf32>
      %416 = arith.addf %arg23, %415 : vector<8x32xf32>
      %417 = vector.broadcast %413 : f32 to vector<8x32xf32>
      %418 = arith.addf %416, %417 : vector<8x32xf32>
      %cst_138 = arith.constant dense<0.000000e+00> : vector<8x96xf32>
      %419 = tpu.matmul %418, %8, %cst_138 {dimension_numbers = #tpu.dot_dimension_numbers<[1], [0], [0], [1], [0, 0, 1, 1], [], []>} : vector<8x32xf32>, vector<32x96xf32>, vector<8x96xf32> -> vector<8x96xf32>
      %420 = vector.broadcast %9 : vector<1x96xf32> to vector<8x96xf32>
      %421 = arith.addf %419, %420 : vector<8x96xf32>
      %422 = vector.extract_strided_slice %421 {offsets = [0, 0], sizes = [8, 32], strides = [1, 1]} : vector<8x96xf32> to vector<8x32xf32>
      %423 = vector.extract_strided_slice %421 {offsets = [0, 32], sizes = [8, 32], strides = [1, 1]} : vector<8x96xf32> to vector<8x32xf32>
      %424 = vector.extract_strided_slice %421 {offsets = [0, 64], sizes = [8, 32], strides = [1, 1]} : vector<8x96xf32> to vector<8x32xf32>
      %425 = vector.extract_strided_slice %422 {offsets = [0, 0], sizes = [8, 16], strides = [1, 1]} : vector<8x32xf32> to vector<8x16xf32>
      %426 = vector.extract_strided_slice %423 {offsets = [0, 0], sizes = [8, 16], strides = [1, 1]} : vector<8x32xf32> to vector<8x16xf32>
      %427 = vector.extract_strided_slice %424 {offsets = [0, 0], sizes = [8, 16], strides = [1, 1]} : vector<8x32xf32> to vector<8x16xf32>
      %428 = tpu.transpose %426, [1, 0] : vector<8x16xf32> -> vector<16x8xf32>
      %cst_139 = arith.constant dense<0.000000e+00> : vector<8x8xf32>
      %429 = tpu.matmul %425, %428, %cst_139 {dimension_numbers = #tpu.dot_dimension_numbers<[1], [0], [0], [1], [0, 0, 1, 1], [], []>} : vector<8x16xf32>, vector<16x8xf32>, vector<8x8xf32> -> vector<8x8xf32>
      %cst_140 = arith.constant 2.500000e-01 : f32
      %430 = vector.broadcast %cst_140 : f32 to vector<8x8xf32>
      %431 = arith.mulf %429, %430 : vector<8x8xf32>
      %432 = arith.addf %431, %5 : vector<8x8xf32>
      %cst_141 = arith.constant dense<0xFF800000> : vector<8xf32>
      %433 = vector.multi_reduction <maximumf>, %432, %cst_141 [1] : vector<8x8xf32> to vector<8xf32>
      %434 = vector.shape_cast %433 : vector<8xf32> to vector<8x1xf32>
      %435 = vector.broadcast %434 : vector<8x1xf32> to vector<8x8xf32>
      %436 = arith.subf %432, %435 : vector<8x8xf32>
      %437 = math.exp %436 : vector<8x8xf32>
      %cst_142 = arith.constant dense<0.000000e+00> : vector<8xf32>
      %438 = vector.multi_reduction <add>, %437, %cst_142 [1] : vector<8x8xf32> to vector<8xf32>
      %439 = vector.shape_cast %438 : vector<8xf32> to vector<8x1xf32>
      %440 = tpu.reciprocal %439 {approx = true} : vector<8x1xf32> -> vector<8x1xf32>
      %441 = vector.broadcast %440 : vector<8x1xf32> to vector<8x8xf32>
      %442 = arith.mulf %437, %441 : vector<8x8xf32>
      %cst_143 = arith.constant dense<0.000000e+00> : vector<8x16xf32>
      %443 = tpu.matmul %442, %427, %cst_143 {dimension_numbers = #tpu.dot_dimension_numbers<[1], [0], [0], [1], [0, 0, 1, 1], [], []>} : vector<8x8xf32>, vector<8x16xf32>, vector<8x16xf32> -> vector<8x16xf32>
      %444 = vector.extract_strided_slice %10 {offsets = [0, 0], sizes = [16, 32], strides = [1, 1]} : vector<32x32xf32> to vector<16x32xf32>
      %cst_144 = arith.constant dense<0.000000e+00> : vector<8x32xf32>
      %445 = tpu.matmul %443, %444, %cst_144 {dimension_numbers = #tpu.dot_dimension_numbers<[1], [0], [0], [1], [0, 0, 1, 1], [], []>} : vector<8x16xf32>, vector<16x32xf32>, vector<8x32xf32> -> vector<8x32xf32>
      %446 = vector.extract_strided_slice %422 {offsets = [0, 16], sizes = [8, 16], strides = [1, 1]} : vector<8x32xf32> to vector<8x16xf32>
      %447 = vector.extract_strided_slice %423 {offsets = [0, 16], sizes = [8, 16], strides = [1, 1]} : vector<8x32xf32> to vector<8x16xf32>
      %448 = vector.extract_strided_slice %424 {offsets = [0, 16], sizes = [8, 16], strides = [1, 1]} : vector<8x32xf32> to vector<8x16xf32>
      %449 = tpu.transpose %447, [1, 0] : vector<8x16xf32> -> vector<16x8xf32>
      %cst_145 = arith.constant dense<0.000000e+00> : vector<8x8xf32>
      %450 = tpu.matmul %446, %449, %cst_145 {dimension_numbers = #tpu.dot_dimension_numbers<[1], [0], [0], [1], [0, 0, 1, 1], [], []>} : vector<8x16xf32>, vector<16x8xf32>, vector<8x8xf32> -> vector<8x8xf32>
      %cst_146 = arith.constant 2.500000e-01 : f32
      %451 = vector.broadcast %cst_146 : f32 to vector<8x8xf32>
      %452 = arith.mulf %450, %451 : vector<8x8xf32>
      %453 = arith.addf %452, %5 : vector<8x8xf32>
      %cst_147 = arith.constant dense<0xFF800000> : vector<8xf32>
      %454 = vector.multi_reduction <maximumf>, %453, %cst_147 [1] : vector<8x8xf32> to vector<8xf32>
      %455 = vector.shape_cast %454 : vector<8xf32> to vector<8x1xf32>
      %456 = vector.broadcast %455 : vector<8x1xf32> to vector<8x8xf32>
      %457 = arith.subf %453, %456 : vector<8x8xf32>
      %458 = math.exp %457 : vector<8x8xf32>
      %cst_148 = arith.constant dense<0.000000e+00> : vector<8xf32>
      %459 = vector.multi_reduction <add>, %458, %cst_148 [1] : vector<8x8xf32> to vector<8xf32>
      %460 = vector.shape_cast %459 : vector<8xf32> to vector<8x1xf32>
      %461 = tpu.reciprocal %460 {approx = true} : vector<8x1xf32> -> vector<8x1xf32>
      %462 = vector.broadcast %461 : vector<8x1xf32> to vector<8x8xf32>
      %463 = arith.mulf %458, %462 : vector<8x8xf32>
      %cst_149 = arith.constant dense<0.000000e+00> : vector<8x16xf32>
      %464 = tpu.matmul %463, %448, %cst_149 {dimension_numbers = #tpu.dot_dimension_numbers<[1], [0], [0], [1], [0, 0, 1, 1], [], []>} : vector<8x8xf32>, vector<8x16xf32>, vector<8x16xf32> -> vector<8x16xf32>
      %465 = vector.extract_strided_slice %10 {offsets = [16, 0], sizes = [16, 32], strides = [1, 1]} : vector<32x32xf32> to vector<16x32xf32>
      %cst_150 = arith.constant dense<0.000000e+00> : vector<8x32xf32>
      %466 = tpu.matmul %464, %465, %cst_150 {dimension_numbers = #tpu.dot_dimension_numbers<[1], [0], [0], [1], [0, 0, 1, 1], [], []>} : vector<8x16xf32>, vector<16x32xf32>, vector<8x32xf32> -> vector<8x32xf32>
      %467 = arith.addf %445, %466 : vector<8x32xf32>
      %468 = vector.broadcast %11 : vector<1x32xf32> to vector<8x32xf32>
      %469 = arith.addf %467, %468 : vector<8x32xf32>
      %cst_151 = arith.constant dense<0.000000e+00> : vector<8xf32>
      %470 = vector.multi_reduction <add>, %469, %cst_151 [1] : vector<8x32xf32> to vector<8xf32>
      %471 = vector.shape_cast %470 : vector<8xf32> to vector<8x1xf32>
      %cst_152 = arith.constant 3.200000e+01 : f32
      %472 = vector.broadcast %cst_152 : f32 to vector<8x1xf32>
      %473 = arith.divf %471, %472 : vector<8x1xf32>
      %474 = vector.broadcast %473 : vector<8x1xf32> to vector<8x32xf32>
      %475 = arith.subf %469, %474 : vector<8x32xf32>
      %476 = arith.mulf %475, %475 : vector<8x32xf32>
      %cst_153 = arith.constant dense<0.000000e+00> : vector<8xf32>
      %477 = vector.multi_reduction <add>, %476, %cst_153 [1] : vector<8x32xf32> to vector<8xf32>
      %478 = vector.shape_cast %477 : vector<8xf32> to vector<8x1xf32>
      %cst_154 = arith.constant 3.200000e+01 : f32
      %479 = vector.broadcast %cst_154 : f32 to vector<8x1xf32>
      %480 = arith.divf %478, %479 : vector<8x1xf32>
      %481 = vector.broadcast %473 : vector<8x1xf32> to vector<8x32xf32>
      %482 = arith.subf %469, %481 : vector<8x32xf32>
      %cst_155 = arith.constant 9.99999974E-6 : f32
      %483 = vector.broadcast %cst_155 : f32 to vector<8x1xf32>
      %484 = arith.addf %480, %483 : vector<8x1xf32>
      %485 = math.rsqrt %484 : vector<8x1xf32>
      %486 = vector.broadcast %485 : vector<8x1xf32> to vector<8x32xf32>
      %487 = arith.mulf %482, %486 : vector<8x32xf32>
      %488 = vector.broadcast %20 : vector<1x32xf32> to vector<8x32xf32>
      %489 = arith.mulf %487, %488 : vector<8x32xf32>
      %490 = vector.broadcast %21 : vector<1x32xf32> to vector<8x32xf32>
      %491 = arith.addf %489, %490 : vector<8x32xf32>
      %492 = vector.broadcast %3 : vector<8x1xf32> to vector<8x32xf32>
      %493 = arith.mulf %491, %492 : vector<8x32xf32>
      %cst_156 = arith.constant dense<0.000000e+00> : vector<8x32xf32>
      %494 = tpu.matmul %493, %29, %cst_156 {dimension_numbers = #tpu.dot_dimension_numbers<[1], [0], [0], [1], [0, 0, 1, 1], [], []>} : vector<8x32xf32>, vector<32x32xf32>, vector<8x32xf32> -> vector<8x32xf32>
      %495 = vector.broadcast %30 : vector<1x32xf32> to vector<8x32xf32>
      %496 = arith.addf %494, %495 : vector<8x32xf32>
      %497 = vector.extract_strided_slice %496 {offsets = [0, 0], sizes = [8, 16], strides = [1, 1]} : vector<8x32xf32> to vector<8x16xf32>
      %498 = vector.extract_strided_slice %27 {offsets = [0, 0], sizes = [8, 16], strides = [1, 1]} : vector<8x32xf32> to vector<8x16xf32>
      %499 = vector.extract_strided_slice %28 {offsets = [0, 0], sizes = [8, 16], strides = [1, 1]} : vector<8x32xf32> to vector<8x16xf32>
      %500 = tpu.transpose %498, [1, 0] : vector<8x16xf32> -> vector<16x8xf32>
      %cst_157 = arith.constant dense<0.000000e+00> : vector<8x8xf32>
      %501 = tpu.matmul %497, %500, %cst_157 {dimension_numbers = #tpu.dot_dimension_numbers<[1], [0], [0], [1], [0, 0, 1, 1], [], []>} : vector<8x16xf32>, vector<16x8xf32>, vector<8x8xf32> -> vector<8x8xf32>
      %cst_158 = arith.constant 2.500000e-01 : f32
      %502 = vector.broadcast %cst_158 : f32 to vector<8x8xf32>
      %503 = arith.mulf %501, %502 : vector<8x8xf32>
      %504 = arith.addf %503, %7 : vector<8x8xf32>
      %cst_159 = arith.constant dense<0xFF800000> : vector<8xf32>
      %505 = vector.multi_reduction <maximumf>, %504, %cst_159 [1] : vector<8x8xf32> to vector<8xf32>
      %506 = vector.shape_cast %505 : vector<8xf32> to vector<8x1xf32>
      %507 = vector.broadcast %506 : vector<8x1xf32> to vector<8x8xf32>
      %508 = arith.subf %504, %507 : vector<8x8xf32>
      %509 = math.exp %508 : vector<8x8xf32>
      %cst_160 = arith.constant dense<0.000000e+00> : vector<8xf32>
      %510 = vector.multi_reduction <add>, %509, %cst_160 [1] : vector<8x8xf32> to vector<8xf32>
      %511 = vector.shape_cast %510 : vector<8xf32> to vector<8x1xf32>
      %512 = tpu.reciprocal %511 {approx = true} : vector<8x1xf32> -> vector<8x1xf32>
      %513 = vector.broadcast %512 : vector<8x1xf32> to vector<8x8xf32>
      %514 = arith.mulf %509, %513 : vector<8x8xf32>
      %cst_161 = arith.constant dense<0.000000e+00> : vector<8x16xf32>
      %515 = tpu.matmul %514, %499, %cst_161 {dimension_numbers = #tpu.dot_dimension_numbers<[1], [0], [0], [1], [0, 0, 1, 1], [], []>} : vector<8x8xf32>, vector<8x16xf32>, vector<8x16xf32> -> vector<8x16xf32>
      %516 = vector.extract_strided_slice %14 {offsets = [0, 0], sizes = [16, 32], strides = [1, 1]} : vector<32x32xf32> to vector<16x32xf32>
      %cst_162 = arith.constant dense<0.000000e+00> : vector<8x32xf32>
      %517 = tpu.matmul %515, %516, %cst_162 {dimension_numbers = #tpu.dot_dimension_numbers<[1], [0], [0], [1], [0, 0, 1, 1], [], []>} : vector<8x16xf32>, vector<16x32xf32>, vector<8x32xf32> -> vector<8x32xf32>
      %518 = vector.extract_strided_slice %496 {offsets = [0, 16], sizes = [8, 16], strides = [1, 1]} : vector<8x32xf32> to vector<8x16xf32>
      %519 = vector.extract_strided_slice %27 {offsets = [0, 16], sizes = [8, 16], strides = [1, 1]} : vector<8x32xf32> to vector<8x16xf32>
      %520 = vector.extract_strided_slice %28 {offsets = [0, 16], sizes = [8, 16], strides = [1, 1]} : vector<8x32xf32> to vector<8x16xf32>
      %521 = tpu.transpose %519, [1, 0] : vector<8x16xf32> -> vector<16x8xf32>
      %cst_163 = arith.constant dense<0.000000e+00> : vector<8x8xf32>
      %522 = tpu.matmul %518, %521, %cst_163 {dimension_numbers = #tpu.dot_dimension_numbers<[1], [0], [0], [1], [0, 0, 1, 1], [], []>} : vector<8x16xf32>, vector<16x8xf32>, vector<8x8xf32> -> vector<8x8xf32>
      %cst_164 = arith.constant 2.500000e-01 : f32
      %523 = vector.broadcast %cst_164 : f32 to vector<8x8xf32>
      %524 = arith.mulf %522, %523 : vector<8x8xf32>
      %525 = arith.addf %524, %7 : vector<8x8xf32>
      %cst_165 = arith.constant dense<0xFF800000> : vector<8xf32>
      %526 = vector.multi_reduction <maximumf>, %525, %cst_165 [1] : vector<8x8xf32> to vector<8xf32>
      %527 = vector.shape_cast %526 : vector<8xf32> to vector<8x1xf32>
      %528 = vector.broadcast %527 : vector<8x1xf32> to vector<8x8xf32>
      %529 = arith.subf %525, %528 : vector<8x8xf32>
      %530 = math.exp %529 : vector<8x8xf32>
      %cst_166 = arith.constant dense<0.000000e+00> : vector<8xf32>
      %531 = vector.multi_reduction <add>, %530, %cst_166 [1] : vector<8x8xf32> to vector<8xf32>
      %532 = vector.shape_cast %531 : vector<8xf32> to vector<8x1xf32>
      %533 = tpu.reciprocal %532 {approx = true} : vector<8x1xf32> -> vector<8x1xf32>
      %534 = vector.broadcast %533 : vector<8x1xf32> to vector<8x8xf32>
      %535 = arith.mulf %530, %534 : vector<8x8xf32>
      %cst_167 = arith.constant dense<0.000000e+00> : vector<8x16xf32>
      %536 = tpu.matmul %535, %520, %cst_167 {dimension_numbers = #tpu.dot_dimension_numbers<[1], [0], [0], [1], [0, 0, 1, 1], [], []>} : vector<8x8xf32>, vector<8x16xf32>, vector<8x16xf32> -> vector<8x16xf32>
      %537 = vector.extract_strided_slice %14 {offsets = [16, 0], sizes = [16, 32], strides = [1, 1]} : vector<32x32xf32> to vector<16x32xf32>
      %cst_168 = arith.constant dense<0.000000e+00> : vector<8x32xf32>
      %538 = tpu.matmul %536, %537, %cst_168 {dimension_numbers = #tpu.dot_dimension_numbers<[1], [0], [0], [1], [0, 0, 1, 1], [], []>} : vector<8x16xf32>, vector<16x32xf32>, vector<8x32xf32> -> vector<8x32xf32>
      %539 = arith.addf %517, %538 : vector<8x32xf32>
      %540 = vector.broadcast %15 : vector<1x32xf32> to vector<8x32xf32>
      %541 = arith.addf %539, %540 : vector<8x32xf32>
      %cst_169 = arith.constant dense<0.000000e+00> : vector<8xf32>
      %542 = vector.multi_reduction <add>, %541, %cst_169 [1] : vector<8x32xf32> to vector<8xf32>
      %543 = vector.shape_cast %542 : vector<8xf32> to vector<8x1xf32>
      %cst_170 = arith.constant 3.200000e+01 : f32
      %544 = vector.broadcast %cst_170 : f32 to vector<8x1xf32>
      %545 = arith.divf %543, %544 : vector<8x1xf32>
      %546 = vector.broadcast %545 : vector<8x1xf32> to vector<8x32xf32>
      %547 = arith.subf %541, %546 : vector<8x32xf32>
      %548 = arith.mulf %547, %547 : vector<8x32xf32>
      %cst_171 = arith.constant dense<0.000000e+00> : vector<8xf32>
      %549 = vector.multi_reduction <add>, %548, %cst_171 [1] : vector<8x32xf32> to vector<8xf32>
      %550 = vector.shape_cast %549 : vector<8xf32> to vector<8x1xf32>
      %cst_172 = arith.constant 3.200000e+01 : f32
      %551 = vector.broadcast %cst_172 : f32 to vector<8x1xf32>
      %552 = arith.divf %550, %551 : vector<8x1xf32>
      %553 = vector.broadcast %545 : vector<8x1xf32> to vector<8x32xf32>
      %554 = arith.subf %541, %553 : vector<8x32xf32>
      %cst_173 = arith.constant 9.99999974E-6 : f32
      %555 = vector.broadcast %cst_173 : f32 to vector<8x1xf32>
      %556 = arith.addf %552, %555 : vector<8x1xf32>
      %557 = math.rsqrt %556 : vector<8x1xf32>
      %558 = vector.broadcast %557 : vector<8x1xf32> to vector<8x32xf32>
      %559 = arith.mulf %554, %558 : vector<8x32xf32>
      %560 = vector.broadcast %20 : vector<1x32xf32> to vector<8x32xf32>
      %561 = arith.mulf %559, %560 : vector<8x32xf32>
      %562 = vector.broadcast %21 : vector<1x32xf32> to vector<8x32xf32>
      %563 = arith.addf %561, %562 : vector<8x32xf32>
      %564 = vector.broadcast %3 : vector<8x1xf32> to vector<8x32xf32>
      %565 = arith.mulf %563, %564 : vector<8x32xf32>
      %cst_174 = arith.constant dense<0.000000e+00> : vector<8x64xf32>
      %566 = tpu.matmul %565, %16, %cst_174 {dimension_numbers = #tpu.dot_dimension_numbers<[1], [0], [0], [1], [0, 0, 1, 1], [], []>} : vector<8x32xf32>, vector<32x64xf32>, vector<8x64xf32> -> vector<8x64xf32>
      %567 = vector.broadcast %17 : vector<1x64xf32> to vector<8x64xf32>
      %568 = arith.addf %566, %567 : vector<8x64xf32>
      %cst_175 = arith.constant 0.000000e+00 : f32
      %569 = vector.broadcast %cst_175 : f32 to vector<8x64xf32>
      %570 = arith.maximumf %568, %569 : vector<8x64xf32>
      %cst_176 = arith.constant dense<0.000000e+00> : vector<8x32xf32>
      %571 = tpu.matmul %570, %18, %cst_176 {dimension_numbers = #tpu.dot_dimension_numbers<[1], [0], [0], [1], [0, 0, 1, 1], [], []>} : vector<8x64xf32>, vector<64x32xf32>, vector<8x32xf32> -> vector<8x32xf32>
      %572 = vector.broadcast %19 : vector<1x32xf32> to vector<8x32xf32>
      %573 = arith.addf %571, %572 : vector<8x32xf32>
      %cst_177 = arith.constant dense<0.000000e+00> : vector<8xf32>
      %574 = vector.multi_reduction <add>, %573, %cst_177 [1] : vector<8x32xf32> to vector<8xf32>
      %575 = vector.shape_cast %574 : vector<8xf32> to vector<8x1xf32>
      %cst_178 = arith.constant 3.200000e+01 : f32
      %576 = vector.broadcast %cst_178 : f32 to vector<8x1xf32>
      %577 = arith.divf %575, %576 : vector<8x1xf32>
      %578 = vector.broadcast %577 : vector<8x1xf32> to vector<8x32xf32>
      %579 = arith.subf %573, %578 : vector<8x32xf32>
      %580 = arith.mulf %579, %579 : vector<8x32xf32>
      %cst_179 = arith.constant dense<0.000000e+00> : vector<8xf32>
      %581 = vector.multi_reduction <add>, %580, %cst_179 [1] : vector<8x32xf32> to vector<8xf32>
      %582 = vector.shape_cast %581 : vector<8xf32> to vector<8x1xf32>
      %cst_180 = arith.constant 3.200000e+01 : f32
      %583 = vector.broadcast %cst_180 : f32 to vector<8x1xf32>
      %584 = arith.divf %582, %583 : vector<8x1xf32>
      %585 = vector.broadcast %577 : vector<8x1xf32> to vector<8x32xf32>
      %586 = arith.subf %573, %585 : vector<8x32xf32>
      %cst_181 = arith.constant 9.99999974E-6 : f32
      %587 = vector.broadcast %cst_181 : f32 to vector<8x1xf32>
      %588 = arith.addf %584, %587 : vector<8x1xf32>
      %589 = math.rsqrt %588 : vector<8x1xf32>
      %590 = vector.broadcast %589 : vector<8x1xf32> to vector<8x32xf32>
      %591 = arith.mulf %586, %590 : vector<8x32xf32>
      %592 = vector.broadcast %20 : vector<1x32xf32> to vector<8x32xf32>
      %593 = arith.mulf %591, %592 : vector<8x32xf32>
      %594 = vector.broadcast %21 : vector<1x32xf32> to vector<8x32xf32>
      %595 = arith.addf %593, %594 : vector<8x32xf32>
      %596 = vector.broadcast %3 : vector<8x1xf32> to vector<8x32xf32>
      %597 = arith.mulf %595, %596 : vector<8x32xf32>
      %598 = arith.addf %46, %36 : f32
      %599 = vector.broadcast %36 : f32 to vector<8x32xf32>
      %600 = arith.mulf %599, %597 : vector<8x32xf32>
      %601 = arith.addf %arg23, %600 : vector<8x32xf32>
      %602 = vector.broadcast %598 : f32 to vector<8x32xf32>
      %603 = arith.addf %601, %602 : vector<8x32xf32>
      %cst_182 = arith.constant dense<0.000000e+00> : vector<8x96xf32>
      %604 = tpu.matmul %603, %8, %cst_182 {dimension_numbers = #tpu.dot_dimension_numbers<[1], [0], [0], [1], [0, 0, 1, 1], [], []>} : vector<8x32xf32>, vector<32x96xf32>, vector<8x96xf32> -> vector<8x96xf32>
      %605 = vector.broadcast %9 : vector<1x96xf32> to vector<8x96xf32>
      %606 = arith.addf %604, %605 : vector<8x96xf32>
      %607 = vector.extract_strided_slice %606 {offsets = [0, 0], sizes = [8, 32], strides = [1, 1]} : vector<8x96xf32> to vector<8x32xf32>
      %608 = vector.extract_strided_slice %606 {offsets = [0, 32], sizes = [8, 32], strides = [1, 1]} : vector<8x96xf32> to vector<8x32xf32>
      %609 = vector.extract_strided_slice %606 {offsets = [0, 64], sizes = [8, 32], strides = [1, 1]} : vector<8x96xf32> to vector<8x32xf32>
      %610 = vector.extract_strided_slice %607 {offsets = [0, 0], sizes = [8, 16], strides = [1, 1]} : vector<8x32xf32> to vector<8x16xf32>
      %611 = vector.extract_strided_slice %608 {offsets = [0, 0], sizes = [8, 16], strides = [1, 1]} : vector<8x32xf32> to vector<8x16xf32>
      %612 = vector.extract_strided_slice %609 {offsets = [0, 0], sizes = [8, 16], strides = [1, 1]} : vector<8x32xf32> to vector<8x16xf32>
      %613 = tpu.transpose %611, [1, 0] : vector<8x16xf32> -> vector<16x8xf32>
      %cst_183 = arith.constant dense<0.000000e+00> : vector<8x8xf32>
      %614 = tpu.matmul %610, %613, %cst_183 {dimension_numbers = #tpu.dot_dimension_numbers<[1], [0], [0], [1], [0, 0, 1, 1], [], []>} : vector<8x16xf32>, vector<16x8xf32>, vector<8x8xf32> -> vector<8x8xf32>
      %cst_184 = arith.constant 2.500000e-01 : f32
      %615 = vector.broadcast %cst_184 : f32 to vector<8x8xf32>
      %616 = arith.mulf %614, %615 : vector<8x8xf32>
      %617 = arith.addf %616, %5 : vector<8x8xf32>
      %cst_185 = arith.constant dense<0xFF800000> : vector<8xf32>
      %618 = vector.multi_reduction <maximumf>, %617, %cst_185 [1] : vector<8x8xf32> to vector<8xf32>
      %619 = vector.shape_cast %618 : vector<8xf32> to vector<8x1xf32>
      %620 = vector.broadcast %619 : vector<8x1xf32> to vector<8x8xf32>
      %621 = arith.subf %617, %620 : vector<8x8xf32>
      %622 = math.exp %621 : vector<8x8xf32>
      %cst_186 = arith.constant dense<0.000000e+00> : vector<8xf32>
      %623 = vector.multi_reduction <add>, %622, %cst_186 [1] : vector<8x8xf32> to vector<8xf32>
      %624 = vector.shape_cast %623 : vector<8xf32> to vector<8x1xf32>
      %625 = tpu.reciprocal %624 {approx = true} : vector<8x1xf32> -> vector<8x1xf32>
      %626 = vector.broadcast %625 : vector<8x1xf32> to vector<8x8xf32>
      %627 = arith.mulf %622, %626 : vector<8x8xf32>
      %cst_187 = arith.constant dense<0.000000e+00> : vector<8x16xf32>
      %628 = tpu.matmul %627, %612, %cst_187 {dimension_numbers = #tpu.dot_dimension_numbers<[1], [0], [0], [1], [0, 0, 1, 1], [], []>} : vector<8x8xf32>, vector<8x16xf32>, vector<8x16xf32> -> vector<8x16xf32>
      %629 = vector.extract_strided_slice %10 {offsets = [0, 0], sizes = [16, 32], strides = [1, 1]} : vector<32x32xf32> to vector<16x32xf32>
      %cst_188 = arith.constant dense<0.000000e+00> : vector<8x32xf32>
      %630 = tpu.matmul %628, %629, %cst_188 {dimension_numbers = #tpu.dot_dimension_numbers<[1], [0], [0], [1], [0, 0, 1, 1], [], []>} : vector<8x16xf32>, vector<16x32xf32>, vector<8x32xf32> -> vector<8x32xf32>
      %631 = vector.extract_strided_slice %607 {offsets = [0, 16], sizes = [8, 16], strides = [1, 1]} : vector<8x32xf32> to vector<8x16xf32>
      %632 = vector.extract_strided_slice %608 {offsets = [0, 16], sizes = [8, 16], strides = [1, 1]} : vector<8x32xf32> to vector<8x16xf32>
      %633 = vector.extract_strided_slice %609 {offsets = [0, 16], sizes = [8, 16], strides = [1, 1]} : vector<8x32xf32> to vector<8x16xf32>
      %634 = tpu.transpose %632, [1, 0] : vector<8x16xf32> -> vector<16x8xf32>
      %cst_189 = arith.constant dense<0.000000e+00> : vector<8x8xf32>
      %635 = tpu.matmul %631, %634, %cst_189 {dimension_numbers = #tpu.dot_dimension_numbers<[1], [0], [0], [1], [0, 0, 1, 1], [], []>} : vector<8x16xf32>, vector<16x8xf32>, vector<8x8xf32> -> vector<8x8xf32>
      %cst_190 = arith.constant 2.500000e-01 : f32
      %636 = vector.broadcast %cst_190 : f32 to vector<8x8xf32>
      %637 = arith.mulf %635, %636 : vector<8x8xf32>
      %638 = arith.addf %637, %5 : vector<8x8xf32>
      %cst_191 = arith.constant dense<0xFF800000> : vector<8xf32>
      %639 = vector.multi_reduction <maximumf>, %638, %cst_191 [1] : vector<8x8xf32> to vector<8xf32>
      %640 = vector.shape_cast %639 : vector<8xf32> to vector<8x1xf32>
      %641 = vector.broadcast %640 : vector<8x1xf32> to vector<8x8xf32>
      %642 = arith.subf %638, %641 : vector<8x8xf32>
      %643 = math.exp %642 : vector<8x8xf32>
      %cst_192 = arith.constant dense<0.000000e+00> : vector<8xf32>
      %644 = vector.multi_reduction <add>, %643, %cst_192 [1] : vector<8x8xf32> to vector<8xf32>
      %645 = vector.shape_cast %644 : vector<8xf32> to vector<8x1xf32>
      %646 = tpu.reciprocal %645 {approx = true} : vector<8x1xf32> -> vector<8x1xf32>
      %647 = vector.broadcast %646 : vector<8x1xf32> to vector<8x8xf32>
      %648 = arith.mulf %643, %647 : vector<8x8xf32>
      %cst_193 = arith.constant dense<0.000000e+00> : vector<8x16xf32>
      %649 = tpu.matmul %648, %633, %cst_193 {dimension_numbers = #tpu.dot_dimension_numbers<[1], [0], [0], [1], [0, 0, 1, 1], [], []>} : vector<8x8xf32>, vector<8x16xf32>, vector<8x16xf32> -> vector<8x16xf32>
      %650 = vector.extract_strided_slice %10 {offsets = [16, 0], sizes = [16, 32], strides = [1, 1]} : vector<32x32xf32> to vector<16x32xf32>
      %cst_194 = arith.constant dense<0.000000e+00> : vector<8x32xf32>
      %651 = tpu.matmul %649, %650, %cst_194 {dimension_numbers = #tpu.dot_dimension_numbers<[1], [0], [0], [1], [0, 0, 1, 1], [], []>} : vector<8x16xf32>, vector<16x32xf32>, vector<8x32xf32> -> vector<8x32xf32>
      %652 = arith.addf %630, %651 : vector<8x32xf32>
      %653 = vector.broadcast %11 : vector<1x32xf32> to vector<8x32xf32>
      %654 = arith.addf %652, %653 : vector<8x32xf32>
      %cst_195 = arith.constant dense<0.000000e+00> : vector<8xf32>
      %655 = vector.multi_reduction <add>, %654, %cst_195 [1] : vector<8x32xf32> to vector<8xf32>
      %656 = vector.shape_cast %655 : vector<8xf32> to vector<8x1xf32>
      %cst_196 = arith.constant 3.200000e+01 : f32
      %657 = vector.broadcast %cst_196 : f32 to vector<8x1xf32>
      %658 = arith.divf %656, %657 : vector<8x1xf32>
      %659 = vector.broadcast %658 : vector<8x1xf32> to vector<8x32xf32>
      %660 = arith.subf %654, %659 : vector<8x32xf32>
      %661 = arith.mulf %660, %660 : vector<8x32xf32>
      %cst_197 = arith.constant dense<0.000000e+00> : vector<8xf32>
      %662 = vector.multi_reduction <add>, %661, %cst_197 [1] : vector<8x32xf32> to vector<8xf32>
      %663 = vector.shape_cast %662 : vector<8xf32> to vector<8x1xf32>
      %cst_198 = arith.constant 3.200000e+01 : f32
      %664 = vector.broadcast %cst_198 : f32 to vector<8x1xf32>
      %665 = arith.divf %663, %664 : vector<8x1xf32>
      %666 = vector.broadcast %658 : vector<8x1xf32> to vector<8x32xf32>
      %667 = arith.subf %654, %666 : vector<8x32xf32>
      %cst_199 = arith.constant 9.99999974E-6 : f32
      %668 = vector.broadcast %cst_199 : f32 to vector<8x1xf32>
      %669 = arith.addf %665, %668 : vector<8x1xf32>
      %670 = math.rsqrt %669 : vector<8x1xf32>
      %671 = vector.broadcast %670 : vector<8x1xf32> to vector<8x32xf32>
      %672 = arith.mulf %667, %671 : vector<8x32xf32>
      %673 = vector.broadcast %20 : vector<1x32xf32> to vector<8x32xf32>
      %674 = arith.mulf %672, %673 : vector<8x32xf32>
      %675 = vector.broadcast %21 : vector<1x32xf32> to vector<8x32xf32>
      %676 = arith.addf %674, %675 : vector<8x32xf32>
      %677 = vector.broadcast %3 : vector<8x1xf32> to vector<8x32xf32>
      %678 = arith.mulf %676, %677 : vector<8x32xf32>
      %cst_200 = arith.constant dense<0.000000e+00> : vector<8x32xf32>
      %679 = tpu.matmul %678, %29, %cst_200 {dimension_numbers = #tpu.dot_dimension_numbers<[1], [0], [0], [1], [0, 0, 1, 1], [], []>} : vector<8x32xf32>, vector<32x32xf32>, vector<8x32xf32> -> vector<8x32xf32>
      %680 = vector.broadcast %30 : vector<1x32xf32> to vector<8x32xf32>
      %681 = arith.addf %679, %680 : vector<8x32xf32>
      %682 = vector.extract_strided_slice %681 {offsets = [0, 0], sizes = [8, 16], strides = [1, 1]} : vector<8x32xf32> to vector<8x16xf32>
      %683 = vector.extract_strided_slice %27 {offsets = [0, 0], sizes = [8, 16], strides = [1, 1]} : vector<8x32xf32> to vector<8x16xf32>
      %684 = vector.extract_strided_slice %28 {offsets = [0, 0], sizes = [8, 16], strides = [1, 1]} : vector<8x32xf32> to vector<8x16xf32>
      %685 = tpu.transpose %683, [1, 0] : vector<8x16xf32> -> vector<16x8xf32>
      %cst_201 = arith.constant dense<0.000000e+00> : vector<8x8xf32>
      %686 = tpu.matmul %682, %685, %cst_201 {dimension_numbers = #tpu.dot_dimension_numbers<[1], [0], [0], [1], [0, 0, 1, 1], [], []>} : vector<8x16xf32>, vector<16x8xf32>, vector<8x8xf32> -> vector<8x8xf32>
      %cst_202 = arith.constant 2.500000e-01 : f32
      %687 = vector.broadcast %cst_202 : f32 to vector<8x8xf32>
      %688 = arith.mulf %686, %687 : vector<8x8xf32>
      %689 = arith.addf %688, %7 : vector<8x8xf32>
      %cst_203 = arith.constant dense<0xFF800000> : vector<8xf32>
      %690 = vector.multi_reduction <maximumf>, %689, %cst_203 [1] : vector<8x8xf32> to vector<8xf32>
      %691 = vector.shape_cast %690 : vector<8xf32> to vector<8x1xf32>
      %692 = vector.broadcast %691 : vector<8x1xf32> to vector<8x8xf32>
      %693 = arith.subf %689, %692 : vector<8x8xf32>
      %694 = math.exp %693 : vector<8x8xf32>
      %cst_204 = arith.constant dense<0.000000e+00> : vector<8xf32>
      %695 = vector.multi_reduction <add>, %694, %cst_204 [1] : vector<8x8xf32> to vector<8xf32>
      %696 = vector.shape_cast %695 : vector<8xf32> to vector<8x1xf32>
      %697 = tpu.reciprocal %696 {approx = true} : vector<8x1xf32> -> vector<8x1xf32>
      %698 = vector.broadcast %697 : vector<8x1xf32> to vector<8x8xf32>
      %699 = arith.mulf %694, %698 : vector<8x8xf32>
      %cst_205 = arith.constant dense<0.000000e+00> : vector<8x16xf32>
      %700 = tpu.matmul %699, %684, %cst_205 {dimension_numbers = #tpu.dot_dimension_numbers<[1], [0], [0], [1], [0, 0, 1, 1], [], []>} : vector<8x8xf32>, vector<8x16xf32>, vector<8x16xf32> -> vector<8x16xf32>
      %701 = vector.extract_strided_slice %14 {offsets = [0, 0], sizes = [16, 32], strides = [1, 1]} : vector<32x32xf32> to vector<16x32xf32>
      %cst_206 = arith.constant dense<0.000000e+00> : vector<8x32xf32>
      %702 = tpu.matmul %700, %701, %cst_206 {dimension_numbers = #tpu.dot_dimension_numbers<[1], [0], [0], [1], [0, 0, 1, 1], [], []>} : vector<8x16xf32>, vector<16x32xf32>, vector<8x32xf32> -> vector<8x32xf32>
      %703 = vector.extract_strided_slice %681 {offsets = [0, 16], sizes = [8, 16], strides = [1, 1]} : vector<8x32xf32> to vector<8x16xf32>
      %704 = vector.extract_strided_slice %27 {offsets = [0, 16], sizes = [8, 16], strides = [1, 1]} : vector<8x32xf32> to vector<8x16xf32>
      %705 = vector.extract_strided_slice %28 {offsets = [0, 16], sizes = [8, 16], strides = [1, 1]} : vector<8x32xf32> to vector<8x16xf32>
      %706 = tpu.transpose %704, [1, 0] : vector<8x16xf32> -> vector<16x8xf32>
      %cst_207 = arith.constant dense<0.000000e+00> : vector<8x8xf32>
      %707 = tpu.matmul %703, %706, %cst_207 {dimension_numbers = #tpu.dot_dimension_numbers<[1], [0], [0], [1], [0, 0, 1, 1], [], []>} : vector<8x16xf32>, vector<16x8xf32>, vector<8x8xf32> -> vector<8x8xf32>
      %cst_208 = arith.constant 2.500000e-01 : f32
      %708 = vector.broadcast %cst_208 : f32 to vector<8x8xf32>
      %709 = arith.mulf %707, %708 : vector<8x8xf32>
      %710 = arith.addf %709, %7 : vector<8x8xf32>
      %cst_209 = arith.constant dense<0xFF800000> : vector<8xf32>
      %711 = vector.multi_reduction <maximumf>, %710, %cst_209 [1] : vector<8x8xf32> to vector<8xf32>
      %712 = vector.shape_cast %711 : vector<8xf32> to vector<8x1xf32>
      %713 = vector.broadcast %712 : vector<8x1xf32> to vector<8x8xf32>
      %714 = arith.subf %710, %713 : vector<8x8xf32>
      %715 = math.exp %714 : vector<8x8xf32>
      %cst_210 = arith.constant dense<0.000000e+00> : vector<8xf32>
      %716 = vector.multi_reduction <add>, %715, %cst_210 [1] : vector<8x8xf32> to vector<8xf32>
      %717 = vector.shape_cast %716 : vector<8xf32> to vector<8x1xf32>
      %718 = tpu.reciprocal %717 {approx = true} : vector<8x1xf32> -> vector<8x1xf32>
      %719 = vector.broadcast %718 : vector<8x1xf32> to vector<8x8xf32>
      %720 = arith.mulf %715, %719 : vector<8x8xf32>
      %cst_211 = arith.constant dense<0.000000e+00> : vector<8x16xf32>
      %721 = tpu.matmul %720, %705, %cst_211 {dimension_numbers = #tpu.dot_dimension_numbers<[1], [0], [0], [1], [0, 0, 1, 1], [], []>} : vector<8x8xf32>, vector<8x16xf32>, vector<8x16xf32> -> vector<8x16xf32>
      %722 = vector.extract_strided_slice %14 {offsets = [16, 0], sizes = [16, 32], strides = [1, 1]} : vector<32x32xf32> to vector<16x32xf32>
      %cst_212 = arith.constant dense<0.000000e+00> : vector<8x32xf32>
      %723 = tpu.matmul %721, %722, %cst_212 {dimension_numbers = #tpu.dot_dimension_numbers<[1], [0], [0], [1], [0, 0, 1, 1], [], []>} : vector<8x16xf32>, vector<16x32xf32>, vector<8x32xf32> -> vector<8x32xf32>
      %724 = arith.addf %702, %723 : vector<8x32xf32>
      %725 = vector.broadcast %15 : vector<1x32xf32> to vector<8x32xf32>
      %726 = arith.addf %724, %725 : vector<8x32xf32>
      %cst_213 = arith.constant dense<0.000000e+00> : vector<8xf32>
      %727 = vector.multi_reduction <add>, %726, %cst_213 [1] : vector<8x32xf32> to vector<8xf32>
      %728 = vector.shape_cast %727 : vector<8xf32> to vector<8x1xf32>
      %cst_214 = arith.constant 3.200000e+01 : f32
      %729 = vector.broadcast %cst_214 : f32 to vector<8x1xf32>
      %730 = arith.divf %728, %729 : vector<8x1xf32>
      %731 = vector.broadcast %730 : vector<8x1xf32> to vector<8x32xf32>
      %732 = arith.subf %726, %731 : vector<8x32xf32>
      %733 = arith.mulf %732, %732 : vector<8x32xf32>
      %cst_215 = arith.constant dense<0.000000e+00> : vector<8xf32>
      %734 = vector.multi_reduction <add>, %733, %cst_215 [1] : vector<8x32xf32> to vector<8xf32>
      %735 = vector.shape_cast %734 : vector<8xf32> to vector<8x1xf32>
      %cst_216 = arith.constant 3.200000e+01 : f32
      %736 = vector.broadcast %cst_216 : f32 to vector<8x1xf32>
      %737 = arith.divf %735, %736 : vector<8x1xf32>
      %738 = vector.broadcast %730 : vector<8x1xf32> to vector<8x32xf32>
      %739 = arith.subf %726, %738 : vector<8x32xf32>
      %cst_217 = arith.constant 9.99999974E-6 : f32
      %740 = vector.broadcast %cst_217 : f32 to vector<8x1xf32>
      %741 = arith.addf %737, %740 : vector<8x1xf32>
      %742 = math.rsqrt %741 : vector<8x1xf32>
      %743 = vector.broadcast %742 : vector<8x1xf32> to vector<8x32xf32>
      %744 = arith.mulf %739, %743 : vector<8x32xf32>
      %745 = vector.broadcast %20 : vector<1x32xf32> to vector<8x32xf32>
      %746 = arith.mulf %744, %745 : vector<8x32xf32>
      %747 = vector.broadcast %21 : vector<1x32xf32> to vector<8x32xf32>
      %748 = arith.addf %746, %747 : vector<8x32xf32>
      %749 = vector.broadcast %3 : vector<8x1xf32> to vector<8x32xf32>
      %750 = arith.mulf %748, %749 : vector<8x32xf32>
      %cst_218 = arith.constant dense<0.000000e+00> : vector<8x64xf32>
      %751 = tpu.matmul %750, %16, %cst_218 {dimension_numbers = #tpu.dot_dimension_numbers<[1], [0], [0], [1], [0, 0, 1, 1], [], []>} : vector<8x32xf32>, vector<32x64xf32>, vector<8x64xf32> -> vector<8x64xf32>
      %752 = vector.broadcast %17 : vector<1x64xf32> to vector<8x64xf32>
      %753 = arith.addf %751, %752 : vector<8x64xf32>
      %cst_219 = arith.constant 0.000000e+00 : f32
      %754 = vector.broadcast %cst_219 : f32 to vector<8x64xf32>
      %755 = arith.maximumf %753, %754 : vector<8x64xf32>
      %cst_220 = arith.constant dense<0.000000e+00> : vector<8x32xf32>
      %756 = tpu.matmul %755, %18, %cst_220 {dimension_numbers = #tpu.dot_dimension_numbers<[1], [0], [0], [1], [0, 0, 1, 1], [], []>} : vector<8x64xf32>, vector<64x32xf32>, vector<8x32xf32> -> vector<8x32xf32>
      %757 = vector.broadcast %19 : vector<1x32xf32> to vector<8x32xf32>
      %758 = arith.addf %756, %757 : vector<8x32xf32>
      %cst_221 = arith.constant dense<0.000000e+00> : vector<8xf32>
      %759 = vector.multi_reduction <add>, %758, %cst_221 [1] : vector<8x32xf32> to vector<8xf32>
      %760 = vector.shape_cast %759 : vector<8xf32> to vector<8x1xf32>
      %cst_222 = arith.constant 3.200000e+01 : f32
      %761 = vector.broadcast %cst_222 : f32 to vector<8x1xf32>
      %762 = arith.divf %760, %761 : vector<8x1xf32>
      %763 = vector.broadcast %762 : vector<8x1xf32> to vector<8x32xf32>
      %764 = arith.subf %758, %763 : vector<8x32xf32>
      %765 = arith.mulf %764, %764 : vector<8x32xf32>
      %cst_223 = arith.constant dense<0.000000e+00> : vector<8xf32>
      %766 = vector.multi_reduction <add>, %765, %cst_223 [1] : vector<8x32xf32> to vector<8xf32>
      %767 = vector.shape_cast %766 : vector<8xf32> to vector<8x1xf32>
      %cst_224 = arith.constant 3.200000e+01 : f32
      %768 = vector.broadcast %cst_224 : f32 to vector<8x1xf32>
      %769 = arith.divf %767, %768 : vector<8x1xf32>
      %770 = vector.broadcast %762 : vector<8x1xf32> to vector<8x32xf32>
      %771 = arith.subf %758, %770 : vector<8x32xf32>
      %cst_225 = arith.constant 9.99999974E-6 : f32
      %772 = vector.broadcast %cst_225 : f32 to vector<8x1xf32>
      %773 = arith.addf %769, %772 : vector<8x1xf32>
      %774 = math.rsqrt %773 : vector<8x1xf32>
      %775 = vector.broadcast %774 : vector<8x1xf32> to vector<8x32xf32>
      %776 = arith.mulf %771, %775 : vector<8x32xf32>
      %777 = vector.broadcast %20 : vector<1x32xf32> to vector<8x32xf32>
      %778 = arith.mulf %776, %777 : vector<8x32xf32>
      %779 = vector.broadcast %21 : vector<1x32xf32> to vector<8x32xf32>
      %780 = arith.addf %778, %779 : vector<8x32xf32>
      %781 = vector.broadcast %3 : vector<8x1xf32> to vector<8x32xf32>
      %782 = arith.mulf %780, %781 : vector<8x32xf32>
      %cst_226 = arith.constant 2.000000e+00 : f32
      %783 = vector.broadcast %cst_226 : f32 to vector<8x32xf32>
      %784 = arith.mulf %783, %412 : vector<8x32xf32>
      %785 = arith.addf %227, %784 : vector<8x32xf32>
      %cst_227 = arith.constant 2.000000e+00 : f32
      %786 = vector.broadcast %cst_227 : f32 to vector<8x32xf32>
      %787 = arith.mulf %786, %597 : vector<8x32xf32>
      %788 = arith.addf %785, %787 : vector<8x32xf32>
      %789 = arith.addf %788, %782 : vector<8x32xf32>
      %790 = vector.broadcast %38 : f32 to vector<8x32xf32>
      %791 = arith.mulf %790, %789 : vector<8x32xf32>
      %792 = arith.addf %arg23, %791 : vector<8x32xf32>
      scf.yield %792 : vector<8x32xf32>
    }
    %c2_i32_46 = arith.constant 2 : i32
    %c0_47 = arith.constant 0 : index
    %c0_48 = arith.constant 0 : index
    %c0_49 = arith.constant 0 : index
    %41 = vector.load %arg21[%c0_47, %c0_48, %c0_49] : memref<1x8x32xf32, #tpu.memory_space<vmem>>, vector<1x8x32xf32>
    %42 = vector.shape_cast %41 : vector<1x8x32xf32> to vector<8x32xf32>
    %43 = vector.shape_cast %40 : vector<8x32xf32> to vector<1x8x32xf32>
    tpu.vector_store %arg21[%c0_47, %c0_48, %c0_49], %43 {strides = array<i32>} : memref<1x8x32xf32, #tpu.memory_space<vmem>>, vector<1x8x32xf32>,
    return
  }
  func.func @transform_0(%arg0: i32) -> i32 {
    %c0_i32 = arith.constant 0 : i32
    %c0_i32_0 = arith.constant 0 : i32
    return %c0_i32 : i32
  }
  func.func @transform_1(%arg0: i32) -> (i32, i32, i32) {
    %c0_i32 = arith.constant 0 : i32
    %c0_i32_0 = arith.constant 0 : i32
    %c0_i32_1 = arith.constant 0 : i32
    return %arg0, %c0_i32, %c0_i32_0 : i32, i32, i32
  }
  func.func @transform_2(%arg0: i32) -> (i32, i32, i32) {
    %c0_i32 = arith.constant 0 : i32
    %c0_i32_0 = arith.constant 0 : i32
    %c0_i32_1 = arith.constant 0 : i32
    return %arg0, %c0_i32, %c0_i32_0 : i32, i32, i32
  }
  func.func @transform_3(%arg0: i32) -> (i32, i32, i32) {
    %c0_i32 = arith.constant 0 : i32
    %c0_i32_0 = arith.constant 0 : i32
    %c0_i32_1 = arith.constant 0 : i32
    return %arg0, %c0_i32, %c0_i32_0 : i32, i32, i32
  }
  func.func @transform_4(%arg0: i32) -> (i32, i32, i32) {
    %c0_i32 = arith.constant 0 : i32
    %c0_i32_0 = arith.constant 0 : i32
    %c0_i32_1 = arith.constant 0 : i32
    return %arg0, %c0_i32, %c0_i32_0 : i32, i32, i32
  }
  func.func @transform_5(%arg0: i32) -> (i32, i32, i32) {
    %c0_i32 = arith.constant 0 : i32
    %c0_i32_0 = arith.constant 0 : i32
    %c0_i32_1 = arith.constant 0 : i32
    return %arg0, %c0_i32, %c0_i32_0 : i32, i32, i32
  }
  func.func @transform_6(%arg0: i32) -> (i32, i32) {
    %c0_i32 = arith.constant 0 : i32
    %c0_i32_0 = arith.constant 0 : i32
    %c0_i32_1 = arith.constant 0 : i32
    return %c0_i32, %c0_i32_0 : i32, i32
  }
  func.func @transform_7(%arg0: i32) -> (i32, i32) {
    %c0_i32 = arith.constant 0 : i32
    %c0_i32_0 = arith.constant 0 : i32
    %c0_i32_1 = arith.constant 0 : i32
    return %c0_i32, %c0_i32_0 : i32, i32
  }
  func.func @transform_8(%arg0: i32) -> (i32, i32) {
    %c0_i32 = arith.constant 0 : i32
    %c0_i32_0 = arith.constant 0 : i32
    %c0_i32_1 = arith.constant 0 : i32
    return %c0_i32, %c0_i32_0 : i32, i32
  }
  func.func @transform_9(%arg0: i32) -> (i32, i32) {
    %c0_i32 = arith.constant 0 : i32
    %c0_i32_0 = arith.constant 0 : i32
    %c0_i32_1 = arith.constant 0 : i32
    return %c0_i32, %c0_i32_0 : i32, i32
  }
  func.func @transform_10(%arg0: i32) -> (i32, i32) {
    %c0_i32 = arith.constant 0 : i32
    %c0_i32_0 = arith.constant 0 : i32
    %c0_i32_1 = arith.constant 0 : i32
    return %c0_i32, %c0_i32_0 : i32, i32
  }
  func.func @transform_11(%arg0: i32) -> (i32, i32) {
    %c0_i32 = arith.constant 0 : i32
    %c0_i32_0 = arith.constant 0 : i32
    %c0_i32_1 = arith.constant 0 : i32
    return %c0_i32, %c0_i32_0 : i32, i32
  }
  func.func @transform_12(%arg0: i32) -> (i32, i32) {
    %c0_i32 = arith.constant 0 : i32
    %c0_i32_0 = arith.constant 0 : i32
    %c0_i32_1 = arith.constant 0 : i32
    return %c0_i32, %c0_i32_0 : i32, i32
  }
  func.func @transform_13(%arg0: i32) -> (i32, i32) {
    %c0_i32 = arith.constant 0 : i32
    %c0_i32_0 = arith.constant 0 : i32
    %c0_i32_1 = arith.constant 0 : i32
    return %c0_i32, %c0_i32_0 : i32, i32
  }
  func.func @transform_14(%arg0: i32) -> (i32, i32) {
    %c0_i32 = arith.constant 0 : i32
    %c0_i32_0 = arith.constant 0 : i32
    %c0_i32_1 = arith.constant 0 : i32
    return %c0_i32, %c0_i32_0 : i32, i32
  }
  func.func @transform_15(%arg0: i32) -> (i32, i32) {
    %c0_i32 = arith.constant 0 : i32
    %c0_i32_0 = arith.constant 0 : i32
    %c0_i32_1 = arith.constant 0 : i32
    return %c0_i32, %c0_i32_0 : i32, i32
  }
  func.func @transform_16(%arg0: i32) -> (i32, i32) {
    %c0_i32 = arith.constant 0 : i32
    %c0_i32_0 = arith.constant 0 : i32
    %c0_i32_1 = arith.constant 0 : i32
    return %c0_i32, %c0_i32_0 : i32, i32
  }
  func.func @transform_17(%arg0: i32) -> (i32, i32) {
    %c0_i32 = arith.constant 0 : i32
    %c0_i32_0 = arith.constant 0 : i32
    %c0_i32_1 = arith.constant 0 : i32
    return %c0_i32, %c0_i32_0 : i32, i32
  }
  func.func @transform_18(%arg0: i32) -> (i32, i32) {
    %c0_i32 = arith.constant 0 : i32
    %c0_i32_0 = arith.constant 0 : i32
    %c0_i32_1 = arith.constant 0 : i32
    return %c0_i32, %c0_i32_0 : i32, i32
  }
  func.func @transform_19(%arg0: i32) -> (i32, i32) {
    %c0_i32 = arith.constant 0 : i32
    %c0_i32_0 = arith.constant 0 : i32
    %c0_i32_1 = arith.constant 0 : i32
    return %c0_i32, %c0_i32_0 : i32, i32
  }
  func.func @transform_20(%arg0: i32) -> (i32, i32, i32) {
    %c0_i32 = arith.constant 0 : i32
    %c0_i32_0 = arith.constant 0 : i32
    %c0_i32_1 = arith.constant 0 : i32
    return %arg0, %c0_i32, %c0_i32_0 : i32, i32, i32
  }
}

</mosaic_0001>

<llo_original>
// kernel: node_decoder_layer.1
$region0: #{node_decoder_layer.1}
  #allocation0 [shape = 'u32[]', space=smem, size = 0x4, offset = 0x4, fixed_abs, tag = 'smem constant byte address 0x4 - core index']
  #allocation1 [shape = 'u32[144,128]{1,0:T(1,128)}', space=vmem, size = 0x12000, scoped, tag = 'internal scratch']
  %s0 = inlined_call_operand.vmem [shape: f32[2], index: 0, kind: input, shape index: {}]
  %s1 = inlined_call_operand.vmem [shape: f32[2,8,32], index: 1, kind: input, shape index: {}]
  %s2 = inlined_call_operand.vmem [shape: f32[2,8,32], index: 2, kind: input, shape index: {}]
  %s3 = inlined_call_operand.vmem [shape: f32[2,8,1], index: 3, kind: input, shape index: {}]
  %s4 = inlined_call_operand.vmem [shape: f32[2,8,8], index: 4, kind: input, shape index: {}]
  %s5 = inlined_call_operand.vmem [shape: f32[2,8,8], index: 5, kind: input, shape index: {}]
  %s6 = inlined_call_operand.vmem [shape: f32[32,96], index: 6, kind: input, shape index: {}]
  %s7 = inlined_call_operand.vmem [shape: f32[1,96], index: 7, kind: input, shape index: {}]
  %s8 = inlined_call_operand.vmem [shape: f32[32,32], index: 8, kind: input, shape index: {}]
  %s9 = inlined_call_operand.vmem [shape: f32[1,32], index: 9, kind: input, shape index: {}]
  %s10 = inlined_call_operand.vmem [shape: f32[32,96], index: 10, kind: input, shape index: {}]
  %s11 = inlined_call_operand.vmem [shape: f32[1,96], index: 11, kind: input, shape index: {}]
  %s12 = inlined_call_operand.vmem [shape: f32[32,32], index: 12, kind: input, shape index: {}]
  %s13 = inlined_call_operand.vmem [shape: f32[1,32], index: 13, kind: input, shape index: {}]
  %s14 = inlined_call_operand.vmem [shape: f32[32,64], index: 14, kind: input, shape index: {}]
  %s15 = inlined_call_operand.vmem [shape: f32[1,64], index: 15, kind: input, shape index: {}]
  %s16 = inlined_call_operand.vmem [shape: f32[64,32], index: 16, kind: input, shape index: {}]
  %s17 = inlined_call_operand.vmem [shape: f32[1,32], index: 17, kind: input, shape index: {}]
  %s18 = inlined_call_operand.vmem [shape: f32[1,32], index: 18, kind: input, shape index: {}]
  %s19 = inlined_call_operand.vmem [shape: f32[1,32], index: 19, kind: input, shape index: {}]
  %s20 = inlined_call_operand.hbm [shape: f32[2,8,32], index: 20, kind: output, shape index: {}]
  %s21 = sld [smem:[#allocation0]]
  $region124: #{node_decoder_layer.1} parent=0
    _
  %s23 = ssub.s32 1, %s21
  %s24 = scalar_select 0, %s23, %s21
  $region1: #{node_decoder_layer.1} parent=0
    #allocation2 [shape = 'u8[512]{0}', space=smem, size = 0x200, scoped, tag = 'input window, operand 0, single buffered']
    #allocation3 [shape = 's32[2]{0}', space=sflag, size = 0x8, scoped, tag = 'scoped memory for node_decoder_layer.1']
    #allocation4 [shape = 's32[2]{0}', space=sflag, size = 0x8, scoped, tag = 'scoped memory for node_decoder_layer.1']
    #allocation5 [shape = 'u8[8192]{0}', space=vmem, size = 0x2000, scoped, tag = 'output window, operand 0']
    %25 = vsyncpa [#allocation4], 0
    %26 = vsyncpa [#allocation3], 0
    %s27 = scalar_lea.sflag [#allocation3], 1
    %28 = vsyncpa %s27, 0
    loop: start=0, step=1, limit=4
    $region2: #{node_decoder_layer.1} parent=1 // loop_pre_header
      _
    $region3: #{node_decoder_layer.1} parent=1 // loop_header
      %s30 = sphi 0, %s34
      %p31 = scmp.ge.s32.totalorder %s30, 4
      %s38 = sphi 0, %s38
      %s40 = sphi 0, %s38
      %s41 = sphi 0, %s40
      %s55 = sphi 0, %s41
      %s61 = sphi 0, %s63
      %s64 = sphi 0, %s61
      %s65 = sphi 0, %s64
      %s81 = sphi 0, %s65
      %s87 = sphi 0, %s89
      %s90 = sphi 0, %s87
      %s91 = sphi 0, %s90
      %s107 = sphi 0, %s91
      %s113 = sphi 0, %s115
      %s116 = sphi 0, %s113
      %s117 = sphi 0, %s116
      %s133 = sphi 0, %s117
      %s139 = sphi 0, %s141
      %s142 = sphi 0, %s139
      %s143 = sphi 0, %s142
      %s159 = sphi 0, %s143
      %s165 = sphi 0, %s167
      %s168 = sphi 0, %s165
      %s169 = sphi 0, %s168
      %s185 = sphi 0, %s169
      %s189 = sphi 0, %s189
      %s191 = sphi 0, %s189
      %s192 = sphi 0, %s191
      %s206 = sphi 0, %s192
      %s210 = sphi 0, %s210
      %s212 = sphi 0, %s210
      %s213 = sphi 0, %s212
      %s227 = sphi 0, %s213
      %s231 = sphi 0, %s231
      %s233 = sphi 0, %s231
      %s234 = sphi 0, %s233
      %s248 = sphi 0, %s234
      %s252 = sphi 0, %s252
      %s254 = sphi 0, %s252
      %s255 = sphi 0, %s254
      %s269 = sphi 0, %s255
      %s273 = sphi 0, %s273
      %s275 = sphi 0, %s273
      %s276 = sphi 0, %s275
      %s290 = sphi 0, %s276
      %s294 = sphi 0, %s294
      %s296 = sphi 0, %s294
      %s297 = sphi 0, %s296
      %s311 = sphi 0, %s297
      %s315 = sphi 0, %s315
      %s317 = sphi 0, %s315
      %s318 = sphi 0, %s317
      %s332 = sphi 0, %s318
      %s336 = sphi 0, %s336
      %s338 = sphi 0, %s336
      %s339 = sphi 0, %s338
      %s353 = sphi 0, %s339
      %s357 = sphi 0, %s357
      %s359 = sphi 0, %s357
      %s360 = sphi 0, %s359
      %s374 = sphi 0, %s360
      %s378 = sphi 0, %s378
      %s380 = sphi 0, %s378
      %s381 = sphi 0, %s380
      %s395 = sphi 0, %s381
      %s399 = sphi 0, %s399
      %s401 = sphi 0, %s399
      %s402 = sphi 0, %s401
      %s416 = sphi 0, %s402
      %s420 = sphi 0, %s420
      %s422 = sphi 0, %s420
      %s423 = sphi 0, %s422
      %s437 = sphi 0, %s423
      %s441 = sphi 0, %s441
      %s443 = sphi 0, %s441
      %s444 = sphi 0, %s443
      %s458 = sphi 0, %s444
      %s462 = sphi 0, %s462
      %s464 = sphi 0, %s462
      %s465 = sphi 0, %s464
      %s479 = sphi 0, %s465
      %s485 = sphi 0, %s487
      %s488 = sphi 0, %s485
      %s489 = sphi 0, %s488
      %s505 = sphi 0, %s489
    $region4: #{node_decoder_layer.1} parent=1 // loop_header_branch
      %33 = sbr.rel (%p31) target = $region8
    $region5: #{node_decoder_layer.1} parent=1 // loop_body
      %s35 = ssub.s32 %s30, 1
      %s36 = ssub.s32 %s30, 2
      %s37 = sadd.s32 %s30, 1
      %s39 = sadd.s32 %s38, 1
      %p42 = scmp.eq.s32.totalorder %s30, 1
      %p43 = scmp.ne.s32.totalorder %s38, %s40
      %p44 = scmp.eq.s32.totalorder %s30, 0
      %p45 = por %p43, %p44
      %p46 = scmp.ne.s32.totalorder %s38, %s40
      %p47 = scmp.eq.s32.totalorder %s35, 1
      %p48 = por %p46, %p47
      %p49 = scmp.ne.s32.totalorder %s40, %s41
      %p50 = scmp.eq.s32.totalorder %s35, 0
      %p51 = por %p49, %p50
      %p52 = scmp.ne.s32.totalorder %s40, %s41
      %p53 = scmp.eq.s32.totalorder %s36, 1
      %p54 = por %p52, %p53
      %p56 = scmp.ne.s32.totalorder %s41, %s55
      %p57 = scmp.eq.s32.totalorder %s36, 0
      %p58 = por %p56, %p57
      %s59 = ssub.s32 %s30, %s37
      %p60 = scmp.eq.s32.totalorder %s59, 0
      %s62 = sadd.s32 %s61, 1
      %s63 = scalar_select %p60, %s61, %s62
      %p66 = pneg %p60
      %p67 = scmp.eq.s32.totalorder %s30, 1
      %p68 = por %p66, %p67
      %p69 = scmp.ne.s32.totalorder %s61, %s64
      %p70 = scmp.eq.s32.totalorder %s30, 0
      %p71 = por %p69, %p70
      %p72 = scmp.ne.s32.totalorder %s61, %s64
      %p73 = scmp.eq.s32.totalorder %s35, 1
      %p74 = por %p72, %p73
      %p75 = scmp.ne.s32.totalorder %s64, %s65
      %p76 = scmp.eq.s32.totalorder %s35, 0
      %p77 = por %p75, %p76
      %p78 = scmp.ne.s32.totalorder %s64, %s65
      %p79 = scmp.eq.s32.totalorder %s36, 1
      %p80 = por %p78, %p79
      %p82 = scmp.ne.s32.totalorder %s65, %s81
      %p83 = scmp.eq.s32.totalorder %s36, 0
      %p84 = por %p82, %p83
      %s85 = ssub.s32 %s30, %s37
      %p86 = scmp.eq.s32.totalorder %s85, 0
      %s88 = sadd.s32 %s87, 1
      %s89 = scalar_select %p86, %s87, %s88
      %p92 = pneg %p86
      %p93 = scmp.eq.s32.totalorder %s30, 1
      %p94 = por %p92, %p93
      %p95 = scmp.ne.s32.totalorder %s87, %s90
      %p96 = scmp.eq.s32.totalorder %s30, 0
      %p97 = por %p95, %p96
      %p98 = scmp.ne.s32.totalorder %s87, %s90
      %p99 = scmp.eq.s32.totalorder %s35, 1
      %p100 = por %p98, %p99
      %p101 = scmp.ne.s32.totalorder %s90, %s91
      %p102 = scmp.eq.s32.totalorder %s35, 0
      %p103 = por %p101, %p102
      %p104 = scmp.ne.s32.totalorder %s90, %s91
      %p105 = scmp.eq.s32.totalorder %s36, 1
      %p106 = por %p104, %p105
      %p108 = scmp.ne.s32.totalorder %s91, %s107
      %p109 = scmp.eq.s32.totalorder %s36, 0
      %p110 = por %p108, %p109
      %s111 = ssub.s32 %s30, %s37
      %p112 = scmp.eq.s32.totalorder %s111, 0
      %s114 = sadd.s32 %s113, 1
      %s115 = scalar_select %p112, %s113, %s114
      %p118 = pneg %p112
      %p119 = scmp.eq.s32.totalorder %s30, 1
      %p120 = por %p118, %p119
      %p121 = scmp.ne.s32.totalorder %s113, %s116
      %p122 = scmp.eq.s32.totalorder %s30, 0
      %p123 = por %p121, %p122
      %p124 = scmp.ne.s32.totalorder %s113, %s116
      %p125 = scmp.eq.s32.totalorder %s35, 1
      %p126 = por %p124, %p125
      %p127 = scmp.ne.s32.totalorder %s116, %s117
      %p128 = scmp.eq.s32.totalorder %s35, 0
      %p129 = por %p127, %p128
      %p130 = scmp.ne.s32.totalorder %s116, %s117
      %p131 = scmp.eq.s32.totalorder %s36, 1
      %p132 = por %p130, %p131
      %p134 = scmp.ne.s32.totalorder %s117, %s133
      %p135 = scmp.eq.s32.totalorder %s36, 0
      %p136 = por %p134, %p135
      %s137 = ssub.s32 %s30, %s37
      %p138 = scmp.eq.s32.totalorder %s137, 0
      %s140 = sadd.s32 %s139, 1
      %s141 = scalar_select %p138, %s139, %s140
      %p144 = pneg %p138
      %p145 = scmp.eq.s32.totalorder %s30, 1
      %p146 = por %p144, %p145
      %p147 = scmp.ne.s32.totalorder %s139, %s142
      %p148 = scmp.eq.s32.totalorder %s30, 0
      %p149 = por %p147, %p148
      %p150 = scmp.ne.s32.totalorder %s139, %s142
      %p151 = scmp.eq.s32.totalorder %s35, 1
      %p152 = por %p150, %p151
      %p153 = scmp.ne.s32.totalorder %s142, %s143
      %p154 = scmp.eq.s32.totalorder %s35, 0
      %p155 = por %p153, %p154
      %p156 = scmp.ne.s32.totalorder %s142, %s143
      %p157 = scmp.eq.s32.totalorder %s36, 1
      %p158 = por %p156, %p157
      %p160 = scmp.ne.s32.totalorder %s143, %s159
      %p161 = scmp.eq.s32.totalorder %s36, 0
      %p162 = por %p160, %p161
      %s163 = ssub.s32 %s30, %s37
      %p164 = scmp.eq.s32.totalorder %s163, 0
      %s166 = sadd.s32 %s165, 1
      %s167 = scalar_select %p164, %s165, %s166
      %p170 = pneg %p164
      %p171 = scmp.eq.s32.totalorder %s30, 1
      %p172 = por %p170, %p171
      %p173 = scmp.ne.s32.totalorder %s165, %s168
      %p174 = scmp.eq.s32.totalorder %s30, 0
      %p175 = por %p173, %p174
      %p176 = scmp.ne.s32.totalorder %s165, %s168
      %p177 = scmp.eq.s32.totalorder %s35, 1
      %p178 = por %p176, %p177
      %p179 = scmp.ne.s32.totalorder %s168, %s169
      %p180 = scmp.eq.s32.totalorder %s35, 0
      %p181 = por %p179, %p180
      %p182 = scmp.ne.s32.totalorder %s168, %s169
      %p183 = scmp.eq.s32.totalorder %s36, 1
      %p184 = por %p182, %p183
      %p186 = scmp.ne.s32.totalorder %s169, %s185
      %p187 = scmp.eq.s32.totalorder %s36, 0
      %p188 = por %p186, %p187
      %s190 = sadd.s32 %s189, 1
      %p193 = scmp.eq.s32.totalorder %s30, 1
      %p194 = scmp.ne.s32.totalorder %s189, %s191
      %p195 = scmp.eq.s32.totalorder %s30, 0
      %p196 = por %p194, %p195
      %p197 = scmp.ne.s32.totalorder %s189, %s191
      %p198 = scmp.eq.s32.totalorder %s35, 1
      %p199 = por %p197, %p198
      %p200 = scmp.ne.s32.totalorder %s191, %s192
      %p201 = scmp.eq.s32.totalorder %s35, 0
      %p202 = por %p200, %p201
      %p203 = scmp.ne.s32.totalorder %s191, %s192
      %p204 = scmp.eq.s32.totalorder %s36, 1
      %p205 = por %p203, %p204
      %p207 = scmp.ne.s32.totalorder %s192, %s206
      %p208 = scmp.eq.s32.totalorder %s36, 0
      %p209 = por %p207, %p208
      %s211 = sadd.s32 %s210, 1
      %p214 = scmp.eq.s32.totalorder %s30, 1
      %p215 = scmp.ne.s32.totalorder %s210, %s212
      %p216 = scmp.eq.s32.totalorder %s30, 0
      %p217 = por %p215, %p216
      %p218 = scmp.ne.s32.totalorder %s210, %s212
      %p219 = scmp.eq.s32.totalorder %s35, 1
      %p220 = por %p218, %p219
      %p221 = scmp.ne.s32.totalorder %s212, %s213
      %p222 = scmp.eq.s32.totalorder %s35, 0
      %p223 = por %p221, %p222
      %p224 = scmp.ne.s32.totalorder %s212, %s213
      %p225 = scmp.eq.s32.totalorder %s36, 1
      %p226 = por %p224, %p225
      %p228 = scmp.ne.s32.totalorder %s213, %s227
      %p229 = scmp.eq.s32.totalorder %s36, 0
      %p230 = por %p228, %p229
      %s232 = sadd.s32 %s231, 1
      %p235 = scmp.eq.s32.totalorder %s30, 1
      %p236 = scmp.ne.s32.totalorder %s231, %s233
      %p237 = scmp.eq.s32.totalorder %s30, 0
      %p238 = por %p236, %p237
      %p239 = scmp.ne.s32.totalorder %s231, %s233
      %p240 = scmp.eq.s32.totalorder %s35, 1
      %p241 = por %p239, %p240
      %p242 = scmp.ne.s32.totalorder %s233, %s234
      %p243 = scmp.eq.s32.totalorder %s35, 0
      %p244 = por %p242, %p243
      %p245 = scmp.ne.s32.totalorder %s233, %s234
      %p246 = scmp.eq.s32.totalorder %s36, 1
      %p247 = por %p245, %p246
      %p249 = scmp.ne.s32.totalorder %s234, %s248
      %p250 = scmp.eq.s32.totalorder %s36, 0
      %p251 = por %p249, %p250
      %s253 = sadd.s32 %s252, 1
      %p256 = scmp.eq.s32.totalorder %s30, 1
      %p257 = scmp.ne.s32.totalorder %s252, %s254
      %p258 = scmp.eq.s32.totalorder %s30, 0
      %p259 = por %p257, %p258
      %p260 = scmp.ne.s32.totalorder %s252, %s254
      %p261 = scmp.eq.s32.totalorder %s35, 1
      %p262 = por %p260, %p261
      %p263 = scmp.ne.s32.totalorder %s254, %s255
      %p264 = scmp.eq.s32.totalorder %s35, 0
      %p265 = por %p263, %p264
      %p266 = scmp.ne.s32.totalorder %s254, %s255
      %p267 = scmp.eq.s32.totalorder %s36, 1
      %p268 = por %p266, %p267
      %p270 = scmp.ne.s32.totalorder %s255, %s269
      %p271 = scmp.eq.s32.totalorder %s36, 0
      %p272 = por %p270, %p271
      %s274 = sadd.s32 %s273, 1
      %p277 = scmp.eq.s32.totalorder %s30, 1
      %p278 = scmp.ne.s32.totalorder %s273, %s275
      %p279 = scmp.eq.s32.totalorder %s30, 0
      %p280 = por %p278, %p279
      %p281 = scmp.ne.s32.totalorder %s273, %s275
      %p282 = scmp.eq.s32.totalorder %s35, 1
      %p283 = por %p281, %p282
      %p284 = scmp.ne.s32.totalorder %s275, %s276
      %p285 = scmp.eq.s32.totalorder %s35, 0
      %p286 = por %p284, %p285
      %p287 = scmp.ne.s32.totalorder %s275, %s276
      %p288 = scmp.eq.s32.totalorder %s36, 1
      %p289 = por %p287, %p288
      %p291 = scmp.ne.s32.totalorder %s276, %s290
      %p292 = scmp.eq.s32.totalorder %s36, 0
      %p293 = por %p291, %p292
      %s295 = sadd.s32 %s294, 1
      %p298 = scmp.eq.s32.totalorder %s30, 1
      %p299 = scmp.ne.s32.totalorder %s294, %s296
      %p300 = scmp.eq.s32.totalorder %s30, 0
      %p301 = por %p299, %p300
      %p302 = scmp.ne.s32.totalorder %s294, %s296
      %p303 = scmp.eq.s32.totalorder %s35, 1
      %p304 = por %p302, %p303
      %p305 = scmp.ne.s32.totalorder %s296, %s297
      %p306 = scmp.eq.s32.totalorder %s35, 0
      %p307 = por %p305, %p306
      %p308 = scmp.ne.s32.totalorder %s296, %s297
      %p309 = scmp.eq.s32.totalorder %s36, 1
      %p310 = por %p308, %p309
      %p312 = scmp.ne.s32.totalorder %s297, %s311
      %p313 = scmp.eq.s32.totalorder %s36, 0
      %p314 = por %p312, %p313
      %s316 = sadd.s32 %s315, 1
      %p319 = scmp.eq.s32.totalorder %s30, 1
      %p320 = scmp.ne.s32.totalorder %s315, %s317
      %p321 = scmp.eq.s32.totalorder %s30, 0
      %p322 = por %p320, %p321
      %p323 = scmp.ne.s32.totalorder %s315, %s317
      %p324 = scmp.eq.s32.totalorder %s35, 1
      %p325 = por %p323, %p324
      %p326 = scmp.ne.s32.totalorder %s317, %s318
      %p327 = scmp.eq.s32.totalorder %s35, 0
      %p328 = por %p326, %p327
      %p329 = scmp.ne.s32.totalorder %s317, %s318
      %p330 = scmp.eq.s32.totalorder %s36, 1
      %p331 = por %p329, %p330
      %p333 = scmp.ne.s32.totalorder %s318, %s332
      %p334 = scmp.eq.s32.totalorder %s36, 0
      %p335 = por %p333, %p334
      %s337 = sadd.s32 %s336, 1
      %p340 = scmp.eq.s32.totalorder %s30, 1
      %p341 = scmp.ne.s32.totalorder %s336, %s338
      %p342 = scmp.eq.s32.totalorder %s30, 0
      %p343 = por %p341, %p342
      %p344 = scmp.ne.s32.totalorder %s336, %s338
      %p345 = scmp.eq.s32.totalorder %s35, 1
      %p346 = por %p344, %p345
      %p347 = scmp.ne.s32.totalorder %s338, %s339
      %p348 = scmp.eq.s32.totalorder %s35, 0
      %p349 = por %p347, %p348
      %p350 = scmp.ne.s32.totalorder %s338, %s339
      %p351 = scmp.eq.s32.totalorder %s36, 1
      %p352 = por %p350, %p351
      %p354 = scmp.ne.s32.totalorder %s339, %s353
      %p355 = scmp.eq.s32.totalorder %s36, 0
      %p356 = por %p354, %p355
      %s358 = sadd.s32 %s357, 1
      %p361 = scmp.eq.s32.totalorder %s30, 1
      %p362 = scmp.ne.s32.totalorder %s357, %s359
      %p363 = scmp.eq.s32.totalorder %s30, 0
      %p364 = por %p362, %p363
      %p365 = scmp.ne.s32.totalorder %s357, %s359
      %p366 = scmp.eq.s32.totalorder %s35, 1
      %p367 = por %p365, %p366
      %p368 = scmp.ne.s32.totalorder %s359, %s360
      %p369 = scmp.eq.s32.totalorder %s35, 0
      %p370 = por %p368, %p369
      %p371 = scmp.ne.s32.totalorder %s359, %s360
      %p372 = scmp.eq.s32.totalorder %s36, 1
      %p373 = por %p371, %p372
      %p375 = scmp.ne.s32.totalorder %s360, %s374
      %p376 = scmp.eq.s32.totalorder %s36, 0
      %p377 = por %p375, %p376
      %s379 = sadd.s32 %s378, 1
      %p382 = scmp.eq.s32.totalorder %s30, 1
      %p383 = scmp.ne.s32.totalorder %s378, %s380
      %p384 = scmp.eq.s32.totalorder %s30, 0
      %p385 = por %p383, %p384
      %p386 = scmp.ne.s32.totalorder %s378, %s380
      %p387 = scmp.eq.s32.totalorder %s35, 1
      %p388 = por %p386, %p387
      %p389 = scmp.ne.s32.totalorder %s380, %s381
      %p390 = scmp.eq.s32.totalorder %s35, 0
      %p391 = por %p389, %p390
      %p392 = scmp.ne.s32.totalorder %s380, %s381
      %p393 = scmp.eq.s32.totalorder %s36, 1
      %p394 = por %p392, %p393
      %p396 = scmp.ne.s32.totalorder %s381, %s395
      %p397 = scmp.eq.s32.totalorder %s36, 0
      %p398 = por %p396, %p397
      %s400 = sadd.s32 %s399, 1
      %p403 = scmp.eq.s32.totalorder %s30, 1
      %p404 = scmp.ne.s32.totalorder %s399, %s401
      %p405 = scmp.eq.s32.totalorder %s30, 0
      %p406 = por %p404, %p405
      %p407 = scmp.ne.s32.totalorder %s399, %s401
      %p408 = scmp.eq.s32.totalorder %s35, 1
      %p409 = por %p407, %p408
      %p410 = scmp.ne.s32.totalorder %s401, %s402
      %p411 = scmp.eq.s32.totalorder %s35, 0
      %p412 = por %p410, %p411
      %p413 = scmp.ne.s32.totalorder %s401, %s402
      %p414 = scmp.eq.s32.totalorder %s36, 1
      %p415 = por %p413, %p414
      %p417 = scmp.ne.s32.totalorder %s402, %s416
      %p418 = scmp.eq.s32.totalorder %s36, 0
      %p419 = por %p417, %p418
      %s421 = sadd.s32 %s420, 1
      %p424 = scmp.eq.s32.totalorder %s30, 1
      %p425 = scmp.ne.s32.totalorder %s420, %s422
      %p426 = scmp.eq.s32.totalorder %s30, 0
      %p427 = por %p425, %p426
      %p428 = scmp.ne.s32.totalorder %s420, %s422
      %p429 = scmp.eq.s32.totalorder %s35, 1
      %p430 = por %p428, %p429
      %p431 = scmp.ne.s32.totalorder %s422, %s423
      %p432 = scmp.eq.s32.totalorder %s35, 0
      %p433 = por %p431, %p432
      %p434 = scmp.ne.s32.totalorder %s422, %s423
      %p435 = scmp.eq.s32.totalorder %s36, 1
      %p436 = por %p434, %p435
      %p438 = scmp.ne.s32.totalorder %s423, %s437
      %p439 = scmp.eq.s32.totalorder %s36, 0
      %p440 = por %p438, %p439
      %s442 = sadd.s32 %s441, 1
      %p445 = scmp.eq.s32.totalorder %s30, 1
      %p446 = scmp.ne.s32.totalorder %s441, %s443
      %p447 = scmp.eq.s32.totalorder %s30, 0
      %p448 = por %p446, %p447
      %p449 = scmp.ne.s32.totalorder %s441, %s443
      %p450 = scmp.eq.s32.totalorder %s35, 1
      %p451 = por %p449, %p450
      %p452 = scmp.ne.s32.totalorder %s443, %s444
      %p453 = scmp.eq.s32.totalorder %s35, 0
      %p454 = por %p452, %p453
      %p455 = scmp.ne.s32.totalorder %s443, %s444
      %p456 = scmp.eq.s32.totalorder %s36, 1
      %p457 = por %p455, %p456
      %p459 = scmp.ne.s32.totalorder %s444, %s458
      %p460 = scmp.eq.s32.totalorder %s36, 0
      %p461 = por %p459, %p460
      %s463 = sadd.s32 %s462, 1
      %p466 = scmp.eq.s32.totalorder %s30, 1
      %p467 = scmp.ne.s32.totalorder %s462, %s464
      %p468 = scmp.eq.s32.totalorder %s30, 0
      %p469 = por %p467, %p468
      %p470 = scmp.ne.s32.totalorder %s462, %s464
      %p471 = scmp.eq.s32.totalorder %s35, 1
      %p472 = por %p470, %p471
      %p473 = scmp.ne.s32.totalorder %s464, %s465
      %p474 = scmp.eq.s32.totalorder %s35, 0
      %p475 = por %p473, %p474
      %p476 = scmp.ne.s32.totalorder %s464, %s465
      %p477 = scmp.eq.s32.totalorder %s36, 1
      %p478 = por %p476, %p477
      %p480 = scmp.ne.s32.totalorder %s465, %s479
      %p481 = scmp.eq.s32.totalorder %s36, 0
      %p482 = por %p480, %p481
      %s483 = ssub.s32 %s30, %s37
      %p484 = scmp.eq.s32.totalorder %s483, 0
      %s486 = sadd.s32 %s485, 1
      %s487 = scalar_select %p484, %s485, %s486
      %p490 = pneg %p484
      %p491 = scmp.eq.s32.totalorder %s30, 1
      %p492 = por %p490, %p491
      %p493 = scmp.ne.s32.totalorder %s485, %s488
      %p494 = scmp.eq.s32.totalorder %s30, 0
      %p495 = por %p493, %p494
      %p496 = scmp.ne.s32.totalorder %s485, %s488
      %p497 = scmp.eq.s32.totalorder %s35, 1
      %p498 = por %p496, %p497
      %p499 = scmp.ne.s32.totalorder %s488, %s489
      %p500 = scmp.eq.s32.totalorder %s35, 0
      %p501 = por %p499, %p500
      %p502 = scmp.ne.s32.totalorder %s488, %s489
      %p503 = scmp.eq.s32.totalorder %s36, 1
      %p504 = por %p502, %p503
      %p506 = scmp.ne.s32.totalorder %s489, %s505
      %p507 = scmp.eq.s32.totalorder %s36, 0
      %p508 = por %p506, %p507
      %p509 = scmp.le.s32.totalorder 1, %s30
      %p510 = scmp.lt.s32.totalorder %s30, 3
      %p511 = pnand %p509, %p510
      %p512 = pneg %p511
      // Predicated region
      $region9: #{node_decoder_layer.1} parent=5 // pred_check
        _
      $region10: #{node_decoder_layer.1} parent=5 // pred_check_branch
        %514 = sbr.rel (%p511) target = $region12
      $region11: #{node_decoder_layer.1} parent=5 // pred_region
        %s515 = ssub.s32 %s30, 1
        // Predicated region
        $region13: #{node_decoder_layer.1} parent=11 // pred_check
          %p516 = pneg %p51
        $region14: #{node_decoder_layer.1} parent=11 // pred_check_branch
          %518 = sbr.rel (%p516) target = $region16
        $region15: #{node_decoder_layer.1} parent=11 // pred_region
          %s520 = ssub.s32 16, 16
          %521 = vsyncadd [#allocation4], %s520
          %s523 = sshll.u32 %s0, 4
          %s524 = int_to_ptr.vmem [resolvable:$true] %s523
          %526 = dma.vmem_to_smem %s524, 16, [#allocation2], [#allocation4]
        $region16: #{node_decoder_layer.1} parent=11 // pred_fallthru
          _
        // Predicated region
        $region17: #{node_decoder_layer.1} parent=11 // pred_check
          %p527 = pneg %p202
        $region18: #{node_decoder_layer.1} parent=11 // pred_check_branch
          %529 = sbr.rel (%p527) target = $region20
        $region19: #{node_decoder_layer.1} parent=11 // pred_region
          _
        $region20: #{node_decoder_layer.1} parent=11 // pred_fallthru
          _
        // Predicated region
        $region21: #{node_decoder_layer.1} parent=11 // pred_check
          %p530 = pneg %p223
        $region22: #{node_decoder_layer.1} parent=11 // pred_check_branch
          %532 = sbr.rel (%p530) target = $region24
        $region23: #{node_decoder_layer.1} parent=11 // pred_region
          _
        $region24: #{node_decoder_layer.1} parent=11 // pred_fallthru
          _
        // Predicated region
        $region25: #{node_decoder_layer.1} parent=11 // pred_check
          %p533 = pneg %p244
        $region26: #{node_decoder_layer.1} parent=11 // pred_check_branch
          %535 = sbr.rel (%p533) target = $region28
        $region27: #{node_decoder_layer.1} parent=11 // pred_region
          _
        $region28: #{node_decoder_layer.1} parent=11 // pred_fallthru
          _
        // Predicated region
        $region29: #{node_decoder_layer.1} parent=11 // pred_check
          %p536 = pneg %p265
        $region30: #{node_decoder_layer.1} parent=11 // pred_check_branch
          %538 = sbr.rel (%p536) target = $region32
        $region31: #{node_decoder_layer.1} parent=11 // pred_region
          _
        $region32: #{node_decoder_layer.1} parent=11 // pred_fallthru
          _
        // Predicated region
        $region33: #{node_decoder_layer.1} parent=11 // pred_check
          %p539 = pneg %p286
        $region34: #{node_decoder_layer.1} parent=11 // pred_check_branch
          %541 = sbr.rel (%p539) target = $region36
        $region35: #{node_decoder_layer.1} parent=11 // pred_region
          _
        $region36: #{node_decoder_layer.1} parent=11 // pred_fallthru
          _
        // Predicated region
        $region37: #{node_decoder_layer.1} parent=11 // pred_check
          %p542 = pneg %p307
        $region38: #{node_decoder_layer.1} parent=11 // pred_check_branch
          %544 = sbr.rel (%p542) target = $region40
        $region39: #{node_decoder_layer.1} parent=11 // pred_region
          _
        $region40: #{node_decoder_layer.1} parent=11 // pred_fallthru
          _
        // Predicated region
        $region41: #{node_decoder_layer.1} parent=11 // pred_check
          %p545 = pneg %p328
        $region42: #{node_decoder_layer.1} parent=11 // pred_check_branch
          %547 = sbr.rel (%p545) target = $region44
        $region43: #{node_decoder_layer.1} parent=11 // pred_region
          _
        $region44: #{node_decoder_layer.1} parent=11 // pred_fallthru
          _
        // Predicated region
        $region45: #{node_decoder_layer.1} parent=11 // pred_check
          %p548 = pneg %p349
        $region46: #{node_decoder_layer.1} parent=11 // pred_check_branch
          %550 = sbr.rel (%p548) target = $region48
        $region47: #{node_decoder_layer.1} parent=11 // pred_region
          _
        $region48: #{node_decoder_layer.1} parent=11 // pred_fallthru
          _
        // Predicated region
        $region49: #{node_decoder_layer.1} parent=11 // pred_check
          %p551 = pneg %p370
        $region50: #{node_decoder_layer.1} parent=11 // pred_check_branch
          %553 = sbr.rel (%p551) target = $region52
        $region51: #{node_decoder_layer.1} parent=11 // pred_region
          _
        $region52: #{node_decoder_layer.1} parent=11 // pred_fallthru
          _
        // Predicated region
        $region53: #{node_decoder_layer.1} parent=11 // pred_check
          %p554 = pneg %p391
        $region54: #{node_decoder_layer.1} parent=11 // pred_check_branch
          %556 = sbr.rel (%p554) target = $region56
        $region55: #{node_decoder_layer.1} parent=11 // pred_region
          _
        $region56: #{node_decoder_layer.1} parent=11 // pred_fallthru
          _
        // Predicated region
        $region57: #{node_decoder_layer.1} parent=11 // pred_check
          %p557 = pneg %p412
        $region58: #{node_decoder_layer.1} parent=11 // pred_check_branch
          %559 = sbr.rel (%p557) target = $region60
        $region59: #{node_decoder_layer.1} parent=11 // pred_region
          _
        $region60: #{node_decoder_layer.1} parent=11 // pred_fallthru
          _
        // Predicated region
        $region61: #{node_decoder_layer.1} parent=11 // pred_check
          %p560 = pneg %p433
        $region62: #{node_decoder_layer.1} parent=11 // pred_check_branch
          %562 = sbr.rel (%p560) target = $region64
        $region63: #{node_decoder_layer.1} parent=11 // pred_region
          _
        $region64: #{node_decoder_layer.1} parent=11 // pred_fallthru
          _
        // Predicated region
        $region65: #{node_decoder_layer.1} parent=11 // pred_check
          %p563 = pneg %p454
        $region66: #{node_decoder_layer.1} parent=11 // pred_check_branch
          %565 = sbr.rel (%p563) target = $region68
        $region67: #{node_decoder_layer.1} parent=11 // pred_region
          _
        $region68: #{node_decoder_layer.1} parent=11 // pred_fallthru
          _
        // Predicated region
        $region69: #{node_decoder_layer.1} parent=11 // pred_check
          %p566 = pneg %p475
        $region70: #{node_decoder_layer.1} parent=11 // pred_check_branch
          %568 = sbr.rel (%p566) target = $region72
        $region71: #{node_decoder_layer.1} parent=11 // pred_region
          _
        $region72: #{node_decoder_layer.1} parent=11 // pred_fallthru
          _
      $region12: #{node_decoder_layer.1} parent=5 // pred_fallthru
        _
      %p569 = scmp.lt.s32.totalorder %s30, 2
      // Predicated region
      $region73: #{node_decoder_layer.1} parent=5 // pred_check
        %p570 = pneg %p569
      $region74: #{node_decoder_layer.1} parent=5 // pred_check_branch
        %572 = sbr.rel (%p570) target = $region76
      $region75: #{node_decoder_layer.1} parent=5 // pred_region
        // Predicated region
        $region77: #{node_decoder_layer.1} parent=75 // pred_check
          %p573 = pneg %p71
        $region78: #{node_decoder_layer.1} parent=75 // pred_check_branch
          %575 = sbr.rel (%p573) target = $region80
        $region79: #{node_decoder_layer.1} parent=75 // pred_region
          %p576 = scmp.lt.s32.totalorder %s30, 1
          %s577 = scalar_select %p576, %s30, 1
          %s578 = smul.addr %s577, 8
          %s579 = scalar_lea.vmem %s1, %s578
        $region80: #{node_decoder_layer.1} parent=75 // pred_fallthru
          _
        // Predicated region
        $region81: #{node_decoder_layer.1} parent=75 // pred_check
          %p580 = pneg %p97
        $region82: #{node_decoder_layer.1} parent=75 // pred_check_branch
          %582 = sbr.rel (%p580) target = $region84
        $region83: #{node_decoder_layer.1} parent=75 // pred_region
          %p583 = scmp.lt.s32.totalorder %s30, 1
          %s584 = scalar_select %p583, %s30, 1
          %s585 = smul.addr %s584, 8
          %s586 = scalar_lea.vmem %s2, %s585
        $region84: #{node_decoder_layer.1} parent=75 // pred_fallthru
          _
        // Predicated region
        $region85: #{node_decoder_layer.1} parent=75 // pred_check
          %p587 = pneg %p123
        $region86: #{node_decoder_layer.1} parent=75 // pred_check_branch
          %589 = sbr.rel (%p587) target = $region88
        $region87: #{node_decoder_layer.1} parent=75 // pred_region
          %p590 = scmp.lt.s32.totalorder %s30, 1
          %s591 = scalar_select %p590, %s30, 1
          %s592 = smul.addr %s591, 8
          %s593 = scalar_lea.vmem %s3, %s592
        $region88: #{node_decoder_layer.1} parent=75 // pred_fallthru
          _
        // Predicated region
        $region89: #{node_decoder_layer.1} parent=75 // pred_check
          %p594 = pneg %p149
        $region90: #{node_decoder_layer.1} parent=75 // pred_check_branch
          %596 = sbr.rel (%p594) target = $region92
        $region91: #{node_decoder_layer.1} parent=75 // pred_region
          %p597 = scmp.lt.s32.totalorder %s30, 1
          %s598 = scalar_select %p597, %s30, 1
          %s599 = smul.addr %s598, 8
          %s600 = scalar_lea.vmem %s4, %s599
        $region92: #{node_decoder_layer.1} parent=75 // pred_fallthru
          _
        // Predicated region
        $region93: #{node_decoder_layer.1} parent=75 // pred_check
          %p601 = pneg %p175
        $region94: #{node_decoder_layer.1} parent=75 // pred_check_branch
          %603 = sbr.rel (%p601) target = $region96
        $region95: #{node_decoder_layer.1} parent=75 // pred_region
          %p604 = scmp.lt.s32.totalorder %s30, 1
          %s605 = scalar_select %p604, %s30, 1
          %s606 = smul.addr %s605, 8
          %s607 = scalar_lea.vmem %s5, %s606
        $region96: #{node_decoder_layer.1} parent=75 // pred_fallthru
          _
      $region76: #{node_decoder_layer.1} parent=5 // pred_fallthru
        _
      %p608 = scmp.le.s32.totalorder 1, %s30
      %p609 = scmp.lt.s32.totalorder %s30, 3
      %p610 = pnand %p608, %p609
      %p611 = pneg %p610
      // Predicated region
      $region97: #{node_decoder_layer.1} parent=5 // pred_check
        _
      $region98: #{node_decoder_layer.1} parent=5 // pred_check_branch
        %613 = sbr.rel (%p610) target = $region100
      $region99: #{node_decoder_layer.1} parent=5 // pred_region
        %s614 = ssub.s32 %s30, 1
        // Predicated region
        $region101: #{node_decoder_layer.1} parent=99 // pred_check
          %p615 = pneg %p51
        $region102: #{node_decoder_layer.1} parent=99 // pred_check_branch
          %617 = sbr.rel (%p615) target = $region104
        $region103: #{node_decoder_layer.1} parent=99 // pred_region
          %618 = dma.done [#allocation4], 16
        $region104: #{node_decoder_layer.1} parent=99 // pred_fallthru
          _
        %619 = sfence
        %p620 = pneg %p51
        %p621 = pneg %p48
        %p622 = scmp.lt.s32.totalorder %s35, 1
        %s623 = scalar_select %p622, %s35, 1
        %s624 = smul.addr %s623, 8
        %s625 = scalar_lea.vmem %s1, %s624
        %p626 = pneg %p77
        %p627 = pneg %p74
        %p628 = scmp.lt.s32.totalorder %s35, 1
        %s629 = scalar_select %p628, %s35, 1
        %s630 = smul.addr %s629, 8
        %s631 = scalar_lea.vmem %s2, %s630
        %p632 = pneg %p103
        %p633 = pneg %p100
        %p634 = scmp.lt.s32.totalorder %s35, 1
        %s635 = scalar_select %p634, %s35, 1
        %s636 = smul.addr %s635, 8
        %s637 = scalar_lea.vmem %s3, %s636
        %p638 = pneg %p129
        %p639 = pneg %p126
        %p640 = scmp.lt.s32.totalorder %s35, 1
        %s641 = scalar_select %p640, %s35, 1
        %s642 = smul.addr %s641, 8
        %s643 = scalar_lea.vmem %s4, %s642
        %p644 = pneg %p155
        %p645 = pneg %p152
        %p646 = scmp.lt.s32.totalorder %s35, 1
        %s647 = scalar_select %p646, %s35, 1
        %s648 = smul.addr %s647, 8
        %s649 = scalar_lea.vmem %s5, %s648
        %p650 = pneg %p181
        %p651 = pneg %p178
        %p652 = pneg %p202
        %p653 = pneg %p199
        %p654 = pneg %p223
        %p655 = pneg %p220
        %p656 = pneg %p244
        %p657 = pneg %p241
        %p658 = pneg %p265
        %p659 = pneg %p262
        %p660 = pneg %p286
        %p661 = pneg %p283
        %p662 = pneg %p307
        %p663 = pneg %p304
        %p664 = pneg %p328
        %p665 = pneg %p325
        %p666 = pneg %p349
        %p667 = pneg %p346
        %p668 = pneg %p370
        %p669 = pneg %p367
        %p670 = pneg %p391
        %p671 = pneg %p388
        %p672 = pneg %p412
        %p673 = pneg %p409
        %p674 = pneg %p433
        %p675 = pneg %p430
        %p676 = pneg %p454
        %p677 = pneg %p451
        %p678 = pneg %p475
        %p679 = pneg %p472
        %p680 = pneg %p501
        %p681 = pneg %p498
        %s682 = sand.u32 %s488, 1
        %s683 = scalar_lea.sflag [#allocation3], %s682
        %s684 = sand.u32 %s488, 1
        %s685 = smul.addr %s684, 8
        %s686 = scalar_lea.vmem [#allocation5], %s685
        %p687 = scmp.lt.s32.totalorder %s35, 1
        %s688 = scalar_select %p687, %s35, 1
        %s689 = smul.addr %s688, 8
        %s690 = scalar_lea.vmem %s1, %s689
        %p691 = scmp.lt.s32.totalorder %s35, 1
        %s692 = scalar_select %p691, %s35, 1
        %s693 = smul.addr %s692, 8
        %s694 = scalar_lea.vmem %s2, %s693
        %p695 = scmp.lt.s32.totalorder %s35, 1
        %s696 = scalar_select %p695, %s35, 1
        %s697 = smul.addr %s696, 8
        %s698 = scalar_lea.vmem %s3, %s697
        %p699 = scmp.lt.s32.totalorder %s35, 1
        %s700 = scalar_select %p699, %s35, 1
        %s701 = smul.addr %s700, 8
        %s702 = scalar_lea.vmem %s4, %s701
        %p703 = scmp.lt.s32.totalorder %s35, 1
        %s704 = scalar_select %p703, %s35, 1
        %s705 = smul.addr %s704, 8
        %s706 = scalar_lea.vmem %s5, %s705
        %v707 = vld [vmem:[%s694] sm:$0xff]
        %v708 = vld [vmem:[%s698] sm:$0xff]
        %v709 = vld [vmem:[%s702] sm:$0xff]
        %v710 = vld [vmem:[%s706] sm:$0xff]
        %v711 = vld [vmem:[%s6] sm:$0xff]
        %v712 = vld [vmem:[%s6 + $0x8] sm:$0xff]
        %v713 = vld [vmem:[%s6 + $0x10] sm:$0xff]
        %v714 = vld [vmem:[%s6 + $0x18] sm:$0xff]
        %v715 = vld [vmem:[%s7] sm:$0x1]
        %v716 = vld [vmem:[%s8] sm:$0xff]
        %v717 = vld [vmem:[%s8 + $0x8] sm:$0xff]
        %v718 = vld [vmem:[%s8 + $0x10] sm:$0xff]
        %v719 = vld [vmem:[%s8 + $0x18] sm:$0xff]
        %v720 = vld [vmem:[%s9] sm:$0x1]
        %v721 = vld [vmem:[%s10] sm:$0xff]
        %v722 = vld [vmem:[%s10 + $0x8] sm:$0xff]
        %v723 = vld [vmem:[%s10 + $0x10] sm:$0xff]
        %v724 = vld [vmem:[%s10 + $0x18] sm:$0xff]
        %v725 = vld [vmem:[%s11] sm:$0x1]
        %v726 = vld [vmem:[%s12] sm:$0xff]
        %v727 = vld [vmem:[%s12 + $0x8] sm:$0xff]
        %v728 = vld [vmem:[%s12 + $0x10] sm:$0xff]
        %v729 = vld [vmem:[%s12 + $0x18] sm:$0xff]
        %v730 = vld [vmem:[%s13] sm:$0x1]
        %v731 = vld [vmem:[%s14] sm:$0xff]
        %v732 = vld [vmem:[%s14 + $0x8] sm:$0xff]
        %v733 = vld [vmem:[%s14 + $0x10] sm:$0xff]
        %v734 = vld [vmem:[%s14 + $0x18] sm:$0xff]
        %v735 = vld [vmem:[%s15] sm:$0x1]
        %v736 = vld [vmem:[%s16] sm:$0xff]
        %v737 = vld [vmem:[%s16 + $0x8] sm:$0xff]
        %v738 = vld [vmem:[%s16 + $0x10] sm:$0xff]
        %v739 = vld [vmem:[%s16 + $0x18] sm:$0xff]
        %v740 = vld [vmem:[%s16 + $0x20] sm:$0xff]
        %v741 = vld [vmem:[%s16 + $0x28] sm:$0xff]
        %v742 = vld [vmem:[%s16 + $0x30] sm:$0xff]
        %v743 = vld [vmem:[%s16 + $0x38] sm:$0xff]
        %v744 = vld [vmem:[%s17] sm:$0x1]
        %v745 = vld [vmem:[%s18] sm:$0x1]
        %v746 = vld [vmem:[%s19] sm:$0x1]
        %v748 = vlaneseq
        %v749 = vshrl.u32 %v748, 7
        %v750 = vsub.s32 0, %v749
        %v751 = vrot.slane %v725, %v750
        %756 = vrot.lane.b32.xlu0 %v721, 96
        %v757 = vpop.permute.xlu0 %756
        %758 = vrot.lane.b32.xlu0 %v722, 96
        %v759 = vpop.permute.xlu0 %758
        %760 = vrot.lane.b32.xlu0 %v723, 96
        %v761 = vpop.permute.xlu0 %760
        %762 = vrot.lane.b32.xlu0 %v724, 96
        %v763 = vpop.permute.xlu0 %762
        %768 = vrot.lane.b32.xlu0 %v751, 96
        %v769 = vpop.permute.xlu0 %768
        %vm771 = vcmask 261120
        %v773 = vsel %vm771, %v707, 0
        %775 = vmatprep.subr.mxu0 0.0
        %776 = vmatpush1.msra.mxu0 0.0
        %777 = vmatprep.subr.mxu0 0.0
        %778 = vmatpush1.msra.mxu0 0.0
        %779 = vmatprep.subr.mxu0 0.0
        %780 = vmatpush1.msra.mxu0 0.0
        %781 = vmatprep.subr.mxu0 0.0
        %782 = vmatpush1.msra.mxu0 0.0
        %783 = vmatprep.subr.mxu0 0.0
        %784 = vmatpush1.msra.mxu0 0.0
        %785 = vmatprep.subr.mxu0 0.0
        %786 = vmatpush1.msra.mxu0 0.0
        %787 = vmatprep.subr.mxu0 0.0
        %788 = vmatpush1.msra.mxu0 0.0
        %789 = vmatprep.subr.mxu0 0.0
        %790 = vmatpush1.msra.mxu0 0.0
        %791 = vmatprep.subr.mxu0 0.0
        %792 = vmatpush1.msra.mxu0 0.0
        %793 = vmatprep.subr.mxu0 0.0
        %794 = vmatpush1.msra.mxu0 0.0
        %795 = vmatprep.subr.mxu0 0.0
        %796 = vmatpush1.msra.mxu0 0.0
        %797 = vmatprep.subr.mxu0 0.0
        %798 = vmatpush1.msra.mxu0 0.0
        %799 = vmatprep.subr.mxu0 0.0
        %800 = vmatpush1.msra.mxu0 %v763
        %801 = vmatprep.subr.mxu0 0.0
        %802 = vmatpush1.msra.mxu0 %v761
        %803 = vmatprep.subr.mxu0 0.0
        %804 = vmatpush1.msra.mxu0 %v759
        %805 = vmatprep.subr.mxu0 0.0
        %806 = vmatpush1.msra.mxu0 %v757
        %807 = vmatprep.subr.mxu0 0.0
        %808 = vmatpush2.msra.mxu0 0.0
        %809 = vmatprep.subr.mxu0 0.0
        %810 = vmatpush2.msra.mxu0 0.0
        %811 = vmatprep.subr.mxu0 0.0
        %812 = vmatpush2.msra.mxu0 0.0
        %813 = vmatprep.subr.mxu0 0.0
        %814 = vmatpush2.msra.mxu0 0.0
        %815 = vmatprep.subr.mxu0 0.0
        %816 = vmatpush2.msra.mxu0 0.0
        %817 = vmatprep.subr.mxu0 0.0
        %818 = vmatpush2.msra.mxu0 0.0
        %819 = vmatprep.subr.mxu0 0.0
        %820 = vmatpush2.msra.mxu0 0.0
        %821 = vmatprep.subr.mxu0 0.0
        %822 = vmatpush2.msra.mxu0 0.0
        %823 = vmatprep.subr.mxu0 0.0
        %824 = vmatpush2.msra.mxu0 0.0
        %825 = vmatprep.subr.mxu0 0.0
        %826 = vmatpush2.msra.mxu0 0.0
        %827 = vmatprep.subr.mxu0 0.0
        %828 = vmatpush2.msra.mxu0 0.0
        %829 = vmatprep.subr.mxu0 0.0
        %830 = vmatpush2.msra.mxu0 0.0
        %831 = vmatprep.subr.mxu0 0.0
        %832 = vmatpush2.msra.mxu0 0.0
        %833 = vmatprep.subr.mxu0 0.0
        %834 = vmatpush2.msra.mxu0 0.0
        %835 = vmatprep.subr.mxu0 0.0
        %836 = vmatpush2.msra.mxu0 0.0
        %837 = vmatprep.subr.mxu0 0.0
        %838 = vmatpush2.msra.mxu0 0.0
        %839 = vmatprep.mubr.f32.mxu0 0.0
        %840 = vmatmul.mubr.f32.gmra.mxu0 %v773
        %v841 = vpop.f32.mrf.mxu0
        %v842 = vadd.f32 %v769, %v841
        %v843 = vpop.f32.mrf.mxu0
        %844 = vdwg.mxu0
        %v845 = vld [vmem:[%s690] sm:$0xff]
        %s846 = sld [smem:[#allocation2]]
        %s847 = sld [smem:[#allocation2 + $0x1]]
        %s848 = ssub.f32 %s847, %s846
        %s849 = smul.f32 %s848, 0.5
        %s850 = smul.f32 %s849, 0.5
        %s851 = smul.f32 %s849, 0.16666667
        loop: start=0, step=1, limit=2
        $region105: #{node_decoder_layer.1} parent=99 // loop_pre_header
          _
        $region106: #{node_decoder_layer.1} parent=99 // loop_header
          %s853 = sphi 0, %s857
          %p854 = scmp.ge.s32.totalorder %s853, 2
          %v858 = vphi %v845, %v6099
        $region107: #{node_decoder_layer.1} parent=99 // loop_header_branch
          %856 = sbr.rel (%p854) target = $region111
        $region108: #{node_decoder_layer.1} parent=99 // loop_body
          %s859 = scvt.s32.f32 %s853
          %s860 = smul.f32 %s849, %s859
          %s861 = sadd.f32 %s846, %s860
          %v862 = vstv %s861
          %v863 = vadd.f32 %v858, %v862
          %v865 = vlaneseq
          %v866 = vshrl.u32 %v865, 7
          %v867 = vsub.s32 0, %v866
          %v868 = vrot.slane %v715, %v867
          %v871 = vsel %vm771, %v863, 0
          %873 = vmatprep.subr.mxu0 0.0
          %874 = vmatpush1.msra.mxu0 0.0
          %875 = vmatprep.subr.mxu0 0.0
          %876 = vmatpush1.msra.mxu0 0.0
          %877 = vmatprep.subr.mxu0 0.0
          %878 = vmatpush1.msra.mxu0 0.0
          %879 = vmatprep.subr.mxu0 0.0
          %880 = vmatpush1.msra.mxu0 0.0
          %881 = vmatprep.subr.mxu0 0.0
          %882 = vmatpush1.msra.mxu0 0.0
          %883 = vmatprep.subr.mxu0 0.0
          %884 = vmatpush1.msra.mxu0 0.0
          %885 = vmatprep.subr.mxu0 0.0
          %886 = vmatpush1.msra.mxu0 0.0
          %887 = vmatprep.subr.mxu0 0.0
          %888 = vmatpush1.msra.mxu0 0.0
          %889 = vmatprep.subr.mxu0 0.0
          %890 = vmatpush1.msra.mxu0 0.0
          %891 = vmatprep.subr.mxu0 0.0
          %892 = vmatpush1.msra.mxu0 0.0
          %893 = vmatprep.subr.mxu0 0.0
          %894 = vmatpush1.msra.mxu0 0.0
          %895 = vmatprep.subr.mxu0 0.0
          %896 = vmatpush1.msra.mxu0 0.0
          %897 = vmatprep.subr.mxu0 0.0
          %898 = vmatpush1.msra.mxu0 %v714
          %899 = vmatprep.subr.mxu0 0.0
          %900 = vmatpush1.msra.mxu0 %v713
          %901 = vmatprep.subr.mxu0 0.0
          %902 = vmatpush1.msra.mxu0 %v712
          %903 = vmatprep.subr.mxu0 0.0
          %904 = vmatpush1.msra.mxu0 %v711
          %905 = vmatprep.subr.mxu0 0.0
          %906 = vmatpush2.msra.mxu0 0.0
          %907 = vmatprep.subr.mxu0 0.0
          %908 = vmatpush2.msra.mxu0 0.0
          %909 = vmatprep.subr.mxu0 0.0
          %910 = vmatpush2.msra.mxu0 0.0
          %911 = vmatprep.subr.mxu0 0.0
          %912 = vmatpush2.msra.mxu0 0.0
          %913 = vmatprep.subr.mxu0 0.0
          %914 = vmatpush2.msra.mxu0 0.0
          %915 = vmatprep.subr.mxu0 0.0
          %916 = vmatpush2.msra.mxu0 0.0
          %917 = vmatprep.subr.mxu0 0.0
          %918 = vmatpush2.msra.mxu0 0.0
          %919 = vmatprep.subr.mxu0 0.0
          %920 = vmatpush2.msra.mxu0 0.0
          %921 = vmatprep.subr.mxu0 0.0
          %922 = vmatpush2.msra.mxu0 0.0
          %923 = vmatprep.subr.mxu0 0.0
          %924 = vmatpush2.msra.mxu0 0.0
          %925 = vmatprep.subr.mxu0 0.0
          %926 = vmatpush2.msra.mxu0 0.0
          %927 = vmatprep.subr.mxu0 0.0
          %928 = vmatpush2.msra.mxu0 0.0
          %929 = vmatprep.subr.mxu0 0.0
          %930 = vmatpush2.msra.mxu0 0.0
          %931 = vmatprep.subr.mxu0 0.0
          %932 = vmatpush2.msra.mxu0 0.0
          %933 = vmatprep.subr.mxu0 0.0
          %934 = vmatpush2.msra.mxu0 0.0
          %935 = vmatprep.subr.mxu0 0.0
          %936 = vmatpush2.msra.mxu0 0.0
          %937 = vmatprep.mubr.f32.mxu0 0.0
          %938 = vmatmul.mubr.f32.gmra.mxu0 %v871
          %v939 = vpop.f32.mrf.mxu0
          %v940 = vadd.f32 %v868, %v939
          %v941 = vpop.f32.mrf.mxu0
          %942 = vdwg.mxu0
          %944 = vrot.lane.b32.xlu0 %v940, 96
          %v945 = vpop.permute.xlu0 %944
          %vm946 = vcmask 130048
          %v947 = vsel %vm946, %v940, 0
          %v949 = vsel %vm946, %v945, 0
          %951 = vmatprep.subr.mxu0 0.0
          %952 = vmatpush1.xpose.msra.mxu0 0.0
          %953 = vmatprep.subr.mxu0 0.0
          %954 = vmatpush1.xpose.msra.mxu0 0.0
          %955 = vmatprep.subr.mxu0 0.0
          %956 = vmatpush1.xpose.msra.mxu0 0.0
          %957 = vmatprep.subr.mxu0 0.0
          %958 = vmatpush1.xpose.msra.mxu0 0.0
          %959 = vmatprep.subr.mxu0 0.0
          %960 = vmatpush1.xpose.msra.mxu0 0.0
          %961 = vmatprep.subr.mxu0 0.0
          %962 = vmatpush1.xpose.msra.mxu0 0.0
          %963 = vmatprep.subr.mxu0 0.0
          %964 = vmatpush1.xpose.msra.mxu0 0.0
          %965 = vmatprep.subr.mxu0 0.0
          %966 = vmatpush1.xpose.msra.mxu0 0.0
          %967 = vmatprep.subr.mxu0 0.0
          %968 = vmatpush1.xpose.msra.mxu0 0.0
          %969 = vmatprep.subr.mxu0 0.0
          %970 = vmatpush1.xpose.msra.mxu0 0.0
          %971 = vmatprep.subr.mxu0 0.0
          %972 = vmatpush1.xpose.msra.mxu0 0.0
          %973 = vmatprep.subr.mxu0 0.0
          %974 = vmatpush1.xpose.msra.mxu0 0.0
          %975 = vmatprep.subr.mxu0 0.0
          %976 = vmatpush1.xpose.msra.mxu0 0.0
          %977 = vmatprep.subr.mxu0 0.0
          %978 = vmatpush1.xpose.msra.mxu0 0.0
          %979 = vmatprep.subr.mxu0 0.0
          %980 = vmatpush1.xpose.msra.mxu0 0.0
          %981 = vmatprep.subr.mxu0 0.0
          %982 = vmatpush1.xpose.msra.mxu0 %v949
          %983 = vmatprep.subr.mxu0 0.0
          %984 = vmatpush2.xpose.msra.mxu0 0.0
          %985 = vmatprep.subr.mxu0 0.0
          %986 = vmatpush2.xpose.msra.mxu0 0.0
          %987 = vmatprep.subr.mxu0 0.0
          %988 = vmatpush2.xpose.msra.mxu0 0.0
          %989 = vmatprep.subr.mxu0 0.0
          %990 = vmatpush2.xpose.msra.mxu0 0.0
          %991 = vmatprep.subr.mxu0 0.0
          %992 = vmatpush2.xpose.msra.mxu0 0.0
          %993 = vmatprep.subr.mxu0 0.0
          %994 = vmatpush2.xpose.msra.mxu0 0.0
          %995 = vmatprep.subr.mxu0 0.0
          %996 = vmatpush2.xpose.msra.mxu0 0.0
          %997 = vmatprep.subr.mxu0 0.0
          %998 = vmatpush2.xpose.msra.mxu0 0.0
          %999 = vmatprep.subr.mxu0 0.0
          %1000 = vmatpush2.xpose.msra.mxu0 0.0
          %1001 = vmatprep.subr.mxu0 0.0
          %1002 = vmatpush2.xpose.msra.mxu0 0.0
          %1003 = vmatprep.subr.mxu0 0.0
          %1004 = vmatpush2.xpose.msra.mxu0 0.0
          %1005 = vmatprep.subr.mxu0 0.0
          %1006 = vmatpush2.xpose.msra.mxu0 0.0
          %1007 = vmatprep.subr.mxu0 0.0
          %1008 = vmatpush2.xpose.msra.mxu0 0.0
          %1009 = vmatprep.subr.mxu0 0.0
          %1010 = vmatpush2.xpose.msra.mxu0 0.0
          %1011 = vmatprep.subr.mxu0 0.0
          %1012 = vmatpush2.xpose.msra.mxu0 0.0
          %1013 = vmatprep.subr.mxu0 0.0
          %1014 = vmatpush2.xpose.msra.mxu0 0.0
          %1015 = vmatprep.mubr.f32.mxu0 0.0
          %1016 = vmatmul.mubr.f32.gmra.mxu0 %v947
          %v1017 = vpop.f32.mrf.mxu0
          %v1018 = vadd.f32 0.0, %v1017
          %v1019 = vpop.f32.mrf.mxu0
          %1020 = vdwg.mxu0
          %v1021 = vmul.f32 %v1018, 0.25
          %v1022 = vadd.f32 %v1021, %v709
          %vm1023 = vcmask 64512
          %v1024 = vsel %vm1023, %v1022, -inf
          %1025 = vmax.xlane.f32.xlu0 %v1024
          %v1026 = vpop.xlane.xlu0 %1025
          %v1027 = vsub.f32 %v1022, %v1026
          %v1028 = vmul.f32 %v1027, 1.442695
          %v1029 = vpow.pop %v1028
          %v1030 = vsel %vm1023, %v1029, 0.0
          %1031 = vadd.xlane.f32.xlu0 %v1030
          %v1032 = vpop.xlane.xlu0 %1031
          %v1033 = vrcp.pop %v1032
          %v1034 = vmul.f32 %v1029, %v1033
          %1035 = vrot.lane.b32.xlu0 %v940, 64
          %v1036 = vpop.permute.xlu0 %1035
          %v1039 = vsel %vm1023, %v1034, 0
          %1041 = vmatprep.subr.mxu0 0.0
          %1042 = vmatpush1.msra.mxu0 0.0
          %1043 = vmatprep.subr.mxu0 0.0
          %1044 = vmatpush1.msra.mxu0 0.0
          %1045 = vmatprep.subr.mxu0 0.0
          %1046 = vmatpush1.msra.mxu0 0.0
          %1047 = vmatprep.subr.mxu0 0.0
          %1048 = vmatpush1.msra.mxu0 0.0
          %1049 = vmatprep.subr.mxu0 0.0
          %1050 = vmatpush1.msra.mxu0 0.0
          %1051 = vmatprep.subr.mxu0 0.0
          %1052 = vmatpush1.msra.mxu0 0.0
          %1053 = vmatprep.subr.mxu0 0.0
          %1054 = vmatpush1.msra.mxu0 0.0
          %1055 = vmatprep.subr.mxu0 0.0
          %1056 = vmatpush1.msra.mxu0 0.0
          %1057 = vmatprep.subr.mxu0 0.0
          %1058 = vmatpush1.msra.mxu0 0.0
          %1059 = vmatprep.subr.mxu0 0.0
          %1060 = vmatpush1.msra.mxu0 0.0
          %1061 = vmatprep.subr.mxu0 0.0
          %1062 = vmatpush1.msra.mxu0 0.0
          %1063 = vmatprep.subr.mxu0 0.0
          %1064 = vmatpush1.msra.mxu0 0.0
          %1065 = vmatprep.subr.mxu0 0.0
          %1066 = vmatpush1.msra.mxu0 0.0
          %1067 = vmatprep.subr.mxu0 0.0
          %1068 = vmatpush1.msra.mxu0 0.0
          %1069 = vmatprep.subr.mxu0 0.0
          %1070 = vmatpush1.msra.mxu0 0.0
          %1071 = vmatprep.subr.mxu0 0.0
          %1072 = vmatpush1.msra.mxu0 %v1036
          %1073 = vmatprep.subr.mxu0 0.0
          %1074 = vmatpush2.msra.mxu0 0.0
          %1075 = vmatprep.subr.mxu0 0.0
          %1076 = vmatpush2.msra.mxu0 0.0
          %1077 = vmatprep.subr.mxu0 0.0
          %1078 = vmatpush2.msra.mxu0 0.0
          %1079 = vmatprep.subr.mxu0 0.0
          %1080 = vmatpush2.msra.mxu0 0.0
          %1081 = vmatprep.subr.mxu0 0.0
          %1082 = vmatpush2.msra.mxu0 0.0
          %1083 = vmatprep.subr.mxu0 0.0
          %1084 = vmatpush2.msra.mxu0 0.0
          %1085 = vmatprep.subr.mxu0 0.0
          %1086 = vmatpush2.msra.mxu0 0.0
          %1087 = vmatprep.subr.mxu0 0.0
          %1088 = vmatpush2.msra.mxu0 0.0
          %1089 = vmatprep.subr.mxu0 0.0
          %1090 = vmatpush2.msra.mxu0 0.0
          %1091 = vmatprep.subr.mxu0 0.0
          %1092 = vmatpush2.msra.mxu0 0.0
          %1093 = vmatprep.subr.mxu0 0.0
          %1094 = vmatpush2.msra.mxu0 0.0
          %1095 = vmatprep.subr.mxu0 0.0
          %1096 = vmatpush2.msra.mxu0 0.0
          %1097 = vmatprep.subr.mxu0 0.0
          %1098 = vmatpush2.msra.mxu0 0.0
          %1099 = vmatprep.subr.mxu0 0.0
          %1100 = vmatpush2.msra.mxu0 0.0
          %1101 = vmatprep.subr.mxu0 0.0
          %1102 = vmatpush2.msra.mxu0 0.0
          %1103 = vmatprep.subr.mxu0 0.0
          %1104 = vmatpush2.msra.mxu0 0.0
          %1105 = vmatprep.mubr.f32.mxu0 0.0
          %1106 = vmatmul.mubr.f32.gmra.mxu0 %v1039
          %v1107 = vpop.f32.mrf.mxu0
          %v1108 = vadd.f32 0.0, %v1107
          %v1109 = vpop.f32.mrf.mxu0
          %1110 = vdwg.mxu0
          %1111 = vrot.lane.b32.xlu0 %v940, 112
          %v1112 = vpop.permute.xlu0 %1111
          %1113 = vrot.lane.b32.xlu0 %v940, 80
          %v1114 = vpop.permute.xlu0 %1113
          %v1115 = vsel %vm946, %v1112, 0
          %v1117 = vsel %vm946, %v1114, 0
          %1119 = vmatprep.subr.mxu0 0.0
          %1120 = vmatpush1.xpose.msra.mxu0 0.0
          %1121 = vmatprep.subr.mxu0 0.0
          %1122 = vmatpush1.xpose.msra.mxu0 0.0
          %1123 = vmatprep.subr.mxu0 0.0
          %1124 = vmatpush1.xpose.msra.mxu0 0.0
          %1125 = vmatprep.subr.mxu0 0.0
          %1126 = vmatpush1.xpose.msra.mxu0 0.0
          %1127 = vmatprep.subr.mxu0 0.0
          %1128 = vmatpush1.xpose.msra.mxu0 0.0
          %1129 = vmatprep.subr.mxu0 0.0
          %1130 = vmatpush1.xpose.msra.mxu0 0.0
          %1131 = vmatprep.subr.mxu0 0.0
          %1132 = vmatpush1.xpose.msra.mxu0 0.0
          %1133 = vmatprep.subr.mxu0 0.0
          %1134 = vmatpush1.xpose.msra.mxu0 0.0
          %1135 = vmatprep.subr.mxu0 0.0
          %1136 = vmatpush1.xpose.msra.mxu0 0.0
          %1137 = vmatprep.subr.mxu0 0.0
          %1138 = vmatpush1.xpose.msra.mxu0 0.0
          %1139 = vmatprep.subr.mxu0 0.0
          %1140 = vmatpush1.xpose.msra.mxu0 0.0
          %1141 = vmatprep.subr.mxu0 0.0
          %1142 = vmatpush1.xpose.msra.mxu0 0.0
          %1143 = vmatprep.subr.mxu0 0.0
          %1144 = vmatpush1.xpose.msra.mxu0 0.0
          %1145 = vmatprep.subr.mxu0 0.0
          %1146 = vmatpush1.xpose.msra.mxu0 0.0
          %1147 = vmatprep.subr.mxu0 0.0
          %1148 = vmatpush1.xpose.msra.mxu0 0.0
          %1149 = vmatprep.subr.mxu0 0.0
          %1150 = vmatpush1.xpose.msra.mxu0 %v1117
          %1151 = vmatprep.subr.mxu0 0.0
          %1152 = vmatpush2.xpose.msra.mxu0 0.0
          %1153 = vmatprep.subr.mxu0 0.0
          %1154 = vmatpush2.xpose.msra.mxu0 0.0
          %1155 = vmatprep.subr.mxu0 0.0
          %1156 = vmatpush2.xpose.msra.mxu0 0.0
          %1157 = vmatprep.subr.mxu0 0.0
          %1158 = vmatpush2.xpose.msra.mxu0 0.0
          %1159 = vmatprep.subr.mxu0 0.0
          %1160 = vmatpush2.xpose.msra.mxu0 0.0
          %1161 = vmatprep.subr.mxu0 0.0
          %1162 = vmatpush2.xpose.msra.mxu0 0.0
          %1163 = vmatprep.subr.mxu0 0.0
          %1164 = vmatpush2.xpose.msra.mxu0 0.0
          %1165 = vmatprep.subr.mxu0 0.0
          %1166 = vmatpush2.xpose.msra.mxu0 0.0
          %1167 = vmatprep.subr.mxu0 0.0
          %1168 = vmatpush2.xpose.msra.mxu0 0.0
          %1169 = vmatprep.subr.mxu0 0.0
          %1170 = vmatpush2.xpose.msra.mxu0 0.0
          %1171 = vmatprep.subr.mxu0 0.0
          %1172 = vmatpush2.xpose.msra.mxu0 0.0
          %1173 = vmatprep.subr.mxu0 0.0
          %1174 = vmatpush2.xpose.msra.mxu0 0.0
          %1175 = vmatprep.subr.mxu0 0.0
          %1176 = vmatpush2.xpose.msra.mxu0 0.0
          %1177 = vmatprep.subr.mxu0 0.0
          %1178 = vmatpush2.xpose.msra.mxu0 0.0
          %1179 = vmatprep.subr.mxu0 0.0
          %1180 = vmatpush2.xpose.msra.mxu0 0.0
          %1181 = vmatprep.subr.mxu0 0.0
          %1182 = vmatpush2.xpose.msra.mxu0 0.0
          %1183 = vmatprep.mubr.f32.mxu0 0.0
          %1184 = vmatmul.mubr.f32.gmra.mxu0 %v1115
          %v1185 = vpop.f32.mrf.mxu0
          %v1186 = vadd.f32 0.0, %v1185
          %v1187 = vpop.f32.mrf.mxu0
          %1188 = vdwg.mxu0
          %v1189 = vmul.f32 %v1186, 0.25
          %v1190 = vadd.f32 %v1189, %v709
          %v1191 = vsel %vm1023, %v1190, -inf
          %1192 = vmax.xlane.f32.xlu0 %v1191
          %v1193 = vpop.xlane.xlu0 %1192
          %v1194 = vsub.f32 %v1190, %v1193
          %v1195 = vmul.f32 %v1194, 1.442695
          %v1196 = vpow.pop %v1195
          %v1197 = vsel %vm1023, %v1196, 0.0
          %1198 = vadd.xlane.f32.xlu0 %v1197
          %v1199 = vpop.xlane.xlu0 %1198
          %v1200 = vrcp.pop %v1199
          %v1201 = vmul.f32 %v1196, %v1200
          %1202 = vrot.lane.b32.xlu0 %v940, 48
          %v1203 = vpop.permute.xlu0 %1202
          %v1206 = vsel %vm1023, %v1201, 0
          %1208 = vmatprep.subr.mxu0 0.0
          %1209 = vmatpush1.msra.mxu0 0.0
          %1210 = vmatprep.subr.mxu0 0.0
          %1211 = vmatpush1.msra.mxu0 0.0
          %1212 = vmatprep.subr.mxu0 0.0
          %1213 = vmatpush1.msra.mxu0 0.0
          %1214 = vmatprep.subr.mxu0 0.0
          %1215 = vmatpush1.msra.mxu0 0.0
          %1216 = vmatprep.subr.mxu0 0.0
          %1217 = vmatpush1.msra.mxu0 0.0
          %1218 = vmatprep.subr.mxu0 0.0
          %1219 = vmatpush1.msra.mxu0 0.0
          %1220 = vmatprep.subr.mxu0 0.0
          %1221 = vmatpush1.msra.mxu0 0.0
          %1222 = vmatprep.subr.mxu0 0.0
          %1223 = vmatpush1.msra.mxu0 0.0
          %1224 = vmatprep.subr.mxu0 0.0
          %1225 = vmatpush1.msra.mxu0 0.0
          %1226 = vmatprep.subr.mxu0 0.0
          %1227 = vmatpush1.msra.mxu0 0.0
          %1228 = vmatprep.subr.mxu0 0.0
          %1229 = vmatpush1.msra.mxu0 0.0
          %1230 = vmatprep.subr.mxu0 0.0
          %1231 = vmatpush1.msra.mxu0 0.0
          %1232 = vmatprep.subr.mxu0 0.0
          %1233 = vmatpush1.msra.mxu0 0.0
          %1234 = vmatprep.subr.mxu0 0.0
          %1235 = vmatpush1.msra.mxu0 0.0
          %1236 = vmatprep.subr.mxu0 0.0
          %1237 = vmatpush1.msra.mxu0 0.0
          %1238 = vmatprep.subr.mxu0 0.0
          %1239 = vmatpush1.msra.mxu0 %v1203
          %1240 = vmatprep.subr.mxu0 0.0
          %1241 = vmatpush2.msra.mxu0 0.0
          %1242 = vmatprep.subr.mxu0 0.0
          %1243 = vmatpush2.msra.mxu0 0.0
          %1244 = vmatprep.subr.mxu0 0.0
          %1245 = vmatpush2.msra.mxu0 0.0
          %1246 = vmatprep.subr.mxu0 0.0
          %1247 = vmatpush2.msra.mxu0 0.0
          %1248 = vmatprep.subr.mxu0 0.0
          %1249 = vmatpush2.msra.mxu0 0.0
          %1250 = vmatprep.subr.mxu0 0.0
          %1251 = vmatpush2.msra.mxu0 0.0
          %1252 = vmatprep.subr.mxu0 0.0
          %1253 = vmatpush2.msra.mxu0 0.0
          %1254 = vmatprep.subr.mxu0 0.0
          %1255 = vmatpush2.msra.mxu0 0.0
          %1256 = vmatprep.subr.mxu0 0.0
          %1257 = vmatpush2.msra.mxu0 0.0
          %1258 = vmatprep.subr.mxu0 0.0
          %1259 = vmatpush2.msra.mxu0 0.0
          %1260 = vmatprep.subr.mxu0 0.0
          %1261 = vmatpush2.msra.mxu0 0.0
          %1262 = vmatprep.subr.mxu0 0.0
          %1263 = vmatpush2.msra.mxu0 0.0
          %1264 = vmatprep.subr.mxu0 0.0
          %1265 = vmatpush2.msra.mxu0 0.0
          %1266 = vmatprep.subr.mxu0 0.0
          %1267 = vmatpush2.msra.mxu0 0.0
          %1268 = vmatprep.subr.mxu0 0.0
          %1269 = vmatpush2.msra.mxu0 0.0
          %1270 = vmatprep.subr.mxu0 0.0
          %1271 = vmatpush2.msra.mxu0 0.0
          %1272 = vmatprep.mubr.f32.mxu0 0.0
          %1273 = vmatmul.mubr.f32.gmra.mxu0 %v1206
          %v1274 = vpop.f32.mrf.mxu0
          %v1275 = vadd.f32 0.0, %v1274
          %v1276 = vpop.f32.mrf.mxu0
          %1277 = vdwg.mxu0
          %v1279 = vsel %vm946, %v1275, 0
          %1281 = vmatprep.subr.mxu0 0.0
          %1282 = vmatpush1.msra.mxu0 0.0
          %1283 = vmatprep.subr.mxu0 0.0
          %1284 = vmatpush1.msra.mxu0 0.0
          %1285 = vmatprep.subr.mxu0 0.0
          %1286 = vmatpush1.msra.mxu0 0.0
          %1287 = vmatprep.subr.mxu0 0.0
          %1288 = vmatpush1.msra.mxu0 0.0
          %1289 = vmatprep.subr.mxu0 0.0
          %1290 = vmatpush1.msra.mxu0 0.0
          %1291 = vmatprep.subr.mxu0 0.0
          %1292 = vmatpush1.msra.mxu0 0.0
          %1293 = vmatprep.subr.mxu0 0.0
          %1294 = vmatpush1.msra.mxu0 0.0
          %1295 = vmatprep.subr.mxu0 0.0
          %1296 = vmatpush1.msra.mxu0 0.0
          %1297 = vmatprep.subr.mxu0 0.0
          %1298 = vmatpush1.msra.mxu0 0.0
          %1299 = vmatprep.subr.mxu0 0.0
          %1300 = vmatpush1.msra.mxu0 0.0
          %1301 = vmatprep.subr.mxu0 0.0
          %1302 = vmatpush1.msra.mxu0 0.0
          %1303 = vmatprep.subr.mxu0 0.0
          %1304 = vmatpush1.msra.mxu0 0.0
          %1305 = vmatprep.subr.mxu0 0.0
          %1306 = vmatpush1.msra.mxu0 0.0
          %1307 = vmatprep.subr.mxu0 0.0
          %1308 = vmatpush1.msra.mxu0 0.0
          %1309 = vmatprep.subr.mxu0 0.0
          %1310 = vmatpush1.msra.mxu0 %v719
          %1311 = vmatprep.subr.mxu0 0.0
          %1312 = vmatpush1.msra.mxu0 %v718
          %1313 = vmatprep.subr.mxu0 0.0
          %1314 = vmatpush2.msra.mxu0 0.0
          %1315 = vmatprep.subr.mxu0 0.0
          %1316 = vmatpush2.msra.mxu0 0.0
          %1317 = vmatprep.subr.mxu0 0.0
          %1318 = vmatpush2.msra.mxu0 0.0
          %1319 = vmatprep.subr.mxu0 0.0
          %1320 = vmatpush2.msra.mxu0 0.0
          %1321 = vmatprep.subr.mxu0 0.0
          %1322 = vmatpush2.msra.mxu0 0.0
          %1323 = vmatprep.subr.mxu0 0.0
          %1324 = vmatpush2.msra.mxu0 0.0
          %1325 = vmatprep.subr.mxu0 0.0
          %1326 = vmatpush2.msra.mxu0 0.0
          %1327 = vmatprep.subr.mxu0 0.0
          %1328 = vmatpush2.msra.mxu0 0.0
          %1329 = vmatprep.subr.mxu0 0.0
          %1330 = vmatpush2.msra.mxu0 0.0
          %1331 = vmatprep.subr.mxu0 0.0
          %1332 = vmatpush2.msra.mxu0 0.0
          %1333 = vmatprep.subr.mxu0 0.0
          %1334 = vmatpush2.msra.mxu0 0.0
          %1335 = vmatprep.subr.mxu0 0.0
          %1336 = vmatpush2.msra.mxu0 0.0
          %1337 = vmatprep.subr.mxu0 0.0
          %1338 = vmatpush2.msra.mxu0 0.0
          %1339 = vmatprep.subr.mxu0 0.0
          %1340 = vmatpush2.msra.mxu0 0.0
          %1341 = vmatprep.subr.mxu0 0.0
          %1342 = vmatpush2.msra.mxu0 0.0
          %1343 = vmatprep.subr.mxu0 0.0
          %1344 = vmatpush2.msra.mxu0 0.0
          %1345 = vmatprep.mubr.f32.mxu0 0.0
          %1346 = vmatmul.mubr.f32.gmra.mxu0 %v1279
          %v1347 = vpop.f32.mrf.mxu0
          %v1348 = vadd.f32 0.0, %v1347
          %v1349 = vpop.f32.mrf.mxu0
          %1350 = vdwg.mxu0
          %v1352 = vsel %vm946, %v1108, 0
          %1354 = vmatprep.subr.mxu0 0.0
          %1355 = vmatpush1.msra.mxu0 0.0
          %1356 = vmatprep.subr.mxu0 0.0
          %1357 = vmatpush1.msra.mxu0 0.0
          %1358 = vmatprep.subr.mxu0 0.0
          %1359 = vmatpush1.msra.mxu0 0.0
          %1360 = vmatprep.subr.mxu0 0.0
          %1361 = vmatpush1.msra.mxu0 0.0
          %1362 = vmatprep.subr.mxu0 0.0
          %1363 = vmatpush1.msra.mxu0 0.0
          %1364 = vmatprep.subr.mxu0 0.0
          %1365 = vmatpush1.msra.mxu0 0.0
          %1366 = vmatprep.subr.mxu0 0.0
          %1367 = vmatpush1.msra.mxu0 0.0
          %1368 = vmatprep.subr.mxu0 0.0
          %1369 = vmatpush1.msra.mxu0 0.0
          %1370 = vmatprep.subr.mxu0 0.0
          %1371 = vmatpush1.msra.mxu0 0.0
          %1372 = vmatprep.subr.mxu0 0.0
          %1373 = vmatpush1.msra.mxu0 0.0
          %1374 = vmatprep.subr.mxu0 0.0
          %1375 = vmatpush1.msra.mxu0 0.0
          %1376 = vmatprep.subr.mxu0 0.0
          %1377 = vmatpush1.msra.mxu0 0.0
          %1378 = vmatprep.subr.mxu0 0.0
          %1379 = vmatpush1.msra.mxu0 0.0
          %1380 = vmatprep.subr.mxu0 0.0
          %1381 = vmatpush1.msra.mxu0 0.0
          %1382 = vmatprep.subr.mxu0 0.0
          %1383 = vmatpush1.msra.mxu0 %v717
          %1384 = vmatprep.subr.mxu0 0.0
          %1385 = vmatpush1.msra.mxu0 %v716
          %1386 = vmatprep.subr.mxu0 0.0
          %1387 = vmatpush2.msra.mxu0 0.0
          %1388 = vmatprep.subr.mxu0 0.0
          %1389 = vmatpush2.msra.mxu0 0.0
          %1390 = vmatprep.subr.mxu0 0.0
          %1391 = vmatpush2.msra.mxu0 0.0
          %1392 = vmatprep.subr.mxu0 0.0
          %1393 = vmatpush2.msra.mxu0 0.0
          %1394 = vmatprep.subr.mxu0 0.0
          %1395 = vmatpush2.msra.mxu0 0.0
          %1396 = vmatprep.subr.mxu0 0.0
          %1397 = vmatpush2.msra.mxu0 0.0
          %1398 = vmatprep.subr.mxu0 0.0
          %1399 = vmatpush2.msra.mxu0 0.0
          %1400 = vmatprep.subr.mxu0 0.0
          %1401 = vmatpush2.msra.mxu0 0.0
          %1402 = vmatprep.subr.mxu0 0.0
          %1403 = vmatpush2.msra.mxu0 0.0
          %1404 = vmatprep.subr.mxu0 0.0
          %1405 = vmatpush2.msra.mxu0 0.0
          %1406 = vmatprep.subr.mxu0 0.0
          %1407 = vmatpush2.msra.mxu0 0.0
          %1408 = vmatprep.subr.mxu0 0.0
          %1409 = vmatpush2.msra.mxu0 0.0
          %1410 = vmatprep.subr.mxu0 0.0
          %1411 = vmatpush2.msra.mxu0 0.0
          %1412 = vmatprep.subr.mxu0 0.0
          %1413 = vmatpush2.msra.mxu0 0.0
          %1414 = vmatprep.subr.mxu0 0.0
          %1415 = vmatpush2.msra.mxu0 0.0
          %1416 = vmatprep.subr.mxu0 0.0
          %1417 = vmatpush2.msra.mxu0 0.0
          %1418 = vmatprep.mubr.f32.mxu0 0.0
          %1419 = vmatmul.mubr.f32.gmra.mxu0 %v1352
          %v1420 = vpop.f32.mrf.mxu0
          %v1421 = vadd.f32 %v1348, %v1420
          %v1422 = vpop.f32.mrf.mxu0
          %1423 = vdwg.mxu0
          %v1425 = vlaneseq
          %v1426 = vshrl.u32 %v1425, 7
          %v1427 = vsub.s32 0, %v1426
          %v1428 = vrot.slane %v720, %v1427
          %v1430 = vadd.f32 %v1421, %v1428
          %v1431 = vsel %vm771, %v1430, 0.0
          %1432 = vadd.xlane.f32.xlu0 %v1431
          %v1433 = vpop.xlane.xlu0 %1432
          %v1434 = vrcp.pop 32.0
          %v1435 = vmul.f32 %v1433, %v1434
          %v1436 = vsub.f32 %v1430, %v1435
          %v1437 = vmul.f32 %v1436, %v1436
          %v1438 = vsel %vm771, %v1437, 0.0
          %1439 = vadd.xlane.f32.xlu0 %v1438
          %v1440 = vpop.xlane.xlu0 %1439
          %v1441 = vmul.f32 %v1440, %v1434
          %v1442 = vadd.f32 %v1441, 1e-05
          %v1443 = vrsqrt.pop %v1442
          %v1444 = vmul.f32 %v1436, %v1443
          %v1446 = vlaneseq
          %v1447 = vshrl.u32 %v1446, 7
          %v1448 = vsub.s32 0, %v1447
          %v1449 = vrot.slane %v745, %v1448
          %v1451 = vmul.f32 %v1444, %v1449
          %v1453 = vlaneseq
          %v1454 = vshrl.u32 %v1453, 7
          %v1455 = vsub.s32 0, %v1454
          %v1456 = vrot.slane %v746, %v1455
          %v1458 = vadd.f32 %v1451, %v1456
          %1460 = vset.pattern.permute.xlu0 0
          %1461 = vperm.xlu0 %1460, %v708
          %v1462 = vpop.permute.xlu0 %1461
          %v1464 = vmul.f32 %v1458, %v1462
          %v1467 = vsel %vm771, %v1464, 0
          %1469 = vmatprep.subr.mxu0 0.0
          %1470 = vmatpush1.msra.mxu0 0.0
          %1471 = vmatprep.subr.mxu0 0.0
          %1472 = vmatpush1.msra.mxu0 0.0
          %1473 = vmatprep.subr.mxu0 0.0
          %1474 = vmatpush1.msra.mxu0 0.0
          %1475 = vmatprep.subr.mxu0 0.0
          %1476 = vmatpush1.msra.mxu0 0.0
          %1477 = vmatprep.subr.mxu0 0.0
          %1478 = vmatpush1.msra.mxu0 0.0
          %1479 = vmatprep.subr.mxu0 0.0
          %1480 = vmatpush1.msra.mxu0 0.0
          %1481 = vmatprep.subr.mxu0 0.0
          %1482 = vmatpush1.msra.mxu0 0.0
          %1483 = vmatprep.subr.mxu0 0.0
          %1484 = vmatpush1.msra.mxu0 0.0
          %1485 = vmatprep.subr.mxu0 0.0
          %1486 = vmatpush1.msra.mxu0 0.0
          %1487 = vmatprep.subr.mxu0 0.0
          %1488 = vmatpush1.msra.mxu0 0.0
          %1489 = vmatprep.subr.mxu0 0.0
          %1490 = vmatpush1.msra.mxu0 0.0
          %1491 = vmatprep.subr.mxu0 0.0
          %1492 = vmatpush1.msra.mxu0 0.0
          %1493 = vmatprep.subr.mxu0 0.0
          %1494 = vmatpush1.msra.mxu0 %v724
          %1495 = vmatprep.subr.mxu0 0.0
          %1496 = vmatpush1.msra.mxu0 %v723
          %1497 = vmatprep.subr.mxu0 0.0
          %1498 = vmatpush1.msra.mxu0 %v722
          %1499 = vmatprep.subr.mxu0 0.0
          %1500 = vmatpush1.msra.mxu0 %v721
          %1501 = vmatprep.subr.mxu0 0.0
          %1502 = vmatpush2.msra.mxu0 0.0
          %1503 = vmatprep.subr.mxu0 0.0
          %1504 = vmatpush2.msra.mxu0 0.0
          %1505 = vmatprep.subr.mxu0 0.0
          %1506 = vmatpush2.msra.mxu0 0.0
          %1507 = vmatprep.subr.mxu0 0.0
          %1508 = vmatpush2.msra.mxu0 0.0
          %1509 = vmatprep.subr.mxu0 0.0
          %1510 = vmatpush2.msra.mxu0 0.0
          %1511 = vmatprep.subr.mxu0 0.0
          %1512 = vmatpush2.msra.mxu0 0.0
          %1513 = vmatprep.subr.mxu0 0.0
          %1514 = vmatpush2.msra.mxu0 0.0
          %1515 = vmatprep.subr.mxu0 0.0
          %1516 = vmatpush2.msra.mxu0 0.0
          %1517 = vmatprep.subr.mxu0 0.0
          %1518 = vmatpush2.msra.mxu0 0.0
          %1519 = vmatprep.subr.mxu0 0.0
          %1520 = vmatpush2.msra.mxu0 0.0
          %1521 = vmatprep.subr.mxu0 0.0
          %1522 = vmatpush2.msra.mxu0 0.0
          %1523 = vmatprep.subr.mxu0 0.0
          %1524 = vmatpush2.msra.mxu0 0.0
          %1525 = vmatprep.subr.mxu0 0.0
          %1526 = vmatpush2.msra.mxu0 0.0
          %1527 = vmatprep.subr.mxu0 0.0
          %1528 = vmatpush2.msra.mxu0 0.0
          %1529 = vmatprep.subr.mxu0 0.0
          %1530 = vmatpush2.msra.mxu0 0.0
          %1531 = vmatprep.subr.mxu0 0.0
          %1532 = vmatpush2.msra.mxu0 0.0
          %1533 = vmatprep.mubr.f32.mxu0 0.0
          %1534 = vmatmul.mubr.f32.gmra.mxu0 %v1467
          %v1535 = vpop.f32.mrf.mxu0
          %v1536 = vadd.f32 %v751, %v1535
          %v1537 = vpop.f32.mrf.mxu0
          %1538 = vdwg.mxu0
          %v1540 = vsel %vm946, %v1536, 0
          %v1543 = vsel %vm946, %v842, 0
          %1545 = vmatprep.subr.mxu0 0.0
          %1546 = vmatpush1.xpose.msra.mxu0 0.0
          %1547 = vmatprep.subr.mxu0 0.0
          %1548 = vmatpush1.xpose.msra.mxu0 0.0
          %1549 = vmatprep.subr.mxu0 0.0
          %1550 = vmatpush1.xpose.msra.mxu0 0.0
          %1551 = vmatprep.subr.mxu0 0.0
          %1552 = vmatpush1.xpose.msra.mxu0 0.0
          %1553 = vmatprep.subr.mxu0 0.0
          %1554 = vmatpush1.xpose.msra.mxu0 0.0
          %1555 = vmatprep.subr.mxu0 0.0
          %1556 = vmatpush1.xpose.msra.mxu0 0.0
          %1557 = vmatprep.subr.mxu0 0.0
          %1558 = vmatpush1.xpose.msra.mxu0 0.0
          %1559 = vmatprep.subr.mxu0 0.0
          %1560 = vmatpush1.xpose.msra.mxu0 0.0
          %1561 = vmatprep.subr.mxu0 0.0
          %1562 = vmatpush1.xpose.msra.mxu0 0.0
          %1563 = vmatprep.subr.mxu0 0.0
          %1564 = vmatpush1.xpose.msra.mxu0 0.0
          %1565 = vmatprep.subr.mxu0 0.0
          %1566 = vmatpush1.xpose.msra.mxu0 0.0
          %1567 = vmatprep.subr.mxu0 0.0
          %1568 = vmatpush1.xpose.msra.mxu0 0.0
          %1569 = vmatprep.subr.mxu0 0.0
          %1570 = vmatpush1.xpose.msra.mxu0 0.0
          %1571 = vmatprep.subr.mxu0 0.0
          %1572 = vmatpush1.xpose.msra.mxu0 0.0
          %1573 = vmatprep.subr.mxu0 0.0
          %1574 = vmatpush1.xpose.msra.mxu0 0.0
          %1575 = vmatprep.subr.mxu0 0.0
          %1576 = vmatpush1.xpose.msra.mxu0 %v1543
          %1577 = vmatprep.subr.mxu0 0.0
          %1578 = vmatpush2.xpose.msra.mxu0 0.0
          %1579 = vmatprep.subr.mxu0 0.0
          %1580 = vmatpush2.xpose.msra.mxu0 0.0
          %1581 = vmatprep.subr.mxu0 0.0
          %1582 = vmatpush2.xpose.msra.mxu0 0.0
          %1583 = vmatprep.subr.mxu0 0.0
          %1584 = vmatpush2.xpose.msra.mxu0 0.0
          %1585 = vmatprep.subr.mxu0 0.0
          %1586 = vmatpush2.xpose.msra.mxu0 0.0
          %1587 = vmatprep.subr.mxu0 0.0
          %1588 = vmatpush2.xpose.msra.mxu0 0.0
          %1589 = vmatprep.subr.mxu0 0.0
          %1590 = vmatpush2.xpose.msra.mxu0 0.0
          %1591 = vmatprep.subr.mxu0 0.0
          %1592 = vmatpush2.xpose.msra.mxu0 0.0
          %1593 = vmatprep.subr.mxu0 0.0
          %1594 = vmatpush2.xpose.msra.mxu0 0.0
          %1595 = vmatprep.subr.mxu0 0.0
          %1596 = vmatpush2.xpose.msra.mxu0 0.0
          %1597 = vmatprep.subr.mxu0 0.0
          %1598 = vmatpush2.xpose.msra.mxu0 0.0
          %1599 = vmatprep.subr.mxu0 0.0
          %1600 = vmatpush2.xpose.msra.mxu0 0.0
          %1601 = vmatprep.subr.mxu0 0.0
          %1602 = vmatpush2.xpose.msra.mxu0 0.0
          %1603 = vmatprep.subr.mxu0 0.0
          %1604 = vmatpush2.xpose.msra.mxu0 0.0
          %1605 = vmatprep.subr.mxu0 0.0
          %1606 = vmatpush2.xpose.msra.mxu0 0.0
          %1607 = vmatprep.subr.mxu0 0.0
          %1608 = vmatpush2.xpose.msra.mxu0 0.0
          %1609 = vmatprep.mubr.f32.mxu0 0.0
          %1610 = vmatmul.mubr.f32.gmra.mxu0 %v1540
          %v1611 = vpop.f32.mrf.mxu0
          %v1612 = vadd.f32 0.0, %v1611
          %v1613 = vpop.f32.mrf.mxu0
          %1614 = vdwg.mxu0
          %v1615 = vmul.f32 %v1612, 0.25
          %v1616 = vadd.f32 %v1615, %v710
          %v1617 = vsel %vm1023, %v1616, -inf
          %1618 = vmax.xlane.f32.xlu0 %v1617
          %v1619 = vpop.xlane.xlu0 %1618
          %v1620 = vsub.f32 %v1616, %v1619
          %v1621 = vmul.f32 %v1620, 1.442695
          %v1622 = vpow.pop %v1621
          %v1623 = vsel %vm1023, %v1622, 0.0
          %1624 = vadd.xlane.f32.xlu0 %v1623
          %v1625 = vpop.xlane.xlu0 %1624
          %v1626 = vrcp.pop %v1625
          %v1627 = vmul.f32 %v1622, %v1626
          %1628 = vrot.lane.b32.xlu0 %v842, 96
          %v1629 = vpop.permute.xlu0 %1628
          %v1632 = vsel %vm1023, %v1627, 0
          %1634 = vmatprep.subr.mxu0 0.0
          %1635 = vmatpush1.msra.mxu0 0.0
          %1636 = vmatprep.subr.mxu0 0.0
          %1637 = vmatpush1.msra.mxu0 0.0
          %1638 = vmatprep.subr.mxu0 0.0
          %1639 = vmatpush1.msra.mxu0 0.0
          %1640 = vmatprep.subr.mxu0 0.0
          %1641 = vmatpush1.msra.mxu0 0.0
          %1642 = vmatprep.subr.mxu0 0.0
          %1643 = vmatpush1.msra.mxu0 0.0
          %1644 = vmatprep.subr.mxu0 0.0
          %1645 = vmatpush1.msra.mxu0 0.0
          %1646 = vmatprep.subr.mxu0 0.0
          %1647 = vmatpush1.msra.mxu0 0.0
          %1648 = vmatprep.subr.mxu0 0.0
          %1649 = vmatpush1.msra.mxu0 0.0
          %1650 = vmatprep.subr.mxu0 0.0
          %1651 = vmatpush1.msra.mxu0 0.0
          %1652 = vmatprep.subr.mxu0 0.0
          %1653 = vmatpush1.msra.mxu0 0.0
          %1654 = vmatprep.subr.mxu0 0.0
          %1655 = vmatpush1.msra.mxu0 0.0
          %1656 = vmatprep.subr.mxu0 0.0
          %1657 = vmatpush1.msra.mxu0 0.0
          %1658 = vmatprep.subr.mxu0 0.0
          %1659 = vmatpush1.msra.mxu0 0.0
          %1660 = vmatprep.subr.mxu0 0.0
          %1661 = vmatpush1.msra.mxu0 0.0
          %1662 = vmatprep.subr.mxu0 0.0
          %1663 = vmatpush1.msra.mxu0 0.0
          %1664 = vmatprep.subr.mxu0 0.0
          %1665 = vmatpush1.msra.mxu0 %v1629
          %1666 = vmatprep.subr.mxu0 0.0
          %1667 = vmatpush2.msra.mxu0 0.0
          %1668 = vmatprep.subr.mxu0 0.0
          %1669 = vmatpush2.msra.mxu0 0.0
          %1670 = vmatprep.subr.mxu0 0.0
          %1671 = vmatpush2.msra.mxu0 0.0
          %1672 = vmatprep.subr.mxu0 0.0
          %1673 = vmatpush2.msra.mxu0 0.0
          %1674 = vmatprep.subr.mxu0 0.0
          %1675 = vmatpush2.msra.mxu0 0.0
          %1676 = vmatprep.subr.mxu0 0.0
          %1677 = vmatpush2.msra.mxu0 0.0
          %1678 = vmatprep.subr.mxu0 0.0
          %1679 = vmatpush2.msra.mxu0 0.0
          %1680 = vmatprep.subr.mxu0 0.0
          %1681 = vmatpush2.msra.mxu0 0.0
          %1682 = vmatprep.subr.mxu0 0.0
          %1683 = vmatpush2.msra.mxu0 0.0
          %1684 = vmatprep.subr.mxu0 0.0
          %1685 = vmatpush2.msra.mxu0 0.0
          %1686 = vmatprep.subr.mxu0 0.0
          %1687 = vmatpush2.msra.mxu0 0.0
          %1688 = vmatprep.subr.mxu0 0.0
          %1689 = vmatpush2.msra.mxu0 0.0
          %1690 = vmatprep.subr.mxu0 0.0
          %1691 = vmatpush2.msra.mxu0 0.0
          %1692 = vmatprep.subr.mxu0 0.0
          %1693 = vmatpush2.msra.mxu0 0.0
          %1694 = vmatprep.subr.mxu0 0.0
          %1695 = vmatpush2.msra.mxu0 0.0
          %1696 = vmatprep.subr.mxu0 0.0
          %1697 = vmatpush2.msra.mxu0 0.0
          %1698 = vmatprep.mubr.f32.mxu0 0.0
          %1699 = vmatmul.mubr.f32.gmra.mxu0 %v1632
          %v1700 = vpop.f32.mrf.mxu0
          %v1701 = vadd.f32 0.0, %v1700
          %v1702 = vpop.f32.mrf.mxu0
          %1703 = vdwg.mxu0
          %1704 = vrot.lane.b32.xlu0 %v1536, 112
          %v1705 = vpop.permute.xlu0 %1704
          %1706 = vrot.lane.b32.xlu0 %v842, 112
          %v1707 = vpop.permute.xlu0 %1706
          %v1708 = vsel %vm946, %v1705, 0
          %v1710 = vsel %vm946, %v1707, 0
          %1712 = vmatprep.subr.mxu0 0.0
          %1713 = vmatpush1.xpose.msra.mxu0 0.0
          %1714 = vmatprep.subr.mxu0 0.0
          %1715 = vmatpush1.xpose.msra.mxu0 0.0
          %1716 = vmatprep.subr.mxu0 0.0
          %1717 = vmatpush1.xpose.msra.mxu0 0.0
          %1718 = vmatprep.subr.mxu0 0.0
          %1719 = vmatpush1.xpose.msra.mxu0 0.0
          %1720 = vmatprep.subr.mxu0 0.0
          %1721 = vmatpush1.xpose.msra.mxu0 0.0
          %1722 = vmatprep.subr.mxu0 0.0
          %1723 = vmatpush1.xpose.msra.mxu0 0.0
          %1724 = vmatprep.subr.mxu0 0.0
          %1725 = vmatpush1.xpose.msra.mxu0 0.0
          %1726 = vmatprep.subr.mxu0 0.0
          %1727 = vmatpush1.xpose.msra.mxu0 0.0
          %1728 = vmatprep.subr.mxu0 0.0
          %1729 = vmatpush1.xpose.msra.mxu0 0.0
          %1730 = vmatprep.subr.mxu0 0.0
          %1731 = vmatpush1.xpose.msra.mxu0 0.0
          %1732 = vmatprep.subr.mxu0 0.0
          %1733 = vmatpush1.xpose.msra.mxu0 0.0
          %1734 = vmatprep.subr.mxu0 0.0
          %1735 = vmatpush1.xpose.msra.mxu0 0.0
          %1736 = vmatprep.subr.mxu0 0.0
          %1737 = vmatpush1.xpose.msra.mxu0 0.0
          %1738 = vmatprep.subr.mxu0 0.0
          %1739 = vmatpush1.xpose.msra.mxu0 0.0
          %1740 = vmatprep.subr.mxu0 0.0
          %1741 = vmatpush1.xpose.msra.mxu0 0.0
          %1742 = vmatprep.subr.mxu0 0.0
          %1743 = vmatpush1.xpose.msra.mxu0 %v1710
          %1744 = vmatprep.subr.mxu0 0.0
          %1745 = vmatpush2.xpose.msra.mxu0 0.0
          %1746 = vmatprep.subr.mxu0 0.0
          %1747 = vmatpush2.xpose.msra.mxu0 0.0
          %1748 = vmatprep.subr.mxu0 0.0
          %1749 = vmatpush2.xpose.msra.mxu0 0.0
          %1750 = vmatprep.subr.mxu0 0.0
          %1751 = vmatpush2.xpose.msra.mxu0 0.0
          %1752 = vmatprep.subr.mxu0 0.0
          %1753 = vmatpush2.xpose.msra.mxu0 0.0
          %1754 = vmatprep.subr.mxu0 0.0
          %1755 = vmatpush2.xpose.msra.mxu0 0.0
          %1756 = vmatprep.subr.mxu0 0.0
          %1757 = vmatpush2.xpose.msra.mxu0 0.0
          %1758 = vmatprep.subr.mxu0 0.0
          %1759 = vmatpush2.xpose.msra.mxu0 0.0
          %1760 = vmatprep.subr.mxu0 0.0
          %1761 = vmatpush2.xpose.msra.mxu0 0.0
          %1762 = vmatprep.subr.mxu0 0.0
          %1763 = vmatpush2.xpose.msra.mxu0 0.0
          %1764 = vmatprep.subr.mxu0 0.0
          %1765 = vmatpush2.xpose.msra.mxu0 0.0
          %1766 = vmatprep.subr.mxu0 0.0
          %1767 = vmatpush2.xpose.msra.mxu0 0.0
          %1768 = vmatprep.subr.mxu0 0.0
          %1769 = vmatpush2.xpose.msra.mxu0 0.0
          %1770 = vmatprep.subr.mxu0 0.0
          %1771 = vmatpush2.xpose.msra.mxu0 0.0
          %1772 = vmatprep.subr.mxu0 0.0
          %1773 = vmatpush2.xpose.msra.mxu0 0.0
          %1774 = vmatprep.subr.mxu0 0.0
          %1775 = vmatpush2.xpose.msra.mxu0 0.0
          %1776 = vmatprep.mubr.f32.mxu0 0.0
          %1777 = vmatmul.mubr.f32.gmra.mxu0 %v1708
          %v1778 = vpop.f32.mrf.mxu0
          %v1779 = vadd.f32 0.0, %v1778
          %v1780 = vpop.f32.mrf.mxu0
          %1781 = vdwg.mxu0
          %v1782 = vmul.f32 %v1779, 0.25
          %v1783 = vadd.f32 %v1782, %v710
          %v1784 = vsel %vm1023, %v1783, -inf
          %1785 = vmax.xlane.f32.xlu0 %v1784
          %v1786 = vpop.xlane.xlu0 %1785
          %v1787 = vsub.f32 %v1783, %v1786
          %v1788 = vmul.f32 %v1787, 1.442695
          %v1789 = vpow.pop %v1788
          %v1790 = vsel %vm1023, %v1789, 0.0
          %1791 = vadd.xlane.f32.xlu0 %v1790
          %v1792 = vpop.xlane.xlu0 %1791
          %v1793 = vrcp.pop %v1792
          %v1794 = vmul.f32 %v1789, %v1793
          %1795 = vrot.lane.b32.xlu0 %v842, 80
          %v1796 = vpop.permute.xlu0 %1795
          %v1799 = vsel %vm1023, %v1794, 0
          %1801 = vmatprep.subr.mxu0 0.0
          %1802 = vmatpush1.msra.mxu0 0.0
          %1803 = vmatprep.subr.mxu0 0.0
          %1804 = vmatpush1.msra.mxu0 0.0
          %1805 = vmatprep.subr.mxu0 0.0
          %1806 = vmatpush1.msra.mxu0 0.0
          %1807 = vmatprep.subr.mxu0 0.0
          %1808 = vmatpush1.msra.mxu0 0.0
          %1809 = vmatprep.subr.mxu0 0.0
          %1810 = vmatpush1.msra.mxu0 0.0
          %1811 = vmatprep.subr.mxu0 0.0
          %1812 = vmatpush1.msra.mxu0 0.0
          %1813 = vmatprep.subr.mxu0 0.0
          %1814 = vmatpush1.msra.mxu0 0.0
          %1815 = vmatprep.subr.mxu0 0.0
          %1816 = vmatpush1.msra.mxu0 0.0
          %1817 = vmatprep.subr.mxu0 0.0
          %1818 = vmatpush1.msra.mxu0 0.0
          %1819 = vmatprep.subr.mxu0 0.0
          %1820 = vmatpush1.msra.mxu0 0.0
          %1821 = vmatprep.subr.mxu0 0.0
          %1822 = vmatpush1.msra.mxu0 0.0
          %1823 = vmatprep.subr.mxu0 0.0
          %1824 = vmatpush1.msra.mxu0 0.0
          %1825 = vmatprep.subr.mxu0 0.0
          %1826 = vmatpush1.msra.mxu0 0.0
          %1827 = vmatprep.subr.mxu0 0.0
          %1828 = vmatpush1.msra.mxu0 0.0
          %1829 = vmatprep.subr.mxu0 0.0
          %1830 = vmatpush1.msra.mxu0 0.0
          %1831 = vmatprep.subr.mxu0 0.0
          %1832 = vmatpush1.msra.mxu0 %v1796
          %1833 = vmatprep.subr.mxu0 0.0
          %1834 = vmatpush2.msra.mxu0 0.0
          %1835 = vmatprep.subr.mxu0 0.0
          %1836 = vmatpush2.msra.mxu0 0.0
          %1837 = vmatprep.subr.mxu0 0.0
          %1838 = vmatpush2.msra.mxu0 0.0
          %1839 = vmatprep.subr.mxu0 0.0
          %1840 = vmatpush2.msra.mxu0 0.0
          %1841 = vmatprep.subr.mxu0 0.0
          %1842 = vmatpush2.msra.mxu0 0.0
          %1843 = vmatprep.subr.mxu0 0.0
          %1844 = vmatpush2.msra.mxu0 0.0
          %1845 = vmatprep.subr.mxu0 0.0
          %1846 = vmatpush2.msra.mxu0 0.0
          %1847 = vmatprep.subr.mxu0 0.0
          %1848 = vmatpush2.msra.mxu0 0.0
          %1849 = vmatprep.subr.mxu0 0.0
          %1850 = vmatpush2.msra.mxu0 0.0
          %1851 = vmatprep.subr.mxu0 0.0
          %1852 = vmatpush2.msra.mxu0 0.0
          %1853 = vmatprep.subr.mxu0 0.0
          %1854 = vmatpush2.msra.mxu0 0.0
          %1855 = vmatprep.subr.mxu0 0.0
          %1856 = vmatpush2.msra.mxu0 0.0
          %1857 = vmatprep.subr.mxu0 0.0
          %1858 = vmatpush2.msra.mxu0 0.0
          %1859 = vmatprep.subr.mxu0 0.0
          %1860 = vmatpush2.msra.mxu0 0.0
          %1861 = vmatprep.subr.mxu0 0.0
          %1862 = vmatpush2.msra.mxu0 0.0
          %1863 = vmatprep.subr.mxu0 0.0
          %1864 = vmatpush2.msra.mxu0 0.0
          %1865 = vmatprep.mubr.f32.mxu0 0.0
          %1866 = vmatmul.mubr.f32.gmra.mxu0 %v1799
          %v1867 = vpop.f32.mrf.mxu0
          %v1868 = vadd.f32 0.0, %v1867
          %v1869 = vpop.f32.mrf.mxu0
          %1870 = vdwg.mxu0
          %v1872 = vsel %vm946, %v1868, 0
          %1874 = vmatprep.subr.mxu0 0.0
          %1875 = vmatpush1.msra.mxu0 0.0
          %1876 = vmatprep.subr.mxu0 0.0
          %1877 = vmatpush1.msra.mxu0 0.0
          %1878 = vmatprep.subr.mxu0 0.0
          %1879 = vmatpush1.msra.mxu0 0.0
          %1880 = vmatprep.subr.mxu0 0.0
          %1881 = vmatpush1.msra.mxu0 0.0
          %1882 = vmatprep.subr.mxu0 0.0
          %1883 = vmatpush1.msra.mxu0 0.0
          %1884 = vmatprep.subr.mxu0 0.0
          %1885 = vmatpush1.msra.mxu0 0.0
          %1886 = vmatprep.subr.mxu0 0.0
          %1887 = vmatpush1.msra.mxu0 0.0
          %1888 = vmatprep.subr.mxu0 0.0
          %1889 = vmatpush1.msra.mxu0 0.0
          %1890 = vmatprep.subr.mxu0 0.0
          %1891 = vmatpush1.msra.mxu0 0.0
          %1892 = vmatprep.subr.mxu0 0.0
          %1893 = vmatpush1.msra.mxu0 0.0
          %1894 = vmatprep.subr.mxu0 0.0
          %1895 = vmatpush1.msra.mxu0 0.0
          %1896 = vmatprep.subr.mxu0 0.0
          %1897 = vmatpush1.msra.mxu0 0.0
          %1898 = vmatprep.subr.mxu0 0.0
          %1899 = vmatpush1.msra.mxu0 0.0
          %1900 = vmatprep.subr.mxu0 0.0
          %1901 = vmatpush1.msra.mxu0 0.0
          %1902 = vmatprep.subr.mxu0 0.0
          %1903 = vmatpush1.msra.mxu0 %v729
          %1904 = vmatprep.subr.mxu0 0.0
          %1905 = vmatpush1.msra.mxu0 %v728
          %1906 = vmatprep.subr.mxu0 0.0
          %1907 = vmatpush2.msra.mxu0 0.0
          %1908 = vmatprep.subr.mxu0 0.0
          %1909 = vmatpush2.msra.mxu0 0.0
          %1910 = vmatprep.subr.mxu0 0.0
          %1911 = vmatpush2.msra.mxu0 0.0
          %1912 = vmatprep.subr.mxu0 0.0
          %1913 = vmatpush2.msra.mxu0 0.0
          %1914 = vmatprep.subr.mxu0 0.0
          %1915 = vmatpush2.msra.mxu0 0.0
          %1916 = vmatprep.subr.mxu0 0.0
          %1917 = vmatpush2.msra.mxu0 0.0
          %1918 = vmatprep.subr.mxu0 0.0
          %1919 = vmatpush2.msra.mxu0 0.0
          %1920 = vmatprep.subr.mxu0 0.0
          %1921 = vmatpush2.msra.mxu0 0.0
          %1922 = vmatprep.subr.mxu0 0.0
          %1923 = vmatpush2.msra.mxu0 0.0
          %1924 = vmatprep.subr.mxu0 0.0
          %1925 = vmatpush2.msra.mxu0 0.0
          %1926 = vmatprep.subr.mxu0 0.0
          %1927 = vmatpush2.msra.mxu0 0.0
          %1928 = vmatprep.subr.mxu0 0.0
          %1929 = vmatpush2.msra.mxu0 0.0
          %1930 = vmatprep.subr.mxu0 0.0
          %1931 = vmatpush2.msra.mxu0 0.0
          %1932 = vmatprep.subr.mxu0 0.0
          %1933 = vmatpush2.msra.mxu0 0.0
          %1934 = vmatprep.subr.mxu0 0.0
          %1935 = vmatpush2.msra.mxu0 0.0
          %1936 = vmatprep.subr.mxu0 0.0
          %1937 = vmatpush2.msra.mxu0 0.0
          %1938 = vmatprep.mubr.f32.mxu0 0.0
          %1939 = vmatmul.mubr.f32.gmra.mxu0 %v1872
          %v1940 = vpop.f32.mrf.mxu0
          %v1941 = vadd.f32 0.0, %v1940
          %v1942 = vpop.f32.mrf.mxu0
          %1943 = vdwg.mxu0
          %v1945 = vsel %vm946, %v1701, 0
          %1947 = vmatprep.subr.mxu0 0.0
          %1948 = vmatpush1.msra.mxu0 0.0
          %1949 = vmatprep.subr.mxu0 0.0
          %1950 = vmatpush1.msra.mxu0 0.0
          %1951 = vmatprep.subr.mxu0 0.0
          %1952 = vmatpush1.msra.mxu0 0.0
          %1953 = vmatprep.subr.mxu0 0.0
          %1954 = vmatpush1.msra.mxu0 0.0
          %1955 = vmatprep.subr.mxu0 0.0
          %1956 = vmatpush1.msra.mxu0 0.0
          %1957 = vmatprep.subr.mxu0 0.0
          %1958 = vmatpush1.msra.mxu0 0.0
          %1959 = vmatprep.subr.mxu0 0.0
          %1960 = vmatpush1.msra.mxu0 0.0
          %1961 = vmatprep.subr.mxu0 0.0
          %1962 = vmatpush1.msra.mxu0 0.0
          %1963 = vmatprep.subr.mxu0 0.0
          %1964 = vmatpush1.msra.mxu0 0.0
          %1965 = vmatprep.subr.mxu0 0.0
          %1966 = vmatpush1.msra.mxu0 0.0
          %1967 = vmatprep.subr.mxu0 0.0
          %1968 = vmatpush1.msra.mxu0 0.0
          %1969 = vmatprep.subr.mxu0 0.0
          %1970 = vmatpush1.msra.mxu0 0.0
          %1971 = vmatprep.subr.mxu0 0.0
          %1972 = vmatpush1.msra.mxu0 0.0
          %1973 = vmatprep.subr.mxu0 0.0
          %1974 = vmatpush1.msra.mxu0 0.0
          %1975 = vmatprep.subr.mxu0 0.0
          %1976 = vmatpush1.msra.mxu0 %v727
          %1977 = vmatprep.subr.mxu0 0.0
          %1978 = vmatpush1.msra.mxu0 %v726
          %1979 = vmatprep.subr.mxu0 0.0
          %1980 = vmatpush2.msra.mxu0 0.0
          %1981 = vmatprep.subr.mxu0 0.0
          %1982 = vmatpush2.msra.mxu0 0.0
          %1983 = vmatprep.subr.mxu0 0.0
          %1984 = vmatpush2.msra.mxu0 0.0
          %1985 = vmatprep.subr.mxu0 0.0
          %1986 = vmatpush2.msra.mxu0 0.0
          %1987 = vmatprep.subr.mxu0 0.0
          %1988 = vmatpush2.msra.mxu0 0.0
          %1989 = vmatprep.subr.mxu0 0.0
          %1990 = vmatpush2.msra.mxu0 0.0
          %1991 = vmatprep.subr.mxu0 0.0
          %1992 = vmatpush2.msra.mxu0 0.0
          %1993 = vmatprep.subr.mxu0 0.0
          %1994 = vmatpush2.msra.mxu0 0.0
          %1995 = vmatprep.subr.mxu0 0.0
          %1996 = vmatpush2.msra.mxu0 0.0
          %1997 = vmatprep.subr.mxu0 0.0
          %1998 = vmatpush2.msra.mxu0 0.0
          %1999 = vmatprep.subr.mxu0 0.0
          %2000 = vmatpush2.msra.mxu0 0.0
          %2001 = vmatprep.subr.mxu0 0.0
          %2002 = vmatpush2.msra.mxu0 0.0
          %2003 = vmatprep.subr.mxu0 0.0
          %2004 = vmatpush2.msra.mxu0 0.0
          %2005 = vmatprep.subr.mxu0 0.0
          %2006 = vmatpush2.msra.mxu0 0.0
          %2007 = vmatprep.subr.mxu0 0.0
          %2008 = vmatpush2.msra.mxu0 0.0
          %2009 = vmatprep.subr.mxu0 0.0
          %2010 = vmatpush2.msra.mxu0 0.0
          %2011 = vmatprep.mubr.f32.mxu0 0.0
          %2012 = vmatmul.mubr.f32.gmra.mxu0 %v1945
          %v2013 = vpop.f32.mrf.mxu0
          %v2014 = vadd.f32 %v1941, %v2013
          %v2015 = vpop.f32.mrf.mxu0
          %2016 = vdwg.mxu0
          %v2018 = vlaneseq
          %v2019 = vshrl.u32 %v2018, 7
          %v2020 = vsub.s32 0, %v2019
          %v2021 = vrot.slane %v730, %v2020
          %v2023 = vadd.f32 %v2014, %v2021
          %v2024 = vsel %vm771, %v2023, 0.0
          %2025 = vadd.xlane.f32.xlu0 %v2024
          %v2026 = vpop.xlane.xlu0 %2025
          %v2027 = vmul.f32 %v2026, %v1434
          %v2028 = vsub.f32 %v2023, %v2027
          %v2029 = vmul.f32 %v2028, %v2028
          %v2030 = vsel %vm771, %v2029, 0.0
          %2031 = vadd.xlane.f32.xlu0 %v2030
          %v2032 = vpop.xlane.xlu0 %2031
          %v2033 = vmul.f32 %v2032, %v1434
          %v2034 = vadd.f32 %v2033, 1e-05
          %v2035 = vrsqrt.pop %v2034
          %v2036 = vmul.f32 %v2028, %v2035
          %v2037 = vmul.f32 %v2036, %v1449
          %v2038 = vadd.f32 %v2037, %v1456
          %v2039 = vmul.f32 %v2038, %v1462
          %v2041 = vlaneseq
          %v2042 = vshrl.u32 %v2041, 7
          %v2043 = vsub.s32 0, %v2042
          %v2044 = vrot.slane %v735, %v2043
          %v2047 = vsel %vm771, %v2039, 0
          %2049 = vmatprep.subr.mxu0 0.0
          %2050 = vmatpush1.msra.mxu0 0.0
          %2051 = vmatprep.subr.mxu0 0.0
          %2052 = vmatpush1.msra.mxu0 0.0
          %2053 = vmatprep.subr.mxu0 0.0
          %2054 = vmatpush1.msra.mxu0 0.0
          %2055 = vmatprep.subr.mxu0 0.0
          %2056 = vmatpush1.msra.mxu0 0.0
          %2057 = vmatprep.subr.mxu0 0.0
          %2058 = vmatpush1.msra.mxu0 0.0
          %2059 = vmatprep.subr.mxu0 0.0
          %2060 = vmatpush1.msra.mxu0 0.0
          %2061 = vmatprep.subr.mxu0 0.0
          %2062 = vmatpush1.msra.mxu0 0.0
          %2063 = vmatprep.subr.mxu0 0.0
          %2064 = vmatpush1.msra.mxu0 0.0
          %2065 = vmatprep.subr.mxu0 0.0
          %2066 = vmatpush1.msra.mxu0 0.0
          %2067 = vmatprep.subr.mxu0 0.0
          %2068 = vmatpush1.msra.mxu0 0.0
          %2069 = vmatprep.subr.mxu0 0.0
          %2070 = vmatpush1.msra.mxu0 0.0
          %2071 = vmatprep.subr.mxu0 0.0
          %2072 = vmatpush1.msra.mxu0 0.0
          %2073 = vmatprep.subr.mxu0 0.0
          %2074 = vmatpush1.msra.mxu0 %v734
          %2075 = vmatprep.subr.mxu0 0.0
          %2076 = vmatpush1.msra.mxu0 %v733
          %2077 = vmatprep.subr.mxu0 0.0
          %2078 = vmatpush1.msra.mxu0 %v732
          %2079 = vmatprep.subr.mxu0 0.0
          %2080 = vmatpush1.msra.mxu0 %v731
          %2081 = vmatprep.subr.mxu0 0.0
          %2082 = vmatpush2.msra.mxu0 0.0
          %2083 = vmatprep.subr.mxu0 0.0
          %2084 = vmatpush2.msra.mxu0 0.0
          %2085 = vmatprep.subr.mxu0 0.0
          %2086 = vmatpush2.msra.mxu0 0.0
          %2087 = vmatprep.subr.mxu0 0.0
          %2088 = vmatpush2.msra.mxu0 0.0
          %2089 = vmatprep.subr.mxu0 0.0
          %2090 = vmatpush2.msra.mxu0 0.0
          %2091 = vmatprep.subr.mxu0 0.0
          %2092 = vmatpush2.msra.mxu0 0.0
          %2093 = vmatprep.subr.mxu0 0.0
          %2094 = vmatpush2.msra.mxu0 0.0
          %2095 = vmatprep.subr.mxu0 0.0
          %2096 = vmatpush2.msra.mxu0 0.0
          %2097 = vmatprep.subr.mxu0 0.0
          %2098 = vmatpush2.msra.mxu0 0.0
          %2099 = vmatprep.subr.mxu0 0.0
          %2100 = vmatpush2.msra.mxu0 0.0
          %2101 = vmatprep.subr.mxu0 0.0
          %2102 = vmatpush2.msra.mxu0 0.0
          %2103 = vmatprep.subr.mxu0 0.0
          %2104 = vmatpush2.msra.mxu0 0.0
          %2105 = vmatprep.subr.mxu0 0.0
          %2106 = vmatpush2.msra.mxu0 0.0
          %2107 = vmatprep.subr.mxu0 0.0
          %2108 = vmatpush2.msra.mxu0 0.0
          %2109 = vmatprep.subr.mxu0 0.0
          %2110 = vmatpush2.msra.mxu0 0.0
          %2111 = vmatprep.subr.mxu0 0.0
          %2112 = vmatpush2.msra.mxu0 0.0
          %2113 = vmatprep.mubr.f32.mxu0 0.0
          %2114 = vmatmul.mubr.f32.gmra.mxu0 %v2047
          %v2115 = vpop.f32.mrf.mxu0
          %v2116 = vadd.f32 %v2044, %v2115
          %v2117 = vpop.f32.mrf.mxu0
          %2118 = vdwg.mxu0
          %v2119 = vmax.f32 %v2116, 0.0
          %v2121 = vlaneseq
          %v2122 = vshrl.u32 %v2121, 7
          %v2123 = vsub.s32 0, %v2122
          %v2124 = vrot.slane %v744, %v2123
          %vm2126 = vcmask 523264
          %v2128 = vsel %vm2126, %v2119, 0
          %2130 = vmatprep.subr.mxu0 0.0
          %2131 = vmatpush1.msra.mxu0 0.0
          %2132 = vmatprep.subr.mxu0 0.0
          %2133 = vmatpush1.msra.mxu0 0.0
          %2134 = vmatprep.subr.mxu0 0.0
          %2135 = vmatpush1.msra.mxu0 0.0
          %2136 = vmatprep.subr.mxu0 0.0
          %2137 = vmatpush1.msra.mxu0 0.0
          %2138 = vmatprep.subr.mxu0 0.0
          %2139 = vmatpush1.msra.mxu0 0.0
          %2140 = vmatprep.subr.mxu0 0.0
          %2141 = vmatpush1.msra.mxu0 0.0
          %2142 = vmatprep.subr.mxu0 0.0
          %2143 = vmatpush1.msra.mxu0 0.0
          %2144 = vmatprep.subr.mxu0 0.0
          %2145 = vmatpush1.msra.mxu0 0.0
          %2146 = vmatprep.subr.mxu0 0.0
          %2147 = vmatpush1.msra.mxu0 %v743
          %2148 = vmatprep.subr.mxu0 0.0
          %2149 = vmatpush1.msra.mxu0 %v742
          %2150 = vmatprep.subr.mxu0 0.0
          %2151 = vmatpush1.msra.mxu0 %v741
          %2152 = vmatprep.subr.mxu0 0.0
          %2153 = vmatpush1.msra.mxu0 %v740
          %2154 = vmatprep.subr.mxu0 0.0
          %2155 = vmatpush1.msra.mxu0 %v739
          %2156 = vmatprep.subr.mxu0 0.0
          %2157 = vmatpush1.msra.mxu0 %v738
          %2158 = vmatprep.subr.mxu0 0.0
          %2159 = vmatpush1.msra.mxu0 %v737
          %2160 = vmatprep.subr.mxu0 0.0
          %2161 = vmatpush1.msra.mxu0 %v736
          %2162 = vmatprep.subr.mxu0 0.0
          %2163 = vmatpush2.msra.mxu0 0.0
          %2164 = vmatprep.subr.mxu0 0.0
          %2165 = vmatpush2.msra.mxu0 0.0
          %2166 = vmatprep.subr.mxu0 0.0
          %2167 = vmatpush2.msra.mxu0 0.0
          %2168 = vmatprep.subr.mxu0 0.0
          %2169 = vmatpush2.msra.mxu0 0.0
          %2170 = vmatprep.subr.mxu0 0.0
          %2171 = vmatpush2.msra.mxu0 0.0
          %2172 = vmatprep.subr.mxu0 0.0
          %2173 = vmatpush2.msra.mxu0 0.0
          %2174 = vmatprep.subr.mxu0 0.0
          %2175 = vmatpush2.msra.mxu0 0.0
          %2176 = vmatprep.subr.mxu0 0.0
          %2177 = vmatpush2.msra.mxu0 0.0
          %2178 = vmatprep.subr.mxu0 0.0
          %2179 = vmatpush2.msra.mxu0 0.0
          %2180 = vmatprep.subr.mxu0 0.0
          %2181 = vmatpush2.msra.mxu0 0.0
          %2182 = vmatprep.subr.mxu0 0.0
          %2183 = vmatpush2.msra.mxu0 0.0
          %2184 = vmatprep.subr.mxu0 0.0
          %2185 = vmatpush2.msra.mxu0 0.0
          %2186 = vmatprep.subr.mxu0 0.0
          %2187 = vmatpush2.msra.mxu0 0.0
          %2188 = vmatprep.subr.mxu0 0.0
          %2189 = vmatpush2.msra.mxu0 0.0
          %2190 = vmatprep.subr.mxu0 0.0
          %2191 = vmatpush2.msra.mxu0 0.0
          %2192 = vmatprep.subr.mxu0 0.0
          %2193 = vmatpush2.msra.mxu0 0.0
          %2194 = vmatprep.mubr.f32.mxu0 0.0
          %2195 = vmatmul.mubr.f32.gmra.mxu0 %v2128
          %v2196 = vpop.f32.mrf.mxu0
          %v2197 = vadd.f32 %v2124, %v2196
          %v2198 = vpop.f32.mrf.mxu0
          %2199 = vdwg.mxu0
          %v2200 = vsel %vm771, %v2197, 0.0
          %2201 = vadd.xlane.f32.xlu0 %v2200
          %v2202 = vpop.xlane.xlu0 %2201
          %v2203 = vmul.f32 %v2202, %v1434
          %v2204 = vsub.f32 %v2197, %v2203
          %v2205 = vmul.f32 %v2204, %v2204
          %v2206 = vsel %vm771, %v2205, 0.0
          %2207 = vadd.xlane.f32.xlu0 %v2206
          %v2208 = vpop.xlane.xlu0 %2207
          %v2209 = vmul.f32 %v2208, %v1434
          %v2210 = vadd.f32 %v2209, 1e-05
          %v2211 = vrsqrt.pop %v2210
          %v2212 = vmul.f32 %v2204, %v2211
          %v2213 = vmul.f32 %v2212, %v1449
          %v2214 = vadd.f32 %v2213, %v1456
          %v2215 = vmul.f32 %v2214, %v1462
          %s2216 = sadd.f32 %s861, %s850
          %v2217 = vstv %s850
          %v2218 = vmul.f32 %v2217, %v2215
          %v2219 = vadd.f32 %v858, %v2218
          %v2220 = vstv %s2216
          %v2221 = vadd.f32 %v2219, %v2220
          %v2223 = vsel %vm771, %v2221, 0
          %2225 = vmatprep.subr.mxu0 0.0
          %2226 = vmatpush1.msra.mxu0 0.0
          %2227 = vmatprep.subr.mxu0 0.0
          %2228 = vmatpush1.msra.mxu0 0.0
          %2229 = vmatprep.subr.mxu0 0.0
          %2230 = vmatpush1.msra.mxu0 0.0
          %2231 = vmatprep.subr.mxu0 0.0
          %2232 = vmatpush1.msra.mxu0 0.0
          %2233 = vmatprep.subr.mxu0 0.0
          %2234 = vmatpush1.msra.mxu0 0.0
          %2235 = vmatprep.subr.mxu0 0.0
          %2236 = vmatpush1.msra.mxu0 0.0
          %2237 = vmatprep.subr.mxu0 0.0
          %2238 = vmatpush1.msra.mxu0 0.0
          %2239 = vmatprep.subr.mxu0 0.0
          %2240 = vmatpush1.msra.mxu0 0.0
          %2241 = vmatprep.subr.mxu0 0.0
          %2242 = vmatpush1.msra.mxu0 0.0
          %2243 = vmatprep.subr.mxu0 0.0
          %2244 = vmatpush1.msra.mxu0 0.0
          %2245 = vmatprep.subr.mxu0 0.0
          %2246 = vmatpush1.msra.mxu0 0.0
          %2247 = vmatprep.subr.mxu0 0.0
          %2248 = vmatpush1.msra.mxu0 0.0
          %2249 = vmatprep.subr.mxu0 0.0
          %2250 = vmatpush1.msra.mxu0 %v714
          %2251 = vmatprep.subr.mxu0 0.0
          %2252 = vmatpush1.msra.mxu0 %v713
          %2253 = vmatprep.subr.mxu0 0.0
          %2254 = vmatpush1.msra.mxu0 %v712
          %2255 = vmatprep.subr.mxu0 0.0
          %2256 = vmatpush1.msra.mxu0 %v711
          %2257 = vmatprep.subr.mxu0 0.0
          %2258 = vmatpush2.msra.mxu0 0.0
          %2259 = vmatprep.subr.mxu0 0.0
          %2260 = vmatpush2.msra.mxu0 0.0
          %2261 = vmatprep.subr.mxu0 0.0
          %2262 = vmatpush2.msra.mxu0 0.0
          %2263 = vmatprep.subr.mxu0 0.0
          %2264 = vmatpush2.msra.mxu0 0.0
          %2265 = vmatprep.subr.mxu0 0.0
          %2266 = vmatpush2.msra.mxu0 0.0
          %2267 = vmatprep.subr.mxu0 0.0
          %2268 = vmatpush2.msra.mxu0 0.0
          %2269 = vmatprep.subr.mxu0 0.0
          %2270 = vmatpush2.msra.mxu0 0.0
          %2271 = vmatprep.subr.mxu0 0.0
          %2272 = vmatpush2.msra.mxu0 0.0
          %2273 = vmatprep.subr.mxu0 0.0
          %2274 = vmatpush2.msra.mxu0 0.0
          %2275 = vmatprep.subr.mxu0 0.0
          %2276 = vmatpush2.msra.mxu0 0.0
          %2277 = vmatprep.subr.mxu0 0.0
          %2278 = vmatpush2.msra.mxu0 0.0
          %2279 = vmatprep.subr.mxu0 0.0
          %2280 = vmatpush2.msra.mxu0 0.0
          %2281 = vmatprep.subr.mxu0 0.0
          %2282 = vmatpush2.msra.mxu0 0.0
          %2283 = vmatprep.subr.mxu0 0.0
          %2284 = vmatpush2.msra.mxu0 0.0
          %2285 = vmatprep.subr.mxu0 0.0
          %2286 = vmatpush2.msra.mxu0 0.0
          %2287 = vmatprep.subr.mxu0 0.0
          %2288 = vmatpush2.msra.mxu0 0.0
          %2289 = vmatprep.mubr.f32.mxu0 0.0
          %2290 = vmatmul.mubr.f32.gmra.mxu0 %v2223
          %v2291 = vpop.f32.mrf.mxu0
          %v2292 = vadd.f32 %v868, %v2291
          %v2293 = vpop.f32.mrf.mxu0
          %2294 = vdwg.mxu0
          %2296 = vrot.lane.b32.xlu0 %v2292, 96
          %v2297 = vpop.permute.xlu0 %2296
          %v2298 = vsel %vm946, %v2292, 0
          %v2300 = vsel %vm946, %v2297, 0
          %2302 = vmatprep.subr.mxu0 0.0
          %2303 = vmatpush1.xpose.msra.mxu0 0.0
          %2304 = vmatprep.subr.mxu0 0.0
          %2305 = vmatpush1.xpose.msra.mxu0 0.0
          %2306 = vmatprep.subr.mxu0 0.0
          %2307 = vmatpush1.xpose.msra.mxu0 0.0
          %2308 = vmatprep.subr.mxu0 0.0
          %2309 = vmatpush1.xpose.msra.mxu0 0.0
          %2310 = vmatprep.subr.mxu0 0.0
          %2311 = vmatpush1.xpose.msra.mxu0 0.0
          %2312 = vmatprep.subr.mxu0 0.0
          %2313 = vmatpush1.xpose.msra.mxu0 0.0
          %2314 = vmatprep.subr.mxu0 0.0
          %2315 = vmatpush1.xpose.msra.mxu0 0.0
          %2316 = vmatprep.subr.mxu0 0.0
          %2317 = vmatpush1.xpose.msra.mxu0 0.0
          %2318 = vmatprep.subr.mxu0 0.0
          %2319 = vmatpush1.xpose.msra.mxu0 0.0
          %2320 = vmatprep.subr.mxu0 0.0
          %2321 = vmatpush1.xpose.msra.mxu0 0.0
          %2322 = vmatprep.subr.mxu0 0.0
          %2323 = vmatpush1.xpose.msra.mxu0 0.0
          %2324 = vmatprep.subr.mxu0 0.0
          %2325 = vmatpush1.xpose.msra.mxu0 0.0
          %2326 = vmatprep.subr.mxu0 0.0
          %2327 = vmatpush1.xpose.msra.mxu0 0.0
          %2328 = vmatprep.subr.mxu0 0.0
          %2329 = vmatpush1.xpose.msra.mxu0 0.0
          %2330 = vmatprep.subr.mxu0 0.0
          %2331 = vmatpush1.xpose.msra.mxu0 0.0
          %2332 = vmatprep.subr.mxu0 0.0
          %2333 = vmatpush1.xpose.msra.mxu0 %v2300
          %2334 = vmatprep.subr.mxu0 0.0
          %2335 = vmatpush2.xpose.msra.mxu0 0.0
          %2336 = vmatprep.subr.mxu0 0.0
          %2337 = vmatpush2.xpose.msra.mxu0 0.0
          %2338 = vmatprep.subr.mxu0 0.0
          %2339 = vmatpush2.xpose.msra.mxu0 0.0
          %2340 = vmatprep.subr.mxu0 0.0
          %2341 = vmatpush2.xpose.msra.mxu0 0.0
          %2342 = vmatprep.subr.mxu0 0.0
          %2343 = vmatpush2.xpose.msra.mxu0 0.0
          %2344 = vmatprep.subr.mxu0 0.0
          %2345 = vmatpush2.xpose.msra.mxu0 0.0
          %2346 = vmatprep.subr.mxu0 0.0
          %2347 = vmatpush2.xpose.msra.mxu0 0.0
          %2348 = vmatprep.subr.mxu0 0.0
          %2349 = vmatpush2.xpose.msra.mxu0 0.0
          %2350 = vmatprep.subr.mxu0 0.0
          %2351 = vmatpush2.xpose.msra.mxu0 0.0
          %2352 = vmatprep.subr.mxu0 0.0
          %2353 = vmatpush2.xpose.msra.mxu0 0.0
          %2354 = vmatprep.subr.mxu0 0.0
          %2355 = vmatpush2.xpose.msra.mxu0 0.0
          %2356 = vmatprep.subr.mxu0 0.0
          %2357 = vmatpush2.xpose.msra.mxu0 0.0
          %2358 = vmatprep.subr.mxu0 0.0
          %2359 = vmatpush2.xpose.msra.mxu0 0.0
          %2360 = vmatprep.subr.mxu0 0.0
          %2361 = vmatpush2.xpose.msra.mxu0 0.0
          %2362 = vmatprep.subr.mxu0 0.0
          %2363 = vmatpush2.xpose.msra.mxu0 0.0
          %2364 = vmatprep.subr.mxu0 0.0
          %2365 = vmatpush2.xpose.msra.mxu0 0.0
          %2366 = vmatprep.mubr.f32.mxu0 0.0
          %2367 = vmatmul.mubr.f32.gmra.mxu0 %v2298
          %v2368 = vpop.f32.mrf.mxu0
          %v2369 = vadd.f32 0.0, %v2368
          %v2370 = vpop.f32.mrf.mxu0
          %2371 = vdwg.mxu0
          %v2372 = vmul.f32 %v2369, 0.25
          %v2373 = vadd.f32 %v2372, %v709
          %v2374 = vsel %vm1023, %v2373, -inf
          %2375 = vmax.xlane.f32.xlu0 %v2374
          %v2376 = vpop.xlane.xlu0 %2375
          %v2377 = vsub.f32 %v2373, %v2376
          %v2378 = vmul.f32 %v2377, 1.442695
          %v2379 = vpow.pop %v2378
          %v2380 = vsel %vm1023, %v2379, 0.0
          %2381 = vadd.xlane.f32.xlu0 %v2380
          %v2382 = vpop.xlane.xlu0 %2381
          %v2383 = vrcp.pop %v2382
          %v2384 = vmul.f32 %v2379, %v2383
          %2385 = vrot.lane.b32.xlu0 %v2292, 64
          %v2386 = vpop.permute.xlu0 %2385
          %v2389 = vsel %vm1023, %v2384, 0
          %2391 = vmatprep.subr.mxu0 0.0
          %2392 = vmatpush1.msra.mxu0 0.0
          %2393 = vmatprep.subr.mxu0 0.0
          %2394 = vmatpush1.msra.mxu0 0.0
          %2395 = vmatprep.subr.mxu0 0.0
          %2396 = vmatpush1.msra.mxu0 0.0
          %2397 = vmatprep.subr.mxu0 0.0
          %2398 = vmatpush1.msra.mxu0 0.0
          %2399 = vmatprep.subr.mxu0 0.0
          %2400 = vmatpush1.msra.mxu0 0.0
          %2401 = vmatprep.subr.mxu0 0.0
          %2402 = vmatpush1.msra.mxu0 0.0
          %2403 = vmatprep.subr.mxu0 0.0
          %2404 = vmatpush1.msra.mxu0 0.0
          %2405 = vmatprep.subr.mxu0 0.0
          %2406 = vmatpush1.msra.mxu0 0.0
          %2407 = vmatprep.subr.mxu0 0.0
          %2408 = vmatpush1.msra.mxu0 0.0
          %2409 = vmatprep.subr.mxu0 0.0
          %2410 = vmatpush1.msra.mxu0 0.0
          %2411 = vmatprep.subr.mxu0 0.0
          %2412 = vmatpush1.msra.mxu0 0.0
          %2413 = vmatprep.subr.mxu0 0.0
          %2414 = vmatpush1.msra.mxu0 0.0
          %2415 = vmatprep.subr.mxu0 0.0
          %2416 = vmatpush1.msra.mxu0 0.0
          %2417 = vmatprep.subr.mxu0 0.0
          %2418 = vmatpush1.msra.mxu0 0.0
          %2419 = vmatprep.subr.mxu0 0.0
          %2420 = vmatpush1.msra.mxu0 0.0
          %2421 = vmatprep.subr.mxu0 0.0
          %2422 = vmatpush1.msra.mxu0 %v2386
          %2423 = vmatprep.subr.mxu0 0.0
          %2424 = vmatpush2.msra.mxu0 0.0
          %2425 = vmatprep.subr.mxu0 0.0
          %2426 = vmatpush2.msra.mxu0 0.0
          %2427 = vmatprep.subr.mxu0 0.0
          %2428 = vmatpush2.msra.mxu0 0.0
          %2429 = vmatprep.subr.mxu0 0.0
          %2430 = vmatpush2.msra.mxu0 0.0
          %2431 = vmatprep.subr.mxu0 0.0
          %2432 = vmatpush2.msra.mxu0 0.0
          %2433 = vmatprep.subr.mxu0 0.0
          %2434 = vmatpush2.msra.mxu0 0.0
          %2435 = vmatprep.subr.mxu0 0.0
          %2436 = vmatpush2.msra.mxu0 0.0
          %2437 = vmatprep.subr.mxu0 0.0
          %2438 = vmatpush2.msra.mxu0 0.0
          %2439 = vmatprep.subr.mxu0 0.0
          %2440 = vmatpush2.msra.mxu0 0.0
          %2441 = vmatprep.subr.mxu0 0.0
          %2442 = vmatpush2.msra.mxu0 0.0
          %2443 = vmatprep.subr.mxu0 0.0
          %2444 = vmatpush2.msra.mxu0 0.0
          %2445 = vmatprep.subr.mxu0 0.0
          %2446 = vmatpush2.msra.mxu0 0.0
          %2447 = vmatprep.subr.mxu0 0.0
          %2448 = vmatpush2.msra.mxu0 0.0
          %2449 = vmatprep.subr.mxu0 0.0
          %2450 = vmatpush2.msra.mxu0 0.0
          %2451 = vmatprep.subr.mxu0 0.0
          %2452 = vmatpush2.msra.mxu0 0.0
          %2453 = vmatprep.subr.mxu0 0.0
          %2454 = vmatpush2.msra.mxu0 0.0
          %2455 = vmatprep.mubr.f32.mxu0 0.0
          %2456 = vmatmul.mubr.f32.gmra.mxu0 %v2389
          %v2457 = vpop.f32.mrf.mxu0
          %v2458 = vadd.f32 0.0, %v2457
          %v2459 = vpop.f32.mrf.mxu0
          %2460 = vdwg.mxu0
          %2461 = vrot.lane.b32.xlu0 %v2292, 112
          %v2462 = vpop.permute.xlu0 %2461
          %2463 = vrot.lane.b32.xlu0 %v2292, 80
          %v2464 = vpop.permute.xlu0 %2463
          %v2465 = vsel %vm946, %v2462, 0
          %v2467 = vsel %vm946, %v2464, 0
          %2469 = vmatprep.subr.mxu0 0.0
          %2470 = vmatpush1.xpose.msra.mxu0 0.0
          %2471 = vmatprep.subr.mxu0 0.0
          %2472 = vmatpush1.xpose.msra.mxu0 0.0
          %2473 = vmatprep.subr.mxu0 0.0
          %2474 = vmatpush1.xpose.msra.mxu0 0.0
          %2475 = vmatprep.subr.mxu0 0.0
          %2476 = vmatpush1.xpose.msra.mxu0 0.0
          %2477 = vmatprep.subr.mxu0 0.0
          %2478 = vmatpush1.xpose.msra.mxu0 0.0
          %2479 = vmatprep.subr.mxu0 0.0
          %2480 = vmatpush1.xpose.msra.mxu0 0.0
          %2481 = vmatprep.subr.mxu0 0.0
          %2482 = vmatpush1.xpose.msra.mxu0 0.0
          %2483 = vmatprep.subr.mxu0 0.0
          %2484 = vmatpush1.xpose.msra.mxu0 0.0
          %2485 = vmatprep.subr.mxu0 0.0
          %2486 = vmatpush1.xpose.msra.mxu0 0.0
          %2487 = vmatprep.subr.mxu0 0.0
          %2488 = vmatpush1.xpose.msra.mxu0 0.0
          %2489 = vmatprep.subr.mxu0 0.0
          %2490 = vmatpush1.xpose.msra.mxu0 0.0
          %2491 = vmatprep.subr.mxu0 0.0
          %2492 = vmatpush1.xpose.msra.mxu0 0.0
          %2493 = vmatprep.subr.mxu0 0.0
          %2494 = vmatpush1.xpose.msra.mxu0 0.0
          %2495 = vmatprep.subr.mxu0 0.0
          %2496 = vmatpush1.xpose.msra.mxu0 0.0
          %2497 = vmatprep.subr.mxu0 0.0
          %2498 = vmatpush1.xpose.msra.mxu0 0.0
          %2499 = vmatprep.subr.mxu0 0.0
          %2500 = vmatpush1.xpose.msra.mxu0 %v2467
          %2501 = vmatprep.subr.mxu0 0.0
          %2502 = vmatpush2.xpose.msra.mxu0 0.0
          %2503 = vmatprep.subr.mxu0 0.0
          %2504 = vmatpush2.xpose.msra.mxu0 0.0
          %2505 = vmatprep.subr.mxu0 0.0
          %2506 = vmatpush2.xpose.msra.mxu0 0.0
          %2507 = vmatprep.subr.mxu0 0.0
          %2508 = vmatpush2.xpose.msra.mxu0 0.0
          %2509 = vmatprep.subr.mxu0 0.0
          %2510 = vmatpush2.xpose.msra.mxu0 0.0
          %2511 = vmatprep.subr.mxu0 0.0
          %2512 = vmatpush2.xpose.msra.mxu0 0.0
          %2513 = vmatprep.subr.mxu0 0.0
          %2514 = vmatpush2.xpose.msra.mxu0 0.0
          %2515 = vmatprep.subr.mxu0 0.0
          %2516 = vmatpush2.xpose.msra.mxu0 0.0
          %2517 = vmatprep.subr.mxu0 0.0
          %2518 = vmatpush2.xpose.msra.mxu0 0.0
          %2519 = vmatprep.subr.mxu0 0.0
          %2520 = vmatpush2.xpose.msra.mxu0 0.0
          %2521 = vmatprep.subr.mxu0 0.0
          %2522 = vmatpush2.xpose.msra.mxu0 0.0
          %2523 = vmatprep.subr.mxu0 0.0
          %2524 = vmatpush2.xpose.msra.mxu0 0.0
          %2525 = vmatprep.subr.mxu0 0.0
          %2526 = vmatpush2.xpose.msra.mxu0 0.0
          %2527 = vmatprep.subr.mxu0 0.0
          %2528 = vmatpush2.xpose.msra.mxu0 0.0
          %2529 = vmatprep.subr.mxu0 0.0
          %2530 = vmatpush2.xpose.msra.mxu0 0.0
          %2531 = vmatprep.subr.mxu0 0.0
          %2532 = vmatpush2.xpose.msra.mxu0 0.0
          %2533 = vmatprep.mubr.f32.mxu0 0.0
          %2534 = vmatmul.mubr.f32.gmra.mxu0 %v2465
          %v2535 = vpop.f32.mrf.mxu0
          %v2536 = vadd.f32 0.0, %v2535
          %v2537 = vpop.f32.mrf.mxu0
          %2538 = vdwg.mxu0
          %v2539 = vmul.f32 %v2536, 0.25
          %v2540 = vadd.f32 %v2539, %v709
          %v2541 = vsel %vm1023, %v2540, -inf
          %2542 = vmax.xlane.f32.xlu0 %v2541
          %v2543 = vpop.xlane.xlu0 %2542
          %v2544 = vsub.f32 %v2540, %v2543
          %v2545 = vmul.f32 %v2544, 1.442695
          %v2546 = vpow.pop %v2545
          %v2547 = vsel %vm1023, %v2546, 0.0
          %2548 = vadd.xlane.f32.xlu0 %v2547
          %v2549 = vpop.xlane.xlu0 %2548
          %v2550 = vrcp.pop %v2549
          %v2551 = vmul.f32 %v2546, %v2550
          %2552 = vrot.lane.b32.xlu0 %v2292, 48
          %v2553 = vpop.permute.xlu0 %2552
          %v2556 = vsel %vm1023, %v2551, 0
          %2558 = vmatprep.subr.mxu0 0.0
          %2559 = vmatpush1.msra.mxu0 0.0
          %2560 = vmatprep.subr.mxu0 0.0
          %2561 = vmatpush1.msra.mxu0 0.0
          %2562 = vmatprep.subr.mxu0 0.0
          %2563 = vmatpush1.msra.mxu0 0.0
          %2564 = vmatprep.subr.mxu0 0.0
          %2565 = vmatpush1.msra.mxu0 0.0
          %2566 = vmatprep.subr.mxu0 0.0
          %2567 = vmatpush1.msra.mxu0 0.0
          %2568 = vmatprep.subr.mxu0 0.0
          %2569 = vmatpush1.msra.mxu0 0.0
          %2570 = vmatprep.subr.mxu0 0.0
          %2571 = vmatpush1.msra.mxu0 0.0
          %2572 = vmatprep.subr.mxu0 0.0
          %2573 = vmatpush1.msra.mxu0 0.0
          %2574 = vmatprep.subr.mxu0 0.0
          %2575 = vmatpush1.msra.mxu0 0.0
          %2576 = vmatprep.subr.mxu0 0.0
          %2577 = vmatpush1.msra.mxu0 0.0
          %2578 = vmatprep.subr.mxu0 0.0
          %2579 = vmatpush1.msra.mxu0 0.0
          %2580 = vmatprep.subr.mxu0 0.0
          %2581 = vmatpush1.msra.mxu0 0.0
          %2582 = vmatprep.subr.mxu0 0.0
          %2583 = vmatpush1.msra.mxu0 0.0
          %2584 = vmatprep.subr.mxu0 0.0
          %2585 = vmatpush1.msra.mxu0 0.0
          %2586 = vmatprep.subr.mxu0 0.0
          %2587 = vmatpush1.msra.mxu0 0.0
          %2588 = vmatprep.subr.mxu0 0.0
          %2589 = vmatpush1.msra.mxu0 %v2553
          %2590 = vmatprep.subr.mxu0 0.0
          %2591 = vmatpush2.msra.mxu0 0.0
          %2592 = vmatprep.subr.mxu0 0.0
          %2593 = vmatpush2.msra.mxu0 0.0
          %2594 = vmatprep.subr.mxu0 0.0
          %2595 = vmatpush2.msra.mxu0 0.0
          %2596 = vmatprep.subr.mxu0 0.0
          %2597 = vmatpush2.msra.mxu0 0.0
          %2598 = vmatprep.subr.mxu0 0.0
          %2599 = vmatpush2.msra.mxu0 0.0
          %2600 = vmatprep.subr.mxu0 0.0
          %2601 = vmatpush2.msra.mxu0 0.0
          %2602 = vmatprep.subr.mxu0 0.0
          %2603 = vmatpush2.msra.mxu0 0.0
          %2604 = vmatprep.subr.mxu0 0.0
          %2605 = vmatpush2.msra.mxu0 0.0
          %2606 = vmatprep.subr.mxu0 0.0
          %2607 = vmatpush2.msra.mxu0 0.0
          %2608 = vmatprep.subr.mxu0 0.0
          %2609 = vmatpush2.msra.mxu0 0.0
          %2610 = vmatprep.subr.mxu0 0.0
          %2611 = vmatpush2.msra.mxu0 0.0
          %2612 = vmatprep.subr.mxu0 0.0
          %2613 = vmatpush2.msra.mxu0 0.0
          %2614 = vmatprep.subr.mxu0 0.0
          %2615 = vmatpush2.msra.mxu0 0.0
          %2616 = vmatprep.subr.mxu0 0.0
          %2617 = vmatpush2.msra.mxu0 0.0
          %2618 = vmatprep.subr.mxu0 0.0
          %2619 = vmatpush2.msra.mxu0 0.0
          %2620 = vmatprep.subr.mxu0 0.0
          %2621 = vmatpush2.msra.mxu0 0.0
          %2622 = vmatprep.mubr.f32.mxu0 0.0
          %2623 = vmatmul.mubr.f32.gmra.mxu0 %v2556
          %v2624 = vpop.f32.mrf.mxu0
          %v2625 = vadd.f32 0.0, %v2624
          %v2626 = vpop.f32.mrf.mxu0
          %2627 = vdwg.mxu0
          %v2629 = vsel %vm946, %v2625, 0
          %2631 = vmatprep.subr.mxu0 0.0
          %2632 = vmatpush1.msra.mxu0 0.0
          %2633 = vmatprep.subr.mxu0 0.0
          %2634 = vmatpush1.msra.mxu0 0.0
          %2635 = vmatprep.subr.mxu0 0.0
          %2636 = vmatpush1.msra.mxu0 0.0
          %2637 = vmatprep.subr.mxu0 0.0
          %2638 = vmatpush1.msra.mxu0 0.0
          %2639 = vmatprep.subr.mxu0 0.0
          %2640 = vmatpush1.msra.mxu0 0.0
          %2641 = vmatprep.subr.mxu0 0.0
          %2642 = vmatpush1.msra.mxu0 0.0
          %2643 = vmatprep.subr.mxu0 0.0
          %2644 = vmatpush1.msra.mxu0 0.0
          %2645 = vmatprep.subr.mxu0 0.0
          %2646 = vmatpush1.msra.mxu0 0.0
          %2647 = vmatprep.subr.mxu0 0.0
          %2648 = vmatpush1.msra.mxu0 0.0
          %2649 = vmatprep.subr.mxu0 0.0
          %2650 = vmatpush1.msra.mxu0 0.0
          %2651 = vmatprep.subr.mxu0 0.0
          %2652 = vmatpush1.msra.mxu0 0.0
          %2653 = vmatprep.subr.mxu0 0.0
          %2654 = vmatpush1.msra.mxu0 0.0
          %2655 = vmatprep.subr.mxu0 0.0
          %2656 = vmatpush1.msra.mxu0 0.0
          %2657 = vmatprep.subr.mxu0 0.0
          %2658 = vmatpush1.msra.mxu0 0.0
          %2659 = vmatprep.subr.mxu0 0.0
          %2660 = vmatpush1.msra.mxu0 %v719
          %2661 = vmatprep.subr.mxu0 0.0
          %2662 = vmatpush1.msra.mxu0 %v718
          %2663 = vmatprep.subr.mxu0 0.0
          %2664 = vmatpush2.msra.mxu0 0.0
          %2665 = vmatprep.subr.mxu0 0.0
          %2666 = vmatpush2.msra.mxu0 0.0
          %2667 = vmatprep.subr.mxu0 0.0
          %2668 = vmatpush2.msra.mxu0 0.0
          %2669 = vmatprep.subr.mxu0 0.0
          %2670 = vmatpush2.msra.mxu0 0.0
          %2671 = vmatprep.subr.mxu0 0.0
          %2672 = vmatpush2.msra.mxu0 0.0
          %2673 = vmatprep.subr.mxu0 0.0
          %2674 = vmatpush2.msra.mxu0 0.0
          %2675 = vmatprep.subr.mxu0 0.0
          %2676 = vmatpush2.msra.mxu0 0.0
          %2677 = vmatprep.subr.mxu0 0.0
          %2678 = vmatpush2.msra.mxu0 0.0
          %2679 = vmatprep.subr.mxu0 0.0
          %2680 = vmatpush2.msra.mxu0 0.0
          %2681 = vmatprep.subr.mxu0 0.0
          %2682 = vmatpush2.msra.mxu0 0.0
          %2683 = vmatprep.subr.mxu0 0.0
          %2684 = vmatpush2.msra.mxu0 0.0
          %2685 = vmatprep.subr.mxu0 0.0
          %2686 = vmatpush2.msra.mxu0 0.0
          %2687 = vmatprep.subr.mxu0 0.0
          %2688 = vmatpush2.msra.mxu0 0.0
          %2689 = vmatprep.subr.mxu0 0.0
          %2690 = vmatpush2.msra.mxu0 0.0
          %2691 = vmatprep.subr.mxu0 0.0
          %2692 = vmatpush2.msra.mxu0 0.0
          %2693 = vmatprep.subr.mxu0 0.0
          %2694 = vmatpush2.msra.mxu0 0.0
          %2695 = vmatprep.mubr.f32.mxu0 0.0
          %2696 = vmatmul.mubr.f32.gmra.mxu0 %v2629
          %v2697 = vpop.f32.mrf.mxu0
          %v2698 = vadd.f32 0.0, %v2697
          %v2699 = vpop.f32.mrf.mxu0
          %2700 = vdwg.mxu0
          %v2702 = vsel %vm946, %v2458, 0
          %2704 = vmatprep.subr.mxu0 0.0
          %2705 = vmatpush1.msra.mxu0 0.0
          %2706 = vmatprep.subr.mxu0 0.0
          %2707 = vmatpush1.msra.mxu0 0.0
          %2708 = vmatprep.subr.mxu0 0.0
          %2709 = vmatpush1.msra.mxu0 0.0
          %2710 = vmatprep.subr.mxu0 0.0
          %2711 = vmatpush1.msra.mxu0 0.0
          %2712 = vmatprep.subr.mxu0 0.0
          %2713 = vmatpush1.msra.mxu0 0.0
          %2714 = vmatprep.subr.mxu0 0.0
          %2715 = vmatpush1.msra.mxu0 0.0
          %2716 = vmatprep.subr.mxu0 0.0
          %2717 = vmatpush1.msra.mxu0 0.0
          %2718 = vmatprep.subr.mxu0 0.0
          %2719 = vmatpush1.msra.mxu0 0.0
          %2720 = vmatprep.subr.mxu0 0.0
          %2721 = vmatpush1.msra.mxu0 0.0
          %2722 = vmatprep.subr.mxu0 0.0
          %2723 = vmatpush1.msra.mxu0 0.0
          %2724 = vmatprep.subr.mxu0 0.0
          %2725 = vmatpush1.msra.mxu0 0.0
          %2726 = vmatprep.subr.mxu0 0.0
          %2727 = vmatpush1.msra.mxu0 0.0
          %2728 = vmatprep.subr.mxu0 0.0
          %2729 = vmatpush1.msra.mxu0 0.0
          %2730 = vmatprep.subr.mxu0 0.0
          %2731 = vmatpush1.msra.mxu0 0.0
          %2732 = vmatprep.subr.mxu0 0.0
          %2733 = vmatpush1.msra.mxu0 %v717
          %2734 = vmatprep.subr.mxu0 0.0
          %2735 = vmatpush1.msra.mxu0 %v716
          %2736 = vmatprep.subr.mxu0 0.0
          %2737 = vmatpush2.msra.mxu0 0.0
          %2738 = vmatprep.subr.mxu0 0.0
          %2739 = vmatpush2.msra.mxu0 0.0
          %2740 = vmatprep.subr.mxu0 0.0
          %2741 = vmatpush2.msra.mxu0 0.0
          %2742 = vmatprep.subr.mxu0 0.0
          %2743 = vmatpush2.msra.mxu0 0.0
          %2744 = vmatprep.subr.mxu0 0.0
          %2745 = vmatpush2.msra.mxu0 0.0
          %2746 = vmatprep.subr.mxu0 0.0
          %2747 = vmatpush2.msra.mxu0 0.0
          %2748 = vmatprep.subr.mxu0 0.0
          %2749 = vmatpush2.msra.mxu0 0.0
          %2750 = vmatprep.subr.mxu0 0.0
          %2751 = vmatpush2.msra.mxu0 0.0
          %2752 = vmatprep.subr.mxu0 0.0
          %2753 = vmatpush2.msra.mxu0 0.0
          %2754 = vmatprep.subr.mxu0 0.0
          %2755 = vmatpush2.msra.mxu0 0.0
          %2756 = vmatprep.subr.mxu0 0.0
          %2757 = vmatpush2.msra.mxu0 0.0
          %2758 = vmatprep.subr.mxu0 0.0
          %2759 = vmatpush2.msra.mxu0 0.0
          %2760 = vmatprep.subr.mxu0 0.0
          %2761 = vmatpush2.msra.mxu0 0.0
          %2762 = vmatprep.subr.mxu0 0.0
          %2763 = vmatpush2.msra.mxu0 0.0
          %2764 = vmatprep.subr.mxu0 0.0
          %2765 = vmatpush2.msra.mxu0 0.0
          %2766 = vmatprep.subr.mxu0 0.0
          %2767 = vmatpush2.msra.mxu0 0.0
          %2768 = vmatprep.mubr.f32.mxu0 0.0
          %2769 = vmatmul.mubr.f32.gmra.mxu0 %v2702
          %v2770 = vpop.f32.mrf.mxu0
          %v2771 = vadd.f32 %v2698, %v2770
          %v2772 = vpop.f32.mrf.mxu0
          %2773 = vdwg.mxu0
          %v2774 = vadd.f32 %v2771, %v1428
          %v2775 = vsel %vm771, %v2774, 0.0
          %2776 = vadd.xlane.f32.xlu0 %v2775
          %v2777 = vpop.xlane.xlu0 %2776
          %v2778 = vmul.f32 %v2777, %v1434
          %v2779 = vsub.f32 %v2774, %v2778
          %v2780 = vmul.f32 %v2779, %v2779
          %v2781 = vsel %vm771, %v2780, 0.0
          %2782 = vadd.xlane.f32.xlu0 %v2781
          %v2783 = vpop.xlane.xlu0 %2782
          %v2784 = vmul.f32 %v2783, %v1434
          %v2785 = vadd.f32 %v2784, 1e-05
          %v2786 = vrsqrt.pop %v2785
          %v2787 = vmul.f32 %v2779, %v2786
          %v2788 = vmul.f32 %v2787, %v1449
          %v2789 = vadd.f32 %v2788, %v1456
          %v2790 = vmul.f32 %v2789, %v1462
          %v2792 = vsel %vm771, %v2790, 0
          %2794 = vmatprep.subr.mxu0 0.0
          %2795 = vmatpush1.msra.mxu0 0.0
          %2796 = vmatprep.subr.mxu0 0.0
          %2797 = vmatpush1.msra.mxu0 0.0
          %2798 = vmatprep.subr.mxu0 0.0
          %2799 = vmatpush1.msra.mxu0 0.0
          %2800 = vmatprep.subr.mxu0 0.0
          %2801 = vmatpush1.msra.mxu0 0.0
          %2802 = vmatprep.subr.mxu0 0.0
          %2803 = vmatpush1.msra.mxu0 0.0
          %2804 = vmatprep.subr.mxu0 0.0
          %2805 = vmatpush1.msra.mxu0 0.0
          %2806 = vmatprep.subr.mxu0 0.0
          %2807 = vmatpush1.msra.mxu0 0.0
          %2808 = vmatprep.subr.mxu0 0.0
          %2809 = vmatpush1.msra.mxu0 0.0
          %2810 = vmatprep.subr.mxu0 0.0
          %2811 = vmatpush1.msra.mxu0 0.0
          %2812 = vmatprep.subr.mxu0 0.0
          %2813 = vmatpush1.msra.mxu0 0.0
          %2814 = vmatprep.subr.mxu0 0.0
          %2815 = vmatpush1.msra.mxu0 0.0
          %2816 = vmatprep.subr.mxu0 0.0
          %2817 = vmatpush1.msra.mxu0 0.0
          %2818 = vmatprep.subr.mxu0 0.0
          %2819 = vmatpush1.msra.mxu0 %v724
          %2820 = vmatprep.subr.mxu0 0.0
          %2821 = vmatpush1.msra.mxu0 %v723
          %2822 = vmatprep.subr.mxu0 0.0
          %2823 = vmatpush1.msra.mxu0 %v722
          %2824 = vmatprep.subr.mxu0 0.0
          %2825 = vmatpush1.msra.mxu0 %v721
          %2826 = vmatprep.subr.mxu0 0.0
          %2827 = vmatpush2.msra.mxu0 0.0
          %2828 = vmatprep.subr.mxu0 0.0
          %2829 = vmatpush2.msra.mxu0 0.0
          %2830 = vmatprep.subr.mxu0 0.0
          %2831 = vmatpush2.msra.mxu0 0.0
          %2832 = vmatprep.subr.mxu0 0.0
          %2833 = vmatpush2.msra.mxu0 0.0
          %2834 = vmatprep.subr.mxu0 0.0
          %2835 = vmatpush2.msra.mxu0 0.0
          %2836 = vmatprep.subr.mxu0 0.0
          %2837 = vmatpush2.msra.mxu0 0.0
          %2838 = vmatprep.subr.mxu0 0.0
          %2839 = vmatpush2.msra.mxu0 0.0
          %2840 = vmatprep.subr.mxu0 0.0
          %2841 = vmatpush2.msra.mxu0 0.0
          %2842 = vmatprep.subr.mxu0 0.0
          %2843 = vmatpush2.msra.mxu0 0.0
          %2844 = vmatprep.subr.mxu0 0.0
          %2845 = vmatpush2.msra.mxu0 0.0
          %2846 = vmatprep.subr.mxu0 0.0
          %2847 = vmatpush2.msra.mxu0 0.0
          %2848 = vmatprep.subr.mxu0 0.0
          %2849 = vmatpush2.msra.mxu0 0.0
          %2850 = vmatprep.subr.mxu0 0.0
          %2851 = vmatpush2.msra.mxu0 0.0
          %2852 = vmatprep.subr.mxu0 0.0
          %2853 = vmatpush2.msra.mxu0 0.0
          %2854 = vmatprep.subr.mxu0 0.0
          %2855 = vmatpush2.msra.mxu0 0.0
          %2856 = vmatprep.subr.mxu0 0.0
          %2857 = vmatpush2.msra.mxu0 0.0
          %2858 = vmatprep.mubr.f32.mxu0 0.0
          %2859 = vmatmul.mubr.f32.gmra.mxu0 %v2792
          %v2860 = vpop.f32.mrf.mxu0
          %v2861 = vadd.f32 %v751, %v2860
          %v2862 = vpop.f32.mrf.mxu0
          %2863 = vdwg.mxu0
          %v2865 = vsel %vm946, %v2861, 0
          %2867 = vmatprep.subr.mxu0 0.0
          %2868 = vmatpush1.xpose.msra.mxu0 0.0
          %2869 = vmatprep.subr.mxu0 0.0
          %2870 = vmatpush1.xpose.msra.mxu0 0.0
          %2871 = vmatprep.subr.mxu0 0.0
          %2872 = vmatpush1.xpose.msra.mxu0 0.0
          %2873 = vmatprep.subr.mxu0 0.0
          %2874 = vmatpush1.xpose.msra.mxu0 0.0
          %2875 = vmatprep.subr.mxu0 0.0
          %2876 = vmatpush1.xpose.msra.mxu0 0.0
          %2877 = vmatprep.subr.mxu0 0.0
          %2878 = vmatpush1.xpose.msra.mxu0 0.0
          %2879 = vmatprep.subr.mxu0 0.0
          %2880 = vmatpush1.xpose.msra.mxu0 0.0
          %2881 = vmatprep.subr.mxu0 0.0
          %2882 = vmatpush1.xpose.msra.mxu0 0.0
          %2883 = vmatprep.subr.mxu0 0.0
          %2884 = vmatpush1.xpose.msra.mxu0 0.0
          %2885 = vmatprep.subr.mxu0 0.0
          %2886 = vmatpush1.xpose.msra.mxu0 0.0
          %2887 = vmatprep.subr.mxu0 0.0
          %2888 = vmatpush1.xpose.msra.mxu0 0.0
          %2889 = vmatprep.subr.mxu0 0.0
          %2890 = vmatpush1.xpose.msra.mxu0 0.0
          %2891 = vmatprep.subr.mxu0 0.0
          %2892 = vmatpush1.xpose.msra.mxu0 0.0
          %2893 = vmatprep.subr.mxu0 0.0
          %2894 = vmatpush1.xpose.msra.mxu0 0.0
          %2895 = vmatprep.subr.mxu0 0.0
          %2896 = vmatpush1.xpose.msra.mxu0 0.0
          %2897 = vmatprep.subr.mxu0 0.0
          %2898 = vmatpush1.xpose.msra.mxu0 %v1543
          %2899 = vmatprep.subr.mxu0 0.0
          %2900 = vmatpush2.xpose.msra.mxu0 0.0
          %2901 = vmatprep.subr.mxu0 0.0
          %2902 = vmatpush2.xpose.msra.mxu0 0.0
          %2903 = vmatprep.subr.mxu0 0.0
          %2904 = vmatpush2.xpose.msra.mxu0 0.0
          %2905 = vmatprep.subr.mxu0 0.0
          %2906 = vmatpush2.xpose.msra.mxu0 0.0
          %2907 = vmatprep.subr.mxu0 0.0
          %2908 = vmatpush2.xpose.msra.mxu0 0.0
          %2909 = vmatprep.subr.mxu0 0.0
          %2910 = vmatpush2.xpose.msra.mxu0 0.0
          %2911 = vmatprep.subr.mxu0 0.0
          %2912 = vmatpush2.xpose.msra.mxu0 0.0
          %2913 = vmatprep.subr.mxu0 0.0
          %2914 = vmatpush2.xpose.msra.mxu0 0.0
          %2915 = vmatprep.subr.mxu0 0.0
          %2916 = vmatpush2.xpose.msra.mxu0 0.0
          %2917 = vmatprep.subr.mxu0 0.0
          %2918 = vmatpush2.xpose.msra.mxu0 0.0
          %2919 = vmatprep.subr.mxu0 0.0
          %2920 = vmatpush2.xpose.msra.mxu0 0.0
          %2921 = vmatprep.subr.mxu0 0.0
          %2922 = vmatpush2.xpose.msra.mxu0 0.0
          %2923 = vmatprep.subr.mxu0 0.0
          %2924 = vmatpush2.xpose.msra.mxu0 0.0
          %2925 = vmatprep.subr.mxu0 0.0
          %2926 = vmatpush2.xpose.msra.mxu0 0.0
          %2927 = vmatprep.subr.mxu0 0.0
          %2928 = vmatpush2.xpose.msra.mxu0 0.0
          %2929 = vmatprep.subr.mxu0 0.0
          %2930 = vmatpush2.xpose.msra.mxu0 0.0
          %2931 = vmatprep.mubr.f32.mxu0 0.0
          %2932 = vmatmul.mubr.f32.gmra.mxu0 %v2865
          %v2933 = vpop.f32.mrf.mxu0
          %v2934 = vadd.f32 0.0, %v2933
          %v2935 = vpop.f32.mrf.mxu0
          %2936 = vdwg.mxu0
          %v2937 = vmul.f32 %v2934, 0.25
          %v2938 = vadd.f32 %v2937, %v710
          %v2939 = vsel %vm1023, %v2938, -inf
          %2940 = vmax.xlane.f32.xlu0 %v2939
          %v2941 = vpop.xlane.xlu0 %2940
          %v2942 = vsub.f32 %v2938, %v2941
          %v2943 = vmul.f32 %v2942, 1.442695
          %v2944 = vpow.pop %v2943
          %v2945 = vsel %vm1023, %v2944, 0.0
          %2946 = vadd.xlane.f32.xlu0 %v2945
          %v2947 = vpop.xlane.xlu0 %2946
          %v2948 = vrcp.pop %v2947
          %v2949 = vmul.f32 %v2944, %v2948
          %v2951 = vsel %vm1023, %v2949, 0
          %2953 = vmatprep.subr.mxu0 0.0
          %2954 = vmatpush1.msra.mxu0 0.0
          %2955 = vmatprep.subr.mxu0 0.0
          %2956 = vmatpush1.msra.mxu0 0.0
          %2957 = vmatprep.subr.mxu0 0.0
          %2958 = vmatpush1.msra.mxu0 0.0
          %2959 = vmatprep.subr.mxu0 0.0
          %2960 = vmatpush1.msra.mxu0 0.0
          %2961 = vmatprep.subr.mxu0 0.0
          %2962 = vmatpush1.msra.mxu0 0.0
          %2963 = vmatprep.subr.mxu0 0.0
          %2964 = vmatpush1.msra.mxu0 0.0
          %2965 = vmatprep.subr.mxu0 0.0
          %2966 = vmatpush1.msra.mxu0 0.0
          %2967 = vmatprep.subr.mxu0 0.0
          %2968 = vmatpush1.msra.mxu0 0.0
          %2969 = vmatprep.subr.mxu0 0.0
          %2970 = vmatpush1.msra.mxu0 0.0
          %2971 = vmatprep.subr.mxu0 0.0
          %2972 = vmatpush1.msra.mxu0 0.0
          %2973 = vmatprep.subr.mxu0 0.0
          %2974 = vmatpush1.msra.mxu0 0.0
          %2975 = vmatprep.subr.mxu0 0.0
          %2976 = vmatpush1.msra.mxu0 0.0
          %2977 = vmatprep.subr.mxu0 0.0
          %2978 = vmatpush1.msra.mxu0 0.0
          %2979 = vmatprep.subr.mxu0 0.0
          %2980 = vmatpush1.msra.mxu0 0.0
          %2981 = vmatprep.subr.mxu0 0.0
          %2982 = vmatpush1.msra.mxu0 0.0
          %2983 = vmatprep.subr.mxu0 0.0
          %2984 = vmatpush1.msra.mxu0 %v1629
          %2985 = vmatprep.subr.mxu0 0.0
          %2986 = vmatpush2.msra.mxu0 0.0
          %2987 = vmatprep.subr.mxu0 0.0
          %2988 = vmatpush2.msra.mxu0 0.0
          %2989 = vmatprep.subr.mxu0 0.0
          %2990 = vmatpush2.msra.mxu0 0.0
          %2991 = vmatprep.subr.mxu0 0.0
          %2992 = vmatpush2.msra.mxu0 0.0
          %2993 = vmatprep.subr.mxu0 0.0
          %2994 = vmatpush2.msra.mxu0 0.0
          %2995 = vmatprep.subr.mxu0 0.0
          %2996 = vmatpush2.msra.mxu0 0.0
          %2997 = vmatprep.subr.mxu0 0.0
          %2998 = vmatpush2.msra.mxu0 0.0
          %2999 = vmatprep.subr.mxu0 0.0
          %3000 = vmatpush2.msra.mxu0 0.0
          %3001 = vmatprep.subr.mxu0 0.0
          %3002 = vmatpush2.msra.mxu0 0.0
          %3003 = vmatprep.subr.mxu0 0.0
          %3004 = vmatpush2.msra.mxu0 0.0
          %3005 = vmatprep.subr.mxu0 0.0
          %3006 = vmatpush2.msra.mxu0 0.0
          %3007 = vmatprep.subr.mxu0 0.0
          %3008 = vmatpush2.msra.mxu0 0.0
          %3009 = vmatprep.subr.mxu0 0.0
          %3010 = vmatpush2.msra.mxu0 0.0
          %3011 = vmatprep.subr.mxu0 0.0
          %3012 = vmatpush2.msra.mxu0 0.0
          %3013 = vmatprep.subr.mxu0 0.0
          %3014 = vmatpush2.msra.mxu0 0.0
          %3015 = vmatprep.subr.mxu0 0.0
          %3016 = vmatpush2.msra.mxu0 0.0
          %3017 = vmatprep.mubr.f32.mxu0 0.0
          %3018 = vmatmul.mubr.f32.gmra.mxu0 %v2951
          %v3019 = vpop.f32.mrf.mxu0
          %v3020 = vadd.f32 0.0, %v3019
          %v3021 = vpop.f32.mrf.mxu0
          %3022 = vdwg.mxu0
          %3023 = vrot.lane.b32.xlu0 %v2861, 112
          %v3024 = vpop.permute.xlu0 %3023
          %v3025 = vsel %vm946, %v3024, 0
          %3027 = vmatprep.subr.mxu0 0.0
          %3028 = vmatpush1.xpose.msra.mxu0 0.0
          %3029 = vmatprep.subr.mxu0 0.0
          %3030 = vmatpush1.xpose.msra.mxu0 0.0
          %3031 = vmatprep.subr.mxu0 0.0
          %3032 = vmatpush1.xpose.msra.mxu0 0.0
          %3033 = vmatprep.subr.mxu0 0.0
          %3034 = vmatpush1.xpose.msra.mxu0 0.0
          %3035 = vmatprep.subr.mxu0 0.0
          %3036 = vmatpush1.xpose.msra.mxu0 0.0
          %3037 = vmatprep.subr.mxu0 0.0
          %3038 = vmatpush1.xpose.msra.mxu0 0.0
          %3039 = vmatprep.subr.mxu0 0.0
          %3040 = vmatpush1.xpose.msra.mxu0 0.0
          %3041 = vmatprep.subr.mxu0 0.0
          %3042 = vmatpush1.xpose.msra.mxu0 0.0
          %3043 = vmatprep.subr.mxu0 0.0
          %3044 = vmatpush1.xpose.msra.mxu0 0.0
          %3045 = vmatprep.subr.mxu0 0.0
          %3046 = vmatpush1.xpose.msra.mxu0 0.0
          %3047 = vmatprep.subr.mxu0 0.0
          %3048 = vmatpush1.xpose.msra.mxu0 0.0
          %3049 = vmatprep.subr.mxu0 0.0
          %3050 = vmatpush1.xpose.msra.mxu0 0.0
          %3051 = vmatprep.subr.mxu0 0.0
          %3052 = vmatpush1.xpose.msra.mxu0 0.0
          %3053 = vmatprep.subr.mxu0 0.0
          %3054 = vmatpush1.xpose.msra.mxu0 0.0
          %3055 = vmatprep.subr.mxu0 0.0
          %3056 = vmatpush1.xpose.msra.mxu0 0.0
          %3057 = vmatprep.subr.mxu0 0.0
          %3058 = vmatpush1.xpose.msra.mxu0 %v1710
          %3059 = vmatprep.subr.mxu0 0.0
          %3060 = vmatpush2.xpose.msra.mxu0 0.0
          %3061 = vmatprep.subr.mxu0 0.0
          %3062 = vmatpush2.xpose.msra.mxu0 0.0
          %3063 = vmatprep.subr.mxu0 0.0
          %3064 = vmatpush2.xpose.msra.mxu0 0.0
          %3065 = vmatprep.subr.mxu0 0.0
          %3066 = vmatpush2.xpose.msra.mxu0 0.0
          %3067 = vmatprep.subr.mxu0 0.0
          %3068 = vmatpush2.xpose.msra.mxu0 0.0
          %3069 = vmatprep.subr.mxu0 0.0
          %3070 = vmatpush2.xpose.msra.mxu0 0.0
          %3071 = vmatprep.subr.mxu0 0.0
          %3072 = vmatpush2.xpose.msra.mxu0 0.0
          %3073 = vmatprep.subr.mxu0 0.0
          %3074 = vmatpush2.xpose.msra.mxu0 0.0
          %3075 = vmatprep.subr.mxu0 0.0
          %3076 = vmatpush2.xpose.msra.mxu0 0.0
          %3077 = vmatprep.subr.mxu0 0.0
          %3078 = vmatpush2.xpose.msra.mxu0 0.0
          %3079 = vmatprep.subr.mxu0 0.0
          %3080 = vmatpush2.xpose.msra.mxu0 0.0
          %3081 = vmatprep.subr.mxu0 0.0
          %3082 = vmatpush2.xpose.msra.mxu0 0.0
          %3083 = vmatprep.subr.mxu0 0.0
          %3084 = vmatpush2.xpose.msra.mxu0 0.0
          %3085 = vmatprep.subr.mxu0 0.0
          %3086 = vmatpush2.xpose.msra.mxu0 0.0
          %3087 = vmatprep.subr.mxu0 0.0
          %3088 = vmatpush2.xpose.msra.mxu0 0.0
          %3089 = vmatprep.subr.mxu0 0.0
          %3090 = vmatpush2.xpose.msra.mxu0 0.0
          %3091 = vmatprep.mubr.f32.mxu0 0.0
          %3092 = vmatmul.mubr.f32.gmra.mxu0 %v3025
          %v3093 = vpop.f32.mrf.mxu0
          %v3094 = vadd.f32 0.0, %v3093
          %v3095 = vpop.f32.mrf.mxu0
          %3096 = vdwg.mxu0
          %v3097 = vmul.f32 %v3094, 0.25
          %v3098 = vadd.f32 %v3097, %v710
          %v3099 = vsel %vm1023, %v3098, -inf
          %3100 = vmax.xlane.f32.xlu0 %v3099
          %v3101 = vpop.xlane.xlu0 %3100
          %v3102 = vsub.f32 %v3098, %v3101
          %v3103 = vmul.f32 %v3102, 1.442695
          %v3104 = vpow.pop %v3103
          %v3105 = vsel %vm1023, %v3104, 0.0
          %3106 = vadd.xlane.f32.xlu0 %v3105
          %v3107 = vpop.xlane.xlu0 %3106
          %v3108 = vrcp.pop %v3107
          %v3109 = vmul.f32 %v3104, %v3108
          %v3111 = vsel %vm1023, %v3109, 0
          %3113 = vmatprep.subr.mxu0 0.0
          %3114 = vmatpush1.msra.mxu0 0.0
          %3115 = vmatprep.subr.mxu0 0.0
          %3116 = vmatpush1.msra.mxu0 0.0
          %3117 = vmatprep.subr.mxu0 0.0
          %3118 = vmatpush1.msra.mxu0 0.0
          %3119 = vmatprep.subr.mxu0 0.0
          %3120 = vmatpush1.msra.mxu0 0.0
          %3121 = vmatprep.subr.mxu0 0.0
          %3122 = vmatpush1.msra.mxu0 0.0
          %3123 = vmatprep.subr.mxu0 0.0
          %3124 = vmatpush1.msra.mxu0 0.0
          %3125 = vmatprep.subr.mxu0 0.0
          %3126 = vmatpush1.msra.mxu0 0.0
          %3127 = vmatprep.subr.mxu0 0.0
          %3128 = vmatpush1.msra.mxu0 0.0
          %3129 = vmatprep.subr.mxu0 0.0
          %3130 = vmatpush1.msra.mxu0 0.0
          %3131 = vmatprep.subr.mxu0 0.0
          %3132 = vmatpush1.msra.mxu0 0.0
          %3133 = vmatprep.subr.mxu0 0.0
          %3134 = vmatpush1.msra.mxu0 0.0
          %3135 = vmatprep.subr.mxu0 0.0
          %3136 = vmatpush1.msra.mxu0 0.0
          %3137 = vmatprep.subr.mxu0 0.0
          %3138 = vmatpush1.msra.mxu0 0.0
          %3139 = vmatprep.subr.mxu0 0.0
          %3140 = vmatpush1.msra.mxu0 0.0
          %3141 = vmatprep.subr.mxu0 0.0
          %3142 = vmatpush1.msra.mxu0 0.0
          %3143 = vmatprep.subr.mxu0 0.0
          %3144 = vmatpush1.msra.mxu0 %v1796
          %3145 = vmatprep.subr.mxu0 0.0
          %3146 = vmatpush2.msra.mxu0 0.0
          %3147 = vmatprep.subr.mxu0 0.0
          %3148 = vmatpush2.msra.mxu0 0.0
          %3149 = vmatprep.subr.mxu0 0.0
          %3150 = vmatpush2.msra.mxu0 0.0
          %3151 = vmatprep.subr.mxu0 0.0
          %3152 = vmatpush2.msra.mxu0 0.0
          %3153 = vmatprep.subr.mxu0 0.0
          %3154 = vmatpush2.msra.mxu0 0.0
          %3155 = vmatprep.subr.mxu0 0.0
          %3156 = vmatpush2.msra.mxu0 0.0
          %3157 = vmatprep.subr.mxu0 0.0
          %3158 = vmatpush2.msra.mxu0 0.0
          %3159 = vmatprep.subr.mxu0 0.0
          %3160 = vmatpush2.msra.mxu0 0.0
          %3161 = vmatprep.subr.mxu0 0.0
          %3162 = vmatpush2.msra.mxu0 0.0
          %3163 = vmatprep.subr.mxu0 0.0
          %3164 = vmatpush2.msra.mxu0 0.0
          %3165 = vmatprep.subr.mxu0 0.0
          %3166 = vmatpush2.msra.mxu0 0.0
          %3167 = vmatprep.subr.mxu0 0.0
          %3168 = vmatpush2.msra.mxu0 0.0
          %3169 = vmatprep.subr.mxu0 0.0
          %3170 = vmatpush2.msra.mxu0 0.0
          %3171 = vmatprep.subr.mxu0 0.0
          %3172 = vmatpush2.msra.mxu0 0.0
          %3173 = vmatprep.subr.mxu0 0.0
          %3174 = vmatpush2.msra.mxu0 0.0
          %3175 = vmatprep.subr.mxu0 0.0
          %3176 = vmatpush2.msra.mxu0 0.0
          %3177 = vmatprep.mubr.f32.mxu0 0.0
          %3178 = vmatmul.mubr.f32.gmra.mxu0 %v3111
          %v3179 = vpop.f32.mrf.mxu0
          %v3180 = vadd.f32 0.0, %v3179
          %v3181 = vpop.f32.mrf.mxu0
          %3182 = vdwg.mxu0
          %v3184 = vsel %vm946, %v3180, 0
          %3186 = vmatprep.subr.mxu0 0.0
          %3187 = vmatpush1.msra.mxu0 0.0
          %3188 = vmatprep.subr.mxu0 0.0
          %3189 = vmatpush1.msra.mxu0 0.0
          %3190 = vmatprep.subr.mxu0 0.0
          %3191 = vmatpush1.msra.mxu0 0.0
          %3192 = vmatprep.subr.mxu0 0.0
          %3193 = vmatpush1.msra.mxu0 0.0
          %3194 = vmatprep.subr.mxu0 0.0
          %3195 = vmatpush1.msra.mxu0 0.0
          %3196 = vmatprep.subr.mxu0 0.0
          %3197 = vmatpush1.msra.mxu0 0.0
          %3198 = vmatprep.subr.mxu0 0.0
          %3199 = vmatpush1.msra.mxu0 0.0
          %3200 = vmatprep.subr.mxu0 0.0
          %3201 = vmatpush1.msra.mxu0 0.0
          %3202 = vmatprep.subr.mxu0 0.0
          %3203 = vmatpush1.msra.mxu0 0.0
          %3204 = vmatprep.subr.mxu0 0.0
          %3205 = vmatpush1.msra.mxu0 0.0
          %3206 = vmatprep.subr.mxu0 0.0
          %3207 = vmatpush1.msra.mxu0 0.0
          %3208 = vmatprep.subr.mxu0 0.0
          %3209 = vmatpush1.msra.mxu0 0.0
          %3210 = vmatprep.subr.mxu0 0.0
          %3211 = vmatpush1.msra.mxu0 0.0
          %3212 = vmatprep.subr.mxu0 0.0
          %3213 = vmatpush1.msra.mxu0 0.0
          %3214 = vmatprep.subr.mxu0 0.0
          %3215 = vmatpush1.msra.mxu0 %v729
          %3216 = vmatprep.subr.mxu0 0.0
          %3217 = vmatpush1.msra.mxu0 %v728
          %3218 = vmatprep.subr.mxu0 0.0
          %3219 = vmatpush2.msra.mxu0 0.0
          %3220 = vmatprep.subr.mxu0 0.0
          %3221 = vmatpush2.msra.mxu0 0.0
          %3222 = vmatprep.subr.mxu0 0.0
          %3223 = vmatpush2.msra.mxu0 0.0
          %3224 = vmatprep.subr.mxu0 0.0
          %3225 = vmatpush2.msra.mxu0 0.0
          %3226 = vmatprep.subr.mxu0 0.0
          %3227 = vmatpush2.msra.mxu0 0.0
          %3228 = vmatprep.subr.mxu0 0.0
          %3229 = vmatpush2.msra.mxu0 0.0
          %3230 = vmatprep.subr.mxu0 0.0
          %3231 = vmatpush2.msra.mxu0 0.0
          %3232 = vmatprep.subr.mxu0 0.0
          %3233 = vmatpush2.msra.mxu0 0.0
          %3234 = vmatprep.subr.mxu0 0.0
          %3235 = vmatpush2.msra.mxu0 0.0
          %3236 = vmatprep.subr.mxu0 0.0
          %3237 = vmatpush2.msra.mxu0 0.0
          %3238 = vmatprep.subr.mxu0 0.0
          %3239 = vmatpush2.msra.mxu0 0.0
          %3240 = vmatprep.subr.mxu0 0.0
          %3241 = vmatpush2.msra.mxu0 0.0
          %3242 = vmatprep.subr.mxu0 0.0
          %3243 = vmatpush2.msra.mxu0 0.0
          %3244 = vmatprep.subr.mxu0 0.0
          %3245 = vmatpush2.msra.mxu0 0.0
          %3246 = vmatprep.subr.mxu0 0.0
          %3247 = vmatpush2.msra.mxu0 0.0
          %3248 = vmatprep.subr.mxu0 0.0
          %3249 = vmatpush2.msra.mxu0 0.0
          %3250 = vmatprep.mubr.f32.mxu0 0.0
          %3251 = vmatmul.mubr.f32.gmra.mxu0 %v3184
          %v3252 = vpop.f32.mrf.mxu0
          %v3253 = vadd.f32 0.0, %v3252
          %v3254 = vpop.f32.mrf.mxu0
          %3255 = vdwg.mxu0
          %v3257 = vsel %vm946, %v3020, 0
          %3259 = vmatprep.subr.mxu0 0.0
          %3260 = vmatpush1.msra.mxu0 0.0
          %3261 = vmatprep.subr.mxu0 0.0
          %3262 = vmatpush1.msra.mxu0 0.0
          %3263 = vmatprep.subr.mxu0 0.0
          %3264 = vmatpush1.msra.mxu0 0.0
          %3265 = vmatprep.subr.mxu0 0.0
          %3266 = vmatpush1.msra.mxu0 0.0
          %3267 = vmatprep.subr.mxu0 0.0
          %3268 = vmatpush1.msra.mxu0 0.0
          %3269 = vmatprep.subr.mxu0 0.0
          %3270 = vmatpush1.msra.mxu0 0.0
          %3271 = vmatprep.subr.mxu0 0.0
          %3272 = vmatpush1.msra.mxu0 0.0
          %3273 = vmatprep.subr.mxu0 0.0
          %3274 = vmatpush1.msra.mxu0 0.0
          %3275 = vmatprep.subr.mxu0 0.0
          %3276 = vmatpush1.msra.mxu0 0.0
          %3277 = vmatprep.subr.mxu0 0.0
          %3278 = vmatpush1.msra.mxu0 0.0
          %3279 = vmatprep.subr.mxu0 0.0
          %3280 = vmatpush1.msra.mxu0 0.0
          %3281 = vmatprep.subr.mxu0 0.0
          %3282 = vmatpush1.msra.mxu0 0.0
          %3283 = vmatprep.subr.mxu0 0.0
          %3284 = vmatpush1.msra.mxu0 0.0
          %3285 = vmatprep.subr.mxu0 0.0
          %3286 = vmatpush1.msra.mxu0 0.0
          %3287 = vmatprep.subr.mxu0 0.0
          %3288 = vmatpush1.msra.mxu0 %v727
          %3289 = vmatprep.subr.mxu0 0.0
          %3290 = vmatpush1.msra.mxu0 %v726
          %3291 = vmatprep.subr.mxu0 0.0
          %3292 = vmatpush2.msra.mxu0 0.0
          %3293 = vmatprep.subr.mxu0 0.0
          %3294 = vmatpush2.msra.mxu0 0.0
          %3295 = vmatprep.subr.mxu0 0.0
          %3296 = vmatpush2.msra.mxu0 0.0
          %3297 = vmatprep.subr.mxu0 0.0
          %3298 = vmatpush2.msra.mxu0 0.0
          %3299 = vmatprep.subr.mxu0 0.0
          %3300 = vmatpush2.msra.mxu0 0.0
          %3301 = vmatprep.subr.mxu0 0.0
          %3302 = vmatpush2.msra.mxu0 0.0
          %3303 = vmatprep.subr.mxu0 0.0
          %3304 = vmatpush2.msra.mxu0 0.0
          %3305 = vmatprep.subr.mxu0 0.0
          %3306 = vmatpush2.msra.mxu0 0.0
          %3307 = vmatprep.subr.mxu0 0.0
          %3308 = vmatpush2.msra.mxu0 0.0
          %3309 = vmatprep.subr.mxu0 0.0
          %3310 = vmatpush2.msra.mxu0 0.0
          %3311 = vmatprep.subr.mxu0 0.0
          %3312 = vmatpush2.msra.mxu0 0.0
          %3313 = vmatprep.subr.mxu0 0.0
          %3314 = vmatpush2.msra.mxu0 0.0
          %3315 = vmatprep.subr.mxu0 0.0
          %3316 = vmatpush2.msra.mxu0 0.0
          %3317 = vmatprep.subr.mxu0 0.0
          %3318 = vmatpush2.msra.mxu0 0.0
          %3319 = vmatprep.subr.mxu0 0.0
          %3320 = vmatpush2.msra.mxu0 0.0
          %3321 = vmatprep.subr.mxu0 0.0
          %3322 = vmatpush2.msra.mxu0 0.0
          %3323 = vmatprep.mubr.f32.mxu0 0.0
          %3324 = vmatmul.mubr.f32.gmra.mxu0 %v3257
          %v3325 = vpop.f32.mrf.mxu0
          %v3326 = vadd.f32 %v3253, %v3325
          %v3327 = vpop.f32.mrf.mxu0
          %3328 = vdwg.mxu0
          %v3329 = vadd.f32 %v3326, %v2021
          %v3330 = vsel %vm771, %v3329, 0.0
          %3331 = vadd.xlane.f32.xlu0 %v3330
          %v3332 = vpop.xlane.xlu0 %3331
          %v3333 = vmul.f32 %v3332, %v1434
          %v3334 = vsub.f32 %v3329, %v3333
          %v3335 = vmul.f32 %v3334, %v3334
          %v3336 = vsel %vm771, %v3335, 0.0
          %3337 = vadd.xlane.f32.xlu0 %v3336
          %v3338 = vpop.xlane.xlu0 %3337
          %v3339 = vmul.f32 %v3338, %v1434
          %v3340 = vadd.f32 %v3339, 1e-05
          %v3341 = vrsqrt.pop %v3340
          %v3342 = vmul.f32 %v3334, %v3341
          %v3343 = vmul.f32 %v3342, %v1449
          %v3344 = vadd.f32 %v3343, %v1456
          %v3345 = vmul.f32 %v3344, %v1462
          %v3347 = vsel %vm771, %v3345, 0
          %3349 = vmatprep.subr.mxu0 0.0
          %3350 = vmatpush1.msra.mxu0 0.0
          %3351 = vmatprep.subr.mxu0 0.0
          %3352 = vmatpush1.msra.mxu0 0.0
          %3353 = vmatprep.subr.mxu0 0.0
          %3354 = vmatpush1.msra.mxu0 0.0
          %3355 = vmatprep.subr.mxu0 0.0
          %3356 = vmatpush1.msra.mxu0 0.0
          %3357 = vmatprep.subr.mxu0 0.0
          %3358 = vmatpush1.msra.mxu0 0.0
          %3359 = vmatprep.subr.mxu0 0.0
          %3360 = vmatpush1.msra.mxu0 0.0
          %3361 = vmatprep.subr.mxu0 0.0
          %3362 = vmatpush1.msra.mxu0 0.0
          %3363 = vmatprep.subr.mxu0 0.0
          %3364 = vmatpush1.msra.mxu0 0.0
          %3365 = vmatprep.subr.mxu0 0.0
          %3366 = vmatpush1.msra.mxu0 0.0
          %3367 = vmatprep.subr.mxu0 0.0
          %3368 = vmatpush1.msra.mxu0 0.0
          %3369 = vmatprep.subr.mxu0 0.0
          %3370 = vmatpush1.msra.mxu0 0.0
          %3371 = vmatprep.subr.mxu0 0.0
          %3372 = vmatpush1.msra.mxu0 0.0
          %3373 = vmatprep.subr.mxu0 0.0
          %3374 = vmatpush1.msra.mxu0 %v734
          %3375 = vmatprep.subr.mxu0 0.0
          %3376 = vmatpush1.msra.mxu0 %v733
          %3377 = vmatprep.subr.mxu0 0.0
          %3378 = vmatpush1.msra.mxu0 %v732
          %3379 = vmatprep.subr.mxu0 0.0
          %3380 = vmatpush1.msra.mxu0 %v731
          %3381 = vmatprep.subr.mxu0 0.0
          %3382 = vmatpush2.msra.mxu0 0.0
          %3383 = vmatprep.subr.mxu0 0.0
          %3384 = vmatpush2.msra.mxu0 0.0
          %3385 = vmatprep.subr.mxu0 0.0
          %3386 = vmatpush2.msra.mxu0 0.0
          %3387 = vmatprep.subr.mxu0 0.0
          %3388 = vmatpush2.msra.mxu0 0.0
          %3389 = vmatprep.subr.mxu0 0.0
          %3390 = vmatpush2.msra.mxu0 0.0
          %3391 = vmatprep.subr.mxu0 0.0
          %3392 = vmatpush2.msra.mxu0 0.0
          %3393 = vmatprep.subr.mxu0 0.0
          %3394 = vmatpush2.msra.mxu0 0.0
          %3395 = vmatprep.subr.mxu0 0.0
          %3396 = vmatpush2.msra.mxu0 0.0
          %3397 = vmatprep.subr.mxu0 0.0
          %3398 = vmatpush2.msra.mxu0 0.0
          %3399 = vmatprep.subr.mxu0 0.0
          %3400 = vmatpush2.msra.mxu0 0.0
          %3401 = vmatprep.subr.mxu0 0.0
          %3402 = vmatpush2.msra.mxu0 0.0
          %3403 = vmatprep.subr.mxu0 0.0
          %3404 = vmatpush2.msra.mxu0 0.0
          %3405 = vmatprep.subr.mxu0 0.0
          %3406 = vmatpush2.msra.mxu0 0.0
          %3407 = vmatprep.subr.mxu0 0.0
          %3408 = vmatpush2.msra.mxu0 0.0
          %3409 = vmatprep.subr.mxu0 0.0
          %3410 = vmatpush2.msra.mxu0 0.0
          %3411 = vmatprep.subr.mxu0 0.0
          %3412 = vmatpush2.msra.mxu0 0.0
          %3413 = vmatprep.mubr.f32.mxu0 0.0
          %3414 = vmatmul.mubr.f32.gmra.mxu0 %v3347
          %v3415 = vpop.f32.mrf.mxu0
          %v3416 = vadd.f32 %v2044, %v3415
          %v3417 = vpop.f32.mrf.mxu0
          %3418 = vdwg.mxu0
          %v3419 = vmax.f32 %v3416, 0.0
          %v3421 = vsel %vm2126, %v3419, 0
          %3423 = vmatprep.subr.mxu0 0.0
          %3424 = vmatpush1.msra.mxu0 0.0
          %3425 = vmatprep.subr.mxu0 0.0
          %3426 = vmatpush1.msra.mxu0 0.0
          %3427 = vmatprep.subr.mxu0 0.0
          %3428 = vmatpush1.msra.mxu0 0.0
          %3429 = vmatprep.subr.mxu0 0.0
          %3430 = vmatpush1.msra.mxu0 0.0
          %3431 = vmatprep.subr.mxu0 0.0
          %3432 = vmatpush1.msra.mxu0 0.0
          %3433 = vmatprep.subr.mxu0 0.0
          %3434 = vmatpush1.msra.mxu0 0.0
          %3435 = vmatprep.subr.mxu0 0.0
          %3436 = vmatpush1.msra.mxu0 0.0
          %3437 = vmatprep.subr.mxu0 0.0
          %3438 = vmatpush1.msra.mxu0 0.0
          %3439 = vmatprep.subr.mxu0 0.0
          %3440 = vmatpush1.msra.mxu0 %v743
          %3441 = vmatprep.subr.mxu0 0.0
          %3442 = vmatpush1.msra.mxu0 %v742
          %3443 = vmatprep.subr.mxu0 0.0
          %3444 = vmatpush1.msra.mxu0 %v741
          %3445 = vmatprep.subr.mxu0 0.0
          %3446 = vmatpush1.msra.mxu0 %v740
          %3447 = vmatprep.subr.mxu0 0.0
          %3448 = vmatpush1.msra.mxu0 %v739
          %3449 = vmatprep.subr.mxu0 0.0
          %3450 = vmatpush1.msra.mxu0 %v738
          %3451 = vmatprep.subr.mxu0 0.0
          %3452 = vmatpush1.msra.mxu0 %v737
          %3453 = vmatprep.subr.mxu0 0.0
          %3454 = vmatpush1.msra.mxu0 %v736
          %3455 = vmatprep.subr.mxu0 0.0
          %3456 = vmatpush2.msra.mxu0 0.0
          %3457 = vmatprep.subr.mxu0 0.0
          %3458 = vmatpush2.msra.mxu0 0.0
          %3459 = vmatprep.subr.mxu0 0.0
          %3460 = vmatpush2.msra.mxu0 0.0
          %3461 = vmatprep.subr.mxu0 0.0
          %3462 = vmatpush2.msra.mxu0 0.0
          %3463 = vmatprep.subr.mxu0 0.0
          %3464 = vmatpush2.msra.mxu0 0.0
          %3465 = vmatprep.subr.mxu0 0.0
          %3466 = vmatpush2.msra.mxu0 0.0
          %3467 = vmatprep.subr.mxu0 0.0
          %3468 = vmatpush2.msra.mxu0 0.0
          %3469 = vmatprep.subr.mxu0 0.0
          %3470 = vmatpush2.msra.mxu0 0.0
          %3471 = vmatprep.subr.mxu0 0.0
          %3472 = vmatpush2.msra.mxu0 0.0
          %3473 = vmatprep.subr.mxu0 0.0
          %3474 = vmatpush2.msra.mxu0 0.0
          %3475 = vmatprep.subr.mxu0 0.0
          %3476 = vmatpush2.msra.mxu0 0.0
          %3477 = vmatprep.subr.mxu0 0.0
          %3478 = vmatpush2.msra.mxu0 0.0
          %3479 = vmatprep.subr.mxu0 0.0
          %3480 = vmatpush2.msra.mxu0 0.0
          %3481 = vmatprep.subr.mxu0 0.0
          %3482 = vmatpush2.msra.mxu0 0.0
          %3483 = vmatprep.subr.mxu0 0.0
          %3484 = vmatpush2.msra.mxu0 0.0
          %3485 = vmatprep.subr.mxu0 0.0
          %3486 = vmatpush2.msra.mxu0 0.0
          %3487 = vmatprep.mubr.f32.mxu0 0.0
          %3488 = vmatmul.mubr.f32.gmra.mxu0 %v3421
          %v3489 = vpop.f32.mrf.mxu0
          %v3490 = vadd.f32 %v2124, %v3489
          %v3491 = vpop.f32.mrf.mxu0
          %3492 = vdwg.mxu0
          %v3493 = vsel %vm771, %v3490, 0.0
          %3494 = vadd.xlane.f32.xlu0 %v3493
          %v3495 = vpop.xlane.xlu0 %3494
          %v3496 = vmul.f32 %v3495, %v1434
          %v3497 = vsub.f32 %v3490, %v3496
          %v3498 = vmul.f32 %v3497, %v3497
          %v3499 = vsel %vm771, %v3498, 0.0
          %3500 = vadd.xlane.f32.xlu0 %v3499
          %v3501 = vpop.xlane.xlu0 %3500
          %v3502 = vmul.f32 %v3501, %v1434
          %v3503 = vadd.f32 %v3502, 1e-05
          %v3504 = vrsqrt.pop %v3503
          %v3505 = vmul.f32 %v3497, %v3504
          %v3506 = vmul.f32 %v3505, %v1449
          %v3507 = vadd.f32 %v3506, %v1456
          %v3508 = vmul.f32 %v3507, %v1462
          %v3509 = vmul.f32 %v2217, %v3508
          %v3510 = vadd.f32 %v858, %v3509
          %v3511 = vadd.f32 %v3510, %v2220
          %v3513 = vsel %vm771, %v3511, 0
          %3515 = vmatprep.subr.mxu0 0.0
          %3516 = vmatpush1.msra.mxu0 0.0
          %3517 = vmatprep.subr.mxu0 0.0
          %3518 = vmatpush1.msra.mxu0 0.0
          %3519 = vmatprep.subr.mxu0 0.0
          %3520 = vmatpush1.msra.mxu0 0.0
          %3521 = vmatprep.subr.mxu0 0.0
          %3522 = vmatpush1.msra.mxu0 0.0
          %3523 = vmatprep.subr.mxu0 0.0
          %3524 = vmatpush1.msra.mxu0 0.0
          %3525 = vmatprep.subr.mxu0 0.0
          %3526 = vmatpush1.msra.mxu0 0.0
          %3527 = vmatprep.subr.mxu0 0.0
          %3528 = vmatpush1.msra.mxu0 0.0
          %3529 = vmatprep.subr.mxu0 0.0
          %3530 = vmatpush1.msra.mxu0 0.0
          %3531 = vmatprep.subr.mxu0 0.0
          %3532 = vmatpush1.msra.mxu0 0.0
          %3533 = vmatprep.subr.mxu0 0.0
          %3534 = vmatpush1.msra.mxu0 0.0
          %3535 = vmatprep.subr.mxu0 0.0
          %3536 = vmatpush1.msra.mxu0 0.0
          %3537 = vmatprep.subr.mxu0 0.0
          %3538 = vmatpush1.msra.mxu0 0.0
          %3539 = vmatprep.subr.mxu0 0.0
          %3540 = vmatpush1.msra.mxu0 %v714
          %3541 = vmatprep.subr.mxu0 0.0
          %3542 = vmatpush1.msra.mxu0 %v713
          %3543 = vmatprep.subr.mxu0 0.0
          %3544 = vmatpush1.msra.mxu0 %v712
          %3545 = vmatprep.subr.mxu0 0.0
          %3546 = vmatpush1.msra.mxu0 %v711
          %3547 = vmatprep.subr.mxu0 0.0
          %3548 = vmatpush2.msra.mxu0 0.0
          %3549 = vmatprep.subr.mxu0 0.0
          %3550 = vmatpush2.msra.mxu0 0.0
          %3551 = vmatprep.subr.mxu0 0.0
          %3552 = vmatpush2.msra.mxu0 0.0
          %3553 = vmatprep.subr.mxu0 0.0
          %3554 = vmatpush2.msra.mxu0 0.0
          %3555 = vmatprep.subr.mxu0 0.0
          %3556 = vmatpush2.msra.mxu0 0.0
          %3557 = vmatprep.subr.mxu0 0.0
          %3558 = vmatpush2.msra.mxu0 0.0
          %3559 = vmatprep.subr.mxu0 0.0
          %3560 = vmatpush2.msra.mxu0 0.0
          %3561 = vmatprep.subr.mxu0 0.0
          %3562 = vmatpush2.msra.mxu0 0.0
          %3563 = vmatprep.subr.mxu0 0.0
          %3564 = vmatpush2.msra.mxu0 0.0
          %3565 = vmatprep.subr.mxu0 0.0
          %3566 = vmatpush2.msra.mxu0 0.0
          %3567 = vmatprep.subr.mxu0 0.0
          %3568 = vmatpush2.msra.mxu0 0.0
          %3569 = vmatprep.subr.mxu0 0.0
          %3570 = vmatpush2.msra.mxu0 0.0
          %3571 = vmatprep.subr.mxu0 0.0
          %3572 = vmatpush2.msra.mxu0 0.0
          %3573 = vmatprep.subr.mxu0 0.0
          %3574 = vmatpush2.msra.mxu0 0.0
          %3575 = vmatprep.subr.mxu0 0.0
          %3576 = vmatpush2.msra.mxu0 0.0
          %3577 = vmatprep.subr.mxu0 0.0
          %3578 = vmatpush2.msra.mxu0 0.0
          %3579 = vmatprep.mubr.f32.mxu0 0.0
          %3580 = vmatmul.mubr.f32.gmra.mxu0 %v3513
          %v3581 = vpop.f32.mrf.mxu0
          %v3582 = vadd.f32 %v868, %v3581
          %v3583 = vpop.f32.mrf.mxu0
          %3584 = vdwg.mxu0
          %3586 = vrot.lane.b32.xlu0 %v3582, 96
          %v3587 = vpop.permute.xlu0 %3586
          %v3588 = vsel %vm946, %v3582, 0
          %v3590 = vsel %vm946, %v3587, 0
          %3592 = vmatprep.subr.mxu0 0.0
          %3593 = vmatpush1.xpose.msra.mxu0 0.0
          %3594 = vmatprep.subr.mxu0 0.0
          %3595 = vmatpush1.xpose.msra.mxu0 0.0
          %3596 = vmatprep.subr.mxu0 0.0
          %3597 = vmatpush1.xpose.msra.mxu0 0.0
          %3598 = vmatprep.subr.mxu0 0.0
          %3599 = vmatpush1.xpose.msra.mxu0 0.0
          %3600 = vmatprep.subr.mxu0 0.0
          %3601 = vmatpush1.xpose.msra.mxu0 0.0
          %3602 = vmatprep.subr.mxu0 0.0
          %3603 = vmatpush1.xpose.msra.mxu0 0.0
          %3604 = vmatprep.subr.mxu0 0.0
          %3605 = vmatpush1.xpose.msra.mxu0 0.0
          %3606 = vmatprep.subr.mxu0 0.0
          %3607 = vmatpush1.xpose.msra.mxu0 0.0
          %3608 = vmatprep.subr.mxu0 0.0
          %3609 = vmatpush1.xpose.msra.mxu0 0.0
          %3610 = vmatprep.subr.mxu0 0.0
          %3611 = vmatpush1.xpose.msra.mxu0 0.0
          %3612 = vmatprep.subr.mxu0 0.0
          %3613 = vmatpush1.xpose.msra.mxu0 0.0
          %3614 = vmatprep.subr.mxu0 0.0
          %3615 = vmatpush1.xpose.msra.mxu0 0.0
          %3616 = vmatprep.subr.mxu0 0.0
          %3617 = vmatpush1.xpose.msra.mxu0 0.0
          %3618 = vmatprep.subr.mxu0 0.0
          %3619 = vmatpush1.xpose.msra.mxu0 0.0
          %3620 = vmatprep.subr.mxu0 0.0
          %3621 = vmatpush1.xpose.msra.mxu0 0.0
          %3622 = vmatprep.subr.mxu0 0.0
          %3623 = vmatpush1.xpose.msra.mxu0 %v3590
          %3624 = vmatprep.subr.mxu0 0.0
          %3625 = vmatpush2.xpose.msra.mxu0 0.0
          %3626 = vmatprep.subr.mxu0 0.0
          %3627 = vmatpush2.xpose.msra.mxu0 0.0
          %3628 = vmatprep.subr.mxu0 0.0
          %3629 = vmatpush2.xpose.msra.mxu0 0.0
          %3630 = vmatprep.subr.mxu0 0.0
          %3631 = vmatpush2.xpose.msra.mxu0 0.0
          %3632 = vmatprep.subr.mxu0 0.0
          %3633 = vmatpush2.xpose.msra.mxu0 0.0
          %3634 = vmatprep.subr.mxu0 0.0
          %3635 = vmatpush2.xpose.msra.mxu0 0.0
          %3636 = vmatprep.subr.mxu0 0.0
          %3637 = vmatpush2.xpose.msra.mxu0 0.0
          %3638 = vmatprep.subr.mxu0 0.0
          %3639 = vmatpush2.xpose.msra.mxu0 0.0
          %3640 = vmatprep.subr.mxu0 0.0
          %3641 = vmatpush2.xpose.msra.mxu0 0.0
          %3642 = vmatprep.subr.mxu0 0.0
          %3643 = vmatpush2.xpose.msra.mxu0 0.0
          %3644 = vmatprep.subr.mxu0 0.0
          %3645 = vmatpush2.xpose.msra.mxu0 0.0
          %3646 = vmatprep.subr.mxu0 0.0
          %3647 = vmatpush2.xpose.msra.mxu0 0.0
          %3648 = vmatprep.subr.mxu0 0.0
          %3649 = vmatpush2.xpose.msra.mxu0 0.0
          %3650 = vmatprep.subr.mxu0 0.0
          %3651 = vmatpush2.xpose.msra.mxu0 0.0
          %3652 = vmatprep.subr.mxu0 0.0
          %3653 = vmatpush2.xpose.msra.mxu0 0.0
          %3654 = vmatprep.subr.mxu0 0.0
          %3655 = vmatpush2.xpose.msra.mxu0 0.0
          %3656 = vmatprep.mubr.f32.mxu0 0.0
          %3657 = vmatmul.mubr.f32.gmra.mxu0 %v3588
          %v3658 = vpop.f32.mrf.mxu0
          %v3659 = vadd.f32 0.0, %v3658
          %v3660 = vpop.f32.mrf.mxu0
          %3661 = vdwg.mxu0
          %v3662 = vmul.f32 %v3659, 0.25
          %v3663 = vadd.f32 %v3662, %v709
          %v3664 = vsel %vm1023, %v3663, -inf
          %3665 = vmax.xlane.f32.xlu0 %v3664
          %v3666 = vpop.xlane.xlu0 %3665
          %v3667 = vsub.f32 %v3663, %v3666
          %v3668 = vmul.f32 %v3667, 1.442695
          %v3669 = vpow.pop %v3668
          %v3670 = vsel %vm1023, %v3669, 0.0
          %3671 = vadd.xlane.f32.xlu0 %v3670
          %v3672 = vpop.xlane.xlu0 %3671
          %v3673 = vrcp.pop %v3672
          %v3674 = vmul.f32 %v3669, %v3673
          %3675 = vrot.lane.b32.xlu0 %v3582, 64
          %v3676 = vpop.permute.xlu0 %3675
          %v3679 = vsel %vm1023, %v3674, 0
          %3681 = vmatprep.subr.mxu0 0.0
          %3682 = vmatpush1.msra.mxu0 0.0
          %3683 = vmatprep.subr.mxu0 0.0
          %3684 = vmatpush1.msra.mxu0 0.0
          %3685 = vmatprep.subr.mxu0 0.0
          %3686 = vmatpush1.msra.mxu0 0.0
          %3687 = vmatprep.subr.mxu0 0.0
          %3688 = vmatpush1.msra.mxu0 0.0
          %3689 = vmatprep.subr.mxu0 0.0
          %3690 = vmatpush1.msra.mxu0 0.0
          %3691 = vmatprep.subr.mxu0 0.0
          %3692 = vmatpush1.msra.mxu0 0.0
          %3693 = vmatprep.subr.mxu0 0.0
          %3694 = vmatpush1.msra.mxu0 0.0
          %3695 = vmatprep.subr.mxu0 0.0
          %3696 = vmatpush1.msra.mxu0 0.0
          %3697 = vmatprep.subr.mxu0 0.0
          %3698 = vmatpush1.msra.mxu0 0.0
          %3699 = vmatprep.subr.mxu0 0.0
          %3700 = vmatpush1.msra.mxu0 0.0
          %3701 = vmatprep.subr.mxu0 0.0
          %3702 = vmatpush1.msra.mxu0 0.0
          %3703 = vmatprep.subr.mxu0 0.0
          %3704 = vmatpush1.msra.mxu0 0.0
          %3705 = vmatprep.subr.mxu0 0.0
          %3706 = vmatpush1.msra.mxu0 0.0
          %3707 = vmatprep.subr.mxu0 0.0
          %3708 = vmatpush1.msra.mxu0 0.0
          %3709 = vmatprep.subr.mxu0 0.0
          %3710 = vmatpush1.msra.mxu0 0.0
          %3711 = vmatprep.subr.mxu0 0.0
          %3712 = vmatpush1.msra.mxu0 %v3676
          %3713 = vmatprep.subr.mxu0 0.0
          %3714 = vmatpush2.msra.mxu0 0.0
          %3715 = vmatprep.subr.mxu0 0.0
          %3716 = vmatpush2.msra.mxu0 0.0
          %3717 = vmatprep.subr.mxu0 0.0
          %3718 = vmatpush2.msra.mxu0 0.0
          %3719 = vmatprep.subr.mxu0 0.0
          %3720 = vmatpush2.msra.mxu0 0.0
          %3721 = vmatprep.subr.mxu0 0.0
          %3722 = vmatpush2.msra.mxu0 0.0
          %3723 = vmatprep.subr.mxu0 0.0
          %3724 = vmatpush2.msra.mxu0 0.0
          %3725 = vmatprep.subr.mxu0 0.0
          %3726 = vmatpush2.msra.mxu0 0.0
          %3727 = vmatprep.subr.mxu0 0.0
          %3728 = vmatpush2.msra.mxu0 0.0
          %3729 = vmatprep.subr.mxu0 0.0
          %3730 = vmatpush2.msra.mxu0 0.0
          %3731 = vmatprep.subr.mxu0 0.0
          %3732 = vmatpush2.msra.mxu0 0.0
          %3733 = vmatprep.subr.mxu0 0.0
          %3734 = vmatpush2.msra.mxu0 0.0
          %3735 = vmatprep.subr.mxu0 0.0
          %3736 = vmatpush2.msra.mxu0 0.0
          %3737 = vmatprep.subr.mxu0 0.0
          %3738 = vmatpush2.msra.mxu0 0.0
          %3739 = vmatprep.subr.mxu0 0.0
          %3740 = vmatpush2.msra.mxu0 0.0
          %3741 = vmatprep.subr.mxu0 0.0
          %3742 = vmatpush2.msra.mxu0 0.0
          %3743 = vmatprep.subr.mxu0 0.0
          %3744 = vmatpush2.msra.mxu0 0.0
          %3745 = vmatprep.mubr.f32.mxu0 0.0
          %3746 = vmatmul.mubr.f32.gmra.mxu0 %v3679
          %v3747 = vpop.f32.mrf.mxu0
          %v3748 = vadd.f32 0.0, %v3747
          %v3749 = vpop.f32.mrf.mxu0
          %3750 = vdwg.mxu0
          %3751 = vrot.lane.b32.xlu0 %v3582, 112
          %v3752 = vpop.permute.xlu0 %3751
          %3753 = vrot.lane.b32.xlu0 %v3582, 80
          %v3754 = vpop.permute.xlu0 %3753
          %v3755 = vsel %vm946, %v3752, 0
          %v3757 = vsel %vm946, %v3754, 0
          %3759 = vmatprep.subr.mxu0 0.0
          %3760 = vmatpush1.xpose.msra.mxu0 0.0
          %3761 = vmatprep.subr.mxu0 0.0
          %3762 = vmatpush1.xpose.msra.mxu0 0.0
          %3763 = vmatprep.subr.mxu0 0.0
          %3764 = vmatpush1.xpose.msra.mxu0 0.0
          %3765 = vmatprep.subr.mxu0 0.0
          %3766 = vmatpush1.xpose.msra.mxu0 0.0
          %3767 = vmatprep.subr.mxu0 0.0
          %3768 = vmatpush1.xpose.msra.mxu0 0.0
          %3769 = vmatprep.subr.mxu0 0.0
          %3770 = vmatpush1.xpose.msra.mxu0 0.0
          %3771 = vmatprep.subr.mxu0 0.0
          %3772 = vmatpush1.xpose.msra.mxu0 0.0
          %3773 = vmatprep.subr.mxu0 0.0
          %3774 = vmatpush1.xpose.msra.mxu0 0.0
          %3775 = vmatprep.subr.mxu0 0.0
          %3776 = vmatpush1.xpose.msra.mxu0 0.0
          %3777 = vmatprep.subr.mxu0 0.0
          %3778 = vmatpush1.xpose.msra.mxu0 0.0
          %3779 = vmatprep.subr.mxu0 0.0
          %3780 = vmatpush1.xpose.msra.mxu0 0.0
          %3781 = vmatprep.subr.mxu0 0.0
          %3782 = vmatpush1.xpose.msra.mxu0 0.0
          %3783 = vmatprep.subr.mxu0 0.0
          %3784 = vmatpush1.xpose.msra.mxu0 0.0
          %3785 = vmatprep.subr.mxu0 0.0
          %3786 = vmatpush1.xpose.msra.mxu0 0.0
          %3787 = vmatprep.subr.mxu0 0.0
          %3788 = vmatpush1.xpose.msra.mxu0 0.0
          %3789 = vmatprep.subr.mxu0 0.0
          %3790 = vmatpush1.xpose.msra.mxu0 %v3757
          %3791 = vmatprep.subr.mxu0 0.0
          %3792 = vmatpush2.xpose.msra.mxu0 0.0
          %3793 = vmatprep.subr.mxu0 0.0
          %3794 = vmatpush2.xpose.msra.mxu0 0.0
          %3795 = vmatprep.subr.mxu0 0.0
          %3796 = vmatpush2.xpose.msra.mxu0 0.0
          %3797 = vmatprep.subr.mxu0 0.0
          %3798 = vmatpush2.xpose.msra.mxu0 0.0
          %3799 = vmatprep.subr.mxu0 0.0
          %3800 = vmatpush2.xpose.msra.mxu0 0.0
          %3801 = vmatprep.subr.mxu0 0.0
          %3802 = vmatpush2.xpose.msra.mxu0 0.0
          %3803 = vmatprep.subr.mxu0 0.0
          %3804 = vmatpush2.xpose.msra.mxu0 0.0
          %3805 = vmatprep.subr.mxu0 0.0
          %3806 = vmatpush2.xpose.msra.mxu0 0.0
          %3807 = vmatprep.subr.mxu0 0.0
          %3808 = vmatpush2.xpose.msra.mxu0 0.0
          %3809 = vmatprep.subr.mxu0 0.0
          %3810 = vmatpush2.xpose.msra.mxu0 0.0
          %3811 = vmatprep.subr.mxu0 0.0
          %3812 = vmatpush2.xpose.msra.mxu0 0.0
          %3813 = vmatprep.subr.mxu0 0.0
          %3814 = vmatpush2.xpose.msra.mxu0 0.0
          %3815 = vmatprep.subr.mxu0 0.0
          %3816 = vmatpush2.xpose.msra.mxu0 0.0
          %3817 = vmatprep.subr.mxu0 0.0
          %3818 = vmatpush2.xpose.msra.mxu0 0.0
          %3819 = vmatprep.subr.mxu0 0.0
          %3820 = vmatpush2.xpose.msra.mxu0 0.0
          %3821 = vmatprep.subr.mxu0 0.0
          %3822 = vmatpush2.xpose.msra.mxu0 0.0
          %3823 = vmatprep.mubr.f32.mxu0 0.0
          %3824 = vmatmul.mubr.f32.gmra.mxu0 %v3755
          %v3825 = vpop.f32.mrf.mxu0
          %v3826 = vadd.f32 0.0, %v3825
          %v3827 = vpop.f32.mrf.mxu0
          %3828 = vdwg.mxu0
          %v3829 = vmul.f32 %v3826, 0.25
          %v3830 = vadd.f32 %v3829, %v709
          %v3831 = vsel %vm1023, %v3830, -inf
          %3832 = vmax.xlane.f32.xlu0 %v3831
          %v3833 = vpop.xlane.xlu0 %3832
          %v3834 = vsub.f32 %v3830, %v3833
          %v3835 = vmul.f32 %v3834, 1.442695
          %v3836 = vpow.pop %v3835
          %v3837 = vsel %vm1023, %v3836, 0.0
          %3838 = vadd.xlane.f32.xlu0 %v3837
          %v3839 = vpop.xlane.xlu0 %3838
          %v3840 = vrcp.pop %v3839
          %v3841 = vmul.f32 %v3836, %v3840
          %3842 = vrot.lane.b32.xlu0 %v3582, 48
          %v3843 = vpop.permute.xlu0 %3842
          %v3846 = vsel %vm1023, %v3841, 0
          %3848 = vmatprep.subr.mxu0 0.0
          %3849 = vmatpush1.msra.mxu0 0.0
          %3850 = vmatprep.subr.mxu0 0.0
          %3851 = vmatpush1.msra.mxu0 0.0
          %3852 = vmatprep.subr.mxu0 0.0
          %3853 = vmatpush1.msra.mxu0 0.0
          %3854 = vmatprep.subr.mxu0 0.0
          %3855 = vmatpush1.msra.mxu0 0.0
          %3856 = vmatprep.subr.mxu0 0.0
          %3857 = vmatpush1.msra.mxu0 0.0
          %3858 = vmatprep.subr.mxu0 0.0
          %3859 = vmatpush1.msra.mxu0 0.0
          %3860 = vmatprep.subr.mxu0 0.0
          %3861 = vmatpush1.msra.mxu0 0.0
          %3862 = vmatprep.subr.mxu0 0.0
          %3863 = vmatpush1.msra.mxu0 0.0
          %3864 = vmatprep.subr.mxu0 0.0
          %3865 = vmatpush1.msra.mxu0 0.0
          %3866 = vmatprep.subr.mxu0 0.0
          %3867 = vmatpush1.msra.mxu0 0.0
          %3868 = vmatprep.subr.mxu0 0.0
          %3869 = vmatpush1.msra.mxu0 0.0
          %3870 = vmatprep.subr.mxu0 0.0
          %3871 = vmatpush1.msra.mxu0 0.0
          %3872 = vmatprep.subr.mxu0 0.0
          %3873 = vmatpush1.msra.mxu0 0.0
          %3874 = vmatprep.subr.mxu0 0.0
          %3875 = vmatpush1.msra.mxu0 0.0
          %3876 = vmatprep.subr.mxu0 0.0
          %3877 = vmatpush1.msra.mxu0 0.0
          %3878 = vmatprep.subr.mxu0 0.0
          %3879 = vmatpush1.msra.mxu0 %v3843
          %3880 = vmatprep.subr.mxu0 0.0
          %3881 = vmatpush2.msra.mxu0 0.0
          %3882 = vmatprep.subr.mxu0 0.0
          %3883 = vmatpush2.msra.mxu0 0.0
          %3884 = vmatprep.subr.mxu0 0.0
          %3885 = vmatpush2.msra.mxu0 0.0
          %3886 = vmatprep.subr.mxu0 0.0
          %3887 = vmatpush2.msra.mxu0 0.0
          %3888 = vmatprep.subr.mxu0 0.0
          %3889 = vmatpush2.msra.mxu0 0.0
          %3890 = vmatprep.subr.mxu0 0.0
          %3891 = vmatpush2.msra.mxu0 0.0
          %3892 = vmatprep.subr.mxu0 0.0
          %3893 = vmatpush2.msra.mxu0 0.0
          %3894 = vmatprep.subr.mxu0 0.0
          %3895 = vmatpush2.msra.mxu0 0.0
          %3896 = vmatprep.subr.mxu0 0.0
          %3897 = vmatpush2.msra.mxu0 0.0
          %3898 = vmatprep.subr.mxu0 0.0
          %3899 = vmatpush2.msra.mxu0 0.0
          %3900 = vmatprep.subr.mxu0 0.0
          %3901 = vmatpush2.msra.mxu0 0.0
          %3902 = vmatprep.subr.mxu0 0.0
          %3903 = vmatpush2.msra.mxu0 0.0
          %3904 = vmatprep.subr.mxu0 0.0
          %3905 = vmatpush2.msra.mxu0 0.0
          %3906 = vmatprep.subr.mxu0 0.0
          %3907 = vmatpush2.msra.mxu0 0.0
          %3908 = vmatprep.subr.mxu0 0.0
          %3909 = vmatpush2.msra.mxu0 0.0
          %3910 = vmatprep.subr.mxu0 0.0
          %3911 = vmatpush2.msra.mxu0 0.0
          %3912 = vmatprep.mubr.f32.mxu0 0.0
          %3913 = vmatmul.mubr.f32.gmra.mxu0 %v3846
          %v3914 = vpop.f32.mrf.mxu0
          %v3915 = vadd.f32 0.0, %v3914
          %v3916 = vpop.f32.mrf.mxu0
          %3917 = vdwg.mxu0
          %v3919 = vsel %vm946, %v3915, 0
          %3921 = vmatprep.subr.mxu0 0.0
          %3922 = vmatpush1.msra.mxu0 0.0
          %3923 = vmatprep.subr.mxu0 0.0
          %3924 = vmatpush1.msra.mxu0 0.0
          %3925 = vmatprep.subr.mxu0 0.0
          %3926 = vmatpush1.msra.mxu0 0.0
          %3927 = vmatprep.subr.mxu0 0.0
          %3928 = vmatpush1.msra.mxu0 0.0
          %3929 = vmatprep.subr.mxu0 0.0
          %3930 = vmatpush1.msra.mxu0 0.0
          %3931 = vmatprep.subr.mxu0 0.0
          %3932 = vmatpush1.msra.mxu0 0.0
          %3933 = vmatprep.subr.mxu0 0.0
          %3934 = vmatpush1.msra.mxu0 0.0
          %3935 = vmatprep.subr.mxu0 0.0
          %3936 = vmatpush1.msra.mxu0 0.0
          %3937 = vmatprep.subr.mxu0 0.0
          %3938 = vmatpush1.msra.mxu0 0.0
          %3939 = vmatprep.subr.mxu0 0.0
          %3940 = vmatpush1.msra.mxu0 0.0
          %3941 = vmatprep.subr.mxu0 0.0
          %3942 = vmatpush1.msra.mxu0 0.0
          %3943 = vmatprep.subr.mxu0 0.0
          %3944 = vmatpush1.msra.mxu0 0.0
          %3945 = vmatprep.subr.mxu0 0.0
          %3946 = vmatpush1.msra.mxu0 0.0
          %3947 = vmatprep.subr.mxu0 0.0
          %3948 = vmatpush1.msra.mxu0 0.0
          %3949 = vmatprep.subr.mxu0 0.0
          %3950 = vmatpush1.msra.mxu0 %v719
          %3951 = vmatprep.subr.mxu0 0.0
          %3952 = vmatpush1.msra.mxu0 %v718
          %3953 = vmatprep.subr.mxu0 0.0
          %3954 = vmatpush2.msra.mxu0 0.0
          %3955 = vmatprep.subr.mxu0 0.0
          %3956 = vmatpush2.msra.mxu0 0.0
          %3957 = vmatprep.subr.mxu0 0.0
          %3958 = vmatpush2.msra.mxu0 0.0
          %3959 = vmatprep.subr.mxu0 0.0
          %3960 = vmatpush2.msra.mxu0 0.0
          %3961 = vmatprep.subr.mxu0 0.0
          %3962 = vmatpush2.msra.mxu0 0.0
          %3963 = vmatprep.subr.mxu0 0.0
          %3964 = vmatpush2.msra.mxu0 0.0
          %3965 = vmatprep.subr.mxu0 0.0
          %3966 = vmatpush2.msra.mxu0 0.0
          %3967 = vmatprep.subr.mxu0 0.0
          %3968 = vmatpush2.msra.mxu0 0.0
          %3969 = vmatprep.subr.mxu0 0.0
          %3970 = vmatpush2.msra.mxu0 0.0
          %3971 = vmatprep.subr.mxu0 0.0
          %3972 = vmatpush2.msra.mxu0 0.0
          %3973 = vmatprep.subr.mxu0 0.0
          %3974 = vmatpush2.msra.mxu0 0.0
          %3975 = vmatprep.subr.mxu0 0.0
          %3976 = vmatpush2.msra.mxu0 0.0
          %3977 = vmatprep.subr.mxu0 0.0
          %3978 = vmatpush2.msra.mxu0 0.0
          %3979 = vmatprep.subr.mxu0 0.0
          %3980 = vmatpush2.msra.mxu0 0.0
          %3981 = vmatprep.subr.mxu0 0.0
          %3982 = vmatpush2.msra.mxu0 0.0
          %3983 = vmatprep.subr.mxu0 0.0
          %3984 = vmatpush2.msra.mxu0 0.0
          %3985 = vmatprep.mubr.f32.mxu0 0.0
          %3986 = vmatmul.mubr.f32.gmra.mxu0 %v3919
          %v3987 = vpop.f32.mrf.mxu0
          %v3988 = vadd.f32 0.0, %v3987
          %v3989 = vpop.f32.mrf.mxu0
          %3990 = vdwg.mxu0
          %v3992 = vsel %vm946, %v3748, 0
          %3994 = vmatprep.subr.mxu0 0.0
          %3995 = vmatpush1.msra.mxu0 0.0
          %3996 = vmatprep.subr.mxu0 0.0
          %3997 = vmatpush1.msra.mxu0 0.0
          %3998 = vmatprep.subr.mxu0 0.0
          %3999 = vmatpush1.msra.mxu0 0.0
          %4000 = vmatprep.subr.mxu0 0.0
          %4001 = vmatpush1.msra.mxu0 0.0
          %4002 = vmatprep.subr.mxu0 0.0
          %4003 = vmatpush1.msra.mxu0 0.0
          %4004 = vmatprep.subr.mxu0 0.0
          %4005 = vmatpush1.msra.mxu0 0.0
          %4006 = vmatprep.subr.mxu0 0.0
          %4007 = vmatpush1.msra.mxu0 0.0
          %4008 = vmatprep.subr.mxu0 0.0
          %4009 = vmatpush1.msra.mxu0 0.0
          %4010 = vmatprep.subr.mxu0 0.0
          %4011 = vmatpush1.msra.mxu0 0.0
          %4012 = vmatprep.subr.mxu0 0.0
          %4013 = vmatpush1.msra.mxu0 0.0
          %4014 = vmatprep.subr.mxu0 0.0
          %4015 = vmatpush1.msra.mxu0 0.0
          %4016 = vmatprep.subr.mxu0 0.0
          %4017 = vmatpush1.msra.mxu0 0.0
          %4018 = vmatprep.subr.mxu0 0.0
          %4019 = vmatpush1.msra.mxu0 0.0
          %4020 = vmatprep.subr.mxu0 0.0
          %4021 = vmatpush1.msra.mxu0 0.0
          %4022 = vmatprep.subr.mxu0 0.0
          %4023 = vmatpush1.msra.mxu0 %v717
          %4024 = vmatprep.subr.mxu0 0.0
          %4025 = vmatpush1.msra.mxu0 %v716
          %4026 = vmatprep.subr.mxu0 0.0
          %4027 = vmatpush2.msra.mxu0 0.0
          %4028 = vmatprep.subr.mxu0 0.0
          %4029 = vmatpush2.msra.mxu0 0.0
          %4030 = vmatprep.subr.mxu0 0.0
          %4031 = vmatpush2.msra.mxu0 0.0
          %4032 = vmatprep.subr.mxu0 0.0
          %4033 = vmatpush2.msra.mxu0 0.0
          %4034 = vmatprep.subr.mxu0 0.0
          %4035 = vmatpush2.msra.mxu0 0.0
          %4036 = vmatprep.subr.mxu0 0.0
          %4037 = vmatpush2.msra.mxu0 0.0
          %4038 = vmatprep.subr.mxu0 0.0
          %4039 = vmatpush2.msra.mxu0 0.0
          %4040 = vmatprep.subr.mxu0 0.0
          %4041 = vmatpush2.msra.mxu0 0.0
          %4042 = vmatprep.subr.mxu0 0.0
          %4043 = vmatpush2.msra.mxu0 0.0
          %4044 = vmatprep.subr.mxu0 0.0
          %4045 = vmatpush2.msra.mxu0 0.0
          %4046 = vmatprep.subr.mxu0 0.0
          %4047 = vmatpush2.msra.mxu0 0.0
          %4048 = vmatprep.subr.mxu0 0.0
          %4049 = vmatpush2.msra.mxu0 0.0
          %4050 = vmatprep.subr.mxu0 0.0
          %4051 = vmatpush2.msra.mxu0 0.0
          %4052 = vmatprep.subr.mxu0 0.0
          %4053 = vmatpush2.msra.mxu0 0.0
          %4054 = vmatprep.subr.mxu0 0.0
          %4055 = vmatpush2.msra.mxu0 0.0
          %4056 = vmatprep.subr.mxu0 0.0
          %4057 = vmatpush2.msra.mxu0 0.0
          %4058 = vmatprep.mubr.f32.mxu0 0.0
          %4059 = vmatmul.mubr.f32.gmra.mxu0 %v3992
          %v4060 = vpop.f32.mrf.mxu0
          %v4061 = vadd.f32 %v3988, %v4060
          %v4062 = vpop.f32.mrf.mxu0
          %4063 = vdwg.mxu0
          %v4064 = vadd.f32 %v4061, %v1428
          %v4065 = vsel %vm771, %v4064, 0.0
          %4066 = vadd.xlane.f32.xlu0 %v4065
          %v4067 = vpop.xlane.xlu0 %4066
          %v4068 = vmul.f32 %v4067, %v1434
          %v4069 = vsub.f32 %v4064, %v4068
          %v4070 = vmul.f32 %v4069, %v4069
          %v4071 = vsel %vm771, %v4070, 0.0
          %4072 = vadd.xlane.f32.xlu0 %v4071
          %v4073 = vpop.xlane.xlu0 %4072
          %v4074 = vmul.f32 %v4073, %v1434
          %v4075 = vadd.f32 %v4074, 1e-05
          %v4076 = vrsqrt.pop %v4075
          %v4077 = vmul.f32 %v4069, %v4076
          %v4078 = vmul.f32 %v4077, %v1449
          %v4079 = vadd.f32 %v4078, %v1456
          %v4080 = vmul.f32 %v4079, %v1462
          %v4082 = vsel %vm771, %v4080, 0
          %4084 = vmatprep.subr.mxu0 0.0
          %4085 = vmatpush1.msra.mxu0 0.0
          %4086 = vmatprep.subr.mxu0 0.0
          %4087 = vmatpush1.msra.mxu0 0.0
          %4088 = vmatprep.subr.mxu0 0.0
          %4089 = vmatpush1.msra.mxu0 0.0
          %4090 = vmatprep.subr.mxu0 0.0
          %4091 = vmatpush1.msra.mxu0 0.0
          %4092 = vmatprep.subr.mxu0 0.0
          %4093 = vmatpush1.msra.mxu0 0.0
          %4094 = vmatprep.subr.mxu0 0.0
          %4095 = vmatpush1.msra.mxu0 0.0
          %4096 = vmatprep.subr.mxu0 0.0
          %4097 = vmatpush1.msra.mxu0 0.0
          %4098 = vmatprep.subr.mxu0 0.0
          %4099 = vmatpush1.msra.mxu0 0.0
          %4100 = vmatprep.subr.mxu0 0.0
          %4101 = vmatpush1.msra.mxu0 0.0
          %4102 = vmatprep.subr.mxu0 0.0
          %4103 = vmatpush1.msra.mxu0 0.0
          %4104 = vmatprep.subr.mxu0 0.0
          %4105 = vmatpush1.msra.mxu0 0.0
          %4106 = vmatprep.subr.mxu0 0.0
          %4107 = vmatpush1.msra.mxu0 0.0
          %4108 = vmatprep.subr.mxu0 0.0
          %4109 = vmatpush1.msra.mxu0 %v724
          %4110 = vmatprep.subr.mxu0 0.0
          %4111 = vmatpush1.msra.mxu0 %v723
          %4112 = vmatprep.subr.mxu0 0.0
          %4113 = vmatpush1.msra.mxu0 %v722
          %4114 = vmatprep.subr.mxu0 0.0
          %4115 = vmatpush1.msra.mxu0 %v721
          %4116 = vmatprep.subr.mxu0 0.0
          %4117 = vmatpush2.msra.mxu0 0.0
          %4118 = vmatprep.subr.mxu0 0.0
          %4119 = vmatpush2.msra.mxu0 0.0
          %4120 = vmatprep.subr.mxu0 0.0
          %4121 = vmatpush2.msra.mxu0 0.0
          %4122 = vmatprep.subr.mxu0 0.0
          %4123 = vmatpush2.msra.mxu0 0.0
          %4124 = vmatprep.subr.mxu0 0.0
          %4125 = vmatpush2.msra.mxu0 0.0
          %4126 = vmatprep.subr.mxu0 0.0
          %4127 = vmatpush2.msra.mxu0 0.0
          %4128 = vmatprep.subr.mxu0 0.0
          %4129 = vmatpush2.msra.mxu0 0.0
          %4130 = vmatprep.subr.mxu0 0.0
          %4131 = vmatpush2.msra.mxu0 0.0
          %4132 = vmatprep.subr.mxu0 0.0
          %4133 = vmatpush2.msra.mxu0 0.0
          %4134 = vmatprep.subr.mxu0 0.0
          %4135 = vmatpush2.msra.mxu0 0.0
          %4136 = vmatprep.subr.mxu0 0.0
          %4137 = vmatpush2.msra.mxu0 0.0
          %4138 = vmatprep.subr.mxu0 0.0
          %4139 = vmatpush2.msra.mxu0 0.0
          %4140 = vmatprep.subr.mxu0 0.0
          %4141 = vmatpush2.msra.mxu0 0.0
          %4142 = vmatprep.subr.mxu0 0.0
          %4143 = vmatpush2.msra.mxu0 0.0
          %4144 = vmatprep.subr.mxu0 0.0
          %4145 = vmatpush2.msra.mxu0 0.0
          %4146 = vmatprep.subr.mxu0 0.0
          %4147 = vmatpush2.msra.mxu0 0.0
          %4148 = vmatprep.mubr.f32.mxu0 0.0
          %4149 = vmatmul.mubr.f32.gmra.mxu0 %v4082
          %v4150 = vpop.f32.mrf.mxu0
          %v4151 = vadd.f32 %v751, %v4150
          %v4152 = vpop.f32.mrf.mxu0
          %4153 = vdwg.mxu0
          %v4155 = vsel %vm946, %v4151, 0
          %4157 = vmatprep.subr.mxu0 0.0
          %4158 = vmatpush1.xpose.msra.mxu0 0.0
          %4159 = vmatprep.subr.mxu0 0.0
          %4160 = vmatpush1.xpose.msra.mxu0 0.0
          %4161 = vmatprep.subr.mxu0 0.0
          %4162 = vmatpush1.xpose.msra.mxu0 0.0
          %4163 = vmatprep.subr.mxu0 0.0
          %4164 = vmatpush1.xpose.msra.mxu0 0.0
          %4165 = vmatprep.subr.mxu0 0.0
          %4166 = vmatpush1.xpose.msra.mxu0 0.0
          %4167 = vmatprep.subr.mxu0 0.0
          %4168 = vmatpush1.xpose.msra.mxu0 0.0
          %4169 = vmatprep.subr.mxu0 0.0
          %4170 = vmatpush1.xpose.msra.mxu0 0.0
          %4171 = vmatprep.subr.mxu0 0.0
          %4172 = vmatpush1.xpose.msra.mxu0 0.0
          %4173 = vmatprep.subr.mxu0 0.0
          %4174 = vmatpush1.xpose.msra.mxu0 0.0
          %4175 = vmatprep.subr.mxu0 0.0
          %4176 = vmatpush1.xpose.msra.mxu0 0.0
          %4177 = vmatprep.subr.mxu0 0.0
          %4178 = vmatpush1.xpose.msra.mxu0 0.0
          %4179 = vmatprep.subr.mxu0 0.0
          %4180 = vmatpush1.xpose.msra.mxu0 0.0
          %4181 = vmatprep.subr.mxu0 0.0
          %4182 = vmatpush1.xpose.msra.mxu0 0.0
          %4183 = vmatprep.subr.mxu0 0.0
          %4184 = vmatpush1.xpose.msra.mxu0 0.0
          %4185 = vmatprep.subr.mxu0 0.0
          %4186 = vmatpush1.xpose.msra.mxu0 0.0
          %4187 = vmatprep.subr.mxu0 0.0
          %4188 = vmatpush1.xpose.msra.mxu0 %v1543
          %4189 = vmatprep.subr.mxu0 0.0
          %4190 = vmatpush2.xpose.msra.mxu0 0.0
          %4191 = vmatprep.subr.mxu0 0.0
          %4192 = vmatpush2.xpose.msra.mxu0 0.0
          %4193 = vmatprep.subr.mxu0 0.0
          %4194 = vmatpush2.xpose.msra.mxu0 0.0
          %4195 = vmatprep.subr.mxu0 0.0
          %4196 = vmatpush2.xpose.msra.mxu0 0.0
          %4197 = vmatprep.subr.mxu0 0.0
          %4198 = vmatpush2.xpose.msra.mxu0 0.0
          %4199 = vmatprep.subr.mxu0 0.0
          %4200 = vmatpush2.xpose.msra.mxu0 0.0
          %4201 = vmatprep.subr.mxu0 0.0
          %4202 = vmatpush2.xpose.msra.mxu0 0.0
          %4203 = vmatprep.subr.mxu0 0.0
          %4204 = vmatpush2.xpose.msra.mxu0 0.0
          %4205 = vmatprep.subr.mxu0 0.0
          %4206 = vmatpush2.xpose.msra.mxu0 0.0
          %4207 = vmatprep.subr.mxu0 0.0
          %4208 = vmatpush2.xpose.msra.mxu0 0.0
          %4209 = vmatprep.subr.mxu0 0.0
          %4210 = vmatpush2.xpose.msra.mxu0 0.0
          %4211 = vmatprep.subr.mxu0 0.0
          %4212 = vmatpush2.xpose.msra.mxu0 0.0
          %4213 = vmatprep.subr.mxu0 0.0
          %4214 = vmatpush2.xpose.msra.mxu0 0.0
          %4215 = vmatprep.subr.mxu0 0.0
          %4216 = vmatpush2.xpose.msra.mxu0 0.0
          %4217 = vmatprep.subr.mxu0 0.0
          %4218 = vmatpush2.xpose.msra.mxu0 0.0
          %4219 = vmatprep.subr.mxu0 0.0
          %4220 = vmatpush2.xpose.msra.mxu0 0.0
          %4221 = vmatprep.mubr.f32.mxu0 0.0
          %4222 = vmatmul.mubr.f32.gmra.mxu0 %v4155
          %v4223 = vpop.f32.mrf.mxu0
          %v4224 = vadd.f32 0.0, %v4223
          %v4225 = vpop.f32.mrf.mxu0
          %4226 = vdwg.mxu0
          %v4227 = vmul.f32 %v4224, 0.25
          %v4228 = vadd.f32 %v4227, %v710
          %v4229 = vsel %vm1023, %v4228, -inf
          %4230 = vmax.xlane.f32.xlu0 %v4229
          %v4231 = vpop.xlane.xlu0 %4230
          %v4232 = vsub.f32 %v4228, %v4231
          %v4233 = vmul.f32 %v4232, 1.442695
          %v4234 = vpow.pop %v4233
          %v4235 = vsel %vm1023, %v4234, 0.0
          %4236 = vadd.xlane.f32.xlu0 %v4235
          %v4237 = vpop.xlane.xlu0 %4236
          %v4238 = vrcp.pop %v4237
          %v4239 = vmul.f32 %v4234, %v4238
          %v4241 = vsel %vm1023, %v4239, 0
          %4243 = vmatprep.subr.mxu0 0.0
          %4244 = vmatpush1.msra.mxu0 0.0
          %4245 = vmatprep.subr.mxu0 0.0
          %4246 = vmatpush1.msra.mxu0 0.0
          %4247 = vmatprep.subr.mxu0 0.0
          %4248 = vmatpush1.msra.mxu0 0.0
          %4249 = vmatprep.subr.mxu0 0.0
          %4250 = vmatpush1.msra.mxu0 0.0
          %4251 = vmatprep.subr.mxu0 0.0
          %4252 = vmatpush1.msra.mxu0 0.0
          %4253 = vmatprep.subr.mxu0 0.0
          %4254 = vmatpush1.msra.mxu0 0.0
          %4255 = vmatprep.subr.mxu0 0.0
          %4256 = vmatpush1.msra.mxu0 0.0
          %4257 = vmatprep.subr.mxu0 0.0
          %4258 = vmatpush1.msra.mxu0 0.0
          %4259 = vmatprep.subr.mxu0 0.0
          %4260 = vmatpush1.msra.mxu0 0.0
          %4261 = vmatprep.subr.mxu0 0.0
          %4262 = vmatpush1.msra.mxu0 0.0
          %4263 = vmatprep.subr.mxu0 0.0
          %4264 = vmatpush1.msra.mxu0 0.0
          %4265 = vmatprep.subr.mxu0 0.0
          %4266 = vmatpush1.msra.mxu0 0.0
          %4267 = vmatprep.subr.mxu0 0.0
          %4268 = vmatpush1.msra.mxu0 0.0
          %4269 = vmatprep.subr.mxu0 0.0
          %4270 = vmatpush1.msra.mxu0 0.0
          %4271 = vmatprep.subr.mxu0 0.0
          %4272 = vmatpush1.msra.mxu0 0.0
          %4273 = vmatprep.subr.mxu0 0.0
          %4274 = vmatpush1.msra.mxu0 %v1629
          %4275 = vmatprep.subr.mxu0 0.0
          %4276 = vmatpush2.msra.mxu0 0.0
          %4277 = vmatprep.subr.mxu0 0.0
          %4278 = vmatpush2.msra.mxu0 0.0
          %4279 = vmatprep.subr.mxu0 0.0
          %4280 = vmatpush2.msra.mxu0 0.0
          %4281 = vmatprep.subr.mxu0 0.0
          %4282 = vmatpush2.msra.mxu0 0.0
          %4283 = vmatprep.subr.mxu0 0.0
          %4284 = vmatpush2.msra.mxu0 0.0
          %4285 = vmatprep.subr.mxu0 0.0
          %4286 = vmatpush2.msra.mxu0 0.0
          %4287 = vmatprep.subr.mxu0 0.0
          %4288 = vmatpush2.msra.mxu0 0.0
          %4289 = vmatprep.subr.mxu0 0.0
          %4290 = vmatpush2.msra.mxu0 0.0
          %4291 = vmatprep.subr.mxu0 0.0
          %4292 = vmatpush2.msra.mxu0 0.0
          %4293 = vmatprep.subr.mxu0 0.0
          %4294 = vmatpush2.msra.mxu0 0.0
          %4295 = vmatprep.subr.mxu0 0.0
          %4296 = vmatpush2.msra.mxu0 0.0
          %4297 = vmatprep.subr.mxu0 0.0
          %4298 = vmatpush2.msra.mxu0 0.0
          %4299 = vmatprep.subr.mxu0 0.0
          %4300 = vmatpush2.msra.mxu0 0.0
          %4301 = vmatprep.subr.mxu0 0.0
          %4302 = vmatpush2.msra.mxu0 0.0
          %4303 = vmatprep.subr.mxu0 0.0
          %4304 = vmatpush2.msra.mxu0 0.0
          %4305 = vmatprep.subr.mxu0 0.0
          %4306 = vmatpush2.msra.mxu0 0.0
          %4307 = vmatprep.mubr.f32.mxu0 0.0
          %4308 = vmatmul.mubr.f32.gmra.mxu0 %v4241
          %v4309 = vpop.f32.mrf.mxu0
          %v4310 = vadd.f32 0.0, %v4309
          %v4311 = vpop.f32.mrf.mxu0
          %4312 = vdwg.mxu0
          %4313 = vrot.lane.b32.xlu0 %v4151, 112
          %v4314 = vpop.permute.xlu0 %4313
          %v4315 = vsel %vm946, %v4314, 0
          %4317 = vmatprep.subr.mxu0 0.0
          %4318 = vmatpush1.xpose.msra.mxu0 0.0
          %4319 = vmatprep.subr.mxu0 0.0
          %4320 = vmatpush1.xpose.msra.mxu0 0.0
          %4321 = vmatprep.subr.mxu0 0.0
          %4322 = vmatpush1.xpose.msra.mxu0 0.0
          %4323 = vmatprep.subr.mxu0 0.0
          %4324 = vmatpush1.xpose.msra.mxu0 0.0
          %4325 = vmatprep.subr.mxu0 0.0
          %4326 = vmatpush1.xpose.msra.mxu0 0.0
          %4327 = vmatprep.subr.mxu0 0.0
          %4328 = vmatpush1.xpose.msra.mxu0 0.0
          %4329 = vmatprep.subr.mxu0 0.0
          %4330 = vmatpush1.xpose.msra.mxu0 0.0
          %4331 = vmatprep.subr.mxu0 0.0
          %4332 = vmatpush1.xpose.msra.mxu0 0.0
          %4333 = vmatprep.subr.mxu0 0.0
          %4334 = vmatpush1.xpose.msra.mxu0 0.0
          %4335 = vmatprep.subr.mxu0 0.0
          %4336 = vmatpush1.xpose.msra.mxu0 0.0
          %4337 = vmatprep.subr.mxu0 0.0
          %4338 = vmatpush1.xpose.msra.mxu0 0.0
          %4339 = vmatprep.subr.mxu0 0.0
          %4340 = vmatpush1.xpose.msra.mxu0 0.0
          %4341 = vmatprep.subr.mxu0 0.0
          %4342 = vmatpush1.xpose.msra.mxu0 0.0
          %4343 = vmatprep.subr.mxu0 0.0
          %4344 = vmatpush1.xpose.msra.mxu0 0.0
          %4345 = vmatprep.subr.mxu0 0.0
          %4346 = vmatpush1.xpose.msra.mxu0 0.0
          %4347 = vmatprep.subr.mxu0 0.0
          %4348 = vmatpush1.xpose.msra.mxu0 %v1710
          %4349 = vmatprep.subr.mxu0 0.0
          %4350 = vmatpush2.xpose.msra.mxu0 0.0
          %4351 = vmatprep.subr.mxu0 0.0
          %4352 = vmatpush2.xpose.msra.mxu0 0.0
          %4353 = vmatprep.subr.mxu0 0.0
          %4354 = vmatpush2.xpose.msra.mxu0 0.0
          %4355 = vmatprep.subr.mxu0 0.0
          %4356 = vmatpush2.xpose.msra.mxu0 0.0
          %4357 = vmatprep.subr.mxu0 0.0
          %4358 = vmatpush2.xpose.msra.mxu0 0.0
          %4359 = vmatprep.subr.mxu0 0.0
          %4360 = vmatpush2.xpose.msra.mxu0 0.0
          %4361 = vmatprep.subr.mxu0 0.0
          %4362 = vmatpush2.xpose.msra.mxu0 0.0
          %4363 = vmatprep.subr.mxu0 0.0
          %4364 = vmatpush2.xpose.msra.mxu0 0.0
          %4365 = vmatprep.subr.mxu0 0.0
          %4366 = vmatpush2.xpose.msra.mxu0 0.0
          %4367 = vmatprep.subr.mxu0 0.0
          %4368 = vmatpush2.xpose.msra.mxu0 0.0
          %4369 = vmatprep.subr.mxu0 0.0
          %4370 = vmatpush2.xpose.msra.mxu0 0.0
          %4371 = vmatprep.subr.mxu0 0.0
          %4372 = vmatpush2.xpose.msra.mxu0 0.0
          %4373 = vmatprep.subr.mxu0 0.0
          %4374 = vmatpush2.xpose.msra.mxu0 0.0
          %4375 = vmatprep.subr.mxu0 0.0
          %4376 = vmatpush2.xpose.msra.mxu0 0.0
          %4377 = vmatprep.subr.mxu0 0.0
          %4378 = vmatpush2.xpose.msra.mxu0 0.0
          %4379 = vmatprep.subr.mxu0 0.0
          %4380 = vmatpush2.xpose.msra.mxu0 0.0
          %4381 = vmatprep.mubr.f32.mxu0 0.0
          %4382 = vmatmul.mubr.f32.gmra.mxu0 %v4315
          %v4383 = vpop.f32.mrf.mxu0
          %v4384 = vadd.f32 0.0, %v4383
          %v4385 = vpop.f32.mrf.mxu0
          %4386 = vdwg.mxu0
          %v4387 = vmul.f32 %v4384, 0.25
          %v4388 = vadd.f32 %v4387, %v710
          %v4389 = vsel %vm1023, %v4388, -inf
          %4390 = vmax.xlane.f32.xlu0 %v4389
          %v4391 = vpop.xlane.xlu0 %4390
          %v4392 = vsub.f32 %v4388, %v4391
          %v4393 = vmul.f32 %v4392, 1.442695
          %v4394 = vpow.pop %v4393
          %v4395 = vsel %vm1023, %v4394, 0.0
          %4396 = vadd.xlane.f32.xlu0 %v4395
          %v4397 = vpop.xlane.xlu0 %4396
          %v4398 = vrcp.pop %v4397
          %v4399 = vmul.f32 %v4394, %v4398
          %v4401 = vsel %vm1023, %v4399, 0
          %4403 = vmatprep.subr.mxu0 0.0
          %4404 = vmatpush1.msra.mxu0 0.0
          %4405 = vmatprep.subr.mxu0 0.0
          %4406 = vmatpush1.msra.mxu0 0.0
          %4407 = vmatprep.subr.mxu0 0.0
          %4408 = vmatpush1.msra.mxu0 0.0
          %4409 = vmatprep.subr.mxu0 0.0
          %4410 = vmatpush1.msra.mxu0 0.0
          %4411 = vmatprep.subr.mxu0 0.0
          %4412 = vmatpush1.msra.mxu0 0.0
          %4413 = vmatprep.subr.mxu0 0.0
          %4414 = vmatpush1.msra.mxu0 0.0
          %4415 = vmatprep.subr.mxu0 0.0
          %4416 = vmatpush1.msra.mxu0 0.0
          %4417 = vmatprep.subr.mxu0 0.0
          %4418 = vmatpush1.msra.mxu0 0.0
          %4419 = vmatprep.subr.mxu0 0.0
          %4420 = vmatpush1.msra.mxu0 0.0
          %4421 = vmatprep.subr.mxu0 0.0
          %4422 = vmatpush1.msra.mxu0 0.0
          %4423 = vmatprep.subr.mxu0 0.0
          %4424 = vmatpush1.msra.mxu0 0.0
          %4425 = vmatprep.subr.mxu0 0.0
          %4426 = vmatpush1.msra.mxu0 0.0
          %4427 = vmatprep.subr.mxu0 0.0
          %4428 = vmatpush1.msra.mxu0 0.0
          %4429 = vmatprep.subr.mxu0 0.0
          %4430 = vmatpush1.msra.mxu0 0.0
          %4431 = vmatprep.subr.mxu0 0.0
          %4432 = vmatpush1.msra.mxu0 0.0
          %4433 = vmatprep.subr.mxu0 0.0
          %4434 = vmatpush1.msra.mxu0 %v1796
          %4435 = vmatprep.subr.mxu0 0.0
          %4436 = vmatpush2.msra.mxu0 0.0
          %4437 = vmatprep.subr.mxu0 0.0
          %4438 = vmatpush2.msra.mxu0 0.0
          %4439 = vmatprep.subr.mxu0 0.0
          %4440 = vmatpush2.msra.mxu0 0.0
          %4441 = vmatprep.subr.mxu0 0.0
          %4442 = vmatpush2.msra.mxu0 0.0
          %4443 = vmatprep.subr.mxu0 0.0
          %4444 = vmatpush2.msra.mxu0 0.0
          %4445 = vmatprep.subr.mxu0 0.0
          %4446 = vmatpush2.msra.mxu0 0.0
          %4447 = vmatprep.subr.mxu0 0.0
          %4448 = vmatpush2.msra.mxu0 0.0
          %4449 = vmatprep.subr.mxu0 0.0
          %4450 = vmatpush2.msra.mxu0 0.0
          %4451 = vmatprep.subr.mxu0 0.0
          %4452 = vmatpush2.msra.mxu0 0.0
          %4453 = vmatprep.subr.mxu0 0.0
          %4454 = vmatpush2.msra.mxu0 0.0
          %4455 = vmatprep.subr.mxu0 0.0
          %4456 = vmatpush2.msra.mxu0 0.0
          %4457 = vmatprep.subr.mxu0 0.0
          %4458 = vmatpush2.msra.mxu0 0.0
          %4459 = vmatprep.subr.mxu0 0.0
          %4460 = vmatpush2.msra.mxu0 0.0
          %4461 = vmatprep.subr.mxu0 0.0
          %4462 = vmatpush2.msra.mxu0 0.0
          %4463 = vmatprep.subr.mxu0 0.0
          %4464 = vmatpush2.msra.mxu0 0.0
          %4465 = vmatprep.subr.mxu0 0.0
          %4466 = vmatpush2.msra.mxu0 0.0
          %4467 = vmatprep.mubr.f32.mxu0 0.0
          %4468 = vmatmul.mubr.f32.gmra.mxu0 %v4401
          %v4469 = vpop.f32.mrf.mxu0
          %v4470 = vadd.f32 0.0, %v4469
          %v4471 = vpop.f32.mrf.mxu0
          %4472 = vdwg.mxu0
          %v4474 = vsel %vm946, %v4470, 0
          %4476 = vmatprep.subr.mxu0 0.0
          %4477 = vmatpush1.msra.mxu0 0.0
          %4478 = vmatprep.subr.mxu0 0.0
          %4479 = vmatpush1.msra.mxu0 0.0
          %4480 = vmatprep.subr.mxu0 0.0
          %4481 = vmatpush1.msra.mxu0 0.0
          %4482 = vmatprep.subr.mxu0 0.0
          %4483 = vmatpush1.msra.mxu0 0.0
          %4484 = vmatprep.subr.mxu0 0.0
          %4485 = vmatpush1.msra.mxu0 0.0
          %4486 = vmatprep.subr.mxu0 0.0
          %4487 = vmatpush1.msra.mxu0 0.0
          %4488 = vmatprep.subr.mxu0 0.0
          %4489 = vmatpush1.msra.mxu0 0.0
          %4490 = vmatprep.subr.mxu0 0.0
          %4491 = vmatpush1.msra.mxu0 0.0
          %4492 = vmatprep.subr.mxu0 0.0
          %4493 = vmatpush1.msra.mxu0 0.0
          %4494 = vmatprep.subr.mxu0 0.0
          %4495 = vmatpush1.msra.mxu0 0.0
          %4496 = vmatprep.subr.mxu0 0.0
          %4497 = vmatpush1.msra.mxu0 0.0
          %4498 = vmatprep.subr.mxu0 0.0
          %4499 = vmatpush1.msra.mxu0 0.0
          %4500 = vmatprep.subr.mxu0 0.0
          %4501 = vmatpush1.msra.mxu0 0.0
          %4502 = vmatprep.subr.mxu0 0.0
          %4503 = vmatpush1.msra.mxu0 0.0
          %4504 = vmatprep.subr.mxu0 0.0
          %4505 = vmatpush1.msra.mxu0 %v729
          %4506 = vmatprep.subr.mxu0 0.0
          %4507 = vmatpush1.msra.mxu0 %v728
          %4508 = vmatprep.subr.mxu0 0.0
          %4509 = vmatpush2.msra.mxu0 0.0
          %4510 = vmatprep.subr.mxu0 0.0
          %4511 = vmatpush2.msra.mxu0 0.0
          %4512 = vmatprep.subr.mxu0 0.0
          %4513 = vmatpush2.msra.mxu0 0.0
          %4514 = vmatprep.subr.mxu0 0.0
          %4515 = vmatpush2.msra.mxu0 0.0
          %4516 = vmatprep.subr.mxu0 0.0
          %4517 = vmatpush2.msra.mxu0 0.0
          %4518 = vmatprep.subr.mxu0 0.0
          %4519 = vmatpush2.msra.mxu0 0.0
          %4520 = vmatprep.subr.mxu0 0.0
          %4521 = vmatpush2.msra.mxu0 0.0
          %4522 = vmatprep.subr.mxu0 0.0
          %4523 = vmatpush2.msra.mxu0 0.0
          %4524 = vmatprep.subr.mxu0 0.0
          %4525 = vmatpush2.msra.mxu0 0.0
          %4526 = vmatprep.subr.mxu0 0.0
          %4527 = vmatpush2.msra.mxu0 0.0
          %4528 = vmatprep.subr.mxu0 0.0
          %4529 = vmatpush2.msra.mxu0 0.0
          %4530 = vmatprep.subr.mxu0 0.0
          %4531 = vmatpush2.msra.mxu0 0.0
          %4532 = vmatprep.subr.mxu0 0.0
          %4533 = vmatpush2.msra.mxu0 0.0
          %4534 = vmatprep.subr.mxu0 0.0
          %4535 = vmatpush2.msra.mxu0 0.0
          %4536 = vmatprep.subr.mxu0 0.0
          %4537 = vmatpush2.msra.mxu0 0.0
          %4538 = vmatprep.subr.mxu0 0.0
          %4539 = vmatpush2.msra.mxu0 0.0
          %4540 = vmatprep.mubr.f32.mxu0 0.0
          %4541 = vmatmul.mubr.f32.gmra.mxu0 %v4474
          %v4542 = vpop.f32.mrf.mxu0
          %v4543 = vadd.f32 0.0, %v4542
          %v4544 = vpop.f32.mrf.mxu0
          %4545 = vdwg.mxu0
          %v4547 = vsel %vm946, %v4310, 0
          %4549 = vmatprep.subr.mxu0 0.0
          %4550 = vmatpush1.msra.mxu0 0.0
          %4551 = vmatprep.subr.mxu0 0.0
          %4552 = vmatpush1.msra.mxu0 0.0
          %4553 = vmatprep.subr.mxu0 0.0
          %4554 = vmatpush1.msra.mxu0 0.0
          %4555 = vmatprep.subr.mxu0 0.0
          %4556 = vmatpush1.msra.mxu0 0.0
          %4557 = vmatprep.subr.mxu0 0.0
          %4558 = vmatpush1.msra.mxu0 0.0
          %4559 = vmatprep.subr.mxu0 0.0
          %4560 = vmatpush1.msra.mxu0 0.0
          %4561 = vmatprep.subr.mxu0 0.0
          %4562 = vmatpush1.msra.mxu0 0.0
          %4563 = vmatprep.subr.mxu0 0.0
          %4564 = vmatpush1.msra.mxu0 0.0
          %4565 = vmatprep.subr.mxu0 0.0
          %4566 = vmatpush1.msra.mxu0 0.0
          %4567 = vmatprep.subr.mxu0 0.0
          %4568 = vmatpush1.msra.mxu0 0.0
          %4569 = vmatprep.subr.mxu0 0.0
          %4570 = vmatpush1.msra.mxu0 0.0
          %4571 = vmatprep.subr.mxu0 0.0
          %4572 = vmatpush1.msra.mxu0 0.0
          %4573 = vmatprep.subr.mxu0 0.0
          %4574 = vmatpush1.msra.mxu0 0.0
          %4575 = vmatprep.subr.mxu0 0.0
          %4576 = vmatpush1.msra.mxu0 0.0
          %4577 = vmatprep.subr.mxu0 0.0
          %4578 = vmatpush1.msra.mxu0 %v727
          %4579 = vmatprep.subr.mxu0 0.0
          %4580 = vmatpush1.msra.mxu0 %v726
          %4581 = vmatprep.subr.mxu0 0.0
          %4582 = vmatpush2.msra.mxu0 0.0
          %4583 = vmatprep.subr.mxu0 0.0
          %4584 = vmatpush2.msra.mxu0 0.0
          %4585 = vmatprep.subr.mxu0 0.0
          %4586 = vmatpush2.msra.mxu0 0.0
          %4587 = vmatprep.subr.mxu0 0.0
          %4588 = vmatpush2.msra.mxu0 0.0
          %4589 = vmatprep.subr.mxu0 0.0
          %4590 = vmatpush2.msra.mxu0 0.0
          %4591 = vmatprep.subr.mxu0 0.0
          %4592 = vmatpush2.msra.mxu0 0.0
          %4593 = vmatprep.subr.mxu0 0.0
          %4594 = vmatpush2.msra.mxu0 0.0
          %4595 = vmatprep.subr.mxu0 0.0
          %4596 = vmatpush2.msra.mxu0 0.0
          %4597 = vmatprep.subr.mxu0 0.0
          %4598 = vmatpush2.msra.mxu0 0.0
          %4599 = vmatprep.subr.mxu0 0.0
          %4600 = vmatpush2.msra.mxu0 0.0
          %4601 = vmatprep.subr.mxu0 0.0
          %4602 = vmatpush2.msra.mxu0 0.0
          %4603 = vmatprep.subr.mxu0 0.0
          %4604 = vmatpush2.msra.mxu0 0.0
          %4605 = vmatprep.subr.mxu0 0.0
          %4606 = vmatpush2.msra.mxu0 0.0
          %4607 = vmatprep.subr.mxu0 0.0
          %4608 = vmatpush2.msra.mxu0 0.0
          %4609 = vmatprep.subr.mxu0 0.0
          %4610 = vmatpush2.msra.mxu0 0.0
          %4611 = vmatprep.subr.mxu0 0.0
          %4612 = vmatpush2.msra.mxu0 0.0
          %4613 = vmatprep.mubr.f32.mxu0 0.0
          %4614 = vmatmul.mubr.f32.gmra.mxu0 %v4547
          %v4615 = vpop.f32.mrf.mxu0
          %v4616 = vadd.f32 %v4543, %v4615
          %v4617 = vpop.f32.mrf.mxu0
          %4618 = vdwg.mxu0
          %v4619 = vadd.f32 %v4616, %v2021
          %v4620 = vsel %vm771, %v4619, 0.0
          %4621 = vadd.xlane.f32.xlu0 %v4620
          %v4622 = vpop.xlane.xlu0 %4621
          %v4623 = vmul.f32 %v4622, %v1434
          %v4624 = vsub.f32 %v4619, %v4623
          %v4625 = vmul.f32 %v4624, %v4624
          %v4626 = vsel %vm771, %v4625, 0.0
          %4627 = vadd.xlane.f32.xlu0 %v4626
          %v4628 = vpop.xlane.xlu0 %4627
          %v4629 = vmul.f32 %v4628, %v1434
          %v4630 = vadd.f32 %v4629, 1e-05
          %v4631 = vrsqrt.pop %v4630
          %v4632 = vmul.f32 %v4624, %v4631
          %v4633 = vmul.f32 %v4632, %v1449
          %v4634 = vadd.f32 %v4633, %v1456
          %v4635 = vmul.f32 %v4634, %v1462
          %v4637 = vsel %vm771, %v4635, 0
          %4639 = vmatprep.subr.mxu0 0.0
          %4640 = vmatpush1.msra.mxu0 0.0
          %4641 = vmatprep.subr.mxu0 0.0
          %4642 = vmatpush1.msra.mxu0 0.0
          %4643 = vmatprep.subr.mxu0 0.0
          %4644 = vmatpush1.msra.mxu0 0.0
          %4645 = vmatprep.subr.mxu0 0.0
          %4646 = vmatpush1.msra.mxu0 0.0
          %4647 = vmatprep.subr.mxu0 0.0
          %4648 = vmatpush1.msra.mxu0 0.0
          %4649 = vmatprep.subr.mxu0 0.0
          %4650 = vmatpush1.msra.mxu0 0.0
          %4651 = vmatprep.subr.mxu0 0.0
          %4652 = vmatpush1.msra.mxu0 0.0
          %4653 = vmatprep.subr.mxu0 0.0
          %4654 = vmatpush1.msra.mxu0 0.0
          %4655 = vmatprep.subr.mxu0 0.0
          %4656 = vmatpush1.msra.mxu0 0.0
          %4657 = vmatprep.subr.mxu0 0.0
          %4658 = vmatpush1.msra.mxu0 0.0
          %4659 = vmatprep.subr.mxu0 0.0
          %4660 = vmatpush1.msra.mxu0 0.0
          %4661 = vmatprep.subr.mxu0 0.0
          %4662 = vmatpush1.msra.mxu0 0.0
          %4663 = vmatprep.subr.mxu0 0.0
          %4664 = vmatpush1.msra.mxu0 %v734
          %4665 = vmatprep.subr.mxu0 0.0
          %4666 = vmatpush1.msra.mxu0 %v733
          %4667 = vmatprep.subr.mxu0 0.0
          %4668 = vmatpush1.msra.mxu0 %v732
          %4669 = vmatprep.subr.mxu0 0.0
          %4670 = vmatpush1.msra.mxu0 %v731
          %4671 = vmatprep.subr.mxu0 0.0
          %4672 = vmatpush2.msra.mxu0 0.0
          %4673 = vmatprep.subr.mxu0 0.0
          %4674 = vmatpush2.msra.mxu0 0.0
          %4675 = vmatprep.subr.mxu0 0.0
          %4676 = vmatpush2.msra.mxu0 0.0
          %4677 = vmatprep.subr.mxu0 0.0
          %4678 = vmatpush2.msra.mxu0 0.0
          %4679 = vmatprep.subr.mxu0 0.0
          %4680 = vmatpush2.msra.mxu0 0.0
          %4681 = vmatprep.subr.mxu0 0.0
          %4682 = vmatpush2.msra.mxu0 0.0
          %4683 = vmatprep.subr.mxu0 0.0
          %4684 = vmatpush2.msra.mxu0 0.0
          %4685 = vmatprep.subr.mxu0 0.0
          %4686 = vmatpush2.msra.mxu0 0.0
          %4687 = vmatprep.subr.mxu0 0.0
          %4688 = vmatpush2.msra.mxu0 0.0
          %4689 = vmatprep.subr.mxu0 0.0
          %4690 = vmatpush2.msra.mxu0 0.0
          %4691 = vmatprep.subr.mxu0 0.0
          %4692 = vmatpush2.msra.mxu0 0.0
          %4693 = vmatprep.subr.mxu0 0.0
          %4694 = vmatpush2.msra.mxu0 0.0
          %4695 = vmatprep.subr.mxu0 0.0
          %4696 = vmatpush2.msra.mxu0 0.0
          %4697 = vmatprep.subr.mxu0 0.0
          %4698 = vmatpush2.msra.mxu0 0.0
          %4699 = vmatprep.subr.mxu0 0.0
          %4700 = vmatpush2.msra.mxu0 0.0
          %4701 = vmatprep.subr.mxu0 0.0
          %4702 = vmatpush2.msra.mxu0 0.0
          %4703 = vmatprep.mubr.f32.mxu0 0.0
          %4704 = vmatmul.mubr.f32.gmra.mxu0 %v4637
          %v4705 = vpop.f32.mrf.mxu0
          %v4706 = vadd.f32 %v2044, %v4705
          %v4707 = vpop.f32.mrf.mxu0
          %4708 = vdwg.mxu0
          %v4709 = vmax.f32 %v4706, 0.0
          %v4711 = vsel %vm2126, %v4709, 0
          %4713 = vmatprep.subr.mxu0 0.0
          %4714 = vmatpush1.msra.mxu0 0.0
          %4715 = vmatprep.subr.mxu0 0.0
          %4716 = vmatpush1.msra.mxu0 0.0
          %4717 = vmatprep.subr.mxu0 0.0
          %4718 = vmatpush1.msra.mxu0 0.0
          %4719 = vmatprep.subr.mxu0 0.0
          %4720 = vmatpush1.msra.mxu0 0.0
          %4721 = vmatprep.subr.mxu0 0.0
          %4722 = vmatpush1.msra.mxu0 0.0
          %4723 = vmatprep.subr.mxu0 0.0
          %4724 = vmatpush1.msra.mxu0 0.0
          %4725 = vmatprep.subr.mxu0 0.0
          %4726 = vmatpush1.msra.mxu0 0.0
          %4727 = vmatprep.subr.mxu0 0.0
          %4728 = vmatpush1.msra.mxu0 0.0
          %4729 = vmatprep.subr.mxu0 0.0
          %4730 = vmatpush1.msra.mxu0 %v743
          %4731 = vmatprep.subr.mxu0 0.0
          %4732 = vmatpush1.msra.mxu0 %v742
          %4733 = vmatprep.subr.mxu0 0.0
          %4734 = vmatpush1.msra.mxu0 %v741
          %4735 = vmatprep.subr.mxu0 0.0
          %4736 = vmatpush1.msra.mxu0 %v740
          %4737 = vmatprep.subr.mxu0 0.0
          %4738 = vmatpush1.msra.mxu0 %v739
          %4739 = vmatprep.subr.mxu0 0.0
          %4740 = vmatpush1.msra.mxu0 %v738
          %4741 = vmatprep.subr.mxu0 0.0
          %4742 = vmatpush1.msra.mxu0 %v737
          %4743 = vmatprep.subr.mxu0 0.0
          %4744 = vmatpush1.msra.mxu0 %v736
          %4745 = vmatprep.subr.mxu0 0.0
          %4746 = vmatpush2.msra.mxu0 0.0
          %4747 = vmatprep.subr.mxu0 0.0
          %4748 = vmatpush2.msra.mxu0 0.0
          %4749 = vmatprep.subr.mxu0 0.0
          %4750 = vmatpush2.msra.mxu0 0.0
          %4751 = vmatprep.subr.mxu0 0.0
          %4752 = vmatpush2.msra.mxu0 0.0
          %4753 = vmatprep.subr.mxu0 0.0
          %4754 = vmatpush2.msra.mxu0 0.0
          %4755 = vmatprep.subr.mxu0 0.0
          %4756 = vmatpush2.msra.mxu0 0.0
          %4757 = vmatprep.subr.mxu0 0.0
          %4758 = vmatpush2.msra.mxu0 0.0
          %4759 = vmatprep.subr.mxu0 0.0
          %4760 = vmatpush2.msra.mxu0 0.0
          %4761 = vmatprep.subr.mxu0 0.0
          %4762 = vmatpush2.msra.mxu0 0.0
          %4763 = vmatprep.subr.mxu0 0.0
          %4764 = vmatpush2.msra.mxu0 0.0
          %4765 = vmatprep.subr.mxu0 0.0
          %4766 = vmatpush2.msra.mxu0 0.0
          %4767 = vmatprep.subr.mxu0 0.0
          %4768 = vmatpush2.msra.mxu0 0.0
          %4769 = vmatprep.subr.mxu0 0.0
          %4770 = vmatpush2.msra.mxu0 0.0
          %4771 = vmatprep.subr.mxu0 0.0
          %4772 = vmatpush2.msra.mxu0 0.0
          %4773 = vmatprep.subr.mxu0 0.0
          %4774 = vmatpush2.msra.mxu0 0.0
          %4775 = vmatprep.subr.mxu0 0.0
          %4776 = vmatpush2.msra.mxu0 0.0
          %4777 = vmatprep.mubr.f32.mxu0 0.0
          %4778 = vmatmul.mubr.f32.gmra.mxu0 %v4711
          %v4779 = vpop.f32.mrf.mxu0
          %v4780 = vadd.f32 %v2124, %v4779
          %v4781 = vpop.f32.mrf.mxu0
          %4782 = vdwg.mxu0
          %v4783 = vsel %vm771, %v4780, 0.0
          %4784 = vadd.xlane.f32.xlu0 %v4783
          %v4785 = vpop.xlane.xlu0 %4784
          %v4786 = vmul.f32 %v4785, %v1434
          %v4787 = vsub.f32 %v4780, %v4786
          %v4788 = vmul.f32 %v4787, %v4787
          %v4789 = vsel %vm771, %v4788, 0.0
          %4790 = vadd.xlane.f32.xlu0 %v4789
          %v4791 = vpop.xlane.xlu0 %4790
          %v4792 = vmul.f32 %v4791, %v1434
          %v4793 = vadd.f32 %v4792, 1e-05
          %v4794 = vrsqrt.pop %v4793
          %v4795 = vmul.f32 %v4787, %v4794
          %v4796 = vmul.f32 %v4795, %v1449
          %v4797 = vadd.f32 %v4796, %v1456
          %v4798 = vmul.f32 %v4797, %v1462
          %s4799 = sadd.f32 %s861, %s849
          %v4800 = vstv %s849
          %v4801 = vmul.f32 %v4800, %v4798
          %v4802 = vadd.f32 %v858, %v4801
          %v4803 = vstv %s4799
          %v4804 = vadd.f32 %v4802, %v4803
          %v4806 = vsel %vm771, %v4804, 0
          %4808 = vmatprep.subr.mxu0 0.0
          %4809 = vmatpush1.msra.mxu0 0.0
          %4810 = vmatprep.subr.mxu0 0.0
          %4811 = vmatpush1.msra.mxu0 0.0
          %4812 = vmatprep.subr.mxu0 0.0
          %4813 = vmatpush1.msra.mxu0 0.0
          %4814 = vmatprep.subr.mxu0 0.0
          %4815 = vmatpush1.msra.mxu0 0.0
          %4816 = vmatprep.subr.mxu0 0.0
          %4817 = vmatpush1.msra.mxu0 0.0
          %4818 = vmatprep.subr.mxu0 0.0
          %4819 = vmatpush1.msra.mxu0 0.0
          %4820 = vmatprep.subr.mxu0 0.0
          %4821 = vmatpush1.msra.mxu0 0.0
          %4822 = vmatprep.subr.mxu0 0.0
          %4823 = vmatpush1.msra.mxu0 0.0
          %4824 = vmatprep.subr.mxu0 0.0
          %4825 = vmatpush1.msra.mxu0 0.0
          %4826 = vmatprep.subr.mxu0 0.0
          %4827 = vmatpush1.msra.mxu0 0.0
          %4828 = vmatprep.subr.mxu0 0.0
          %4829 = vmatpush1.msra.mxu0 0.0
          %4830 = vmatprep.subr.mxu0 0.0
          %4831 = vmatpush1.msra.mxu0 0.0
          %4832 = vmatprep.subr.mxu0 0.0
          %4833 = vmatpush1.msra.mxu0 %v714
          %4834 = vmatprep.subr.mxu0 0.0
          %4835 = vmatpush1.msra.mxu0 %v713
          %4836 = vmatprep.subr.mxu0 0.0
          %4837 = vmatpush1.msra.mxu0 %v712
          %4838 = vmatprep.subr.mxu0 0.0
          %4839 = vmatpush1.msra.mxu0 %v711
          %4840 = vmatprep.subr.mxu0 0.0
          %4841 = vmatpush2.msra.mxu0 0.0
          %4842 = vmatprep.subr.mxu0 0.0
          %4843 = vmatpush2.msra.mxu0 0.0
          %4844 = vmatprep.subr.mxu0 0.0
          %4845 = vmatpush2.msra.mxu0 0.0
          %4846 = vmatprep.subr.mxu0 0.0
          %4847 = vmatpush2.msra.mxu0 0.0
          %4848 = vmatprep.subr.mxu0 0.0
          %4849 = vmatpush2.msra.mxu0 0.0
          %4850 = vmatprep.subr.mxu0 0.0
          %4851 = vmatpush2.msra.mxu0 0.0
          %4852 = vmatprep.subr.mxu0 0.0
          %4853 = vmatpush2.msra.mxu0 0.0
          %4854 = vmatprep.subr.mxu0 0.0
          %4855 = vmatpush2.msra.mxu0 0.0
          %4856 = vmatprep.subr.mxu0 0.0
          %4857 = vmatpush2.msra.mxu0 0.0
          %4858 = vmatprep.subr.mxu0 0.0
          %4859 = vmatpush2.msra.mxu0 0.0
          %4860 = vmatprep.subr.mxu0 0.0
          %4861 = vmatpush2.msra.mxu0 0.0
          %4862 = vmatprep.subr.mxu0 0.0
          %4863 = vmatpush2.msra.mxu0 0.0
          %4864 = vmatprep.subr.mxu0 0.0
          %4865 = vmatpush2.msra.mxu0 0.0
          %4866 = vmatprep.subr.mxu0 0.0
          %4867 = vmatpush2.msra.mxu0 0.0
          %4868 = vmatprep.subr.mxu0 0.0
          %4869 = vmatpush2.msra.mxu0 0.0
          %4870 = vmatprep.subr.mxu0 0.0
          %4871 = vmatpush2.msra.mxu0 0.0
          %4872 = vmatprep.mubr.f32.mxu0 0.0
          %4873 = vmatmul.mubr.f32.gmra.mxu0 %v4806
          %v4874 = vpop.f32.mrf.mxu0
          %v4875 = vadd.f32 %v868, %v4874
          %v4876 = vpop.f32.mrf.mxu0
          %4877 = vdwg.mxu0
          %4879 = vrot.lane.b32.xlu0 %v4875, 96
          %v4880 = vpop.permute.xlu0 %4879
          %v4881 = vsel %vm946, %v4875, 0
          %v4883 = vsel %vm946, %v4880, 0
          %4885 = vmatprep.subr.mxu0 0.0
          %4886 = vmatpush1.xpose.msra.mxu0 0.0
          %4887 = vmatprep.subr.mxu0 0.0
          %4888 = vmatpush1.xpose.msra.mxu0 0.0
          %4889 = vmatprep.subr.mxu0 0.0
          %4890 = vmatpush1.xpose.msra.mxu0 0.0
          %4891 = vmatprep.subr.mxu0 0.0
          %4892 = vmatpush1.xpose.msra.mxu0 0.0
          %4893 = vmatprep.subr.mxu0 0.0
          %4894 = vmatpush1.xpose.msra.mxu0 0.0
          %4895 = vmatprep.subr.mxu0 0.0
          %4896 = vmatpush1.xpose.msra.mxu0 0.0
          %4897 = vmatprep.subr.mxu0 0.0
          %4898 = vmatpush1.xpose.msra.mxu0 0.0
          %4899 = vmatprep.subr.mxu0 0.0
          %4900 = vmatpush1.xpose.msra.mxu0 0.0
          %4901 = vmatprep.subr.mxu0 0.0
          %4902 = vmatpush1.xpose.msra.mxu0 0.0
          %4903 = vmatprep.subr.mxu0 0.0
          %4904 = vmatpush1.xpose.msra.mxu0 0.0
          %4905 = vmatprep.subr.mxu0 0.0
          %4906 = vmatpush1.xpose.msra.mxu0 0.0
          %4907 = vmatprep.subr.mxu0 0.0
          %4908 = vmatpush1.xpose.msra.mxu0 0.0
          %4909 = vmatprep.subr.mxu0 0.0
          %4910 = vmatpush1.xpose.msra.mxu0 0.0
          %4911 = vmatprep.subr.mxu0 0.0
          %4912 = vmatpush1.xpose.msra.mxu0 0.0
          %4913 = vmatprep.subr.mxu0 0.0
          %4914 = vmatpush1.xpose.msra.mxu0 0.0
          %4915 = vmatprep.subr.mxu0 0.0
          %4916 = vmatpush1.xpose.msra.mxu0 %v4883
          %4917 = vmatprep.subr.mxu0 0.0
          %4918 = vmatpush2.xpose.msra.mxu0 0.0
          %4919 = vmatprep.subr.mxu0 0.0
          %4920 = vmatpush2.xpose.msra.mxu0 0.0
          %4921 = vmatprep.subr.mxu0 0.0
          %4922 = vmatpush2.xpose.msra.mxu0 0.0
          %4923 = vmatprep.subr.mxu0 0.0
          %4924 = vmatpush2.xpose.msra.mxu0 0.0
          %4925 = vmatprep.subr.mxu0 0.0
          %4926 = vmatpush2.xpose.msra.mxu0 0.0
          %4927 = vmatprep.subr.mxu0 0.0
          %4928 = vmatpush2.xpose.msra.mxu0 0.0
          %4929 = vmatprep.subr.mxu0 0.0
          %4930 = vmatpush2.xpose.msra.mxu0 0.0
          %4931 = vmatprep.subr.mxu0 0.0
          %4932 = vmatpush2.xpose.msra.mxu0 0.0
          %4933 = vmatprep.subr.mxu0 0.0
          %4934 = vmatpush2.xpose.msra.mxu0 0.0
          %4935 = vmatprep.subr.mxu0 0.0
          %4936 = vmatpush2.xpose.msra.mxu0 0.0
          %4937 = vmatprep.subr.mxu0 0.0
          %4938 = vmatpush2.xpose.msra.mxu0 0.0
          %4939 = vmatprep.subr.mxu0 0.0
          %4940 = vmatpush2.xpose.msra.mxu0 0.0
          %4941 = vmatprep.subr.mxu0 0.0
          %4942 = vmatpush2.xpose.msra.mxu0 0.0
          %4943 = vmatprep.subr.mxu0 0.0
          %4944 = vmatpush2.xpose.msra.mxu0 0.0
          %4945 = vmatprep.subr.mxu0 0.0
          %4946 = vmatpush2.xpose.msra.mxu0 0.0
          %4947 = vmatprep.subr.mxu0 0.0
          %4948 = vmatpush2.xpose.msra.mxu0 0.0
          %4949 = vmatprep.mubr.f32.mxu0 0.0
          %4950 = vmatmul.mubr.f32.gmra.mxu0 %v4881
          %v4951 = vpop.f32.mrf.mxu0
          %v4952 = vadd.f32 0.0, %v4951
          %v4953 = vpop.f32.mrf.mxu0
          %4954 = vdwg.mxu0
          %v4955 = vmul.f32 %v4952, 0.25
          %v4956 = vadd.f32 %v4955, %v709
          %v4957 = vsel %vm1023, %v4956, -inf
          %4958 = vmax.xlane.f32.xlu0 %v4957
          %v4959 = vpop.xlane.xlu0 %4958
          %v4960 = vsub.f32 %v4956, %v4959
          %v4961 = vmul.f32 %v4960, 1.442695
          %v4962 = vpow.pop %v4961
          %v4963 = vsel %vm1023, %v4962, 0.0
          %4964 = vadd.xlane.f32.xlu0 %v4963
          %v4965 = vpop.xlane.xlu0 %4964
          %v4966 = vrcp.pop %v4965
          %v4967 = vmul.f32 %v4962, %v4966
          %4968 = vrot.lane.b32.xlu0 %v4875, 64
          %v4969 = vpop.permute.xlu0 %4968
          %v4972 = vsel %vm1023, %v4967, 0
          %4974 = vmatprep.subr.mxu0 0.0
          %4975 = vmatpush1.msra.mxu0 0.0
          %4976 = vmatprep.subr.mxu0 0.0
          %4977 = vmatpush1.msra.mxu0 0.0
          %4978 = vmatprep.subr.mxu0 0.0
          %4979 = vmatpush1.msra.mxu0 0.0
          %4980 = vmatprep.subr.mxu0 0.0
          %4981 = vmatpush1.msra.mxu0 0.0
          %4982 = vmatprep.subr.mxu0 0.0
          %4983 = vmatpush1.msra.mxu0 0.0
          %4984 = vmatprep.subr.mxu0 0.0
          %4985 = vmatpush1.msra.mxu0 0.0
          %4986 = vmatprep.subr.mxu0 0.0
          %4987 = vmatpush1.msra.mxu0 0.0
          %4988 = vmatprep.subr.mxu0 0.0
          %4989 = vmatpush1.msra.mxu0 0.0
          %4990 = vmatprep.subr.mxu0 0.0
          %4991 = vmatpush1.msra.mxu0 0.0
          %4992 = vmatprep.subr.mxu0 0.0
          %4993 = vmatpush1.msra.mxu0 0.0
          %4994 = vmatprep.subr.mxu0 0.0
          %4995 = vmatpush1.msra.mxu0 0.0
          %4996 = vmatprep.subr.mxu0 0.0
          %4997 = vmatpush1.msra.mxu0 0.0
          %4998 = vmatprep.subr.mxu0 0.0
          %4999 = vmatpush1.msra.mxu0 0.0
          %5000 = vmatprep.subr.mxu0 0.0
          %5001 = vmatpush1.msra.mxu0 0.0
          %5002 = vmatprep.subr.mxu0 0.0
          %5003 = vmatpush1.msra.mxu0 0.0
          %5004 = vmatprep.subr.mxu0 0.0
          %5005 = vmatpush1.msra.mxu0 %v4969
          %5006 = vmatprep.subr.mxu0 0.0
          %5007 = vmatpush2.msra.mxu0 0.0
          %5008 = vmatprep.subr.mxu0 0.0
          %5009 = vmatpush2.msra.mxu0 0.0
          %5010 = vmatprep.subr.mxu0 0.0
          %5011 = vmatpush2.msra.mxu0 0.0
          %5012 = vmatprep.subr.mxu0 0.0
          %5013 = vmatpush2.msra.mxu0 0.0
          %5014 = vmatprep.subr.mxu0 0.0
          %5015 = vmatpush2.msra.mxu0 0.0
          %5016 = vmatprep.subr.mxu0 0.0
          %5017 = vmatpush2.msra.mxu0 0.0
          %5018 = vmatprep.subr.mxu0 0.0
          %5019 = vmatpush2.msra.mxu0 0.0
          %5020 = vmatprep.subr.mxu0 0.0
          %5021 = vmatpush2.msra.mxu0 0.0
          %5022 = vmatprep.subr.mxu0 0.0
          %5023 = vmatpush2.msra.mxu0 0.0
          %5024 = vmatprep.subr.mxu0 0.0
          %5025 = vmatpush2.msra.mxu0 0.0
          %5026 = vmatprep.subr.mxu0 0.0
          %5027 = vmatpush2.msra.mxu0 0.0
          %5028 = vmatprep.subr.mxu0 0.0
          %5029 = vmatpush2.msra.mxu0 0.0
          %5030 = vmatprep.subr.mxu0 0.0
          %5031 = vmatpush2.msra.mxu0 0.0
          %5032 = vmatprep.subr.mxu0 0.0
          %5033 = vmatpush2.msra.mxu0 0.0
          %5034 = vmatprep.subr.mxu0 0.0
          %5035 = vmatpush2.msra.mxu0 0.0
          %5036 = vmatprep.subr.mxu0 0.0
          %5037 = vmatpush2.msra.mxu0 0.0
          %5038 = vmatprep.mubr.f32.mxu0 0.0
          %5039 = vmatmul.mubr.f32.gmra.mxu0 %v4972
          %v5040 = vpop.f32.mrf.mxu0
          %v5041 = vadd.f32 0.0, %v5040
          %v5042 = vpop.f32.mrf.mxu0
          %5043 = vdwg.mxu0
          %5044 = vrot.lane.b32.xlu0 %v4875, 112
          %v5045 = vpop.permute.xlu0 %5044
          %5046 = vrot.lane.b32.xlu0 %v4875, 80
          %v5047 = vpop.permute.xlu0 %5046
          %v5048 = vsel %vm946, %v5045, 0
          %v5050 = vsel %vm946, %v5047, 0
          %5052 = vmatprep.subr.mxu0 0.0
          %5053 = vmatpush1.xpose.msra.mxu0 0.0
          %5054 = vmatprep.subr.mxu0 0.0
          %5055 = vmatpush1.xpose.msra.mxu0 0.0
          %5056 = vmatprep.subr.mxu0 0.0
          %5057 = vmatpush1.xpose.msra.mxu0 0.0
          %5058 = vmatprep.subr.mxu0 0.0
          %5059 = vmatpush1.xpose.msra.mxu0 0.0
          %5060 = vmatprep.subr.mxu0 0.0
          %5061 = vmatpush1.xpose.msra.mxu0 0.0
          %5062 = vmatprep.subr.mxu0 0.0
          %5063 = vmatpush1.xpose.msra.mxu0 0.0
          %5064 = vmatprep.subr.mxu0 0.0
          %5065 = vmatpush1.xpose.msra.mxu0 0.0
          %5066 = vmatprep.subr.mxu0 0.0
          %5067 = vmatpush1.xpose.msra.mxu0 0.0
          %5068 = vmatprep.subr.mxu0 0.0
          %5069 = vmatpush1.xpose.msra.mxu0 0.0
          %5070 = vmatprep.subr.mxu0 0.0
          %5071 = vmatpush1.xpose.msra.mxu0 0.0
          %5072 = vmatprep.subr.mxu0 0.0
          %5073 = vmatpush1.xpose.msra.mxu0 0.0
          %5074 = vmatprep.subr.mxu0 0.0
          %5075 = vmatpush1.xpose.msra.mxu0 0.0
          %5076 = vmatprep.subr.mxu0 0.0
          %5077 = vmatpush1.xpose.msra.mxu0 0.0
          %5078 = vmatprep.subr.mxu0 0.0
          %5079 = vmatpush1.xpose.msra.mxu0 0.0
          %5080 = vmatprep.subr.mxu0 0.0
          %5081 = vmatpush1.xpose.msra.mxu0 0.0
          %5082 = vmatprep.subr.mxu0 0.0
          %5083 = vmatpush1.xpose.msra.mxu0 %v5050
          %5084 = vmatprep.subr.mxu0 0.0
          %5085 = vmatpush2.xpose.msra.mxu0 0.0
          %5086 = vmatprep.subr.mxu0 0.0
          %5087 = vmatpush2.xpose.msra.mxu0 0.0
          %5088 = vmatprep.subr.mxu0 0.0
          %5089 = vmatpush2.xpose.msra.mxu0 0.0
          %5090 = vmatprep.subr.mxu0 0.0
          %5091 = vmatpush2.xpose.msra.mxu0 0.0
          %5092 = vmatprep.subr.mxu0 0.0
          %5093 = vmatpush2.xpose.msra.mxu0 0.0
          %5094 = vmatprep.subr.mxu0 0.0
          %5095 = vmatpush2.xpose.msra.mxu0 0.0
          %5096 = vmatprep.subr.mxu0 0.0
          %5097 = vmatpush2.xpose.msra.mxu0 0.0
          %5098 = vmatprep.subr.mxu0 0.0
          %5099 = vmatpush2.xpose.msra.mxu0 0.0
          %5100 = vmatprep.subr.mxu0 0.0
          %5101 = vmatpush2.xpose.msra.mxu0 0.0
          %5102 = vmatprep.subr.mxu0 0.0
          %5103 = vmatpush2.xpose.msra.mxu0 0.0
          %5104 = vmatprep.subr.mxu0 0.0
          %5105 = vmatpush2.xpose.msra.mxu0 0.0
          %5106 = vmatprep.subr.mxu0 0.0
          %5107 = vmatpush2.xpose.msra.mxu0 0.0
          %5108 = vmatprep.subr.mxu0 0.0
          %5109 = vmatpush2.xpose.msra.mxu0 0.0
          %5110 = vmatprep.subr.mxu0 0.0
          %5111 = vmatpush2.xpose.msra.mxu0 0.0
          %5112 = vmatprep.subr.mxu0 0.0
          %5113 = vmatpush2.xpose.msra.mxu0 0.0
          %5114 = vmatprep.subr.mxu0 0.0
          %5115 = vmatpush2.xpose.msra.mxu0 0.0
          %5116 = vmatprep.mubr.f32.mxu0 0.0
          %5117 = vmatmul.mubr.f32.gmra.mxu0 %v5048
          %v5118 = vpop.f32.mrf.mxu0
          %v5119 = vadd.f32 0.0, %v5118
          %v5120 = vpop.f32.mrf.mxu0
          %5121 = vdwg.mxu0
          %v5122 = vmul.f32 %v5119, 0.25
          %v5123 = vadd.f32 %v5122, %v709
          %v5124 = vsel %vm1023, %v5123, -inf
          %5125 = vmax.xlane.f32.xlu0 %v5124
          %v5126 = vpop.xlane.xlu0 %5125
          %v5127 = vsub.f32 %v5123, %v5126
          %v5128 = vmul.f32 %v5127, 1.442695
          %v5129 = vpow.pop %v5128
          %v5130 = vsel %vm1023, %v5129, 0.0
          %5131 = vadd.xlane.f32.xlu0 %v5130
          %v5132 = vpop.xlane.xlu0 %5131
          %v5133 = vrcp.pop %v5132
          %v5134 = vmul.f32 %v5129, %v5133
          %5135 = vrot.lane.b32.xlu0 %v4875, 48
          %v5136 = vpop.permute.xlu0 %5135
          %v5139 = vsel %vm1023, %v5134, 0
          %5141 = vmatprep.subr.mxu0 0.0
          %5142 = vmatpush1.msra.mxu0 0.0
          %5143 = vmatprep.subr.mxu0 0.0
          %5144 = vmatpush1.msra.mxu0 0.0
          %5145 = vmatprep.subr.mxu0 0.0
          %5146 = vmatpush1.msra.mxu0 0.0
          %5147 = vmatprep.subr.mxu0 0.0
          %5148 = vmatpush1.msra.mxu0 0.0
          %5149 = vmatprep.subr.mxu0 0.0
          %5150 = vmatpush1.msra.mxu0 0.0
          %5151 = vmatprep.subr.mxu0 0.0
          %5152 = vmatpush1.msra.mxu0 0.0
          %5153 = vmatprep.subr.mxu0 0.0
          %5154 = vmatpush1.msra.mxu0 0.0
          %5155 = vmatprep.subr.mxu0 0.0
          %5156 = vmatpush1.msra.mxu0 0.0
          %5157 = vmatprep.subr.mxu0 0.0
          %5158 = vmatpush1.msra.mxu0 0.0
          %5159 = vmatprep.subr.mxu0 0.0
          %5160 = vmatpush1.msra.mxu0 0.0
          %5161 = vmatprep.subr.mxu0 0.0
          %5162 = vmatpush1.msra.mxu0 0.0
          %5163 = vmatprep.subr.mxu0 0.0
          %5164 = vmatpush1.msra.mxu0 0.0
          %5165 = vmatprep.subr.mxu0 0.0
          %5166 = vmatpush1.msra.mxu0 0.0
          %5167 = vmatprep.subr.mxu0 0.0
          %5168 = vmatpush1.msra.mxu0 0.0
          %5169 = vmatprep.subr.mxu0 0.0
          %5170 = vmatpush1.msra.mxu0 0.0
          %5171 = vmatprep.subr.mxu0 0.0
          %5172 = vmatpush1.msra.mxu0 %v5136
          %5173 = vmatprep.subr.mxu0 0.0
          %5174 = vmatpush2.msra.mxu0 0.0
          %5175 = vmatprep.subr.mxu0 0.0
          %5176 = vmatpush2.msra.mxu0 0.0
          %5177 = vmatprep.subr.mxu0 0.0
          %5178 = vmatpush2.msra.mxu0 0.0
          %5179 = vmatprep.subr.mxu0 0.0
          %5180 = vmatpush2.msra.mxu0 0.0
          %5181 = vmatprep.subr.mxu0 0.0
          %5182 = vmatpush2.msra.mxu0 0.0
          %5183 = vmatprep.subr.mxu0 0.0
          %5184 = vmatpush2.msra.mxu0 0.0
          %5185 = vmatprep.subr.mxu0 0.0
          %5186 = vmatpush2.msra.mxu0 0.0
          %5187 = vmatprep.subr.mxu0 0.0
          %5188 = vmatpush2.msra.mxu0 0.0
          %5189 = vmatprep.subr.mxu0 0.0
          %5190 = vmatpush2.msra.mxu0 0.0
          %5191 = vmatprep.subr.mxu0 0.0
          %5192 = vmatpush2.msra.mxu0 0.0
          %5193 = vmatprep.subr.mxu0 0.0
          %5194 = vmatpush2.msra.mxu0 0.0
          %5195 = vmatprep.subr.mxu0 0.0
          %5196 = vmatpush2.msra.mxu0 0.0
          %5197 = vmatprep.subr.mxu0 0.0
          %5198 = vmatpush2.msra.mxu0 0.0
          %5199 = vmatprep.subr.mxu0 0.0
          %5200 = vmatpush2.msra.mxu0 0.0
          %5201 = vmatprep.subr.mxu0 0.0
          %5202 = vmatpush2.msra.mxu0 0.0
          %5203 = vmatprep.subr.mxu0 0.0
          %5204 = vmatpush2.msra.mxu0 0.0
          %5205 = vmatprep.mubr.f32.mxu0 0.0
          %5206 = vmatmul.mubr.f32.gmra.mxu0 %v5139
          %v5207 = vpop.f32.mrf.mxu0
          %v5208 = vadd.f32 0.0, %v5207
          %v5209 = vpop.f32.mrf.mxu0
          %5210 = vdwg.mxu0
          %v5212 = vsel %vm946, %v5208, 0
          %5214 = vmatprep.subr.mxu0 0.0
          %5215 = vmatpush1.msra.mxu0 0.0
          %5216 = vmatprep.subr.mxu0 0.0
          %5217 = vmatpush1.msra.mxu0 0.0
          %5218 = vmatprep.subr.mxu0 0.0
          %5219 = vmatpush1.msra.mxu0 0.0
          %5220 = vmatprep.subr.mxu0 0.0
          %5221 = vmatpush1.msra.mxu0 0.0
          %5222 = vmatprep.subr.mxu0 0.0
          %5223 = vmatpush1.msra.mxu0 0.0
          %5224 = vmatprep.subr.mxu0 0.0
          %5225 = vmatpush1.msra.mxu0 0.0
          %5226 = vmatprep.subr.mxu0 0.0
          %5227 = vmatpush1.msra.mxu0 0.0
          %5228 = vmatprep.subr.mxu0 0.0
          %5229 = vmatpush1.msra.mxu0 0.0
          %5230 = vmatprep.subr.mxu0 0.0
          %5231 = vmatpush1.msra.mxu0 0.0
          %5232 = vmatprep.subr.mxu0 0.0
          %5233 = vmatpush1.msra.mxu0 0.0
          %5234 = vmatprep.subr.mxu0 0.0
          %5235 = vmatpush1.msra.mxu0 0.0
          %5236 = vmatprep.subr.mxu0 0.0
          %5237 = vmatpush1.msra.mxu0 0.0
          %5238 = vmatprep.subr.mxu0 0.0
          %5239 = vmatpush1.msra.mxu0 0.0
          %5240 = vmatprep.subr.mxu0 0.0
          %5241 = vmatpush1.msra.mxu0 0.0
          %5242 = vmatprep.subr.mxu0 0.0
          %5243 = vmatpush1.msra.mxu0 %v719
          %5244 = vmatprep.subr.mxu0 0.0
          %5245 = vmatpush1.msra.mxu0 %v718
          %5246 = vmatprep.subr.mxu0 0.0
          %5247 = vmatpush2.msra.mxu0 0.0
          %5248 = vmatprep.subr.mxu0 0.0
          %5249 = vmatpush2.msra.mxu0 0.0
          %5250 = vmatprep.subr.mxu0 0.0
          %5251 = vmatpush2.msra.mxu0 0.0
          %5252 = vmatprep.subr.mxu0 0.0
          %5253 = vmatpush2.msra.mxu0 0.0
          %5254 = vmatprep.subr.mxu0 0.0
          %5255 = vmatpush2.msra.mxu0 0.0
          %5256 = vmatprep.subr.mxu0 0.0
          %5257 = vmatpush2.msra.mxu0 0.0
          %5258 = vmatprep.subr.mxu0 0.0
          %5259 = vmatpush2.msra.mxu0 0.0
          %5260 = vmatprep.subr.mxu0 0.0
          %5261 = vmatpush2.msra.mxu0 0.0
          %5262 = vmatprep.subr.mxu0 0.0
          %5263 = vmatpush2.msra.mxu0 0.0
          %5264 = vmatprep.subr.mxu0 0.0
          %5265 = vmatpush2.msra.mxu0 0.0
          %5266 = vmatprep.subr.mxu0 0.0
          %5267 = vmatpush2.msra.mxu0 0.0
          %5268 = vmatprep.subr.mxu0 0.0
          %5269 = vmatpush2.msra.mxu0 0.0
          %5270 = vmatprep.subr.mxu0 0.0
          %5271 = vmatpush2.msra.mxu0 0.0
          %5272 = vmatprep.subr.mxu0 0.0
          %5273 = vmatpush2.msra.mxu0 0.0
          %5274 = vmatprep.subr.mxu0 0.0
          %5275 = vmatpush2.msra.mxu0 0.0
          %5276 = vmatprep.subr.mxu0 0.0
          %5277 = vmatpush2.msra.mxu0 0.0
          %5278 = vmatprep.mubr.f32.mxu0 0.0
          %5279 = vmatmul.mubr.f32.gmra.mxu0 %v5212
          %v5280 = vpop.f32.mrf.mxu0
          %v5281 = vadd.f32 0.0, %v5280
          %v5282 = vpop.f32.mrf.mxu0
          %5283 = vdwg.mxu0
          %v5285 = vsel %vm946, %v5041, 0
          %5287 = vmatprep.subr.mxu0 0.0
          %5288 = vmatpush1.msra.mxu0 0.0
          %5289 = vmatprep.subr.mxu0 0.0
          %5290 = vmatpush1.msra.mxu0 0.0
          %5291 = vmatprep.subr.mxu0 0.0
          %5292 = vmatpush1.msra.mxu0 0.0
          %5293 = vmatprep.subr.mxu0 0.0
          %5294 = vmatpush1.msra.mxu0 0.0
          %5295 = vmatprep.subr.mxu0 0.0
          %5296 = vmatpush1.msra.mxu0 0.0
          %5297 = vmatprep.subr.mxu0 0.0
          %5298 = vmatpush1.msra.mxu0 0.0
          %5299 = vmatprep.subr.mxu0 0.0
          %5300 = vmatpush1.msra.mxu0 0.0
          %5301 = vmatprep.subr.mxu0 0.0
          %5302 = vmatpush1.msra.mxu0 0.0
          %5303 = vmatprep.subr.mxu0 0.0
          %5304 = vmatpush1.msra.mxu0 0.0
          %5305 = vmatprep.subr.mxu0 0.0
          %5306 = vmatpush1.msra.mxu0 0.0
          %5307 = vmatprep.subr.mxu0 0.0
          %5308 = vmatpush1.msra.mxu0 0.0
          %5309 = vmatprep.subr.mxu0 0.0
          %5310 = vmatpush1.msra.mxu0 0.0
          %5311 = vmatprep.subr.mxu0 0.0
          %5312 = vmatpush1.msra.mxu0 0.0
          %5313 = vmatprep.subr.mxu0 0.0
          %5314 = vmatpush1.msra.mxu0 0.0
          %5315 = vmatprep.subr.mxu0 0.0
          %5316 = vmatpush1.msra.mxu0 %v717
          %5317 = vmatprep.subr.mxu0 0.0
          %5318 = vmatpush1.msra.mxu0 %v716
          %5319 = vmatprep.subr.mxu0 0.0
          %5320 = vmatpush2.msra.mxu0 0.0
          %5321 = vmatprep.subr.mxu0 0.0
          %5322 = vmatpush2.msra.mxu0 0.0
          %5323 = vmatprep.subr.mxu0 0.0
          %5324 = vmatpush2.msra.mxu0 0.0
          %5325 = vmatprep.subr.mxu0 0.0
          %5326 = vmatpush2.msra.mxu0 0.0
          %5327 = vmatprep.subr.mxu0 0.0
          %5328 = vmatpush2.msra.mxu0 0.0
          %5329 = vmatprep.subr.mxu0 0.0
          %5330 = vmatpush2.msra.mxu0 0.0
          %5331 = vmatprep.subr.mxu0 0.0
          %5332 = vmatpush2.msra.mxu0 0.0
          %5333 = vmatprep.subr.mxu0 0.0
          %5334 = vmatpush2.msra.mxu0 0.0
          %5335 = vmatprep.subr.mxu0 0.0
          %5336 = vmatpush2.msra.mxu0 0.0
          %5337 = vmatprep.subr.mxu0 0.0
          %5338 = vmatpush2.msra.mxu0 0.0
          %5339 = vmatprep.subr.mxu0 0.0
          %5340 = vmatpush2.msra.mxu0 0.0
          %5341 = vmatprep.subr.mxu0 0.0
          %5342 = vmatpush2.msra.mxu0 0.0
          %5343 = vmatprep.subr.mxu0 0.0
          %5344 = vmatpush2.msra.mxu0 0.0
          %5345 = vmatprep.subr.mxu0 0.0
          %5346 = vmatpush2.msra.mxu0 0.0
          %5347 = vmatprep.subr.mxu0 0.0
          %5348 = vmatpush2.msra.mxu0 0.0
          %5349 = vmatprep.subr.mxu0 0.0
          %5350 = vmatpush2.msra.mxu0 0.0
          %5351 = vmatprep.mubr.f32.mxu0 0.0
          %5352 = vmatmul.mubr.f32.gmra.mxu0 %v5285
          %v5353 = vpop.f32.mrf.mxu0
          %v5354 = vadd.f32 %v5281, %v5353
          %v5355 = vpop.f32.mrf.mxu0
          %5356 = vdwg.mxu0
          %v5357 = vadd.f32 %v5354, %v1428
          %v5358 = vsel %vm771, %v5357, 0.0
          %5359 = vadd.xlane.f32.xlu0 %v5358
          %v5360 = vpop.xlane.xlu0 %5359
          %v5361 = vmul.f32 %v5360, %v1434
          %v5362 = vsub.f32 %v5357, %v5361
          %v5363 = vmul.f32 %v5362, %v5362
          %v5364 = vsel %vm771, %v5363, 0.0
          %5365 = vadd.xlane.f32.xlu0 %v5364
          %v5366 = vpop.xlane.xlu0 %5365
          %v5367 = vmul.f32 %v5366, %v1434
          %v5368 = vadd.f32 %v5367, 1e-05
          %v5369 = vrsqrt.pop %v5368
          %v5370 = vmul.f32 %v5362, %v5369
          %v5371 = vmul.f32 %v5370, %v1449
          %v5372 = vadd.f32 %v5371, %v1456
          %v5373 = vmul.f32 %v5372, %v1462
          %v5375 = vsel %vm771, %v5373, 0
          %5377 = vmatprep.subr.mxu0 0.0
          %5378 = vmatpush1.msra.mxu0 0.0
          %5379 = vmatprep.subr.mxu0 0.0
          %5380 = vmatpush1.msra.mxu0 0.0
          %5381 = vmatprep.subr.mxu0 0.0
          %5382 = vmatpush1.msra.mxu0 0.0
          %5383 = vmatprep.subr.mxu0 0.0
          %5384 = vmatpush1.msra.mxu0 0.0
          %5385 = vmatprep.subr.mxu0 0.0
          %5386 = vmatpush1.msra.mxu0 0.0
          %5387 = vmatprep.subr.mxu0 0.0
          %5388 = vmatpush1.msra.mxu0 0.0
          %5389 = vmatprep.subr.mxu0 0.0
          %5390 = vmatpush1.msra.mxu0 0.0
          %5391 = vmatprep.subr.mxu0 0.0
          %5392 = vmatpush1.msra.mxu0 0.0
          %5393 = vmatprep.subr.mxu0 0.0
          %5394 = vmatpush1.msra.mxu0 0.0
          %5395 = vmatprep.subr.mxu0 0.0
          %5396 = vmatpush1.msra.mxu0 0.0
          %5397 = vmatprep.subr.mxu0 0.0
          %5398 = vmatpush1.msra.mxu0 0.0
          %5399 = vmatprep.subr.mxu0 0.0
          %5400 = vmatpush1.msra.mxu0 0.0
          %5401 = vmatprep.subr.mxu0 0.0
          %5402 = vmatpush1.msra.mxu0 %v724
          %5403 = vmatprep.subr.mxu0 0.0
          %5404 = vmatpush1.msra.mxu0 %v723
          %5405 = vmatprep.subr.mxu0 0.0
          %5406 = vmatpush1.msra.mxu0 %v722
          %5407 = vmatprep.subr.mxu0 0.0
          %5408 = vmatpush1.msra.mxu0 %v721
          %5409 = vmatprep.subr.mxu0 0.0
          %5410 = vmatpush2.msra.mxu0 0.0
          %5411 = vmatprep.subr.mxu0 0.0
          %5412 = vmatpush2.msra.mxu0 0.0
          %5413 = vmatprep.subr.mxu0 0.0
          %5414 = vmatpush2.msra.mxu0 0.0
          %5415 = vmatprep.subr.mxu0 0.0
          %5416 = vmatpush2.msra.mxu0 0.0
          %5417 = vmatprep.subr.mxu0 0.0
          %5418 = vmatpush2.msra.mxu0 0.0
          %5419 = vmatprep.subr.mxu0 0.0
          %5420 = vmatpush2.msra.mxu0 0.0
          %5421 = vmatprep.subr.mxu0 0.0
          %5422 = vmatpush2.msra.mxu0 0.0
          %5423 = vmatprep.subr.mxu0 0.0
          %5424 = vmatpush2.msra.mxu0 0.0
          %5425 = vmatprep.subr.mxu0 0.0
          %5426 = vmatpush2.msra.mxu0 0.0
          %5427 = vmatprep.subr.mxu0 0.0
          %5428 = vmatpush2.msra.mxu0 0.0
          %5429 = vmatprep.subr.mxu0 0.0
          %5430 = vmatpush2.msra.mxu0 0.0
          %5431 = vmatprep.subr.mxu0 0.0
          %5432 = vmatpush2.msra.mxu0 0.0
          %5433 = vmatprep.subr.mxu0 0.0
          %5434 = vmatpush2.msra.mxu0 0.0
          %5435 = vmatprep.subr.mxu0 0.0
          %5436 = vmatpush2.msra.mxu0 0.0
          %5437 = vmatprep.subr.mxu0 0.0
          %5438 = vmatpush2.msra.mxu0 0.0
          %5439 = vmatprep.subr.mxu0 0.0
          %5440 = vmatpush2.msra.mxu0 0.0
          %5441 = vmatprep.mubr.f32.mxu0 0.0
          %5442 = vmatmul.mubr.f32.gmra.mxu0 %v5375
          %v5443 = vpop.f32.mrf.mxu0
          %v5444 = vadd.f32 %v751, %v5443
          %v5445 = vpop.f32.mrf.mxu0
          %5446 = vdwg.mxu0
          %v5448 = vsel %vm946, %v5444, 0
          %5450 = vmatprep.subr.mxu0 0.0
          %5451 = vmatpush1.xpose.msra.mxu0 0.0
          %5452 = vmatprep.subr.mxu0 0.0
          %5453 = vmatpush1.xpose.msra.mxu0 0.0
          %5454 = vmatprep.subr.mxu0 0.0
          %5455 = vmatpush1.xpose.msra.mxu0 0.0
          %5456 = vmatprep.subr.mxu0 0.0
          %5457 = vmatpush1.xpose.msra.mxu0 0.0
          %5458 = vmatprep.subr.mxu0 0.0
          %5459 = vmatpush1.xpose.msra.mxu0 0.0
          %5460 = vmatprep.subr.mxu0 0.0
          %5461 = vmatpush1.xpose.msra.mxu0 0.0
          %5462 = vmatprep.subr.mxu0 0.0
          %5463 = vmatpush1.xpose.msra.mxu0 0.0
          %5464 = vmatprep.subr.mxu0 0.0
          %5465 = vmatpush1.xpose.msra.mxu0 0.0
          %5466 = vmatprep.subr.mxu0 0.0
          %5467 = vmatpush1.xpose.msra.mxu0 0.0
          %5468 = vmatprep.subr.mxu0 0.0
          %5469 = vmatpush1.xpose.msra.mxu0 0.0
          %5470 = vmatprep.subr.mxu0 0.0
          %5471 = vmatpush1.xpose.msra.mxu0 0.0
          %5472 = vmatprep.subr.mxu0 0.0
          %5473 = vmatpush1.xpose.msra.mxu0 0.0
          %5474 = vmatprep.subr.mxu0 0.0
          %5475 = vmatpush1.xpose.msra.mxu0 0.0
          %5476 = vmatprep.subr.mxu0 0.0
          %5477 = vmatpush1.xpose.msra.mxu0 0.0
          %5478 = vmatprep.subr.mxu0 0.0
          %5479 = vmatpush1.xpose.msra.mxu0 0.0
          %5480 = vmatprep.subr.mxu0 0.0
          %5481 = vmatpush1.xpose.msra.mxu0 %v1543
          %5482 = vmatprep.subr.mxu0 0.0
          %5483 = vmatpush2.xpose.msra.mxu0 0.0
          %5484 = vmatprep.subr.mxu0 0.0
          %5485 = vmatpush2.xpose.msra.mxu0 0.0
          %5486 = vmatprep.subr.mxu0 0.0
          %5487 = vmatpush2.xpose.msra.mxu0 0.0
          %5488 = vmatprep.subr.mxu0 0.0
          %5489 = vmatpush2.xpose.msra.mxu0 0.0
          %5490 = vmatprep.subr.mxu0 0.0
          %5491 = vmatpush2.xpose.msra.mxu0 0.0
          %5492 = vmatprep.subr.mxu0 0.0
          %5493 = vmatpush2.xpose.msra.mxu0 0.0
          %5494 = vmatprep.subr.mxu0 0.0
          %5495 = vmatpush2.xpose.msra.mxu0 0.0
          %5496 = vmatprep.subr.mxu0 0.0
          %5497 = vmatpush2.xpose.msra.mxu0 0.0
          %5498 = vmatprep.subr.mxu0 0.0
          %5499 = vmatpush2.xpose.msra.mxu0 0.0
          %5500 = vmatprep.subr.mxu0 0.0
          %5501 = vmatpush2.xpose.msra.mxu0 0.0
          %5502 = vmatprep.subr.mxu0 0.0
          %5503 = vmatpush2.xpose.msra.mxu0 0.0
          %5504 = vmatprep.subr.mxu0 0.0
          %5505 = vmatpush2.xpose.msra.mxu0 0.0
          %5506 = vmatprep.subr.mxu0 0.0
          %5507 = vmatpush2.xpose.msra.mxu0 0.0
          %5508 = vmatprep.subr.mxu0 0.0
          %5509 = vmatpush2.xpose.msra.mxu0 0.0
          %5510 = vmatprep.subr.mxu0 0.0
          %5511 = vmatpush2.xpose.msra.mxu0 0.0
          %5512 = vmatprep.subr.mxu0 0.0
          %5513 = vmatpush2.xpose.msra.mxu0 0.0
          %5514 = vmatprep.mubr.f32.mxu0 0.0
          %5515 = vmatmul.mubr.f32.gmra.mxu0 %v5448
          %v5516 = vpop.f32.mrf.mxu0
          %v5517 = vadd.f32 0.0, %v5516
          %v5518 = vpop.f32.mrf.mxu0
          %5519 = vdwg.mxu0
          %v5520 = vmul.f32 %v5517, 0.25
          %v5521 = vadd.f32 %v5520, %v710
          %v5522 = vsel %vm1023, %v5521, -inf
          %5523 = vmax.xlane.f32.xlu0 %v5522
          %v5524 = vpop.xlane.xlu0 %5523
          %v5525 = vsub.f32 %v5521, %v5524
          %v5526 = vmul.f32 %v5525, 1.442695
          %v5527 = vpow.pop %v5526
          %v5528 = vsel %vm1023, %v5527, 0.0
          %5529 = vadd.xlane.f32.xlu0 %v5528
          %v5530 = vpop.xlane.xlu0 %5529
          %v5531 = vrcp.pop %v5530
          %v5532 = vmul.f32 %v5527, %v5531
          %v5534 = vsel %vm1023, %v5532, 0
          %5536 = vmatprep.subr.mxu0 0.0
          %5537 = vmatpush1.msra.mxu0 0.0
          %5538 = vmatprep.subr.mxu0 0.0
          %5539 = vmatpush1.msra.mxu0 0.0
          %5540 = vmatprep.subr.mxu0 0.0
          %5541 = vmatpush1.msra.mxu0 0.0
          %5542 = vmatprep.subr.mxu0 0.0
          %5543 = vmatpush1.msra.mxu0 0.0
          %5544 = vmatprep.subr.mxu0 0.0
          %5545 = vmatpush1.msra.mxu0 0.0
          %5546 = vmatprep.subr.mxu0 0.0
          %5547 = vmatpush1.msra.mxu0 0.0
          %5548 = vmatprep.subr.mxu0 0.0
          %5549 = vmatpush1.msra.mxu0 0.0
          %5550 = vmatprep.subr.mxu0 0.0
          %5551 = vmatpush1.msra.mxu0 0.0
          %5552 = vmatprep.subr.mxu0 0.0
          %5553 = vmatpush1.msra.mxu0 0.0
          %5554 = vmatprep.subr.mxu0 0.0
          %5555 = vmatpush1.msra.mxu0 0.0
          %5556 = vmatprep.subr.mxu0 0.0
          %5557 = vmatpush1.msra.mxu0 0.0
          %5558 = vmatprep.subr.mxu0 0.0
          %5559 = vmatpush1.msra.mxu0 0.0
          %5560 = vmatprep.subr.mxu0 0.0
          %5561 = vmatpush1.msra.mxu0 0.0
          %5562 = vmatprep.subr.mxu0 0.0
          %5563 = vmatpush1.msra.mxu0 0.0
          %5564 = vmatprep.subr.mxu0 0.0
          %5565 = vmatpush1.msra.mxu0 0.0
          %5566 = vmatprep.subr.mxu0 0.0
          %5567 = vmatpush1.msra.mxu0 %v1629
          %5568 = vmatprep.subr.mxu0 0.0
          %5569 = vmatpush2.msra.mxu0 0.0
          %5570 = vmatprep.subr.mxu0 0.0
          %5571 = vmatpush2.msra.mxu0 0.0
          %5572 = vmatprep.subr.mxu0 0.0
          %5573 = vmatpush2.msra.mxu0 0.0
          %5574 = vmatprep.subr.mxu0 0.0
          %5575 = vmatpush2.msra.mxu0 0.0
          %5576 = vmatprep.subr.mxu0 0.0
          %5577 = vmatpush2.msra.mxu0 0.0
          %5578 = vmatprep.subr.mxu0 0.0
          %5579 = vmatpush2.msra.mxu0 0.0
          %5580 = vmatprep.subr.mxu0 0.0
          %5581 = vmatpush2.msra.mxu0 0.0
          %5582 = vmatprep.subr.mxu0 0.0
          %5583 = vmatpush2.msra.mxu0 0.0
          %5584 = vmatprep.subr.mxu0 0.0
          %5585 = vmatpush2.msra.mxu0 0.0
          %5586 = vmatprep.subr.mxu0 0.0
          %5587 = vmatpush2.msra.mxu0 0.0
          %5588 = vmatprep.subr.mxu0 0.0
          %5589 = vmatpush2.msra.mxu0 0.0
          %5590 = vmatprep.subr.mxu0 0.0
          %5591 = vmatpush2.msra.mxu0 0.0
          %5592 = vmatprep.subr.mxu0 0.0
          %5593 = vmatpush2.msra.mxu0 0.0
          %5594 = vmatprep.subr.mxu0 0.0
          %5595 = vmatpush2.msra.mxu0 0.0
          %5596 = vmatprep.subr.mxu0 0.0
          %5597 = vmatpush2.msra.mxu0 0.0
          %5598 = vmatprep.subr.mxu0 0.0
          %5599 = vmatpush2.msra.mxu0 0.0
          %5600 = vmatprep.mubr.f32.mxu0 0.0
          %5601 = vmatmul.mubr.f32.gmra.mxu0 %v5534
          %v5602 = vpop.f32.mrf.mxu0
          %v5603 = vadd.f32 0.0, %v5602
          %v5604 = vpop.f32.mrf.mxu0
          %5605 = vdwg.mxu0
          %5606 = vrot.lane.b32.xlu0 %v5444, 112
          %v5607 = vpop.permute.xlu0 %5606
          %v5608 = vsel %vm946, %v5607, 0
          %5610 = vmatprep.subr.mxu0 0.0
          %5611 = vmatpush1.xpose.msra.mxu0 0.0
          %5612 = vmatprep.subr.mxu0 0.0
          %5613 = vmatpush1.xpose.msra.mxu0 0.0
          %5614 = vmatprep.subr.mxu0 0.0
          %5615 = vmatpush1.xpose.msra.mxu0 0.0
          %5616 = vmatprep.subr.mxu0 0.0
          %5617 = vmatpush1.xpose.msra.mxu0 0.0
          %5618 = vmatprep.subr.mxu0 0.0
          %5619 = vmatpush1.xpose.msra.mxu0 0.0
          %5620 = vmatprep.subr.mxu0 0.0
          %5621 = vmatpush1.xpose.msra.mxu0 0.0
          %5622 = vmatprep.subr.mxu0 0.0
          %5623 = vmatpush1.xpose.msra.mxu0 0.0
          %5624 = vmatprep.subr.mxu0 0.0
          %5625 = vmatpush1.xpose.msra.mxu0 0.0
          %5626 = vmatprep.subr.mxu0 0.0
          %5627 = vmatpush1.xpose.msra.mxu0 0.0
          %5628 = vmatprep.subr.mxu0 0.0
          %5629 = vmatpush1.xpose.msra.mxu0 0.0
          %5630 = vmatprep.subr.mxu0 0.0
          %5631 = vmatpush1.xpose.msra.mxu0 0.0
          %5632 = vmatprep.subr.mxu0 0.0
          %5633 = vmatpush1.xpose.msra.mxu0 0.0
          %5634 = vmatprep.subr.mxu0 0.0
          %5635 = vmatpush1.xpose.msra.mxu0 0.0
          %5636 = vmatprep.subr.mxu0 0.0
          %5637 = vmatpush1.xpose.msra.mxu0 0.0
          %5638 = vmatprep.subr.mxu0 0.0
          %5639 = vmatpush1.xpose.msra.mxu0 0.0
          %5640 = vmatprep.subr.mxu0 0.0
          %5641 = vmatpush1.xpose.msra.mxu0 %v1710
          %5642 = vmatprep.subr.mxu0 0.0
          %5643 = vmatpush2.xpose.msra.mxu0 0.0
          %5644 = vmatprep.subr.mxu0 0.0
          %5645 = vmatpush2.xpose.msra.mxu0 0.0
          %5646 = vmatprep.subr.mxu0 0.0
          %5647 = vmatpush2.xpose.msra.mxu0 0.0
          %5648 = vmatprep.subr.mxu0 0.0
          %5649 = vmatpush2.xpose.msra.mxu0 0.0
          %5650 = vmatprep.subr.mxu0 0.0
          %5651 = vmatpush2.xpose.msra.mxu0 0.0
          %5652 = vmatprep.subr.mxu0 0.0
          %5653 = vmatpush2.xpose.msra.mxu0 0.0
          %5654 = vmatprep.subr.mxu0 0.0
          %5655 = vmatpush2.xpose.msra.mxu0 0.0
          %5656 = vmatprep.subr.mxu0 0.0
          %5657 = vmatpush2.xpose.msra.mxu0 0.0
          %5658 = vmatprep.subr.mxu0 0.0
          %5659 = vmatpush2.xpose.msra.mxu0 0.0
          %5660 = vmatprep.subr.mxu0 0.0
          %5661 = vmatpush2.xpose.msra.mxu0 0.0
          %5662 = vmatprep.subr.mxu0 0.0
          %5663 = vmatpush2.xpose.msra.mxu0 0.0
          %5664 = vmatprep.subr.mxu0 0.0
          %5665 = vmatpush2.xpose.msra.mxu0 0.0
          %5666 = vmatprep.subr.mxu0 0.0
          %5667 = vmatpush2.xpose.msra.mxu0 0.0
          %5668 = vmatprep.subr.mxu0 0.0
          %5669 = vmatpush2.xpose.msra.mxu0 0.0
          %5670 = vmatprep.subr.mxu0 0.0
          %5671 = vmatpush2.xpose.msra.mxu0 0.0
          %5672 = vmatprep.subr.mxu0 0.0
          %5673 = vmatpush2.xpose.msra.mxu0 0.0
          %5674 = vmatprep.mubr.f32.mxu0 0.0
          %5675 = vmatmul.mubr.f32.gmra.mxu0 %v5608
          %v5676 = vpop.f32.mrf.mxu0
          %v5677 = vadd.f32 0.0, %v5676
          %v5678 = vpop.f32.mrf.mxu0
          %5679 = vdwg.mxu0
          %v5680 = vmul.f32 %v5677, 0.25
          %v5681 = vadd.f32 %v5680, %v710
          %v5682 = vsel %vm1023, %v5681, -inf
          %5683 = vmax.xlane.f32.xlu0 %v5682
          %v5684 = vpop.xlane.xlu0 %5683
          %v5685 = vsub.f32 %v5681, %v5684
          %v5686 = vmul.f32 %v5685, 1.442695
          %v5687 = vpow.pop %v5686
          %v5688 = vsel %vm1023, %v5687, 0.0
          %5689 = vadd.xlane.f32.xlu0 %v5688
          %v5690 = vpop.xlane.xlu0 %5689
          %v5691 = vrcp.pop %v5690
          %v5692 = vmul.f32 %v5687, %v5691
          %v5694 = vsel %vm1023, %v5692, 0
          %5696 = vmatprep.subr.mxu0 0.0
          %5697 = vmatpush1.msra.mxu0 0.0
          %5698 = vmatprep.subr.mxu0 0.0
          %5699 = vmatpush1.msra.mxu0 0.0
          %5700 = vmatprep.subr.mxu0 0.0
          %5701 = vmatpush1.msra.mxu0 0.0
          %5702 = vmatprep.subr.mxu0 0.0
          %5703 = vmatpush1.msra.mxu0 0.0
          %5704 = vmatprep.subr.mxu0 0.0
          %5705 = vmatpush1.msra.mxu0 0.0
          %5706 = vmatprep.subr.mxu0 0.0
          %5707 = vmatpush1.msra.mxu0 0.0
          %5708 = vmatprep.subr.mxu0 0.0
          %5709 = vmatpush1.msra.mxu0 0.0
          %5710 = vmatprep.subr.mxu0 0.0
          %5711 = vmatpush1.msra.mxu0 0.0
          %5712 = vmatprep.subr.mxu0 0.0
          %5713 = vmatpush1.msra.mxu0 0.0
          %5714 = vmatprep.subr.mxu0 0.0
          %5715 = vmatpush1.msra.mxu0 0.0
          %5716 = vmatprep.subr.mxu0 0.0
          %5717 = vmatpush1.msra.mxu0 0.0
          %5718 = vmatprep.subr.mxu0 0.0
          %5719 = vmatpush1.msra.mxu0 0.0
          %5720 = vmatprep.subr.mxu0 0.0
          %5721 = vmatpush1.msra.mxu0 0.0
          %5722 = vmatprep.subr.mxu0 0.0
          %5723 = vmatpush1.msra.mxu0 0.0
          %5724 = vmatprep.subr.mxu0 0.0
          %5725 = vmatpush1.msra.mxu0 0.0
          %5726 = vmatprep.subr.mxu0 0.0
          %5727 = vmatpush1.msra.mxu0 %v1796
          %5728 = vmatprep.subr.mxu0 0.0
          %5729 = vmatpush2.msra.mxu0 0.0
          %5730 = vmatprep.subr.mxu0 0.0
          %5731 = vmatpush2.msra.mxu0 0.0
          %5732 = vmatprep.subr.mxu0 0.0
          %5733 = vmatpush2.msra.mxu0 0.0
          %5734 = vmatprep.subr.mxu0 0.0
          %5735 = vmatpush2.msra.mxu0 0.0
          %5736 = vmatprep.subr.mxu0 0.0
          %5737 = vmatpush2.msra.mxu0 0.0
          %5738 = vmatprep.subr.mxu0 0.0
          %5739 = vmatpush2.msra.mxu0 0.0
          %5740 = vmatprep.subr.mxu0 0.0
          %5741 = vmatpush2.msra.mxu0 0.0
          %5742 = vmatprep.subr.mxu0 0.0
          %5743 = vmatpush2.msra.mxu0 0.0
          %5744 = vmatprep.subr.mxu0 0.0
          %5745 = vmatpush2.msra.mxu0 0.0
          %5746 = vmatprep.subr.mxu0 0.0
          %5747 = vmatpush2.msra.mxu0 0.0
          %5748 = vmatprep.subr.mxu0 0.0
          %5749 = vmatpush2.msra.mxu0 0.0
          %5750 = vmatprep.subr.mxu0 0.0
          %5751 = vmatpush2.msra.mxu0 0.0
          %5752 = vmatprep.subr.mxu0 0.0
          %5753 = vmatpush2.msra.mxu0 0.0
          %5754 = vmatprep.subr.mxu0 0.0
          %5755 = vmatpush2.msra.mxu0 0.0
          %5756 = vmatprep.subr.mxu0 0.0
          %5757 = vmatpush2.msra.mxu0 0.0
          %5758 = vmatprep.subr.mxu0 0.0
          %5759 = vmatpush2.msra.mxu0 0.0
          %5760 = vmatprep.mubr.f32.mxu0 0.0
          %5761 = vmatmul.mubr.f32.gmra.mxu0 %v5694
          %v5762 = vpop.f32.mrf.mxu0
          %v5763 = vadd.f32 0.0, %v5762
          %v5764 = vpop.f32.mrf.mxu0
          %5765 = vdwg.mxu0
          %v5767 = vsel %vm946, %v5763, 0
          %5769 = vmatprep.subr.mxu0 0.0
          %5770 = vmatpush1.msra.mxu0 0.0
          %5771 = vmatprep.subr.mxu0 0.0
          %5772 = vmatpush1.msra.mxu0 0.0
          %5773 = vmatprep.subr.mxu0 0.0
          %5774 = vmatpush1.msra.mxu0 0.0
          %5775 = vmatprep.subr.mxu0 0.0
          %5776 = vmatpush1.msra.mxu0 0.0
          %5777 = vmatprep.subr.mxu0 0.0
          %5778 = vmatpush1.msra.mxu0 0.0
          %5779 = vmatprep.subr.mxu0 0.0
          %5780 = vmatpush1.msra.mxu0 0.0
          %5781 = vmatprep.subr.mxu0 0.0
          %5782 = vmatpush1.msra.mxu0 0.0
          %5783 = vmatprep.subr.mxu0 0.0
          %5784 = vmatpush1.msra.mxu0 0.0
          %5785 = vmatprep.subr.mxu0 0.0
          %5786 = vmatpush1.msra.mxu0 0.0
          %5787 = vmatprep.subr.mxu0 0.0
          %5788 = vmatpush1.msra.mxu0 0.0
          %5789 = vmatprep.subr.mxu0 0.0
          %5790 = vmatpush1.msra.mxu0 0.0
          %5791 = vmatprep.subr.mxu0 0.0
          %5792 = vmatpush1.msra.mxu0 0.0
          %5793 = vmatprep.subr.mxu0 0.0
          %5794 = vmatpush1.msra.mxu0 0.0
          %5795 = vmatprep.subr.mxu0 0.0
          %5796 = vmatpush1.msra.mxu0 0.0
          %5797 = vmatprep.subr.mxu0 0.0
          %5798 = vmatpush1.msra.mxu0 %v729
          %5799 = vmatprep.subr.mxu0 0.0
          %5800 = vmatpush1.msra.mxu0 %v728
          %5801 = vmatprep.subr.mxu0 0.0
          %5802 = vmatpush2.msra.mxu0 0.0
          %5803 = vmatprep.subr.mxu0 0.0
          %5804 = vmatpush2.msra.mxu0 0.0
          %5805 = vmatprep.subr.mxu0 0.0
          %5806 = vmatpush2.msra.mxu0 0.0
          %5807 = vmatprep.subr.mxu0 0.0
          %5808 = vmatpush2.msra.mxu0 0.0
          %5809 = vmatprep.subr.mxu0 0.0
          %5810 = vmatpush2.msra.mxu0 0.0
          %5811 = vmatprep.subr.mxu0 0.0
          %5812 = vmatpush2.msra.mxu0 0.0
          %5813 = vmatprep.subr.mxu0 0.0
          %5814 = vmatpush2.msra.mxu0 0.0
          %5815 = vmatprep.subr.mxu0 0.0
          %5816 = vmatpush2.msra.mxu0 0.0
          %5817 = vmatprep.subr.mxu0 0.0
          %5818 = vmatpush2.msra.mxu0 0.0
          %5819 = vmatprep.subr.mxu0 0.0
          %5820 = vmatpush2.msra.mxu0 0.0
          %5821 = vmatprep.subr.mxu0 0.0
          %5822 = vmatpush2.msra.mxu0 0.0
          %5823 = vmatprep.subr.mxu0 0.0
          %5824 = vmatpush2.msra.mxu0 0.0
          %5825 = vmatprep.subr.mxu0 0.0
          %5826 = vmatpush2.msra.mxu0 0.0
          %5827 = vmatprep.subr.mxu0 0.0
          %5828 = vmatpush2.msra.mxu0 0.0
          %5829 = vmatprep.subr.mxu0 0.0
          %5830 = vmatpush2.msra.mxu0 0.0
          %5831 = vmatprep.subr.mxu0 0.0
          %5832 = vmatpush2.msra.mxu0 0.0
          %5833 = vmatprep.mubr.f32.mxu0 0.0
          %5834 = vmatmul.mubr.f32.gmra.mxu0 %v5767
          %v5835 = vpop.f32.mrf.mxu0
          %v5836 = vadd.f32 0.0, %v5835
          %v5837 = vpop.f32.mrf.mxu0
          %5838 = vdwg.mxu0
          %v5840 = vsel %vm946, %v5603, 0
          %5842 = vmatprep.subr.mxu0 0.0
          %5843 = vmatpush1.msra.mxu0 0.0
          %5844 = vmatprep.subr.mxu0 0.0
          %5845 = vmatpush1.msra.mxu0 0.0
          %5846 = vmatprep.subr.mxu0 0.0
          %5847 = vmatpush1.msra.mxu0 0.0
          %5848 = vmatprep.subr.mxu0 0.0
          %5849 = vmatpush1.msra.mxu0 0.0
          %5850 = vmatprep.subr.mxu0 0.0
          %5851 = vmatpush1.msra.mxu0 0.0
          %5852 = vmatprep.subr.mxu0 0.0
          %5853 = vmatpush1.msra.mxu0 0.0
          %5854 = vmatprep.subr.mxu0 0.0
          %5855 = vmatpush1.msra.mxu0 0.0
          %5856 = vmatprep.subr.mxu0 0.0
          %5857 = vmatpush1.msra.mxu0 0.0
          %5858 = vmatprep.subr.mxu0 0.0
          %5859 = vmatpush1.msra.mxu0 0.0
          %5860 = vmatprep.subr.mxu0 0.0
          %5861 = vmatpush1.msra.mxu0 0.0
          %5862 = vmatprep.subr.mxu0 0.0
          %5863 = vmatpush1.msra.mxu0 0.0
          %5864 = vmatprep.subr.mxu0 0.0
          %5865 = vmatpush1.msra.mxu0 0.0
          %5866 = vmatprep.subr.mxu0 0.0
          %5867 = vmatpush1.msra.mxu0 0.0
          %5868 = vmatprep.subr.mxu0 0.0
          %5869 = vmatpush1.msra.mxu0 0.0
          %5870 = vmatprep.subr.mxu0 0.0
          %5871 = vmatpush1.msra.mxu0 %v727
          %5872 = vmatprep.subr.mxu0 0.0
          %5873 = vmatpush1.msra.mxu0 %v726
          %5874 = vmatprep.subr.mxu0 0.0
          %5875 = vmatpush2.msra.mxu0 0.0
          %5876 = vmatprep.subr.mxu0 0.0
          %5877 = vmatpush2.msra.mxu0 0.0
          %5878 = vmatprep.subr.mxu0 0.0
          %5879 = vmatpush2.msra.mxu0 0.0
          %5880 = vmatprep.subr.mxu0 0.0
          %5881 = vmatpush2.msra.mxu0 0.0
          %5882 = vmatprep.subr.mxu0 0.0
          %5883 = vmatpush2.msra.mxu0 0.0
          %5884 = vmatprep.subr.mxu0 0.0
          %5885 = vmatpush2.msra.mxu0 0.0
          %5886 = vmatprep.subr.mxu0 0.0
          %5887 = vmatpush2.msra.mxu0 0.0
          %5888 = vmatprep.subr.mxu0 0.0
          %5889 = vmatpush2.msra.mxu0 0.0
          %5890 = vmatprep.subr.mxu0 0.0
          %5891 = vmatpush2.msra.mxu0 0.0
          %5892 = vmatprep.subr.mxu0 0.0
          %5893 = vmatpush2.msra.mxu0 0.0
          %5894 = vmatprep.subr.mxu0 0.0
          %5895 = vmatpush2.msra.mxu0 0.0
          %5896 = vmatprep.subr.mxu0 0.0
          %5897 = vmatpush2.msra.mxu0 0.0
          %5898 = vmatprep.subr.mxu0 0.0
          %5899 = vmatpush2.msra.mxu0 0.0
          %5900 = vmatprep.subr.mxu0 0.0
          %5901 = vmatpush2.msra.mxu0 0.0
          %5902 = vmatprep.subr.mxu0 0.0
          %5903 = vmatpush2.msra.mxu0 0.0
          %5904 = vmatprep.subr.mxu0 0.0
          %5905 = vmatpush2.msra.mxu0 0.0
          %5906 = vmatprep.mubr.f32.mxu0 0.0
          %5907 = vmatmul.mubr.f32.gmra.mxu0 %v5840
          %v5908 = vpop.f32.mrf.mxu0
          %v5909 = vadd.f32 %v5836, %v5908
          %v5910 = vpop.f32.mrf.mxu0
          %5911 = vdwg.mxu0
          %v5912 = vadd.f32 %v5909, %v2021
          %v5913 = vsel %vm771, %v5912, 0.0
          %5914 = vadd.xlane.f32.xlu0 %v5913
          %v5915 = vpop.xlane.xlu0 %5914
          %v5916 = vmul.f32 %v5915, %v1434
          %v5917 = vsub.f32 %v5912, %v5916
          %v5918 = vmul.f32 %v5917, %v5917
          %v5919 = vsel %vm771, %v5918, 0.0
          %5920 = vadd.xlane.f32.xlu0 %v5919
          %v5921 = vpop.xlane.xlu0 %5920
          %v5922 = vmul.f32 %v5921, %v1434
          %v5923 = vadd.f32 %v5922, 1e-05
          %v5924 = vrsqrt.pop %v5923
          %v5925 = vmul.f32 %v5917, %v5924
          %v5926 = vmul.f32 %v5925, %v1449
          %v5927 = vadd.f32 %v5926, %v1456
          %v5928 = vmul.f32 %v5927, %v1462
          %v5930 = vsel %vm771, %v5928, 0
          %5932 = vmatprep.subr.mxu0 0.0
          %5933 = vmatpush1.msra.mxu0 0.0
          %5934 = vmatprep.subr.mxu0 0.0
          %5935 = vmatpush1.msra.mxu0 0.0
          %5936 = vmatprep.subr.mxu0 0.0
          %5937 = vmatpush1.msra.mxu0 0.0
          %5938 = vmatprep.subr.mxu0 0.0
          %5939 = vmatpush1.msra.mxu0 0.0
          %5940 = vmatprep.subr.mxu0 0.0
          %5941 = vmatpush1.msra.mxu0 0.0
          %5942 = vmatprep.subr.mxu0 0.0
          %5943 = vmatpush1.msra.mxu0 0.0
          %5944 = vmatprep.subr.mxu0 0.0
          %5945 = vmatpush1.msra.mxu0 0.0
          %5946 = vmatprep.subr.mxu0 0.0
          %5947 = vmatpush1.msra.mxu0 0.0
          %5948 = vmatprep.subr.mxu0 0.0
          %5949 = vmatpush1.msra.mxu0 0.0
          %5950 = vmatprep.subr.mxu0 0.0
          %5951 = vmatpush1.msra.mxu0 0.0
          %5952 = vmatprep.subr.mxu0 0.0
          %5953 = vmatpush1.msra.mxu0 0.0
          %5954 = vmatprep.subr.mxu0 0.0
          %5955 = vmatpush1.msra.mxu0 0.0
          %5956 = vmatprep.subr.mxu0 0.0
          %5957 = vmatpush1.msra.mxu0 %v734
          %5958 = vmatprep.subr.mxu0 0.0
          %5959 = vmatpush1.msra.mxu0 %v733
          %5960 = vmatprep.subr.mxu0 0.0
          %5961 = vmatpush1.msra.mxu0 %v732
          %5962 = vmatprep.subr.mxu0 0.0
          %5963 = vmatpush1.msra.mxu0 %v731
          %5964 = vmatprep.subr.mxu0 0.0
          %5965 = vmatpush2.msra.mxu0 0.0
          %5966 = vmatprep.subr.mxu0 0.0
          %5967 = vmatpush2.msra.mxu0 0.0
          %5968 = vmatprep.subr.mxu0 0.0
          %5969 = vmatpush2.msra.mxu0 0.0
          %5970 = vmatprep.subr.mxu0 0.0
          %5971 = vmatpush2.msra.mxu0 0.0
          %5972 = vmatprep.subr.mxu0 0.0
          %5973 = vmatpush2.msra.mxu0 0.0
          %5974 = vmatprep.subr.mxu0 0.0
          %5975 = vmatpush2.msra.mxu0 0.0
          %5976 = vmatprep.subr.mxu0 0.0
          %5977 = vmatpush2.msra.mxu0 0.0
          %5978 = vmatprep.subr.mxu0 0.0
          %5979 = vmatpush2.msra.mxu0 0.0
          %5980 = vmatprep.subr.mxu0 0.0
          %5981 = vmatpush2.msra.mxu0 0.0
          %5982 = vmatprep.subr.mxu0 0.0
          %5983 = vmatpush2.msra.mxu0 0.0
          %5984 = vmatprep.subr.mxu0 0.0
          %5985 = vmatpush2.msra.mxu0 0.0
          %5986 = vmatprep.subr.mxu0 0.0
          %5987 = vmatpush2.msra.mxu0 0.0
          %5988 = vmatprep.subr.mxu0 0.0
          %5989 = vmatpush2.msra.mxu0 0.0
          %5990 = vmatprep.subr.mxu0 0.0
          %5991 = vmatpush2.msra.mxu0 0.0
          %5992 = vmatprep.subr.mxu0 0.0
          %5993 = vmatpush2.msra.mxu0 0.0
          %5994 = vmatprep.subr.mxu0 0.0
          %5995 = vmatpush2.msra.mxu0 0.0
          %5996 = vmatprep.mubr.f32.mxu0 0.0
          %5997 = vmatmul.mubr.f32.gmra.mxu0 %v5930
          %v5998 = vpop.f32.mrf.mxu0
          %v5999 = vadd.f32 %v2044, %v5998
          %v6000 = vpop.f32.mrf.mxu0
          %6001 = vdwg.mxu0
          %v6002 = vmax.f32 %v5999, 0.0
          %v6004 = vsel %vm2126, %v6002, 0
          %6006 = vmatprep.subr.mxu0 0.0
          %6007 = vmatpush1.msra.mxu0 0.0
          %6008 = vmatprep.subr.mxu0 0.0
          %6009 = vmatpush1.msra.mxu0 0.0
          %6010 = vmatprep.subr.mxu0 0.0
          %6011 = vmatpush1.msra.mxu0 0.0
          %6012 = vmatprep.subr.mxu0 0.0
          %6013 = vmatpush1.msra.mxu0 0.0
          %6014 = vmatprep.subr.mxu0 0.0
          %6015 = vmatpush1.msra.mxu0 0.0
          %6016 = vmatprep.subr.mxu0 0.0
          %6017 = vmatpush1.msra.mxu0 0.0
          %6018 = vmatprep.subr.mxu0 0.0
          %6019 = vmatpush1.msra.mxu0 0.0
          %6020 = vmatprep.subr.mxu0 0.0
          %6021 = vmatpush1.msra.mxu0 0.0
          %6022 = vmatprep.subr.mxu0 0.0
          %6023 = vmatpush1.msra.mxu0 %v743
          %6024 = vmatprep.subr.mxu0 0.0
          %6025 = vmatpush1.msra.mxu0 %v742
          %6026 = vmatprep.subr.mxu0 0.0
          %6027 = vmatpush1.msra.mxu0 %v741
          %6028 = vmatprep.subr.mxu0 0.0
          %6029 = vmatpush1.msra.mxu0 %v740
          %6030 = vmatprep.subr.mxu0 0.0
          %6031 = vmatpush1.msra.mxu0 %v739
          %6032 = vmatprep.subr.mxu0 0.0
          %6033 = vmatpush1.msra.mxu0 %v738
          %6034 = vmatprep.subr.mxu0 0.0
          %6035 = vmatpush1.msra.mxu0 %v737
          %6036 = vmatprep.subr.mxu0 0.0
          %6037 = vmatpush1.msra.mxu0 %v736
          %6038 = vmatprep.subr.mxu0 0.0
          %6039 = vmatpush2.msra.mxu0 0.0
          %6040 = vmatprep.subr.mxu0 0.0
          %6041 = vmatpush2.msra.mxu0 0.0
          %6042 = vmatprep.subr.mxu0 0.0
          %6043 = vmatpush2.msra.mxu0 0.0
          %6044 = vmatprep.subr.mxu0 0.0
          %6045 = vmatpush2.msra.mxu0 0.0
          %6046 = vmatprep.subr.mxu0 0.0
          %6047 = vmatpush2.msra.mxu0 0.0
          %6048 = vmatprep.subr.mxu0 0.0
          %6049 = vmatpush2.msra.mxu0 0.0
          %6050 = vmatprep.subr.mxu0 0.0
          %6051 = vmatpush2.msra.mxu0 0.0
          %6052 = vmatprep.subr.mxu0 0.0
          %6053 = vmatpush2.msra.mxu0 0.0
          %6054 = vmatprep.subr.mxu0 0.0
          %6055 = vmatpush2.msra.mxu0 0.0
          %6056 = vmatprep.subr.mxu0 0.0
          %6057 = vmatpush2.msra.mxu0 0.0
          %6058 = vmatprep.subr.mxu0 0.0
          %6059 = vmatpush2.msra.mxu0 0.0
          %6060 = vmatprep.subr.mxu0 0.0
          %6061 = vmatpush2.msra.mxu0 0.0
          %6062 = vmatprep.subr.mxu0 0.0
          %6063 = vmatpush2.msra.mxu0 0.0
          %6064 = vmatprep.subr.mxu0 0.0
          %6065 = vmatpush2.msra.mxu0 0.0
          %6066 = vmatprep.subr.mxu0 0.0
          %6067 = vmatpush2.msra.mxu0 0.0
          %6068 = vmatprep.subr.mxu0 0.0
          %6069 = vmatpush2.msra.mxu0 0.0
          %6070 = vmatprep.mubr.f32.mxu0 0.0
          %6071 = vmatmul.mubr.f32.gmra.mxu0 %v6004
          %v6072 = vpop.f32.mrf.mxu0
          %v6073 = vadd.f32 %v2124, %v6072
          %v6074 = vpop.f32.mrf.mxu0
          %6075 = vdwg.mxu0
          %v6076 = vsel %vm771, %v6073, 0.0
          %6077 = vadd.xlane.f32.xlu0 %v6076
          %v6078 = vpop.xlane.xlu0 %6077
          %v6079 = vmul.f32 %v6078, %v1434
          %v6080 = vsub.f32 %v6073, %v6079
          %v6081 = vmul.f32 %v6080, %v6080
          %v6082 = vsel %vm771, %v6081, 0.0
          %6083 = vadd.xlane.f32.xlu0 %v6082
          %v6084 = vpop.xlane.xlu0 %6083
          %v6085 = vmul.f32 %v6084, %v1434
          %v6086 = vadd.f32 %v6085, 1e-05
          %v6087 = vrsqrt.pop %v6086
          %v6088 = vmul.f32 %v6080, %v6087
          %v6089 = vmul.f32 %v6088, %v1449
          %v6090 = vadd.f32 %v6089, %v1456
          %v6091 = vmul.f32 %v6090, %v1462
          %v6092 = vmul.f32 %v3508, 2.0
          %v6093 = vadd.f32 %v2215, %v6092
          %v6094 = vmul.f32 %v4798, 2.0
          %v6095 = vadd.f32 %v6093, %v6094
          %v6096 = vadd.f32 %v6095, %v6091
          %v6097 = vstv %s851
          %v6098 = vmul.f32 %v6097, %v6096
          %v6099 = vadd.f32 %v858, %v6098
        $region109: #{node_decoder_layer.1} parent=99 // loop_footer
          %s857 = sadd.s32 1, %s853
        $region110: #{node_decoder_layer.1} parent=99 // loop_footer_branch
          %852 = sbr.rel target = $region106
        $region111: #{node_decoder_layer.1} parent=99 // loop_exit
          _
        %6100 = vst.msk [vmem:[%s686] sm:$0xff] %vm771, %v858
        %s6101 = sand.u32 %s488, 1
        %s6102 = scalar_lea.sflag [#allocation3], %s6101
        %s6103 = sand.u32 %s488, 1
        %s6104 = smul.addr %s6103, 8
        %s6105 = scalar_lea.vmem [#allocation5], %s6104
        // Predicated region
        $region112: #{node_decoder_layer.1} parent=99 // pred_check
          %p6106 = pneg %p498
        $region113: #{node_decoder_layer.1} parent=99 // pred_check_branch
          %6108 = sbr.rel (%p6106) target = $region115
        $region114: #{node_decoder_layer.1} parent=99 // pred_region
          %s6110 = ssub.s32 128, 128
          %6111 = vsyncadd %s6102, %s6110
          %s6112 = smul.addr %s35, 128
          %s6113 = scalar_lea.hbm %s20, %s6112
          %s6115 = sshll.u32 %s6105, 4
          %s6116 = int_to_ptr.vmem [resolvable:$true] %s6115
          %6118 = dma.vmem_to_hbm [thread:$0]  %s6116, 128, %s6113, %s6102
        $region115: #{node_decoder_layer.1} parent=99 // pred_fallthru
          _
      $region100: #{node_decoder_layer.1} parent=5 // pred_fallthru
        _
      %p6119 = scmp.le.s32.totalorder 2, %s30
      // Predicated region
      $region116: #{node_decoder_layer.1} parent=5 // pred_check
        %p6120 = pneg %p6119
      $region117: #{node_decoder_layer.1} parent=5 // pred_check_branch
        %6122 = sbr.rel (%p6120) target = $region119
      $region118: #{node_decoder_layer.1} parent=5 // pred_region
        %s6123 = ssub.s32 %s30, 2
        // Predicated region
        $region120: #{node_decoder_layer.1} parent=118 // pred_check
          %p6124 = pneg %p504
        $region121: #{node_decoder_layer.1} parent=118 // pred_check_branch
          %6126 = sbr.rel (%p6124) target = $region123
        $region122: #{node_decoder_layer.1} parent=118 // pred_region
          %s6127 = sand.u32 %s489, 1
          %s6128 = scalar_lea.sflag [#allocation3], %s6127
          %s6129 = sand.u32 %s489, 1
          %s6130 = smul.addr %s6129, 8
          %s6131 = scalar_lea.vmem [#allocation5], %s6130
          %6132 = dma.done %s6128, 128
        $region123: #{node_decoder_layer.1} parent=118 // pred_fallthru
          _
      $region119: #{node_decoder_layer.1} parent=5 // pred_fallthru
        _
    $region6: #{node_decoder_layer.1} parent=1 // loop_footer
      %s34 = sadd.s32 1, %s30
    $region7: #{node_decoder_layer.1} parent=1 // loop_footer_branch
      %29 = sbr.rel target = $region3
    $region8: #{node_decoder_layer.1} parent=1 // loop_exit
      _
    %6133 = vsyncpa [#allocation3], 1
    %s6134 = scalar_lea.sflag [#allocation3], 1
    %6135 = vsyncpa %s6134, 1
    %6136 = vsyncpa [#allocation4], 1
    %s6137 = scalar_lea.sflag [#allocation4], 1
    %6138 = vsyncpa %s6137, 1

</llo_original>
